<compile_context>
chip_gen: v7x
topology: tpu7x:2x2x1
jax: 0.10.0
libtpu: 0.0.40
codegen_flags: <defaults>
</compile_context>

<pallas_src>
import functools

import jax
import jax.numpy as jnp
from jax.experimental import pallas as pl
from jax.experimental.pallas import tpu as pltpu

F32 = jnp.float32
BF16 = jnp.bfloat16
VMEM_SPEC = pl.BlockSpec(memory_space=pltpu.MemorySpace.VMEM)

# Canonical flat ordering of all parameters fed to the fused kernel.
PARAM_ORDER = (
    # pre-trained edge classifier: sigmoid(MLP([x_src, x_dst, edge_attr])), L=3
    # (src/dst first-layer weights merged into one [2*hidden, node_indim] block)
    "ec_w0sd", "ec_w0e", "ec_b0", "ec_w1", "ec_b1", "ec_w2", "ec_b2",
    # hc_node_encoder / hc_edge_encoder: MLP, L=2, bias=False
    "ne_w0", "ne_w1", "ee_w0", "ee_w1",
    # p_beta / p_cluster heads: MLP, L=3
    "pb_w0", "pb_b0", "pb_w1", "pb_b1", "pb_w2", "pb_b2",
    "pc_w0", "pc_b0", "pc_w1", "pc_b1", "pc_w2", "pc_b2",
    # ResIN: L_hc identical interaction networks, stacked along a leading layer axis
    "r_rw0ds", "r_rw0e", "r_rb0", "r_rw1", "r_rb1", "r_rw2", "r_rb2",
    "r_ow0x", "r_ow0a", "r_ob0", "r_ow1", "r_ob1", "r_ow2", "r_ob2",
    # p_track_param interaction network (edge input = concat of L_hc+1 edge feats)
    "t_rw0ds", "t_rw0e", "t_rb0", "t_rw1", "t_rb1", "t_rw2", "t_rb2",
    "t_ow0x", "t_ow0a", "t_ob0", "t_ow1", "t_ob1", "t_ow2", "t_ob2",
)


# --------------------------------------------------------------------------
# Fused forward kernel (lane-dense [features, rows] layout everywhere)
# --------------------------------------------------------------------------
def _fused_forward_kernel(*refs, n_layers, alpha, threshold):
    xT_ref, eT_ref, src_row_ref, dst_row_ref = refs[:4]
    n_params = len(PARAM_ORDER)
    P = dict(zip(PARAM_ORDER, refs[4:4 + n_params]))
    wT_ref, node_ref = refs[4 + n_params:]

    xT = xT_ref[...]            # [node_indim, Np]   lane axis = (padded) nodes
    eT = eT_ref[...]            # [edge_indim, Ep]   lane axis = (padded) edges
    src_row = src_row_ref[...]  # [1, Ep] int32 (padded entries = Np, out of range)
    dst_row = dst_row_ref[...]  # [1, Ep] int32

    Np = xT.shape[1]
    Ep = eT.shape[1]

    relu = lambda v: jnp.maximum(v, 0.0)

    def mm(a, b):               # small dense MLP matmuls: f32 operands, f32 accum
        return jnp.dot(a, b, preferred_element_type=F32)

    def mmb(a, b):              # big gather/scatter matmuls: bf16 operands, f32 accum
        return jnp.dot(a.astype(BF16), b.astype(BF16), preferred_element_type=F32)

    # ---- gather / scatter operators built in-register (never stored to HBM).
    # bf16 one-hots (0/1 is exact in bf16); the scatter operator is the dst
    # one-hot transposed once on the XLU and reused by EC / all layers / track.
    iota_ne = jax.lax.broadcasted_iota(jnp.int32, (Np, Ep), 0)   # node id per row
    g_src = (iota_ne == src_row).astype(F32).astype(BF16)        # [Np, Ep]
    g_dst_f = (iota_ne == dst_row).astype(F32)
    g_dst = g_dst_f.astype(BF16)                                 # [Np, Ep]
    scat = jnp.transpose(g_dst_f).astype(BF16)                   # [Ep, Np]

    # ---- pre-trained edge classifier: W = sigmoid(MLP([x_src, x_dst, e])) ----
    # weight-before-gather: one K=node_indim matmul produces both pre-gather
    # operands ([2*hidden, Np]), then the one-hot matmuls carry hidden rows.
    a = mm(P["ec_w0sd"][...], xT)                                # [2*hidden, Np]
    hd = a.shape[0] // 2
    h = relu(mmb(a[:hd], g_src) + mmb(a[hd:], g_dst)
             + mm(P["ec_w0e"][...], eT) + P["ec_b0"][...])
    h = relu(mm(P["ec_w1"][...], h) + P["ec_b1"][...])
    wT = jax.nn.sigmoid(mm(P["ec_w2"][...], h) + P["ec_b2"][...])   # [1, Ep]
    wT_ref[...] = wT

    # edge_subgraph(data, W > threshold): emulated by masking every contribution
    # of a below-threshold edge to the node aggregation (shapes stay static).
    # TODO(synk): true dynamic edge removal (variable E) has no static-shape
    # Pallas equivalent; node-level outputs are mathematically identical.
    mask = (wT > threshold).astype(F32)   # [1, Ep]

    # ---- node / edge encoders (outer ReLU of ModularGraphTCN fused in) ----
    h_hc = relu(mm(P["ne_w1"][...], relu(mm(P["ne_w0"][...], xT))))   # [h_dim, Np]
    e_hc = relu(mm(P["ee_w1"][...], relu(mm(P["ee_w0"][...], eT))))   # [e_dim, Ep]

    # p_track edge-term accumulator (incremental; no edge_attrs list kept live)
    m_tr = mm(P["t_rw0e"][0], e_hc)                                   # [hidden, Ep]

    # ---- ResIN stack: L_hc identical interaction networks with residual ----
    e_prev = e_hc
    for l in range(n_layers):
        # relational MLP on [x_i (dst), x_j (src), edge_attr]; weights applied
        # before the gather so the O(Np*Ep) matmuls carry `hidden` rows.
        a = mm(P["r_rw0ds"][l], h_hc)                # [2*hidden, Np]
        hd = a.shape[0] // 2
        m = relu(mmb(a[:hd], g_dst) + mmb(a[hd:], g_src)
                 + mm(P["r_rw0e"][l], e_prev) + P["r_rb0"][l])
        m = relu(mm(P["r_rw1"][l], m) + P["r_rb1"][l])
        e_out = mm(P["r_rw2"][l], m) + P["r_rb2"][l]          # [e_dim, Ep]
        m_tr = m_tr + mm(P["t_rw0e"][l + 1], e_out)           # track-head accum
        # masked scatter-add (aggr="add"); object weight applied before scatter.
        bmsg = mm(P["r_ow0a"][l], e_out * mask)               # [hidden, Ep]
        aggw = mmb(bmsg, scat)                                # [hidden, Np]
        c = relu(mm(P["r_ow0x"][l], h_hc) + aggw + P["r_ob0"][l])
        c = relu(mm(P["r_ow1"][l], c) + P["r_ob1"][l])
        dx = mm(P["r_ow2"][l], c) + P["r_ob2"][l]             # [h_dim, Np]
        # ResIN residual: x' = alpha * x + (1 - alpha) * relu(delta_x)
        h_hc = alpha * h_hc + (1.0 - alpha) * relu(dx)
        e_prev = e_out

    # ---- p_beta head: sigmoid(MLP(h)) + 1e-8 ----
    b = relu(mm(P["pb_w0"][...], h_hc) + P["pb_b0"][...])
    b = relu(mm(P["pb_w1"][...], b) + P["pb_b1"][...])
    bT = jax.nn.sigmoid(mm(P["pb_w2"][...], b) + P["pb_b2"][...]) + 1e-8   # [1, Np]

    # ---- p_cluster head ----
    c = relu(mm(P["pc_w0"][...], h_hc) + P["pc_b0"][...])
    c = relu(mm(P["pc_w1"][...], c) + P["pc_b1"][...])
    hT = mm(P["pc_w2"][...], c) + P["pc_b2"][...]                          # [h_outdim, Np]

    # ---- p_track_param interaction network ----
    a = mm(P["t_rw0ds"][...], h_hc)                            # [2*hidden, Np]
    hd = a.shape[0] // 2
    m = relu(mmb(a[:hd], g_dst) + mmb(a[hd:], g_src) + m_tr + P["t_rb0"][...])
    m = relu(mm(P["t_rw1"][...], m) + P["t_rb1"][...])
    te = mm(P["t_rw2"][...], m) + P["t_rb2"][...]              # [1, Ep]
    tb = mm(P["t_ow0a"][...], te * mask)                       # [hidden, Ep]
    aggw = mmb(tb, scat)                                       # [hidden, Np]
    c = relu(mm(P["t_ow0x"][...], h_hc) + aggw + P["t_ob0"][...])
    c = relu(mm(P["t_ow1"][...], c) + P["t_ob1"][...])
    pT = mm(P["t_ow2"][...], c) + P["t_ob2"][...]              # [1, Np]

    # fused node-side output slab: [H ; B ; P] -> [h_outdim + 2, Np]
    node_ref[...] = jnp.concatenate([hT, bT, pT], axis=0)


# --------------------------------------------------------------------------
# Deterministic parameter construction (synthetic, PyTorch-Linear-style init),
# stored directly in torch Linear layout [out, in] / biases as [out, 1].
# --------------------------------------------------------------------------
def _linear_t(key, fan_in, fan_out, bias=True):
    kw, kb = jax.random.split(key)
    bound = 1.0 / (fan_in ** 0.5)
    w = jax.random.uniform(kw, (fan_out, fan_in), F32, -bound, bound)
    b = jax.random.uniform(kb, (fan_out, 1), F32, -bound, bound) if bias else None
    return w, b


def init_mlp_t(key, in_dim, out_dim, hidden, L, bias=True):
    # gnn_tracking MLP: Linear(in,h) -> ReLU -> [Linear(h,h) -> ReLU]*(L-2) -> Linear(h,out)
    dims = [in_dim] + [hidden] * (L - 1) + [out_dim]
    keys = jax.random.split(key, L)
    ws, bs = [], []
    for k, di, do in zip(keys, dims[:-1], dims[1:]):
        w, b = _linear_t(k, di, do, bias)
        ws.append(w)
        bs.append(b)
    return ws, bs


def init_in_t(key, node_indim, edge_indim, node_outdim, edge_outdim, hidden):
    # IN: relational_model = MLP(2*node_indim+edge_indim, edge_outdim, hidden, L=3)
    #     object_model     = MLP(node_indim+edge_outdim, node_outdim, hidden, L=3)
    k_rel, k_obj = jax.random.split(key)
    rws, rbs = init_mlp_t(k_rel, 2 * node_indim + edge_indim, edge_outdim, hidden, 3)
    ows, obs = init_mlp_t(k_obj, node_indim + edge_outdim, node_outdim, hidden, 3)
    rw0, ow0 = rws[0], ows[0]
    return {
        # merged first-layer weight: [dst block ; src block] -> [2*hidden, node_indim]
        "rw0ds": jnp.concatenate([rw0[:, :node_indim],
                                  rw0[:, node_indim:2 * node_indim]], axis=0),
        "rw0e": rw0[:, 2 * node_indim:],
        "rb0": rbs[0], "rw1": rws[1], "rb1": rbs[1], "rw2": rws[2], "rb2": rbs[2],
        "ow0x": ow0[:, :node_indim], "ow0a": ow0[:, node_indim:],
        "ob0": obs[0], "ow1": ows[1], "ob1": obs[1], "ow2": ows[2], "ob2": obs[2],
    }


def _round_up(v, m):
    return ((v + m - 1) // m) * m


# --------------------------------------------------------------------------
# PreTrainedECGraphTCN (ModularGraphTCN + ResIN stack), single fused Pallas call
# --------------------------------------------------------------------------
class PreTrainedECGraphTCNPallas:
    def __init__(self, key, *, node_indim, edge_indim,
                 interaction_node_hidden_dim=5, interaction_edge_hidden_dim=4,
                 h_dim=5, e_dim=4, h_outdim=2, hidden_dim=40,
                 L_hc=3, alpha_hc=0.5, ec_threshold=0.5):
        del interaction_node_hidden_dim, interaction_edge_hidden_dim  # == h_dim / e_dim here
        self.alpha_hc = float(alpha_hc)
        self.ec_threshold = float(ec_threshold)
        self.L_hc = int(L_hc)
        self.e_dim = int(e_dim)
        self.h_dim = int(h_dim)
        self.h_outdim = int(h_outdim)

        # Generation-aware VMEM budget (v7x has 64 MiB, v5e/v6e 128 MiB).
        try:
            cap = pltpu.get_tpu_info().vmem_capacity_bytes
            self.vmem_limit = min(int(cap // 2), 64 * 1024 * 1024)
        except Exception:
            self.vmem_limit = None   # fall back to compiler default

        keys = jax.random.split(key, 6 + L_hc)
        p = {}

        # "Pre-trained" edge classifier (synthetic): sigmoid(MLP([x_src, x_dst, e]))
        ec_ws, ec_bs = init_mlp_t(keys[0], 2 * node_indim + edge_indim, 1, hidden_dim, 3)
        p["ec_w0sd"] = jnp.concatenate(
            [ec_ws[0][:, :node_indim], ec_ws[0][:, node_indim:2 * node_indim]], axis=0)
        p["ec_w0e"] = ec_ws[0][:, 2 * node_indim:]
        p["ec_b0"], p["ec_w1"], p["ec_b1"], p["ec_w2"], p["ec_b2"] = (
            ec_bs[0], ec_ws[1], ec_bs[1], ec_ws[2], ec_bs[2])

        # hc_node_encoder / hc_edge_encoder: MLP(..., L=2, bias=False)
        ne_ws, _ = init_mlp_t(keys[1], node_indim, h_dim, hidden_dim, 2, bias=False)
        p["ne_w0"], p["ne_w1"] = ne_ws
        ee_ws, _ = init_mlp_t(keys[2], edge_indim, e_dim, hidden_dim, 2, bias=False)
        p["ee_w0"], p["ee_w1"] = ee_ws

        # p_beta / p_cluster: MLP(h_dim, ..., hidden_dim, L=3)
        pb_ws, pb_bs = init_mlp_t(keys[3], h_dim, 1, hidden_dim, 3)
        p["pb_w0"], p["pb_b0"], p["pb_w1"], p["pb_b1"], p["pb_w2"], p["pb_b2"] = (
            pb_ws[0], pb_bs[0], pb_ws[1], pb_bs[1], pb_ws[2], pb_bs[2])
        pc_ws, pc_bs = init_mlp_t(keys[4], h_dim, h_outdim, hidden_dim, 3)
        p["pc_w0"], p["pc_b0"], p["pc_w1"], p["pc_b1"], p["pc_w2"], p["pc_b2"] = (
            pc_ws[0], pc_bs[0], pc_ws[1], pc_bs[1], pc_ws[2], pc_bs[2])

        # p_track_param: IN(h_dim, e_dim*(L_hc+1) -> node_outdim=1, edge_outdim=1)
        t = init_in_t(keys[5], h_dim, e_dim * (L_hc + 1), 1, 1, hidden_dim)
        # split the edge block of the first relational weight per concat piece
        t["rw0e"] = jnp.transpose(
            t["rw0e"].reshape(hidden_dim, L_hc + 1, e_dim), (1, 0, 2))
        for k, v in t.items():
            p["t_" + k] = v

        # ResIN.identical_in_layers: L_hc identical IN(h_dim, e_dim) layers, stacked
        layers = [init_in_t(keys[6 + i], h_dim, e_dim, h_dim, e_dim, hidden_dim)
                  for i in range(L_hc)]
        for k in layers[0]:
            p["r_" + k] = jnp.stack([layers[i][k] for i in range(L_hc)], axis=0)

        self.params = p

    def __call__(self, x, edge_index, edge_attr):
        N = x.shape[0]
        E = edge_attr.shape[0]
        # Lane-dense, 128-aligned row axes (zero-padded; padded edges point at
        # an out-of-range node id so their one-hot columns are all-zero).
        Np = _round_up(max(N, 1), 128)
        Ep = _round_up(max(E, 1), 128)
        src = edge_index[0].astype(jnp.int32)
        dst = edge_index[1].astype(jnp.int32)

        xT = jnp.zeros((x.shape[1], Np), F32).at[:, :N].set(x.T.astype(F32))
        eT = jnp.zeros((edge_attr.shape[1], Ep), F32).at[:, :E].set(edge_attr.T.astype(F32))
        src_p = jnp.full((1, Ep), Np, jnp.int32).at[0, :E].set(src)
        dst_p = jnp.full((1, Ep), Np, jnp.int32).at[0, :E].set(dst)

        args = [xT, eT, src_p, dst_p] + [self.params[n] for n in PARAM_ORDER]

        kernel = functools.partial(
            _fused_forward_kernel,
            n_layers=self.L_hc,
            alpha=self.alpha_hc,
            threshold=self.ec_threshold,
        )
        out_shapes = (
            jax.ShapeDtypeStruct((1, Ep), F32),                    # W^T (unmasked)
            jax.ShapeDtypeStruct((self.h_outdim + 2, Np), F32),    # [H ; B ; P]^T
        )
        wT, nodeT = pl.pallas_call(
            kernel,
            out_shape=out_shapes,
            in_specs=[VMEM_SPEC] * len(args),
            out_specs=(VMEM_SPEC, VMEM_SPEC),
            compiler_params=pltpu.CompilerParams(vmem_limit_bytes=self.vmem_limit),
        )(*args)

        w = wT[:, :E].T                      # [E, 1], unmasked edge weights
        node = nodeT[:, :N]                  # strip node padding
        H = node[: self.h_outdim].T          # [N, h_outdim]
        B = node[self.h_outdim: self.h_outdim + 1].T   # [N, 1]
        Pt = node[self.h_outdim + 1:].T                # [N, 1]
        return {
            "W": w,
            "H": H,
            "B": B,
            "P": Pt,
            "ec_hit_mask": jnp.ones((N,), dtype=jnp.bool_),   # mask_orphan_nodes=False
            "ec_edge_mask": w[:, 0] > self.ec_threshold,
        }


if __name__ == "__main__":
    key = jax.random.PRNGKey(0)
    k_model, k_x, k_e, k_ei = jax.random.split(key, 4)

    N, E = 32, 64
    node_indim, edge_indim = 6, 4
    h_outdim = 2

    model = PreTrainedECGraphTCNPallas(
        k_model, node_indim=node_indim, edge_indim=edge_indim)

    x = jax.random.normal(k_x, (N, node_indim), F32)
    edge_attr = jax.random.normal(k_e, (E, edge_indim), F32)
    edge_index = jax.random.randint(k_ei, (2, E), 0, N, dtype=jnp.int32)

    fwd = jax.jit(model.__call__)
    out = fwd(x, edge_index, edge_attr)
    out = jax.block_until_ready(out)

    assert out["W"].shape == (E, 1)
    assert out["H"].shape == (N, h_outdim)
    assert out["B"].shape == (N, 1)
    assert out["P"].shape == (N, 1)
    assert out["ec_hit_mask"].shape == (N,)
    assert out["ec_edge_mask"].shape == (E,)
    assert bool(jnp.all(jnp.isfinite(out["W"])))
    assert bool(jnp.all(jnp.isfinite(out["H"])))
    assert bool(jnp.all(jnp.isfinite(out["B"])))
    assert bool(jnp.all(jnp.isfinite(out["P"])))
    print("KERNEL_OK")
</pallas_src>

<mosaic_0001>
module attributes {stable_mosaic.version = 11 : i64} {
  func.func @_fused_forward_kernel(%arg0: memref<6x128xf32, #tpu.memory_space<vmem>>, %arg1: memref<4x128xf32, #tpu.memory_space<vmem>>, %arg2: memref<1x128xi32, #tpu.memory_space<vmem>>, %arg3: memref<1x128xi32, #tpu.memory_space<vmem>>, %arg4: memref<80x6xf32, #tpu.memory_space<vmem>>, %arg5: memref<40x4xf32, #tpu.memory_space<vmem>>, %arg6: memref<40x1xf32, #tpu.memory_space<vmem>>, %arg7: memref<40x40xf32, #tpu.memory_space<vmem>>, %arg8: memref<40x1xf32, #tpu.memory_space<vmem>>, %arg9: memref<1x40xf32, #tpu.memory_space<vmem>>, %arg10: memref<1x1xf32, #tpu.memory_space<vmem>>, %arg11: memref<40x6xf32, #tpu.memory_space<vmem>>, %arg12: memref<5x40xf32, #tpu.memory_space<vmem>>, %arg13: memref<40x4xf32, #tpu.memory_space<vmem>>, %arg14: memref<4x40xf32, #tpu.memory_space<vmem>>, %arg15: memref<40x5xf32, #tpu.memory_space<vmem>>, %arg16: memref<40x1xf32, #tpu.memory_space<vmem>>, %arg17: memref<40x40xf32, #tpu.memory_space<vmem>>, %arg18: memref<40x1xf32, #tpu.memory_space<vmem>>, %arg19: memref<1x40xf32, #tpu.memory_space<vmem>>, %arg20: memref<1x1xf32, #tpu.memory_space<vmem>>, %arg21: memref<40x5xf32, #tpu.memory_space<vmem>>, %arg22: memref<40x1xf32, #tpu.memory_space<vmem>>, %arg23: memref<40x40xf32, #tpu.memory_space<vmem>>, %arg24: memref<40x1xf32, #tpu.memory_space<vmem>>, %arg25: memref<2x40xf32, #tpu.memory_space<vmem>>, %arg26: memref<2x1xf32, #tpu.memory_space<vmem>>, %arg27: memref<3x80x5xf32, #tpu.memory_space<vmem>>, %arg28: memref<3x40x4xf32, #tpu.memory_space<vmem>>, %arg29: memref<3x40x1xf32, #tpu.memory_space<vmem>>, %arg30: memref<3x40x40xf32, #tpu.memory_space<vmem>>, %arg31: memref<3x40x1xf32, #tpu.memory_space<vmem>>, %arg32: memref<3x4x40xf32, #tpu.memory_space<vmem>>, %arg33: memref<3x4x1xf32, #tpu.memory_space<vmem>>, %arg34: memref<3x40x5xf32, #tpu.memory_space<vmem>>, %arg35: memref<3x40x4xf32, #tpu.memory_space<vmem>>, %arg36: memref<3x40x1xf32, #tpu.memory_space<vmem>>, %arg37: memref<3x40x40xf32, #tpu.memory_space<vmem>>, %arg38: memref<3x40x1xf32, #tpu.memory_space<vmem>>, %arg39: memref<3x5x40xf32, #tpu.memory_space<vmem>>, %arg40: memref<3x5x1xf32, #tpu.memory_space<vmem>>, %arg41: memref<80x5xf32, #tpu.memory_space<vmem>>, %arg42: memref<4x40x4xf32, #tpu.memory_space<vmem>>, %arg43: memref<40x1xf32, #tpu.memory_space<vmem>>, %arg44: memref<40x40xf32, #tpu.memory_space<vmem>>, %arg45: memref<40x1xf32, #tpu.memory_space<vmem>>, %arg46: memref<1x40xf32, #tpu.memory_space<vmem>>, %arg47: memref<1x1xf32, #tpu.memory_space<vmem>>, %arg48: memref<40x5xf32, #tpu.memory_space<vmem>>, %arg49: memref<40x1xf32, #tpu.memory_space<vmem>>, %arg50: memref<40x1xf32, #tpu.memory_space<vmem>>, %arg51: memref<40x40xf32, #tpu.memory_space<vmem>>, %arg52: memref<40x1xf32, #tpu.memory_space<vmem>>, %arg53: memref<1x40xf32, #tpu.memory_space<vmem>>, %arg54: memref<1x1xf32, #tpu.memory_space<vmem>>, %arg55: memref<1x128xf32, #tpu.memory_space<vmem>>, %arg56: memref<4x128xf32, #tpu.memory_space<vmem>>) attributes {dimension_semantics = [], scalar_prefetch = 0 : i64, scratch_operands = 0 : i64, tpu.core_type = #tpu.core_type<tc>} {
    %c0 = arith.constant 0 : index
    %c0_0 = arith.constant 0 : index
    %0 = vector.load %arg0[%c0, %c0_0] : memref<6x128xf32, #tpu.memory_space<vmem>>, vector<6x128xf32>
    %c0_1 = arith.constant 0 : index
    %c0_2 = arith.constant 0 : index
    %1 = vector.load %arg1[%c0_1, %c0_2] : memref<4x128xf32, #tpu.memory_space<vmem>>, vector<4x128xf32>
    %c0_3 = arith.constant 0 : index
    %c0_4 = arith.constant 0 : index
    %2 = vector.load %arg2[%c0_3, %c0_4] : memref<1x128xi32, #tpu.memory_space<vmem>>, vector<1x128xi32>
    %c0_5 = arith.constant 0 : index
    %c0_6 = arith.constant 0 : index
    %3 = vector.load %arg3[%c0_5, %c0_6] : memref<1x128xi32, #tpu.memory_space<vmem>>, vector<1x128xi32>
    %4 = tpu.iota {dimensions = array<i32: 0>} : vector<128x128xi32>
    %5 = vector.broadcast %2 : vector<1x128xi32> to vector<128x128xi32>
    %6 = arith.cmpi eq, %4, %5 : vector<128x128xi32>
    %7 = arith.extui %6 : vector<128x128xi1> to vector<128x128xi32>
    %8 = arith.sitofp %7 : vector<128x128xi32> to vector<128x128xf32>
    %9 = arith.truncf %8 : vector<128x128xf32> to vector<128x128xbf16>
    %10 = vector.broadcast %3 : vector<1x128xi32> to vector<128x128xi32>
    %11 = arith.cmpi eq, %4, %10 : vector<128x128xi32>
    %12 = arith.extui %11 : vector<128x128xi1> to vector<128x128xi32>
    %13 = arith.sitofp %12 : vector<128x128xi32> to vector<128x128xf32>
    %14 = arith.truncf %13 : vector<128x128xf32> to vector<128x128xbf16>
    %15 = tpu.transpose %13, [1, 0] : vector<128x128xf32> -> vector<128x128xf32>
    %16 = arith.truncf %15 : vector<128x128xf32> to vector<128x128xbf16>
    %c0_7 = arith.constant 0 : index
    %c0_8 = arith.constant 0 : index
    %17 = vector.load %arg4[%c0_7, %c0_8] : memref<80x6xf32, #tpu.memory_space<vmem>>, vector<80x6xf32>
    %cst = arith.constant dense<0.000000e+00> : vector<80x128xf32>
    %18 = tpu.matmul %17, %0, %cst {dimension_numbers = #tpu.dot_dimension_numbers<[1], [0], [0], [1], [0, 0, 1, 1], [], []>} : vector<80x6xf32>, vector<6x128xf32>, vector<80x128xf32> -> vector<80x128xf32>
    %19 = vector.extract_strided_slice %18 {offsets = [0, 0], sizes = [40, 128], strides = [1, 1]} : vector<80x128xf32> to vector<40x128xf32>
    %20 = arith.truncf %19 : vector<40x128xf32> to vector<40x128xbf16>
    %cst_9 = arith.constant dense<0.000000e+00> : vector<40x128xf32>
    %21 = tpu.matmul %20, %9, %cst_9 {dimension_numbers = #tpu.dot_dimension_numbers<[1], [0], [0], [1], [0, 0, 1, 1], [], []>} : vector<40x128xbf16>, vector<128x128xbf16>, vector<40x128xf32> -> vector<40x128xf32>
    %22 = vector.extract_strided_slice %18 {offsets = [40, 0], sizes = [40, 128], strides = [1, 1]} : vector<80x128xf32> to vector<40x128xf32>
    %23 = arith.truncf %22 : vector<40x128xf32> to vector<40x128xbf16>
    %cst_10 = arith.constant dense<0.000000e+00> : vector<40x128xf32>
    %24 = tpu.matmul %23, %14, %cst_10 {dimension_numbers = #tpu.dot_dimension_numbers<[1], [0], [0], [1], [0, 0, 1, 1], [], []>} : vector<40x128xbf16>, vector<128x128xbf16>, vector<40x128xf32> -> vector<40x128xf32>
    %25 = arith.addf %21, %24 : vector<40x128xf32>
    %c0_11 = arith.constant 0 : index
    %c0_12 = arith.constant 0 : index
    %26 = vector.load %arg5[%c0_11, %c0_12] : memref<40x4xf32, #tpu.memory_space<vmem>>, vector<40x4xf32>
    %cst_13 = arith.constant dense<0.000000e+00> : vector<40x128xf32>
    %27 = tpu.matmul %26, %1, %cst_13 {dimension_numbers = #tpu.dot_dimension_numbers<[1], [0], [0], [1], [0, 0, 1, 1], [], []>} : vector<40x4xf32>, vector<4x128xf32>, vector<40x128xf32> -> vector<40x128xf32>
    %28 = arith.addf %25, %27 : vector<40x128xf32>
    %c0_14 = arith.constant 0 : index
    %c0_15 = arith.constant 0 : index
    %29 = vector.load %arg6[%c0_14, %c0_15] : memref<40x1xf32, #tpu.memory_space<vmem>>, vector<40x1xf32>
    %30 = vector.broadcast %29 : vector<40x1xf32> to vector<40x128xf32>
    %31 = arith.addf %28, %30 : vector<40x128xf32>
    %cst_16 = arith.constant 0.000000e+00 : f32
    %32 = vector.broadcast %cst_16 : f32 to vector<40x128xf32>
    %33 = arith.maximumf %31, %32 : vector<40x128xf32>
    %c0_17 = arith.constant 0 : index
    %c0_18 = arith.constant 0 : index
    %34 = vector.load %arg7[%c0_17, %c0_18] : memref<40x40xf32, #tpu.memory_space<vmem>>, vector<40x40xf32>
    %cst_19 = arith.constant dense<0.000000e+00> : vector<40x128xf32>
    %35 = tpu.matmul %34, %33, %cst_19 {dimension_numbers = #tpu.dot_dimension_numbers<[1], [0], [0], [1], [0, 0, 1, 1], [], []>} : vector<40x40xf32>, vector<40x128xf32>, vector<40x128xf32> -> vector<40x128xf32>
    %c0_20 = arith.constant 0 : index
    %c0_21 = arith.constant 0 : index
    %36 = vector.load %arg8[%c0_20, %c0_21] : memref<40x1xf32, #tpu.memory_space<vmem>>, vector<40x1xf32>
    %37 = vector.broadcast %36 : vector<40x1xf32> to vector<40x128xf32>
    %38 = arith.addf %35, %37 : vector<40x128xf32>
    %cst_22 = arith.constant 0.000000e+00 : f32
    %39 = vector.broadcast %cst_22 : f32 to vector<40x128xf32>
    %40 = arith.maximumf %38, %39 : vector<40x128xf32>
    %c0_23 = arith.constant 0 : index
    %c0_24 = arith.constant 0 : index
    %41 = vector.load %arg9[%c0_23, %c0_24] : memref<1x40xf32, #tpu.memory_space<vmem>>, vector<1x40xf32>
    %cst_25 = arith.constant dense<0.000000e+00> : vector<1x128xf32>
    %42 = tpu.matmul %41, %40, %cst_25 {dimension_numbers = #tpu.dot_dimension_numbers<[1], [0], [0], [1], [0, 0, 1, 1], [], []>} : vector<1x40xf32>, vector<40x128xf32>, vector<1x128xf32> -> vector<1x128xf32>
    %c0_26 = arith.constant 0 : index
    %c0_27 = arith.constant 0 : index
    %43 = vector.load %arg10[%c0_26, %c0_27] : memref<1x1xf32, #tpu.memory_space<vmem>>, vector<1x1xf32>
    %44 = vector.broadcast %43 : vector<1x1xf32> to vector<1x128xf32>
    %45 = arith.addf %42, %44 : vector<1x128xf32>
    %46 = arith.negf %45 : vector<1x128xf32>
    %47 = math.exp %46 : vector<1x128xf32>
    %cst_28 = arith.constant 1.000000e+00 : f32
    %48 = vector.broadcast %cst_28 : f32 to vector<1x128xf32>
    %49 = arith.addf %48, %47 : vector<1x128xf32>
    %50 = arith.divf %48, %49 : vector<1x128xf32>
    %c0_29 = arith.constant 0 : index
    %c0_30 = arith.constant 0 : index
    %51 = vector.load %arg55[%c0_29, %c0_30] : memref<1x128xf32, #tpu.memory_space<vmem>>, vector<1x128xf32>
    tpu.vector_store %arg55[%c0_29, %c0_30], %50 {strides = array<i32>} : memref<1x128xf32, #tpu.memory_space<vmem>>, vector<1x128xf32>,
    %cst_31 = arith.constant 5.000000e-01 : f32
    %52 = vector.broadcast %cst_31 : f32 to vector<1x128xf32>
    %53 = arith.cmpf ogt, %50, %52 : vector<1x128xf32>
    %54 = arith.extui %53 : vector<1x128xi1> to vector<1x128xi32>
    %55 = arith.sitofp %54 : vector<1x128xi32> to vector<1x128xf32>
    %c0_32 = arith.constant 0 : index
    %c0_33 = arith.constant 0 : index
    %56 = vector.load %arg12[%c0_32, %c0_33] : memref<5x40xf32, #tpu.memory_space<vmem>>, vector<5x40xf32>
    %c0_34 = arith.constant 0 : index
    %c0_35 = arith.constant 0 : index
    %57 = vector.load %arg11[%c0_34, %c0_35] : memref<40x6xf32, #tpu.memory_space<vmem>>, vector<40x6xf32>
    %cst_36 = arith.constant dense<0.000000e+00> : vector<40x128xf32>
    %58 = tpu.matmul %57, %0, %cst_36 {dimension_numbers = #tpu.dot_dimension_numbers<[1], [0], [0], [1], [0, 0, 1, 1], [], []>} : vector<40x6xf32>, vector<6x128xf32>, vector<40x128xf32> -> vector<40x128xf32>
    %cst_37 = arith.constant 0.000000e+00 : f32
    %59 = vector.broadcast %cst_37 : f32 to vector<40x128xf32>
    %60 = arith.maximumf %58, %59 : vector<40x128xf32>
    %cst_38 = arith.constant dense<0.000000e+00> : vector<5x128xf32>
    %61 = tpu.matmul %56, %60, %cst_38 {dimension_numbers = #tpu.dot_dimension_numbers<[1], [0], [0], [1], [0, 0, 1, 1], [], []>} : vector<5x40xf32>, vector<40x128xf32>, vector<5x128xf32> -> vector<5x128xf32>
    %cst_39 = arith.constant 0.000000e+00 : f32
    %62 = vector.broadcast %cst_39 : f32 to vector<5x128xf32>
    %63 = arith.maximumf %61, %62 : vector<5x128xf32>
    %c0_40 = arith.constant 0 : index
    %c0_41 = arith.constant 0 : index
    %64 = vector.load %arg14[%c0_40, %c0_41] : memref<4x40xf32, #tpu.memory_space<vmem>>, vector<4x40xf32>
    %c0_42 = arith.constant 0 : index
    %c0_43 = arith.constant 0 : index
    %65 = vector.load %arg13[%c0_42, %c0_43] : memref<40x4xf32, #tpu.memory_space<vmem>>, vector<40x4xf32>
    %cst_44 = arith.constant dense<0.000000e+00> : vector<40x128xf32>
    %66 = tpu.matmul %65, %1, %cst_44 {dimension_numbers = #tpu.dot_dimension_numbers<[1], [0], [0], [1], [0, 0, 1, 1], [], []>} : vector<40x4xf32>, vector<4x128xf32>, vector<40x128xf32> -> vector<40x128xf32>
    %cst_45 = arith.constant 0.000000e+00 : f32
    %67 = vector.broadcast %cst_45 : f32 to vector<40x128xf32>
    %68 = arith.maximumf %66, %67 : vector<40x128xf32>
    %cst_46 = arith.constant dense<0.000000e+00> : vector<4x128xf32>
    %69 = tpu.matmul %64, %68, %cst_46 {dimension_numbers = #tpu.dot_dimension_numbers<[1], [0], [0], [1], [0, 0, 1, 1], [], []>} : vector<4x40xf32>, vector<40x128xf32>, vector<4x128xf32> -> vector<4x128xf32>
    %cst_47 = arith.constant 0.000000e+00 : f32
    %70 = vector.broadcast %cst_47 : f32 to vector<4x128xf32>
    %71 = arith.maximumf %69, %70 : vector<4x128xf32>
    %c0_48 = arith.constant 0 : index
    %c0_49 = arith.constant 0 : index
    %c0_50 = arith.constant 0 : index
    %72 = vector.load %arg42[%c0_48, %c0_49, %c0_50] : memref<4x40x4xf32, #tpu.memory_space<vmem>>, vector<1x40x4xf32>
    %73 = vector.shape_cast %72 : vector<1x40x4xf32> to vector<40x4xf32>
    %cst_51 = arith.constant dense<0.000000e+00> : vector<40x128xf32>
    %74 = tpu.matmul %73, %71, %cst_51 {dimension_numbers = #tpu.dot_dimension_numbers<[1], [0], [0], [1], [0, 0, 1, 1], [], []>} : vector<40x4xf32>, vector<4x128xf32>, vector<40x128xf32> -> vector<40x128xf32>
    %c0_52 = arith.constant 0 : index
    %c0_53 = arith.constant 0 : index
    %c0_54 = arith.constant 0 : index
    %75 = vector.load %arg27[%c0_52, %c0_53, %c0_54] : memref<3x80x5xf32, #tpu.memory_space<vmem>>, vector<1x80x5xf32>
    %76 = vector.shape_cast %75 : vector<1x80x5xf32> to vector<80x5xf32>
    %cst_55 = arith.constant dense<0.000000e+00> : vector<80x128xf32>
    %77 = tpu.matmul %76, %63, %cst_55 {dimension_numbers = #tpu.dot_dimension_numbers<[1], [0], [0], [1], [0, 0, 1, 1], [], []>} : vector<80x5xf32>, vector<5x128xf32>, vector<80x128xf32> -> vector<80x128xf32>
    %78 = vector.extract_strided_slice %77 {offsets = [0, 0], sizes = [40, 128], strides = [1, 1]} : vector<80x128xf32> to vector<40x128xf32>
    %79 = arith.truncf %78 : vector<40x128xf32> to vector<40x128xbf16>
    %cst_56 = arith.constant dense<0.000000e+00> : vector<40x128xf32>
    %80 = tpu.matmul %79, %14, %cst_56 {dimension_numbers = #tpu.dot_dimension_numbers<[1], [0], [0], [1], [0, 0, 1, 1], [], []>} : vector<40x128xbf16>, vector<128x128xbf16>, vector<40x128xf32> -> vector<40x128xf32>
    %81 = vector.extract_strided_slice %77 {offsets = [40, 0], sizes = [40, 128], strides = [1, 1]} : vector<80x128xf32> to vector<40x128xf32>
    %82 = arith.truncf %81 : vector<40x128xf32> to vector<40x128xbf16>
    %cst_57 = arith.constant dense<0.000000e+00> : vector<40x128xf32>
    %83 = tpu.matmul %82, %9, %cst_57 {dimension_numbers = #tpu.dot_dimension_numbers<[1], [0], [0], [1], [0, 0, 1, 1], [], []>} : vector<40x128xbf16>, vector<128x128xbf16>, vector<40x128xf32> -> vector<40x128xf32>
    %84 = arith.addf %80, %83 : vector<40x128xf32>
    %c0_58 = arith.constant 0 : index
    %c0_59 = arith.constant 0 : index
    %c0_60 = arith.constant 0 : index
    %85 = vector.load %arg28[%c0_58, %c0_59, %c0_60] : memref<3x40x4xf32, #tpu.memory_space<vmem>>, vector<1x40x4xf32>
    %86 = vector.shape_cast %85 : vector<1x40x4xf32> to vector<40x4xf32>
    %cst_61 = arith.constant dense<0.000000e+00> : vector<40x128xf32>
    %87 = tpu.matmul %86, %71, %cst_61 {dimension_numbers = #tpu.dot_dimension_numbers<[1], [0], [0], [1], [0, 0, 1, 1], [], []>} : vector<40x4xf32>, vector<4x128xf32>, vector<40x128xf32> -> vector<40x128xf32>
    %88 = arith.addf %84, %87 : vector<40x128xf32>
    %c0_62 = arith.constant 0 : index
    %c0_63 = arith.constant 0 : index
    %c0_64 = arith.constant 0 : index
    %89 = vector.load %arg29[%c0_62, %c0_63, %c0_64] : memref<3x40x1xf32, #tpu.memory_space<vmem>>, vector<1x40x1xf32>
    %90 = vector.shape_cast %89 : vector<1x40x1xf32> to vector<40x1xf32>
    %91 = vector.broadcast %90 : vector<40x1xf32> to vector<40x128xf32>
    %92 = arith.addf %88, %91 : vector<40x128xf32>
    %cst_65 = arith.constant 0.000000e+00 : f32
    %93 = vector.broadcast %cst_65 : f32 to vector<40x128xf32>
    %94 = arith.maximumf %92, %93 : vector<40x128xf32>
    %c0_66 = arith.constant 0 : index
    %c0_67 = arith.constant 0 : index
    %c0_68 = arith.constant 0 : index
    %95 = vector.load %arg30[%c0_66, %c0_67, %c0_68] : memref<3x40x40xf32, #tpu.memory_space<vmem>>, vector<1x40x40xf32>
    %96 = vector.shape_cast %95 : vector<1x40x40xf32> to vector<40x40xf32>
    %cst_69 = arith.constant dense<0.000000e+00> : vector<40x128xf32>
    %97 = tpu.matmul %96, %94, %cst_69 {dimension_numbers = #tpu.dot_dimension_numbers<[1], [0], [0], [1], [0, 0, 1, 1], [], []>} : vector<40x40xf32>, vector<40x128xf32>, vector<40x128xf32> -> vector<40x128xf32>
    %c0_70 = arith.constant 0 : index
    %c0_71 = arith.constant 0 : index
    %c0_72 = arith.constant 0 : index
    %98 = vector.load %arg31[%c0_70, %c0_71, %c0_72] : memref<3x40x1xf32, #tpu.memory_space<vmem>>, vector<1x40x1xf32>
    %99 = vector.shape_cast %98 : vector<1x40x1xf32> to vector<40x1xf32>
    %100 = vector.broadcast %99 : vector<40x1xf32> to vector<40x128xf32>
    %101 = arith.addf %97, %100 : vector<40x128xf32>
    %cst_73 = arith.constant 0.000000e+00 : f32
    %102 = vector.broadcast %cst_73 : f32 to vector<40x128xf32>
    %103 = arith.maximumf %101, %102 : vector<40x128xf32>
    %c0_74 = arith.constant 0 : index
    %c0_75 = arith.constant 0 : index
    %c0_76 = arith.constant 0 : index
    %104 = vector.load %arg32[%c0_74, %c0_75, %c0_76] : memref<3x4x40xf32, #tpu.memory_space<vmem>>, vector<1x4x40xf32>
    %105 = vector.shape_cast %104 : vector<1x4x40xf32> to vector<4x40xf32>
    %cst_77 = arith.constant dense<0.000000e+00> : vector<4x128xf32>
    %106 = tpu.matmul %105, %103, %cst_77 {dimension_numbers = #tpu.dot_dimension_numbers<[1], [0], [0], [1], [0, 0, 1, 1], [], []>} : vector<4x40xf32>, vector<40x128xf32>, vector<4x128xf32> -> vector<4x128xf32>
    %c0_78 = arith.constant 0 : index
    %c0_79 = arith.constant 0 : index
    %c0_80 = arith.constant 0 : index
    %107 = vector.load %arg33[%c0_78, %c0_79, %c0_80] : memref<3x4x1xf32, #tpu.memory_space<vmem>>, vector<1x4x1xf32>
    %108 = vector.shape_cast %107 : vector<1x4x1xf32> to vector<4x1xf32>
    %109 = vector.broadcast %108 : vector<4x1xf32> to vector<4x128xf32>
    %110 = arith.addf %106, %109 : vector<4x128xf32>
    %c1 = arith.constant 1 : index
    %c0_81 = arith.constant 0 : index
    %c0_82 = arith.constant 0 : index
    %111 = vector.load %arg42[%c1, %c0_81, %c0_82] : memref<4x40x4xf32, #tpu.memory_space<vmem>>, vector<1x40x4xf32>
    %112 = vector.shape_cast %111 : vector<1x40x4xf32> to vector<40x4xf32>
    %cst_83 = arith.constant dense<0.000000e+00> : vector<40x128xf32>
    %113 = tpu.matmul %112, %110, %cst_83 {dimension_numbers = #tpu.dot_dimension_numbers<[1], [0], [0], [1], [0, 0, 1, 1], [], []>} : vector<40x4xf32>, vector<4x128xf32>, vector<40x128xf32> -> vector<40x128xf32>
    %114 = arith.addf %74, %113 : vector<40x128xf32>
    %c0_84 = arith.constant 0 : index
    %c0_85 = arith.constant 0 : index
    %c0_86 = arith.constant 0 : index
    %115 = vector.load %arg35[%c0_84, %c0_85, %c0_86] : memref<3x40x4xf32, #tpu.memory_space<vmem>>, vector<1x40x4xf32>
    %116 = vector.shape_cast %115 : vector<1x40x4xf32> to vector<40x4xf32>
    %117 = vector.broadcast %55 : vector<1x128xf32> to vector<4x128xf32>
    %118 = arith.mulf %110, %117 : vector<4x128xf32>
    %cst_87 = arith.constant dense<0.000000e+00> : vector<40x128xf32>
    %119 = tpu.matmul %116, %118, %cst_87 {dimension_numbers = #tpu.dot_dimension_numbers<[1], [0], [0], [1], [0, 0, 1, 1], [], []>} : vector<40x4xf32>, vector<4x128xf32>, vector<40x128xf32> -> vector<40x128xf32>
    %120 = arith.truncf %119 : vector<40x128xf32> to vector<40x128xbf16>
    %cst_88 = arith.constant dense<0.000000e+00> : vector<40x128xf32>
    %121 = tpu.matmul %120, %16, %cst_88 {dimension_numbers = #tpu.dot_dimension_numbers<[1], [0], [0], [1], [0, 0, 1, 1], [], []>} : vector<40x128xbf16>, vector<128x128xbf16>, vector<40x128xf32> -> vector<40x128xf32>
    %c0_89 = arith.constant 0 : index
    %c0_90 = arith.constant 0 : index
    %c0_91 = arith.constant 0 : index
    %122 = vector.load %arg34[%c0_89, %c0_90, %c0_91] : memref<3x40x5xf32, #tpu.memory_space<vmem>>, vector<1x40x5xf32>
    %123 = vector.shape_cast %122 : vector<1x40x5xf32> to vector<40x5xf32>
    %cst_92 = arith.constant dense<0.000000e+00> : vector<40x128xf32>
    %124 = tpu.matmul %123, %63, %cst_92 {dimension_numbers = #tpu.dot_dimension_numbers<[1], [0], [0], [1], [0, 0, 1, 1], [], []>} : vector<40x5xf32>, vector<5x128xf32>, vector<40x128xf32> -> vector<40x128xf32>
    %125 = arith.addf %124, %121 : vector<40x128xf32>
    %c0_93 = arith.constant 0 : index
    %c0_94 = arith.constant 0 : index
    %c0_95 = arith.constant 0 : index
    %126 = vector.load %arg36[%c0_93, %c0_94, %c0_95] : memref<3x40x1xf32, #tpu.memory_space<vmem>>, vector<1x40x1xf32>
    %127 = vector.shape_cast %126 : vector<1x40x1xf32> to vector<40x1xf32>
    %128 = vector.broadcast %127 : vector<40x1xf32> to vector<40x128xf32>
    %129 = arith.addf %125, %128 : vector<40x128xf32>
    %cst_96 = arith.constant 0.000000e+00 : f32
    %130 = vector.broadcast %cst_96 : f32 to vector<40x128xf32>
    %131 = arith.maximumf %129, %130 : vector<40x128xf32>
    %c0_97 = arith.constant 0 : index
    %c0_98 = arith.constant 0 : index
    %c0_99 = arith.constant 0 : index
    %132 = vector.load %arg37[%c0_97, %c0_98, %c0_99] : memref<3x40x40xf32, #tpu.memory_space<vmem>>, vector<1x40x40xf32>
    %133 = vector.shape_cast %132 : vector<1x40x40xf32> to vector<40x40xf32>
    %cst_100 = arith.constant dense<0.000000e+00> : vector<40x128xf32>
    %134 = tpu.matmul %133, %131, %cst_100 {dimension_numbers = #tpu.dot_dimension_numbers<[1], [0], [0], [1], [0, 0, 1, 1], [], []>} : vector<40x40xf32>, vector<40x128xf32>, vector<40x128xf32> -> vector<40x128xf32>
    %c0_101 = arith.constant 0 : index
    %c0_102 = arith.constant 0 : index
    %c0_103 = arith.constant 0 : index
    %135 = vector.load %arg38[%c0_101, %c0_102, %c0_103] : memref<3x40x1xf32, #tpu.memory_space<vmem>>, vector<1x40x1xf32>
    %136 = vector.shape_cast %135 : vector<1x40x1xf32> to vector<40x1xf32>
    %137 = vector.broadcast %136 : vector<40x1xf32> to vector<40x128xf32>
    %138 = arith.addf %134, %137 : vector<40x128xf32>
    %cst_104 = arith.constant 0.000000e+00 : f32
    %139 = vector.broadcast %cst_104 : f32 to vector<40x128xf32>
    %140 = arith.maximumf %138, %139 : vector<40x128xf32>
    %c0_105 = arith.constant 0 : index
    %c0_106 = arith.constant 0 : index
    %c0_107 = arith.constant 0 : index
    %141 = vector.load %arg39[%c0_105, %c0_106, %c0_107] : memref<3x5x40xf32, #tpu.memory_space<vmem>>, vector<1x5x40xf32>
    %142 = vector.shape_cast %141 : vector<1x5x40xf32> to vector<5x40xf32>
    %cst_108 = arith.constant dense<0.000000e+00> : vector<5x128xf32>
    %143 = tpu.matmul %142, %140, %cst_108 {dimension_numbers = #tpu.dot_dimension_numbers<[1], [0], [0], [1], [0, 0, 1, 1], [], []>} : vector<5x40xf32>, vector<40x128xf32>, vector<5x128xf32> -> vector<5x128xf32>
    %c0_109 = arith.constant 0 : index
    %c0_110 = arith.constant 0 : index
    %c0_111 = arith.constant 0 : index
    %144 = vector.load %arg40[%c0_109, %c0_110, %c0_111] : memref<3x5x1xf32, #tpu.memory_space<vmem>>, vector<1x5x1xf32>
    %145 = vector.shape_cast %144 : vector<1x5x1xf32> to vector<5x1xf32>
    %146 = vector.broadcast %145 : vector<5x1xf32> to vector<5x128xf32>
    %147 = arith.addf %143, %146 : vector<5x128xf32>
    %cst_112 = arith.constant 5.000000e-01 : f32
    %148 = vector.broadcast %cst_112 : f32 to vector<5x128xf32>
    %149 = arith.mulf %148, %63 : vector<5x128xf32>
    %cst_113 = arith.constant 0.000000e+00 : f32
    %150 = vector.broadcast %cst_113 : f32 to vector<5x128xf32>
    %151 = arith.maximumf %147, %150 : vector<5x128xf32>
    %cst_114 = arith.constant 5.000000e-01 : f32
    %152 = vector.broadcast %cst_114 : f32 to vector<5x128xf32>
    %153 = arith.mulf %152, %151 : vector<5x128xf32>
    %154 = arith.addf %149, %153 : vector<5x128xf32>
    %c1_115 = arith.constant 1 : index
    %c0_116 = arith.constant 0 : index
    %c0_117 = arith.constant 0 : index
    %155 = vector.load %arg27[%c1_115, %c0_116, %c0_117] : memref<3x80x5xf32, #tpu.memory_space<vmem>>, vector<1x80x5xf32>
    %156 = vector.shape_cast %155 : vector<1x80x5xf32> to vector<80x5xf32>
    %cst_118 = arith.constant dense<0.000000e+00> : vector<80x128xf32>
    %157 = tpu.matmul %156, %154, %cst_118 {dimension_numbers = #tpu.dot_dimension_numbers<[1], [0], [0], [1], [0, 0, 1, 1], [], []>} : vector<80x5xf32>, vector<5x128xf32>, vector<80x128xf32> -> vector<80x128xf32>
    %158 = vector.extract_strided_slice %157 {offsets = [0, 0], sizes = [40, 128], strides = [1, 1]} : vector<80x128xf32> to vector<40x128xf32>
    %159 = arith.truncf %158 : vector<40x128xf32> to vector<40x128xbf16>
    %cst_119 = arith.constant dense<0.000000e+00> : vector<40x128xf32>
    %160 = tpu.matmul %159, %14, %cst_119 {dimension_numbers = #tpu.dot_dimension_numbers<[1], [0], [0], [1], [0, 0, 1, 1], [], []>} : vector<40x128xbf16>, vector<128x128xbf16>, vector<40x128xf32> -> vector<40x128xf32>
    %161 = vector.extract_strided_slice %157 {offsets = [40, 0], sizes = [40, 128], strides = [1, 1]} : vector<80x128xf32> to vector<40x128xf32>
    %162 = arith.truncf %161 : vector<40x128xf32> to vector<40x128xbf16>
    %cst_120 = arith.constant dense<0.000000e+00> : vector<40x128xf32>
    %163 = tpu.matmul %162, %9, %cst_120 {dimension_numbers = #tpu.dot_dimension_numbers<[1], [0], [0], [1], [0, 0, 1, 1], [], []>} : vector<40x128xbf16>, vector<128x128xbf16>, vector<40x128xf32> -> vector<40x128xf32>
    %164 = arith.addf %160, %163 : vector<40x128xf32>
    %c1_121 = arith.constant 1 : index
    %c0_122 = arith.constant 0 : index
    %c0_123 = arith.constant 0 : index
    %165 = vector.load %arg28[%c1_121, %c0_122, %c0_123] : memref<3x40x4xf32, #tpu.memory_space<vmem>>, vector<1x40x4xf32>
    %166 = vector.shape_cast %165 : vector<1x40x4xf32> to vector<40x4xf32>
    %cst_124 = arith.constant dense<0.000000e+00> : vector<40x128xf32>
    %167 = tpu.matmul %166, %110, %cst_124 {dimension_numbers = #tpu.dot_dimension_numbers<[1], [0], [0], [1], [0, 0, 1, 1], [], []>} : vector<40x4xf32>, vector<4x128xf32>, vector<40x128xf32> -> vector<40x128xf32>
    %168 = arith.addf %164, %167 : vector<40x128xf32>
    %c1_125 = arith.constant 1 : index
    %c0_126 = arith.constant 0 : index
    %c0_127 = arith.constant 0 : index
    %169 = vector.load %arg29[%c1_125, %c0_126, %c0_127] : memref<3x40x1xf32, #tpu.memory_space<vmem>>, vector<1x40x1xf32>
    %170 = vector.shape_cast %169 : vector<1x40x1xf32> to vector<40x1xf32>
    %171 = vector.broadcast %170 : vector<40x1xf32> to vector<40x128xf32>
    %172 = arith.addf %168, %171 : vector<40x128xf32>
    %cst_128 = arith.constant 0.000000e+00 : f32
    %173 = vector.broadcast %cst_128 : f32 to vector<40x128xf32>
    %174 = arith.maximumf %172, %173 : vector<40x128xf32>
    %c1_129 = arith.constant 1 : index
    %c0_130 = arith.constant 0 : index
    %c0_131 = arith.constant 0 : index
    %175 = vector.load %arg30[%c1_129, %c0_130, %c0_131] : memref<3x40x40xf32, #tpu.memory_space<vmem>>, vector<1x40x40xf32>
    %176 = vector.shape_cast %175 : vector<1x40x40xf32> to vector<40x40xf32>
    %cst_132 = arith.constant dense<0.000000e+00> : vector<40x128xf32>
    %177 = tpu.matmul %176, %174, %cst_132 {dimension_numbers = #tpu.dot_dimension_numbers<[1], [0], [0], [1], [0, 0, 1, 1], [], []>} : vector<40x40xf32>, vector<40x128xf32>, vector<40x128xf32> -> vector<40x128xf32>
    %c1_133 = arith.constant 1 : index
    %c0_134 = arith.constant 0 : index
    %c0_135 = arith.constant 0 : index
    %178 = vector.load %arg31[%c1_133, %c0_134, %c0_135] : memref<3x40x1xf32, #tpu.memory_space<vmem>>, vector<1x40x1xf32>
    %179 = vector.shape_cast %178 : vector<1x40x1xf32> to vector<40x1xf32>
    %180 = vector.broadcast %179 : vector<40x1xf32> to vector<40x128xf32>
    %181 = arith.addf %177, %180 : vector<40x128xf32>
    %cst_136 = arith.constant 0.000000e+00 : f32
    %182 = vector.broadcast %cst_136 : f32 to vector<40x128xf32>
    %183 = arith.maximumf %181, %182 : vector<40x128xf32>
    %c1_137 = arith.constant 1 : index
    %c0_138 = arith.constant 0 : index
    %c0_139 = arith.constant 0 : index
    %184 = vector.load %arg32[%c1_137, %c0_138, %c0_139] : memref<3x4x40xf32, #tpu.memory_space<vmem>>, vector<1x4x40xf32>
    %185 = vector.shape_cast %184 : vector<1x4x40xf32> to vector<4x40xf32>
    %cst_140 = arith.constant dense<0.000000e+00> : vector<4x128xf32>
    %186 = tpu.matmul %185, %183, %cst_140 {dimension_numbers = #tpu.dot_dimension_numbers<[1], [0], [0], [1], [0, 0, 1, 1], [], []>} : vector<4x40xf32>, vector<40x128xf32>, vector<4x128xf32> -> vector<4x128xf32>
    %c1_141 = arith.constant 1 : index
    %c0_142 = arith.constant 0 : index
    %c0_143 = arith.constant 0 : index
    %187 = vector.load %arg33[%c1_141, %c0_142, %c0_143] : memref<3x4x1xf32, #tpu.memory_space<vmem>>, vector<1x4x1xf32>
    %188 = vector.shape_cast %187 : vector<1x4x1xf32> to vector<4x1xf32>
    %189 = vector.broadcast %188 : vector<4x1xf32> to vector<4x128xf32>
    %190 = arith.addf %186, %189 : vector<4x128xf32>
    %c2 = arith.constant 2 : index
    %c0_144 = arith.constant 0 : index
    %c0_145 = arith.constant 0 : index
    %191 = vector.load %arg42[%c2, %c0_144, %c0_145] : memref<4x40x4xf32, #tpu.memory_space<vmem>>, vector<1x40x4xf32>
    %192 = vector.shape_cast %191 : vector<1x40x4xf32> to vector<40x4xf32>
    %cst_146 = arith.constant dense<0.000000e+00> : vector<40x128xf32>
    %193 = tpu.matmul %192, %190, %cst_146 {dimension_numbers = #tpu.dot_dimension_numbers<[1], [0], [0], [1], [0, 0, 1, 1], [], []>} : vector<40x4xf32>, vector<4x128xf32>, vector<40x128xf32> -> vector<40x128xf32>
    %194 = arith.addf %114, %193 : vector<40x128xf32>
    %c1_147 = arith.constant 1 : index
    %c0_148 = arith.constant 0 : index
    %c0_149 = arith.constant 0 : index
    %195 = vector.load %arg35[%c1_147, %c0_148, %c0_149] : memref<3x40x4xf32, #tpu.memory_space<vmem>>, vector<1x40x4xf32>
    %196 = vector.shape_cast %195 : vector<1x40x4xf32> to vector<40x4xf32>
    %197 = vector.broadcast %55 : vector<1x128xf32> to vector<4x128xf32>
    %198 = arith.mulf %190, %197 : vector<4x128xf32>
    %cst_150 = arith.constant dense<0.000000e+00> : vector<40x128xf32>
    %199 = tpu.matmul %196, %198, %cst_150 {dimension_numbers = #tpu.dot_dimension_numbers<[1], [0], [0], [1], [0, 0, 1, 1], [], []>} : vector<40x4xf32>, vector<4x128xf32>, vector<40x128xf32> -> vector<40x128xf32>
    %200 = arith.truncf %199 : vector<40x128xf32> to vector<40x128xbf16>
    %cst_151 = arith.constant dense<0.000000e+00> : vector<40x128xf32>
    %201 = tpu.matmul %200, %16, %cst_151 {dimension_numbers = #tpu.dot_dimension_numbers<[1], [0], [0], [1], [0, 0, 1, 1], [], []>} : vector<40x128xbf16>, vector<128x128xbf16>, vector<40x128xf32> -> vector<40x128xf32>
    %c1_152 = arith.constant 1 : index
    %c0_153 = arith.constant 0 : index
    %c0_154 = arith.constant 0 : index
    %202 = vector.load %arg34[%c1_152, %c0_153, %c0_154] : memref<3x40x5xf32, #tpu.memory_space<vmem>>, vector<1x40x5xf32>
    %203 = vector.shape_cast %202 : vector<1x40x5xf32> to vector<40x5xf32>
    %cst_155 = arith.constant dense<0.000000e+00> : vector<40x128xf32>
    %204 = tpu.matmul %203, %154, %cst_155 {dimension_numbers = #tpu.dot_dimension_numbers<[1], [0], [0], [1], [0, 0, 1, 1], [], []>} : vector<40x5xf32>, vector<5x128xf32>, vector<40x128xf32> -> vector<40x128xf32>
    %205 = arith.addf %204, %201 : vector<40x128xf32>
    %c1_156 = arith.constant 1 : index
    %c0_157 = arith.constant 0 : index
    %c0_158 = arith.constant 0 : index
    %206 = vector.load %arg36[%c1_156, %c0_157, %c0_158] : memref<3x40x1xf32, #tpu.memory_space<vmem>>, vector<1x40x1xf32>
    %207 = vector.shape_cast %206 : vector<1x40x1xf32> to vector<40x1xf32>
    %208 = vector.broadcast %207 : vector<40x1xf32> to vector<40x128xf32>
    %209 = arith.addf %205, %208 : vector<40x128xf32>
    %cst_159 = arith.constant 0.000000e+00 : f32
    %210 = vector.broadcast %cst_159 : f32 to vector<40x128xf32>
    %211 = arith.maximumf %209, %210 : vector<40x128xf32>
    %c1_160 = arith.constant 1 : index
    %c0_161 = arith.constant 0 : index
    %c0_162 = arith.constant 0 : index
    %212 = vector.load %arg37[%c1_160, %c0_161, %c0_162] : memref<3x40x40xf32, #tpu.memory_space<vmem>>, vector<1x40x40xf32>
    %213 = vector.shape_cast %212 : vector<1x40x40xf32> to vector<40x40xf32>
    %cst_163 = arith.constant dense<0.000000e+00> : vector<40x128xf32>
    %214 = tpu.matmul %213, %211, %cst_163 {dimension_numbers = #tpu.dot_dimension_numbers<[1], [0], [0], [1], [0, 0, 1, 1], [], []>} : vector<40x40xf32>, vector<40x128xf32>, vector<40x128xf32> -> vector<40x128xf32>
    %c1_164 = arith.constant 1 : index
    %c0_165 = arith.constant 0 : index
    %c0_166 = arith.constant 0 : index
    %215 = vector.load %arg38[%c1_164, %c0_165, %c0_166] : memref<3x40x1xf32, #tpu.memory_space<vmem>>, vector<1x40x1xf32>
    %216 = vector.shape_cast %215 : vector<1x40x1xf32> to vector<40x1xf32>
    %217 = vector.broadcast %216 : vector<40x1xf32> to vector<40x128xf32>
    %218 = arith.addf %214, %217 : vector<40x128xf32>
    %cst_167 = arith.constant 0.000000e+00 : f32
    %219 = vector.broadcast %cst_167 : f32 to vector<40x128xf32>
    %220 = arith.maximumf %218, %219 : vector<40x128xf32>
    %c1_168 = arith.constant 1 : index
    %c0_169 = arith.constant 0 : index
    %c0_170 = arith.constant 0 : index
    %221 = vector.load %arg39[%c1_168, %c0_169, %c0_170] : memref<3x5x40xf32, #tpu.memory_space<vmem>>, vector<1x5x40xf32>
    %222 = vector.shape_cast %221 : vector<1x5x40xf32> to vector<5x40xf32>
    %cst_171 = arith.constant dense<0.000000e+00> : vector<5x128xf32>
    %223 = tpu.matmul %222, %220, %cst_171 {dimension_numbers = #tpu.dot_dimension_numbers<[1], [0], [0], [1], [0, 0, 1, 1], [], []>} : vector<5x40xf32>, vector<40x128xf32>, vector<5x128xf32> -> vector<5x128xf32>
    %c1_172 = arith.constant 1 : index
    %c0_173 = arith.constant 0 : index
    %c0_174 = arith.constant 0 : index
    %224 = vector.load %arg40[%c1_172, %c0_173, %c0_174] : memref<3x5x1xf32, #tpu.memory_space<vmem>>, vector<1x5x1xf32>
    %225 = vector.shape_cast %224 : vector<1x5x1xf32> to vector<5x1xf32>
    %226 = vector.broadcast %225 : vector<5x1xf32> to vector<5x128xf32>
    %227 = arith.addf %223, %226 : vector<5x128xf32>
    %cst_175 = arith.constant 5.000000e-01 : f32
    %228 = vector.broadcast %cst_175 : f32 to vector<5x128xf32>
    %229 = arith.mulf %228, %154 : vector<5x128xf32>
    %cst_176 = arith.constant 0.000000e+00 : f32
    %230 = vector.broadcast %cst_176 : f32 to vector<5x128xf32>
    %231 = arith.maximumf %227, %230 : vector<5x128xf32>
    %cst_177 = arith.constant 5.000000e-01 : f32
    %232 = vector.broadcast %cst_177 : f32 to vector<5x128xf32>
    %233 = arith.mulf %232, %231 : vector<5x128xf32>
    %234 = arith.addf %229, %233 : vector<5x128xf32>
    %c2_178 = arith.constant 2 : index
    %c0_179 = arith.constant 0 : index
    %c0_180 = arith.constant 0 : index
    %235 = vector.load %arg27[%c2_178, %c0_179, %c0_180] : memref<3x80x5xf32, #tpu.memory_space<vmem>>, vector<1x80x5xf32>
    %236 = vector.shape_cast %235 : vector<1x80x5xf32> to vector<80x5xf32>
    %cst_181 = arith.constant dense<0.000000e+00> : vector<80x128xf32>
    %237 = tpu.matmul %236, %234, %cst_181 {dimension_numbers = #tpu.dot_dimension_numbers<[1], [0], [0], [1], [0, 0, 1, 1], [], []>} : vector<80x5xf32>, vector<5x128xf32>, vector<80x128xf32> -> vector<80x128xf32>
    %238 = vector.extract_strided_slice %237 {offsets = [0, 0], sizes = [40, 128], strides = [1, 1]} : vector<80x128xf32> to vector<40x128xf32>
    %239 = arith.truncf %238 : vector<40x128xf32> to vector<40x128xbf16>
    %cst_182 = arith.constant dense<0.000000e+00> : vector<40x128xf32>
    %240 = tpu.matmul %239, %14, %cst_182 {dimension_numbers = #tpu.dot_dimension_numbers<[1], [0], [0], [1], [0, 0, 1, 1], [], []>} : vector<40x128xbf16>, vector<128x128xbf16>, vector<40x128xf32> -> vector<40x128xf32>
    %241 = vector.extract_strided_slice %237 {offsets = [40, 0], sizes = [40, 128], strides = [1, 1]} : vector<80x128xf32> to vector<40x128xf32>
    %242 = arith.truncf %241 : vector<40x128xf32> to vector<40x128xbf16>
    %cst_183 = arith.constant dense<0.000000e+00> : vector<40x128xf32>
    %243 = tpu.matmul %242, %9, %cst_183 {dimension_numbers = #tpu.dot_dimension_numbers<[1], [0], [0], [1], [0, 0, 1, 1], [], []>} : vector<40x128xbf16>, vector<128x128xbf16>, vector<40x128xf32> -> vector<40x128xf32>
    %244 = arith.addf %240, %243 : vector<40x128xf32>
    %c2_184 = arith.constant 2 : index
    %c0_185 = arith.constant 0 : index
    %c0_186 = arith.constant 0 : index
    %245 = vector.load %arg28[%c2_184, %c0_185, %c0_186] : memref<3x40x4xf32, #tpu.memory_space<vmem>>, vector<1x40x4xf32>
    %246 = vector.shape_cast %245 : vector<1x40x4xf32> to vector<40x4xf32>
    %cst_187 = arith.constant dense<0.000000e+00> : vector<40x128xf32>
    %247 = tpu.matmul %246, %190, %cst_187 {dimension_numbers = #tpu.dot_dimension_numbers<[1], [0], [0], [1], [0, 0, 1, 1], [], []>} : vector<40x4xf32>, vector<4x128xf32>, vector<40x128xf32> -> vector<40x128xf32>
    %248 = arith.addf %244, %247 : vector<40x128xf32>
    %c2_188 = arith.constant 2 : index
    %c0_189 = arith.constant 0 : index
    %c0_190 = arith.constant 0 : index
    %249 = vector.load %arg29[%c2_188, %c0_189, %c0_190] : memref<3x40x1xf32, #tpu.memory_space<vmem>>, vector<1x40x1xf32>
    %250 = vector.shape_cast %249 : vector<1x40x1xf32> to vector<40x1xf32>
    %251 = vector.broadcast %250 : vector<40x1xf32> to vector<40x128xf32>
    %252 = arith.addf %248, %251 : vector<40x128xf32>
    %cst_191 = arith.constant 0.000000e+00 : f32
    %253 = vector.broadcast %cst_191 : f32 to vector<40x128xf32>
    %254 = arith.maximumf %252, %253 : vector<40x128xf32>
    %c2_192 = arith.constant 2 : index
    %c0_193 = arith.constant 0 : index
    %c0_194 = arith.constant 0 : index
    %255 = vector.load %arg30[%c2_192, %c0_193, %c0_194] : memref<3x40x40xf32, #tpu.memory_space<vmem>>, vector<1x40x40xf32>
    %256 = vector.shape_cast %255 : vector<1x40x40xf32> to vector<40x40xf32>
    %cst_195 = arith.constant dense<0.000000e+00> : vector<40x128xf32>
    %257 = tpu.matmul %256, %254, %cst_195 {dimension_numbers = #tpu.dot_dimension_numbers<[1], [0], [0], [1], [0, 0, 1, 1], [], []>} : vector<40x40xf32>, vector<40x128xf32>, vector<40x128xf32> -> vector<40x128xf32>
    %c2_196 = arith.constant 2 : index
    %c0_197 = arith.constant 0 : index
    %c0_198 = arith.constant 0 : index
    %258 = vector.load %arg31[%c2_196, %c0_197, %c0_198] : memref<3x40x1xf32, #tpu.memory_space<vmem>>, vector<1x40x1xf32>
    %259 = vector.shape_cast %258 : vector<1x40x1xf32> to vector<40x1xf32>
    %260 = vector.broadcast %259 : vector<40x1xf32> to vector<40x128xf32>
    %261 = arith.addf %257, %260 : vector<40x128xf32>
    %cst_199 = arith.constant 0.000000e+00 : f32
    %262 = vector.broadcast %cst_199 : f32 to vector<40x128xf32>
    %263 = arith.maximumf %261, %262 : vector<40x128xf32>
    %c2_200 = arith.constant 2 : index
    %c0_201 = arith.constant 0 : index
    %c0_202 = arith.constant 0 : index
    %264 = vector.load %arg32[%c2_200, %c0_201, %c0_202] : memref<3x4x40xf32, #tpu.memory_space<vmem>>, vector<1x4x40xf32>
    %265 = vector.shape_cast %264 : vector<1x4x40xf32> to vector<4x40xf32>
    %cst_203 = arith.constant dense<0.000000e+00> : vector<4x128xf32>
    %266 = tpu.matmul %265, %263, %cst_203 {dimension_numbers = #tpu.dot_dimension_numbers<[1], [0], [0], [1], [0, 0, 1, 1], [], []>} : vector<4x40xf32>, vector<40x128xf32>, vector<4x128xf32> -> vector<4x128xf32>
    %c2_204 = arith.constant 2 : index
    %c0_205 = arith.constant 0 : index
    %c0_206 = arith.constant 0 : index
    %267 = vector.load %arg33[%c2_204, %c0_205, %c0_206] : memref<3x4x1xf32, #tpu.memory_space<vmem>>, vector<1x4x1xf32>
    %268 = vector.shape_cast %267 : vector<1x4x1xf32> to vector<4x1xf32>
    %269 = vector.broadcast %268 : vector<4x1xf32> to vector<4x128xf32>
    %270 = arith.addf %266, %269 : vector<4x128xf32>
    %c3 = arith.constant 3 : index
    %c0_207 = arith.constant 0 : index
    %c0_208 = arith.constant 0 : index
    %271 = vector.load %arg42[%c3, %c0_207, %c0_208] : memref<4x40x4xf32, #tpu.memory_space<vmem>>, vector<1x40x4xf32>
    %272 = vector.shape_cast %271 : vector<1x40x4xf32> to vector<40x4xf32>
    %cst_209 = arith.constant dense<0.000000e+00> : vector<40x128xf32>
    %273 = tpu.matmul %272, %270, %cst_209 {dimension_numbers = #tpu.dot_dimension_numbers<[1], [0], [0], [1], [0, 0, 1, 1], [], []>} : vector<40x4xf32>, vector<4x128xf32>, vector<40x128xf32> -> vector<40x128xf32>
    %274 = arith.addf %194, %273 : vector<40x128xf32>
    %c2_210 = arith.constant 2 : index
    %c0_211 = arith.constant 0 : index
    %c0_212 = arith.constant 0 : index
    %275 = vector.load %arg35[%c2_210, %c0_211, %c0_212] : memref<3x40x4xf32, #tpu.memory_space<vmem>>, vector<1x40x4xf32>
    %276 = vector.shape_cast %275 : vector<1x40x4xf32> to vector<40x4xf32>
    %277 = vector.broadcast %55 : vector<1x128xf32> to vector<4x128xf32>
    %278 = arith.mulf %270, %277 : vector<4x128xf32>
    %cst_213 = arith.constant dense<0.000000e+00> : vector<40x128xf32>
    %279 = tpu.matmul %276, %278, %cst_213 {dimension_numbers = #tpu.dot_dimension_numbers<[1], [0], [0], [1], [0, 0, 1, 1], [], []>} : vector<40x4xf32>, vector<4x128xf32>, vector<40x128xf32> -> vector<40x128xf32>
    %280 = arith.truncf %279 : vector<40x128xf32> to vector<40x128xbf16>
    %cst_214 = arith.constant dense<0.000000e+00> : vector<40x128xf32>
    %281 = tpu.matmul %280, %16, %cst_214 {dimension_numbers = #tpu.dot_dimension_numbers<[1], [0], [0], [1], [0, 0, 1, 1], [], []>} : vector<40x128xbf16>, vector<128x128xbf16>, vector<40x128xf32> -> vector<40x128xf32>
    %c2_215 = arith.constant 2 : index
    %c0_216 = arith.constant 0 : index
    %c0_217 = arith.constant 0 : index
    %282 = vector.load %arg34[%c2_215, %c0_216, %c0_217] : memref<3x40x5xf32, #tpu.memory_space<vmem>>, vector<1x40x5xf32>
    %283 = vector.shape_cast %282 : vector<1x40x5xf32> to vector<40x5xf32>
    %cst_218 = arith.constant dense<0.000000e+00> : vector<40x128xf32>
    %284 = tpu.matmul %283, %234, %cst_218 {dimension_numbers = #tpu.dot_dimension_numbers<[1], [0], [0], [1], [0, 0, 1, 1], [], []>} : vector<40x5xf32>, vector<5x128xf32>, vector<40x128xf32> -> vector<40x128xf32>
    %285 = arith.addf %284, %281 : vector<40x128xf32>
    %c2_219 = arith.constant 2 : index
    %c0_220 = arith.constant 0 : index
    %c0_221 = arith.constant 0 : index
    %286 = vector.load %arg36[%c2_219, %c0_220, %c0_221] : memref<3x40x1xf32, #tpu.memory_space<vmem>>, vector<1x40x1xf32>
    %287 = vector.shape_cast %286 : vector<1x40x1xf32> to vector<40x1xf32>
    %288 = vector.broadcast %287 : vector<40x1xf32> to vector<40x128xf32>
    %289 = arith.addf %285, %288 : vector<40x128xf32>
    %cst_222 = arith.constant 0.000000e+00 : f32
    %290 = vector.broadcast %cst_222 : f32 to vector<40x128xf32>
    %291 = arith.maximumf %289, %290 : vector<40x128xf32>
    %c2_223 = arith.constant 2 : index
    %c0_224 = arith.constant 0 : index
    %c0_225 = arith.constant 0 : index
    %292 = vector.load %arg37[%c2_223, %c0_224, %c0_225] : memref<3x40x40xf32, #tpu.memory_space<vmem>>, vector<1x40x40xf32>
    %293 = vector.shape_cast %292 : vector<1x40x40xf32> to vector<40x40xf32>
    %cst_226 = arith.constant dense<0.000000e+00> : vector<40x128xf32>
    %294 = tpu.matmul %293, %291, %cst_226 {dimension_numbers = #tpu.dot_dimension_numbers<[1], [0], [0], [1], [0, 0, 1, 1], [], []>} : vector<40x40xf32>, vector<40x128xf32>, vector<40x128xf32> -> vector<40x128xf32>
    %c2_227 = arith.constant 2 : index
    %c0_228 = arith.constant 0 : index
    %c0_229 = arith.constant 0 : index
    %295 = vector.load %arg38[%c2_227, %c0_228, %c0_229] : memref<3x40x1xf32, #tpu.memory_space<vmem>>, vector<1x40x1xf32>
    %296 = vector.shape_cast %295 : vector<1x40x1xf32> to vector<40x1xf32>
    %297 = vector.broadcast %296 : vector<40x1xf32> to vector<40x128xf32>
    %298 = arith.addf %294, %297 : vector<40x128xf32>
    %cst_230 = arith.constant 0.000000e+00 : f32
    %299 = vector.broadcast %cst_230 : f32 to vector<40x128xf32>
    %300 = arith.maximumf %298, %299 : vector<40x128xf32>
    %c2_231 = arith.constant 2 : index
    %c0_232 = arith.constant 0 : index
    %c0_233 = arith.constant 0 : index
    %301 = vector.load %arg39[%c2_231, %c0_232, %c0_233] : memref<3x5x40xf32, #tpu.memory_space<vmem>>, vector<1x5x40xf32>
    %302 = vector.shape_cast %301 : vector<1x5x40xf32> to vector<5x40xf32>
    %cst_234 = arith.constant dense<0.000000e+00> : vector<5x128xf32>
    %303 = tpu.matmul %302, %300, %cst_234 {dimension_numbers = #tpu.dot_dimension_numbers<[1], [0], [0], [1], [0, 0, 1, 1], [], []>} : vector<5x40xf32>, vector<40x128xf32>, vector<5x128xf32> -> vector<5x128xf32>
    %c2_235 = arith.constant 2 : index
    %c0_236 = arith.constant 0 : index
    %c0_237 = arith.constant 0 : index
    %304 = vector.load %arg40[%c2_235, %c0_236, %c0_237] : memref<3x5x1xf32, #tpu.memory_space<vmem>>, vector<1x5x1xf32>
    %305 = vector.shape_cast %304 : vector<1x5x1xf32> to vector<5x1xf32>
    %306 = vector.broadcast %305 : vector<5x1xf32> to vector<5x128xf32>
    %307 = arith.addf %303, %306 : vector<5x128xf32>
    %cst_238 = arith.constant 5.000000e-01 : f32
    %308 = vector.broadcast %cst_238 : f32 to vector<5x128xf32>
    %309 = arith.mulf %308, %234 : vector<5x128xf32>
    %cst_239 = arith.constant 0.000000e+00 : f32
    %310 = vector.broadcast %cst_239 : f32 to vector<5x128xf32>
    %311 = arith.maximumf %307, %310 : vector<5x128xf32>
    %cst_240 = arith.constant 5.000000e-01 : f32
    %312 = vector.broadcast %cst_240 : f32 to vector<5x128xf32>
    %313 = arith.mulf %312, %311 : vector<5x128xf32>
    %314 = arith.addf %309, %313 : vector<5x128xf32>
    %c0_241 = arith.constant 0 : index
    %c0_242 = arith.constant 0 : index
    %315 = vector.load %arg15[%c0_241, %c0_242] : memref<40x5xf32, #tpu.memory_space<vmem>>, vector<40x5xf32>
    %cst_243 = arith.constant dense<0.000000e+00> : vector<40x128xf32>
    %316 = tpu.matmul %315, %314, %cst_243 {dimension_numbers = #tpu.dot_dimension_numbers<[1], [0], [0], [1], [0, 0, 1, 1], [], []>} : vector<40x5xf32>, vector<5x128xf32>, vector<40x128xf32> -> vector<40x128xf32>
    %c0_244 = arith.constant 0 : index
    %c0_245 = arith.constant 0 : index
    %317 = vector.load %arg16[%c0_244, %c0_245] : memref<40x1xf32, #tpu.memory_space<vmem>>, vector<40x1xf32>
    %318 = vector.broadcast %317 : vector<40x1xf32> to vector<40x128xf32>
    %319 = arith.addf %316, %318 : vector<40x128xf32>
    %cst_246 = arith.constant 0.000000e+00 : f32
    %320 = vector.broadcast %cst_246 : f32 to vector<40x128xf32>
    %321 = arith.maximumf %319, %320 : vector<40x128xf32>
    %c0_247 = arith.constant 0 : index
    %c0_248 = arith.constant 0 : index
    %322 = vector.load %arg17[%c0_247, %c0_248] : memref<40x40xf32, #tpu.memory_space<vmem>>, vector<40x40xf32>
    %cst_249 = arith.constant dense<0.000000e+00> : vector<40x128xf32>
    %323 = tpu.matmul %322, %321, %cst_249 {dimension_numbers = #tpu.dot_dimension_numbers<[1], [0], [0], [1], [0, 0, 1, 1], [], []>} : vector<40x40xf32>, vector<40x128xf32>, vector<40x128xf32> -> vector<40x128xf32>
    %c0_250 = arith.constant 0 : index
    %c0_251 = arith.constant 0 : index
    %324 = vector.load %arg18[%c0_250, %c0_251] : memref<40x1xf32, #tpu.memory_space<vmem>>, vector<40x1xf32>
    %325 = vector.broadcast %324 : vector<40x1xf32> to vector<40x128xf32>
    %326 = arith.addf %323, %325 : vector<40x128xf32>
    %cst_252 = arith.constant 0.000000e+00 : f32
    %327 = vector.broadcast %cst_252 : f32 to vector<40x128xf32>
    %328 = arith.maximumf %326, %327 : vector<40x128xf32>
    %c0_253 = arith.constant 0 : index
    %c0_254 = arith.constant 0 : index
    %329 = vector.load %arg19[%c0_253, %c0_254] : memref<1x40xf32, #tpu.memory_space<vmem>>, vector<1x40xf32>
    %cst_255 = arith.constant dense<0.000000e+00> : vector<1x128xf32>
    %330 = tpu.matmul %329, %328, %cst_255 {dimension_numbers = #tpu.dot_dimension_numbers<[1], [0], [0], [1], [0, 0, 1, 1], [], []>} : vector<1x40xf32>, vector<40x128xf32>, vector<1x128xf32> -> vector<1x128xf32>
    %c0_256 = arith.constant 0 : index
    %c0_257 = arith.constant 0 : index
    %331 = vector.load %arg20[%c0_256, %c0_257] : memref<1x1xf32, #tpu.memory_space<vmem>>, vector<1x1xf32>
    %332 = vector.broadcast %331 : vector<1x1xf32> to vector<1x128xf32>
    %333 = arith.addf %330, %332 : vector<1x128xf32>
    %334 = arith.negf %333 : vector<1x128xf32>
    %335 = math.exp %334 : vector<1x128xf32>
    %cst_258 = arith.constant 1.000000e+00 : f32
    %336 = vector.broadcast %cst_258 : f32 to vector<1x128xf32>
    %337 = arith.addf %336, %335 : vector<1x128xf32>
    %338 = arith.divf %336, %337 : vector<1x128xf32>
    %cst_259 = arith.constant 9.99999993E-9 : f32
    %339 = vector.broadcast %cst_259 : f32 to vector<1x128xf32>
    %340 = arith.addf %338, %339 : vector<1x128xf32>
    %c0_260 = arith.constant 0 : index
    %c0_261 = arith.constant 0 : index
    %341 = vector.load %arg21[%c0_260, %c0_261] : memref<40x5xf32, #tpu.memory_space<vmem>>, vector<40x5xf32>
    %cst_262 = arith.constant dense<0.000000e+00> : vector<40x128xf32>
    %342 = tpu.matmul %341, %314, %cst_262 {dimension_numbers = #tpu.dot_dimension_numbers<[1], [0], [0], [1], [0, 0, 1, 1], [], []>} : vector<40x5xf32>, vector<5x128xf32>, vector<40x128xf32> -> vector<40x128xf32>
    %c0_263 = arith.constant 0 : index
    %c0_264 = arith.constant 0 : index
    %343 = vector.load %arg22[%c0_263, %c0_264] : memref<40x1xf32, #tpu.memory_space<vmem>>, vector<40x1xf32>
    %344 = vector.broadcast %343 : vector<40x1xf32> to vector<40x128xf32>
    %345 = arith.addf %342, %344 : vector<40x128xf32>
    %cst_265 = arith.constant 0.000000e+00 : f32
    %346 = vector.broadcast %cst_265 : f32 to vector<40x128xf32>
    %347 = arith.maximumf %345, %346 : vector<40x128xf32>
    %c0_266 = arith.constant 0 : index
    %c0_267 = arith.constant 0 : index
    %348 = vector.load %arg23[%c0_266, %c0_267] : memref<40x40xf32, #tpu.memory_space<vmem>>, vector<40x40xf32>
    %cst_268 = arith.constant dense<0.000000e+00> : vector<40x128xf32>
    %349 = tpu.matmul %348, %347, %cst_268 {dimension_numbers = #tpu.dot_dimension_numbers<[1], [0], [0], [1], [0, 0, 1, 1], [], []>} : vector<40x40xf32>, vector<40x128xf32>, vector<40x128xf32> -> vector<40x128xf32>
    %c0_269 = arith.constant 0 : index
    %c0_270 = arith.constant 0 : index
    %350 = vector.load %arg24[%c0_269, %c0_270] : memref<40x1xf32, #tpu.memory_space<vmem>>, vector<40x1xf32>
    %351 = vector.broadcast %350 : vector<40x1xf32> to vector<40x128xf32>
    %352 = arith.addf %349, %351 : vector<40x128xf32>
    %cst_271 = arith.constant 0.000000e+00 : f32
    %353 = vector.broadcast %cst_271 : f32 to vector<40x128xf32>
    %354 = arith.maximumf %352, %353 : vector<40x128xf32>
    %c0_272 = arith.constant 0 : index
    %c0_273 = arith.constant 0 : index
    %355 = vector.load %arg25[%c0_272, %c0_273] : memref<2x40xf32, #tpu.memory_space<vmem>>, vector<2x40xf32>
    %cst_274 = arith.constant dense<0.000000e+00> : vector<2x128xf32>
    %356 = tpu.matmul %355, %354, %cst_274 {dimension_numbers = #tpu.dot_dimension_numbers<[1], [0], [0], [1], [0, 0, 1, 1], [], []>} : vector<2x40xf32>, vector<40x128xf32>, vector<2x128xf32> -> vector<2x128xf32>
    %c0_275 = arith.constant 0 : index
    %c0_276 = arith.constant 0 : index
    %357 = vector.load %arg26[%c0_275, %c0_276] : memref<2x1xf32, #tpu.memory_space<vmem>>, vector<2x1xf32>
    %358 = vector.broadcast %357 : vector<2x1xf32> to vector<2x128xf32>
    %359 = arith.addf %356, %358 : vector<2x128xf32>
    %c0_277 = arith.constant 0 : index
    %c0_278 = arith.constant 0 : index
    %360 = vector.load %arg41[%c0_277, %c0_278] : memref<80x5xf32, #tpu.memory_space<vmem>>, vector<80x5xf32>
    %cst_279 = arith.constant dense<0.000000e+00> : vector<80x128xf32>
    %361 = tpu.matmul %360, %314, %cst_279 {dimension_numbers = #tpu.dot_dimension_numbers<[1], [0], [0], [1], [0, 0, 1, 1], [], []>} : vector<80x5xf32>, vector<5x128xf32>, vector<80x128xf32> -> vector<80x128xf32>
    %362 = vector.extract_strided_slice %361 {offsets = [0, 0], sizes = [40, 128], strides = [1, 1]} : vector<80x128xf32> to vector<40x128xf32>
    %363 = arith.truncf %362 : vector<40x128xf32> to vector<40x128xbf16>
    %cst_280 = arith.constant dense<0.000000e+00> : vector<40x128xf32>
    %364 = tpu.matmul %363, %14, %cst_280 {dimension_numbers = #tpu.dot_dimension_numbers<[1], [0], [0], [1], [0, 0, 1, 1], [], []>} : vector<40x128xbf16>, vector<128x128xbf16>, vector<40x128xf32> -> vector<40x128xf32>
    %365 = vector.extract_strided_slice %361 {offsets = [40, 0], sizes = [40, 128], strides = [1, 1]} : vector<80x128xf32> to vector<40x128xf32>
    %366 = arith.truncf %365 : vector<40x128xf32> to vector<40x128xbf16>
    %cst_281 = arith.constant dense<0.000000e+00> : vector<40x128xf32>
    %367 = tpu.matmul %366, %9, %cst_281 {dimension_numbers = #tpu.dot_dimension_numbers<[1], [0], [0], [1], [0, 0, 1, 1], [], []>} : vector<40x128xbf16>, vector<128x128xbf16>, vector<40x128xf32> -> vector<40x128xf32>
    %368 = arith.addf %364, %367 : vector<40x128xf32>
    %369 = arith.addf %368, %274 : vector<40x128xf32>
    %c0_282 = arith.constant 0 : index
    %c0_283 = arith.constant 0 : index
    %370 = vector.load %arg43[%c0_282, %c0_283] : memref<40x1xf32, #tpu.memory_space<vmem>>, vector<40x1xf32>
    %371 = vector.broadcast %370 : vector<40x1xf32> to vector<40x128xf32>
    %372 = arith.addf %369, %371 : vector<40x128xf32>
    %cst_284 = arith.constant 0.000000e+00 : f32
    %373 = vector.broadcast %cst_284 : f32 to vector<40x128xf32>
    %374 = arith.maximumf %372, %373 : vector<40x128xf32>
    %c0_285 = arith.constant 0 : index
    %c0_286 = arith.constant 0 : index
    %375 = vector.load %arg44[%c0_285, %c0_286] : memref<40x40xf32, #tpu.memory_space<vmem>>, vector<40x40xf32>
    %cst_287 = arith.constant dense<0.000000e+00> : vector<40x128xf32>
    %376 = tpu.matmul %375, %374, %cst_287 {dimension_numbers = #tpu.dot_dimension_numbers<[1], [0], [0], [1], [0, 0, 1, 1], [], []>} : vector<40x40xf32>, vector<40x128xf32>, vector<40x128xf32> -> vector<40x128xf32>
    %c0_288 = arith.constant 0 : index
    %c0_289 = arith.constant 0 : index
    %377 = vector.load %arg45[%c0_288, %c0_289] : memref<40x1xf32, #tpu.memory_space<vmem>>, vector<40x1xf32>
    %378 = vector.broadcast %377 : vector<40x1xf32> to vector<40x128xf32>
    %379 = arith.addf %376, %378 : vector<40x128xf32>
    %cst_290 = arith.constant 0.000000e+00 : f32
    %380 = vector.broadcast %cst_290 : f32 to vector<40x128xf32>
    %381 = arith.maximumf %379, %380 : vector<40x128xf32>
    %c0_291 = arith.constant 0 : index
    %c0_292 = arith.constant 0 : index
    %382 = vector.load %arg46[%c0_291, %c0_292] : memref<1x40xf32, #tpu.memory_space<vmem>>, vector<1x40xf32>
    %cst_293 = arith.constant dense<0.000000e+00> : vector<1x128xf32>
    %383 = tpu.matmul %382, %381, %cst_293 {dimension_numbers = #tpu.dot_dimension_numbers<[1], [0], [0], [1], [0, 0, 1, 1], [], []>} : vector<1x40xf32>, vector<40x128xf32>, vector<1x128xf32> -> vector<1x128xf32>
    %c0_294 = arith.constant 0 : index
    %c0_295 = arith.constant 0 : index
    %384 = vector.load %arg47[%c0_294, %c0_295] : memref<1x1xf32, #tpu.memory_space<vmem>>, vector<1x1xf32>
    %385 = vector.broadcast %384 : vector<1x1xf32> to vector<1x128xf32>
    %386 = arith.addf %383, %385 : vector<1x128xf32>
    %c0_296 = arith.constant 0 : index
    %c0_297 = arith.constant 0 : index
    %387 = vector.load %arg49[%c0_296, %c0_297] : memref<40x1xf32, #tpu.memory_space<vmem>>, vector<40x1xf32>
    %388 = arith.mulf %386, %55 : vector<1x128xf32>
    %cst_298 = arith.constant dense<0.000000e+00> : vector<40x128xf32>
    %389 = tpu.matmul %387, %388, %cst_298 {dimension_numbers = #tpu.dot_dimension_numbers<[1], [0], [0], [1], [0, 0, 1, 1], [], []>} : vector<40x1xf32>, vector<1x128xf32>, vector<40x128xf32> -> vector<40x128xf32>
    %390 = arith.truncf %389 : vector<40x128xf32> to vector<40x128xbf16>
    %cst_299 = arith.constant dense<0.000000e+00> : vector<40x128xf32>
    %391 = tpu.matmul %390, %16, %cst_299 {dimension_numbers = #tpu.dot_dimension_numbers<[1], [0], [0], [1], [0, 0, 1, 1], [], []>} : vector<40x128xbf16>, vector<128x128xbf16>, vector<40x128xf32> -> vector<40x128xf32>
    %c0_300 = arith.constant 0 : index
    %c0_301 = arith.constant 0 : index
    %392 = vector.load %arg48[%c0_300, %c0_301] : memref<40x5xf32, #tpu.memory_space<vmem>>, vector<40x5xf32>
    %cst_302 = arith.constant dense<0.000000e+00> : vector<40x128xf32>
    %393 = tpu.matmul %392, %314, %cst_302 {dimension_numbers = #tpu.dot_dimension_numbers<[1], [0], [0], [1], [0, 0, 1, 1], [], []>} : vector<40x5xf32>, vector<5x128xf32>, vector<40x128xf32> -> vector<40x128xf32>
    %394 = arith.addf %393, %391 : vector<40x128xf32>
    %c0_303 = arith.constant 0 : index
    %c0_304 = arith.constant 0 : index
    %395 = vector.load %arg50[%c0_303, %c0_304] : memref<40x1xf32, #tpu.memory_space<vmem>>, vector<40x1xf32>
    %396 = vector.broadcast %395 : vector<40x1xf32> to vector<40x128xf32>
    %397 = arith.addf %394, %396 : vector<40x128xf32>
    %cst_305 = arith.constant 0.000000e+00 : f32
    %398 = vector.broadcast %cst_305 : f32 to vector<40x128xf32>
    %399 = arith.maximumf %397, %398 : vector<40x128xf32>
    %c0_306 = arith.constant 0 : index
    %c0_307 = arith.constant 0 : index
    %400 = vector.load %arg51[%c0_306, %c0_307] : memref<40x40xf32, #tpu.memory_space<vmem>>, vector<40x40xf32>
    %cst_308 = arith.constant dense<0.000000e+00> : vector<40x128xf32>
    %401 = tpu.matmul %400, %399, %cst_308 {dimension_numbers = #tpu.dot_dimension_numbers<[1], [0], [0], [1], [0, 0, 1, 1], [], []>} : vector<40x40xf32>, vector<40x128xf32>, vector<40x128xf32> -> vector<40x128xf32>
    %c0_309 = arith.constant 0 : index
    %c0_310 = arith.constant 0 : index
    %402 = vector.load %arg52[%c0_309, %c0_310] : memref<40x1xf32, #tpu.memory_space<vmem>>, vector<40x1xf32>
    %403 = vector.broadcast %402 : vector<40x1xf32> to vector<40x128xf32>
    %404 = arith.addf %401, %403 : vector<40x128xf32>
    %cst_311 = arith.constant 0.000000e+00 : f32
    %405 = vector.broadcast %cst_311 : f32 to vector<40x128xf32>
    %406 = arith.maximumf %404, %405 : vector<40x128xf32>
    %c0_312 = arith.constant 0 : index
    %c0_313 = arith.constant 0 : index
    %407 = vector.load %arg53[%c0_312, %c0_313] : memref<1x40xf32, #tpu.memory_space<vmem>>, vector<1x40xf32>
    %cst_314 = arith.constant dense<0.000000e+00> : vector<1x128xf32>
    %408 = tpu.matmul %407, %406, %cst_314 {dimension_numbers = #tpu.dot_dimension_numbers<[1], [0], [0], [1], [0, 0, 1, 1], [], []>} : vector<1x40xf32>, vector<40x128xf32>, vector<1x128xf32> -> vector<1x128xf32>
    %c0_315 = arith.constant 0 : index
    %c0_316 = arith.constant 0 : index
    %409 = vector.load %arg54[%c0_315, %c0_316] : memref<1x1xf32, #tpu.memory_space<vmem>>, vector<1x1xf32>
    %410 = vector.broadcast %409 : vector<1x1xf32> to vector<1x128xf32>
    %411 = arith.addf %408, %410 : vector<1x128xf32>
    %412 = tpu.concatenate %359, %340, %411 in 0 : vector<2x128xf32>, vector<1x128xf32>, vector<1x128xf32> -> vector<4x128xf32>
    %c0_317 = arith.constant 0 : index
    %c0_318 = arith.constant 0 : index
    %413 = vector.load %arg56[%c0_317, %c0_318] : memref<4x128xf32, #tpu.memory_space<vmem>>, vector<4x128xf32>
    tpu.vector_store %arg56[%c0_317, %c0_318], %412 {strides = array<i32>} : memref<4x128xf32, #tpu.memory_space<vmem>>, vector<4x128xf32>,
    return
  }
}

</mosaic_0001>

<llo_original>
// kernel: a_call__.1
$region0: #{a_call__.1}
  #allocation0 [shape = 'u32[]', space=smem, size = 0x4, offset = 0x4, fixed_abs, tag = 'smem constant byte address 0x4 - core index']
  #allocation1 [shape = 'u32[144,128]{1,0:T(1,128)}', space=vmem, size = 0x12000, scoped, tag = 'internal scratch']
  #allocation2 [shape = 'f32[1,1]{1,0:T(1,128)S(1)}', space=vmem, size = 0x200, scoped, tag = 'scoped memory for a_call__.1']
  #allocation3 [shape = 'f32[1,1]{1,0:T(1,128)S(1)}', space=vmem, size = 0x200, scoped, tag = 'scoped memory for a_call__.1']
  #allocation4 [shape = 'f32[1,1]{1,0:T(1,128)S(1)}', space=vmem, size = 0x200, scoped, tag = 'scoped memory for a_call__.1']
  #allocation5 [shape = 'f32[1,1]{1,0:T(1,128)S(1)}', space=vmem, size = 0x200, scoped, tag = 'scoped memory for a_call__.1']
  %s0 = inlined_call_operand.smem [shape: u32[57], index: -1, kind: input, shape index: {}]
  %s1 = sld [smem:[%s0]]
  %s2 = scalar_lea.smem %s0, 1
  %s3 = sld [smem:[%s2]]
  %s4 = scalar_lea.smem %s0, 2
  %s5 = sld [smem:[%s4]]
  %s6 = scalar_lea.smem %s0, 3
  %s7 = sld [smem:[%s6]]
  %s8 = scalar_lea.smem %s0, 4
  %s9 = sld [smem:[%s8]]
  %s10 = scalar_lea.smem %s0, 5
  %s11 = sld [smem:[%s10]]
  %s12 = scalar_lea.smem %s0, 6
  %s13 = sld [smem:[%s12]]
  %s14 = scalar_lea.smem %s0, 7
  %s15 = sld [smem:[%s14]]
  %s16 = scalar_lea.smem %s0, 8
  %s17 = sld [smem:[%s16]]
  %s18 = scalar_lea.smem %s0, 9
  %s19 = sld [smem:[%s18]]
  %s20 = scalar_lea.smem %s0, 10
  %s21 = sld [smem:[%s20]]
  %s22 = scalar_lea.smem %s0, 11
  %s23 = sld [smem:[%s22]]
  %s24 = scalar_lea.smem %s0, 12
  %s25 = sld [smem:[%s24]]
  %s26 = scalar_lea.smem %s0, 13
  %s27 = sld [smem:[%s26]]
  %s28 = scalar_lea.smem %s0, 14
  %s29 = sld [smem:[%s28]]
  %s30 = scalar_lea.smem %s0, 15
  %s31 = sld [smem:[%s30]]
  %s32 = scalar_lea.smem %s0, 16
  %s33 = sld [smem:[%s32]]
  %s34 = scalar_lea.smem %s0, 17
  %s35 = sld [smem:[%s34]]
  %s36 = scalar_lea.smem %s0, 18
  %s37 = sld [smem:[%s36]]
  %s38 = scalar_lea.smem %s0, 19
  %s39 = sld [smem:[%s38]]
  %s40 = scalar_lea.smem %s0, 20
  %s41 = sld [smem:[%s40]]
  %s42 = scalar_lea.smem %s0, 21
  %s43 = sld [smem:[%s42]]
  %s44 = scalar_lea.smem %s0, 22
  %s45 = sld [smem:[%s44]]
  %s46 = scalar_lea.smem %s0, 23
  %s47 = sld [smem:[%s46]]
  %s48 = scalar_lea.smem %s0, 24
  %s49 = sld [smem:[%s48]]
  %s50 = scalar_lea.smem %s0, 25
  %s51 = sld [smem:[%s50]]
  %s52 = scalar_lea.smem %s0, 26
  %s53 = sld [smem:[%s52]]
  %s54 = scalar_lea.smem %s0, 27
  %s55 = sld [smem:[%s54]]
  %s56 = scalar_lea.smem %s0, 28
  %s57 = sld [smem:[%s56]]
  %s58 = scalar_lea.smem %s0, 29
  %s59 = sld [smem:[%s58]]
  %s60 = scalar_lea.smem %s0, 30
  %s61 = sld [smem:[%s60]]
  %s62 = scalar_lea.smem %s0, 31
  %s63 = sld [smem:[%s62]]
  %s64 = scalar_lea.smem %s0, 32
  %s65 = sld [smem:[%s64]]
  %s66 = scalar_lea.smem %s0, 33
  %s67 = sld [smem:[%s66]]
  %s68 = scalar_lea.smem %s0, 34
  %s69 = sld [smem:[%s68]]
  %s70 = scalar_lea.smem %s0, 35
  %s71 = sld [smem:[%s70]]
  %s72 = scalar_lea.smem %s0, 36
  %s73 = sld [smem:[%s72]]
  %s74 = scalar_lea.smem %s0, 37
  %s75 = sld [smem:[%s74]]
  %s76 = scalar_lea.smem %s0, 38
  %s77 = sld [smem:[%s76]]
  %s78 = scalar_lea.smem %s0, 39
  %s79 = sld [smem:[%s78]]
  %s80 = scalar_lea.smem %s0, 40
  %s81 = sld [smem:[%s80]]
  %s82 = scalar_lea.smem %s0, 41
  %s83 = sld [smem:[%s82]]
  %s84 = scalar_lea.smem %s0, 42
  %s85 = sld [smem:[%s84]]
  %s86 = scalar_lea.smem %s0, 43
  %s87 = sld [smem:[%s86]]
  %s88 = scalar_lea.smem %s0, 44
  %s89 = sld [smem:[%s88]]
  %s90 = scalar_lea.smem %s0, 45
  %s91 = sld [smem:[%s90]]
  %s92 = scalar_lea.smem %s0, 46
  %s93 = sld [smem:[%s92]]
  %s94 = scalar_lea.smem %s0, 47
  %s95 = sld [smem:[%s94]]
  %s96 = scalar_lea.smem %s0, 48
  %s97 = sld [smem:[%s96]]
  %s98 = scalar_lea.smem %s0, 49
  %s99 = sld [smem:[%s98]]
  %s100 = scalar_lea.smem %s0, 50
  %s101 = sld [smem:[%s100]]
  %s102 = scalar_lea.smem %s0, 51
  %s103 = sld [smem:[%s102]]
  %s104 = scalar_lea.smem %s0, 52
  %s105 = sld [smem:[%s104]]
  %s106 = scalar_lea.smem %s0, 53
  %s107 = sld [smem:[%s106]]
  %s108 = scalar_lea.smem %s0, 54
  %s109 = sld [smem:[%s108]]
  %s110 = scalar_lea.smem %s0, 55
  %s111 = sld [smem:[%s110]]
  %s112 = scalar_lea.smem %s0, 56
  %s113 = sld [smem:[%s112]]
  %114 = xla_tuple %s111, %s113
  %s115 = sld [smem:[#allocation0]]
  $region402: #{a_call__.1} parent=0
    _
  %s117 = ssub.s32 1, %s115
  %s118 = scalar_select 0, %s117, %s115
  %v119 = vstv %s21
  %120 = vst [vmem:[#allocation2] sm:$0x1] %v119
  %v121 = vstv %s41
  %122 = vst [vmem:[#allocation3] sm:$0x1] %v121
  %v123 = vstv %s95
  %124 = vst [vmem:[#allocation4] sm:$0x1] %v123
  %v125 = vstv %s109
  %126 = vst [vmem:[#allocation5] sm:$0x1] %v125
  $region1: #{a_call__.1} parent=0
    #allocation6 [shape = 'u8[20480]{0}', space=vmem, size = 0x5000, scoped, tag = 'input window, operand 6, single buffered']
    #allocation7 [shape = 's32[1]{0}', space=sflag, size = 0x4, scoped, tag = 'scoped memory for a_call__.1']
    #allocation8 [shape = 'u8[20480]{0}', space=vmem, size = 0x5000, scoped, tag = 'input window, operand 7, single buffered']
    #allocation9 [shape = 's32[1]{0}', space=sflag, size = 0x4, scoped, tag = 'scoped memory for a_call__.1']
    #allocation10 [shape = 'u8[20480]{0}', space=vmem, size = 0x5000, scoped, tag = 'input window, operand 8, single buffered']
    #allocation11 [shape = 'u8[20480]{0}', space=vmem, size = 0x5000, scoped, tag = 'input window, operand 11, single buffered']
    #allocation12 [shape = 's32[1]{0}', space=sflag, size = 0x4, scoped, tag = 'scoped memory for a_call__.1']
    #allocation13 [shape = 'u8[20480]{0}', space=vmem, size = 0x5000, scoped, tag = 'input window, operand 13, single buffered']
    #allocation14 [shape = 'u8[2048]{0}', space=vmem, size = 0x800, scoped, tag = 'input window, operand 14, single buffered']
    #allocation15 [shape = 's32[1]{0}', space=sflag, size = 0x4, scoped, tag = 'scoped memory for a_call__.1']
    #allocation16 [shape = 'u8[20480]{0}', space=vmem, size = 0x5000, scoped, tag = 'input window, operand 15, single buffered']
    #allocation17 [shape = 'u8[20480]{0}', space=vmem, size = 0x5000, scoped, tag = 'input window, operand 16, single buffered']
    #allocation18 [shape = 's32[1]{0}', space=sflag, size = 0x4, scoped, tag = 'scoped memory for a_call__.1']
    #allocation19 [shape = 'u8[20480]{0}', space=vmem, size = 0x5000, scoped, tag = 'input window, operand 17, single buffered']
    #allocation20 [shape = 'u8[20480]{0}', space=vmem, size = 0x5000, scoped, tag = 'input window, operand 18, single buffered']
    #allocation21 [shape = 's32[1]{0}', space=sflag, size = 0x4, scoped, tag = 'scoped memory for a_call__.1']
    #allocation22 [shape = 'u8[512]{0}', space=vmem, size = 0x400, scoped, tag = 'input window, operand 19, single buffered']
    #allocation23 [shape = 'u8[20480]{0}', space=vmem, size = 0x5000, scoped, tag = 'input window, operand 21, single buffered']
    #allocation24 [shape = 's32[1]{0}', space=sflag, size = 0x4, scoped, tag = 'scoped memory for a_call__.1']
    #allocation25 [shape = 'u8[20480]{0}', space=vmem, size = 0x5000, scoped, tag = 'input window, operand 22, single buffered']
    #allocation26 [shape = 'u8[20480]{0}', space=vmem, size = 0x5000, scoped, tag = 'input window, operand 23, single buffered']
    #allocation27 [shape = 's32[1]{0}', space=sflag, size = 0x4, scoped, tag = 'scoped memory for a_call__.1']
    #allocation28 [shape = 'u8[20480]{0}', space=vmem, size = 0x5000, scoped, tag = 'input window, operand 24, single buffered']
    #allocation29 [shape = 'u8[1024]{0}', space=vmem, size = 0x400, scoped, tag = 'input window, operand 26, single buffered']
    #allocation30 [shape = 's32[1]{0}', space=sflag, size = 0x4, scoped, tag = 'scoped memory for a_call__.1']
    #allocation31 [shape = 'u8[122880]{0}', space=vmem, size = 0x1e000, scoped, tag = 'input window, operand 27, single buffered']
    #allocation32 [shape = 'u8[61440]{0}', space=vmem, size = 0xf000, scoped, tag = 'input window, operand 29, single buffered']
    #allocation33 [shape = 's32[1]{0}', space=sflag, size = 0x4, scoped, tag = 'scoped memory for a_call__.1']
    #allocation34 [shape = 'u8[61440]{0}', space=vmem, size = 0xf000, scoped, tag = 'input window, operand 30, single buffered']
    #allocation35 [shape = 'u8[61440]{0}', space=vmem, size = 0xf000, scoped, tag = 'input window, operand 31, single buffered']
    #allocation36 [shape = 's32[1]{0}', space=sflag, size = 0x4, scoped, tag = 'scoped memory for a_call__.1']
    #allocation37 [shape = 'u8[6144]{0}', space=vmem, size = 0x1800, scoped, tag = 'input window, operand 32, single buffered']
    #allocation38 [shape = 'u8[6144]{0}', space=vmem, size = 0x1800, scoped, tag = 'input window, operand 33, single buffered']
    #allocation39 [shape = 's32[1]{0}', space=sflag, size = 0x4, scoped, tag = 'scoped memory for a_call__.1']
    #allocation40 [shape = 'u8[61440]{0}', space=vmem, size = 0xf000, scoped, tag = 'input window, operand 34, single buffered']
    #allocation41 [shape = 'u8[61440]{0}', space=vmem, size = 0xf000, scoped, tag = 'input window, operand 35, single buffered']
    #allocation42 [shape = 's32[1]{0}', space=sflag, size = 0x4, scoped, tag = 'scoped memory for a_call__.1']
    #allocation43 [shape = 'u8[61440]{0}', space=vmem, size = 0xf000, scoped, tag = 'input window, operand 36, single buffered']
    #allocation44 [shape = 'u8[61440]{0}', space=vmem, size = 0xf000, scoped, tag = 'input window, operand 37, single buffered']
    #allocation45 [shape = 's32[1]{0}', space=sflag, size = 0x4, scoped, tag = 'scoped memory for a_call__.1']
    #allocation46 [shape = 'u8[61440]{0}', space=vmem, size = 0xf000, scoped, tag = 'input window, operand 38, single buffered']
    #allocation47 [shape = 'u8[12288]{0}', space=vmem, size = 0x3000, scoped, tag = 'input window, operand 39, single buffered']
    #allocation48 [shape = 's32[1]{0}', space=sflag, size = 0x4, scoped, tag = 'scoped memory for a_call__.1']
    #allocation49 [shape = 'u8[12288]{0}', space=vmem, size = 0x3000, scoped, tag = 'input window, operand 40, single buffered']
    #allocation50 [shape = 'u8[40960]{0}', space=vmem, size = 0xa000, scoped, tag = 'input window, operand 41, single buffered']
    #allocation51 [shape = 's32[1]{0}', space=sflag, size = 0x4, scoped, tag = 'scoped memory for a_call__.1']
    #allocation52 [shape = 'u8[81920]{0}', space=vmem, size = 0x14000, scoped, tag = 'input window, operand 42, single buffered']
    #allocation53 [shape = 'u8[20480]{0}', space=vmem, size = 0x5000, scoped, tag = 'input window, operand 43, single buffered']
    #allocation54 [shape = 's32[1]{0}', space=sflag, size = 0x4, scoped, tag = 'scoped memory for a_call__.1']
    #allocation55 [shape = 'u8[20480]{0}', space=vmem, size = 0x5000, scoped, tag = 'input window, operand 44, single buffered']
    #allocation56 [shape = 'u8[20480]{0}', space=vmem, size = 0x5000, scoped, tag = 'input window, operand 45, single buffered']
    #allocation57 [shape = 's32[1]{0}', space=sflag, size = 0x4, scoped, tag = 'scoped memory for a_call__.1']
    #allocation58 [shape = 'u8[512]{0}', space=vmem, size = 0x400, scoped, tag = 'input window, operand 46, single buffered']
    #allocation59 [shape = 'u8[20480]{0}', space=vmem, size = 0x5000, scoped, tag = 'input window, operand 48, single buffered']
    #allocation60 [shape = 's32[1]{0}', space=sflag, size = 0x4, scoped, tag = 'scoped memory for a_call__.1']
    #allocation61 [shape = 'u8[20480]{0}', space=vmem, size = 0x5000, scoped, tag = 'input window, operand 49, single buffered']
    #allocation62 [shape = 'u8[20480]{0}', space=vmem, size = 0x5000, scoped, tag = 'input window, operand 50, single buffered']
    #allocation63 [shape = 's32[1]{0}', space=sflag, size = 0x4, scoped, tag = 'scoped memory for a_call__.1']
    #allocation64 [shape = 'u8[20480]{0}', space=vmem, size = 0x5000, scoped, tag = 'input window, operand 51, single buffered']
    #allocation65 [shape = 'u8[20480]{0}', space=vmem, size = 0x5000, scoped, tag = 'input window, operand 52, single buffered']
    #allocation66 [shape = 's32[1]{0}', space=sflag, size = 0x4, scoped, tag = 'scoped memory for a_call__.1']
    #allocation67 [shape = 'u8[512]{0}', space=vmem, size = 0x400, scoped, tag = 'input window, operand 53, single buffered']
    %127 = vsyncpa [#allocation7], 0
    %128 = vsyncpa [#allocation9], 0
    %129 = vsyncpa [#allocation12], 0
    %130 = vsyncpa [#allocation15], 0
    %131 = vsyncpa [#allocation18], 0
    %132 = vsyncpa [#allocation21], 0
    %133 = vsyncpa [#allocation24], 0
    %134 = vsyncpa [#allocation27], 0
    %135 = vsyncpa [#allocation30], 0
    %136 = vsyncpa [#allocation33], 0
    %137 = vsyncpa [#allocation36], 0
    %138 = vsyncpa [#allocation39], 0
    %139 = vsyncpa [#allocation42], 0
    %140 = vsyncpa [#allocation45], 0
    %141 = vsyncpa [#allocation48], 0
    %142 = vsyncpa [#allocation51], 0
    %143 = vsyncpa [#allocation54], 0
    %144 = vsyncpa [#allocation57], 0
    %145 = vsyncpa [#allocation60], 0
    %146 = vsyncpa [#allocation63], 0
    %147 = vsyncpa [#allocation66], 0
    // Predicated region
    $region2: #{a_call__.1} parent=1 // pred_check
      _
    $region3: #{a_call__.1} parent=1 // pred_check_branch
      %149 = sbr.rel (0) target = $region5
    $region4: #{a_call__.1} parent=1 // pred_region
      _
    $region5: #{a_call__.1} parent=1 // pred_fallthru
      _
    // Predicated region
    $region6: #{a_call__.1} parent=1 // pred_check
      _
    $region7: #{a_call__.1} parent=1 // pred_check_branch
      %151 = sbr.rel (0) target = $region9
    $region8: #{a_call__.1} parent=1 // pred_region
      _
    $region9: #{a_call__.1} parent=1 // pred_fallthru
      _
    // Predicated region
    $region10: #{a_call__.1} parent=1 // pred_check
      _
    $region11: #{a_call__.1} parent=1 // pred_check_branch
      %153 = sbr.rel (0) target = $region13
    $region12: #{a_call__.1} parent=1 // pred_region
      _
    $region13: #{a_call__.1} parent=1 // pred_fallthru
      _
    // Predicated region
    $region14: #{a_call__.1} parent=1 // pred_check
      _
    $region15: #{a_call__.1} parent=1 // pred_check_branch
      %155 = sbr.rel (0) target = $region17
    $region16: #{a_call__.1} parent=1 // pred_region
      _
    $region17: #{a_call__.1} parent=1 // pred_fallthru
      _
    // Predicated region
    $region18: #{a_call__.1} parent=1 // pred_check
      _
    $region19: #{a_call__.1} parent=1 // pred_check_branch
      %157 = sbr.rel (0) target = $region21
    $region20: #{a_call__.1} parent=1 // pred_region
      _
    $region21: #{a_call__.1} parent=1 // pred_fallthru
      _
    // Predicated region
    $region22: #{a_call__.1} parent=1 // pred_check
      _
    $region23: #{a_call__.1} parent=1 // pred_check_branch
      %159 = sbr.rel (0) target = $region25
    $region24: #{a_call__.1} parent=1 // pred_region
      _
    $region25: #{a_call__.1} parent=1 // pred_fallthru
      _
    // Predicated region
    $region26: #{a_call__.1} parent=1 // pred_check
      _
    $region27: #{a_call__.1} parent=1 // pred_check_branch
      %161 = sbr.rel (0) target = $region29
    $region28: #{a_call__.1} parent=1 // pred_region
      %s163 = ssub.s32 640, 640
      %164 = vsyncadd [#allocation7], %s163
      %s165 = sshll.u32 [#allocation6], 4
      %s166 = int_to_ptr.vmem [resolvable:$true] %s165
      %171 = dma.hbm_to_vmem [thread:$0]  %s13, 640, %s166, [#allocation7], 128, 128, 8
    $region29: #{a_call__.1} parent=1 // pred_fallthru
      _
    // Predicated region
    $region30: #{a_call__.1} parent=1 // pred_check
      _
    $region31: #{a_call__.1} parent=1 // pred_check_branch
      %173 = sbr.rel (0) target = $region33
    $region32: #{a_call__.1} parent=1 // pred_region
      %s175 = ssub.s32 640, 640
      %176 = vsyncadd [#allocation9], %s175
      %s177 = sshll.u32 [#allocation8], 4
      %s178 = int_to_ptr.vmem [resolvable:$true] %s177
      %183 = dma.hbm_to_vmem [thread:$0]  %s15, 640, %s178, [#allocation9], 128, 128, 8
    $region33: #{a_call__.1} parent=1 // pred_fallthru
      _
    // Predicated region
    $region34: #{a_call__.1} parent=1 // pred_check
      _
    $region35: #{a_call__.1} parent=1 // pred_check_branch
      %185 = sbr.rel (0) target = $region37
    $region36: #{a_call__.1} parent=1 // pred_region
      %s187 = ssub.s32 640, 640
      %188 = vsyncadd [#allocation9], %s187
      %s189 = sshll.u32 [#allocation10], 4
      %s190 = int_to_ptr.vmem [resolvable:$true] %s189
      %195 = dma.hbm_to_vmem [thread:$0]  %s17, 640, %s190, [#allocation9], 128, 128, 8
    $region37: #{a_call__.1} parent=1 // pred_fallthru
      _
    // Predicated region
    $region38: #{a_call__.1} parent=1 // pred_check
      _
    $region39: #{a_call__.1} parent=1 // pred_check_branch
      %197 = sbr.rel (0) target = $region41
    $region40: #{a_call__.1} parent=1 // pred_region
      _
    $region41: #{a_call__.1} parent=1 // pred_fallthru
      _
    // Predicated region
    $region42: #{a_call__.1} parent=1 // pred_check
      _
    $region43: #{a_call__.1} parent=1 // pred_check_branch
      %199 = sbr.rel (0) target = $region45
    $region44: #{a_call__.1} parent=1 // pred_region
      _
    $region45: #{a_call__.1} parent=1 // pred_fallthru
      _
    // Predicated region
    $region46: #{a_call__.1} parent=1 // pred_check
      _
    $region47: #{a_call__.1} parent=1 // pred_check_branch
      %201 = sbr.rel (0) target = $region49
    $region48: #{a_call__.1} parent=1 // pred_region
      %s203 = ssub.s32 640, 640
      %204 = vsyncadd [#allocation12], %s203
      %s205 = sshll.u32 [#allocation11], 4
      %s206 = int_to_ptr.vmem [resolvable:$true] %s205
      %211 = dma.hbm_to_vmem [thread:$0]  %s23, 640, %s206, [#allocation12], 128, 128, 8
    $region49: #{a_call__.1} parent=1 // pred_fallthru
      _
    // Predicated region
    $region50: #{a_call__.1} parent=1 // pred_check
      _
    $region51: #{a_call__.1} parent=1 // pred_check_branch
      %213 = sbr.rel (0) target = $region53
    $region52: #{a_call__.1} parent=1 // pred_region
      _
    $region53: #{a_call__.1} parent=1 // pred_fallthru
      _
    // Predicated region
    $region54: #{a_call__.1} parent=1 // pred_check
      _
    $region55: #{a_call__.1} parent=1 // pred_check_branch
      %215 = sbr.rel (0) target = $region57
    $region56: #{a_call__.1} parent=1 // pred_region
      %s217 = ssub.s32 640, 640
      %218 = vsyncadd [#allocation12], %s217
      %s219 = sshll.u32 [#allocation13], 4
      %s220 = int_to_ptr.vmem [resolvable:$true] %s219
      %225 = dma.hbm_to_vmem [thread:$0]  %s27, 640, %s220, [#allocation12], 128, 128, 8
    $region57: #{a_call__.1} parent=1 // pred_fallthru
      _
    // Predicated region
    $region58: #{a_call__.1} parent=1 // pred_check
      _
    $region59: #{a_call__.1} parent=1 // pred_check_branch
      %227 = sbr.rel (0) target = $region61
    $region60: #{a_call__.1} parent=1 // pred_region
      %s229 = ssub.s32 64, 64
      %230 = vsyncadd [#allocation15], %s229
      %s232 = sshll.u32 [#allocation14], 4
      %s233 = int_to_ptr.vmem [resolvable:$true] %s232
      %235 = dma.hbm_to_vmem [thread:$0]  %s29, 64, %s233, [#allocation15]
    $region61: #{a_call__.1} parent=1 // pred_fallthru
      _
    // Predicated region
    $region62: #{a_call__.1} parent=1 // pred_check
      _
    $region63: #{a_call__.1} parent=1 // pred_check_branch
      %237 = sbr.rel (0) target = $region65
    $region64: #{a_call__.1} parent=1 // pred_region
      %s239 = ssub.s32 640, 640
      %240 = vsyncadd [#allocation15], %s239
      %s241 = sshll.u32 [#allocation16], 4
      %s242 = int_to_ptr.vmem [resolvable:$true] %s241
      %247 = dma.hbm_to_vmem [thread:$0]  %s31, 640, %s242, [#allocation15], 128, 128, 8
    $region65: #{a_call__.1} parent=1 // pred_fallthru
      _
    // Predicated region
    $region66: #{a_call__.1} parent=1 // pred_check
      _
    $region67: #{a_call__.1} parent=1 // pred_check_branch
      %249 = sbr.rel (0) target = $region69
    $region68: #{a_call__.1} parent=1 // pred_region
      %s251 = ssub.s32 640, 640
      %252 = vsyncadd [#allocation18], %s251
      %s253 = sshll.u32 [#allocation17], 4
      %s254 = int_to_ptr.vmem [resolvable:$true] %s253
      %259 = dma.hbm_to_vmem [thread:$0]  %s33, 640, %s254, [#allocation18], 128, 128, 8
    $region69: #{a_call__.1} parent=1 // pred_fallthru
      _
    // Predicated region
    $region70: #{a_call__.1} parent=1 // pred_check
      _
    $region71: #{a_call__.1} parent=1 // pred_check_branch
      %261 = sbr.rel (0) target = $region73
    $region72: #{a_call__.1} parent=1 // pred_region
      %s263 = ssub.s32 640, 640
      %264 = vsyncadd [#allocation18], %s263
      %s265 = sshll.u32 [#allocation19], 4
      %s266 = int_to_ptr.vmem [resolvable:$true] %s265
      %271 = dma.hbm_to_vmem [thread:$0]  %s35, 640, %s266, [#allocation18], 128, 128, 8
    $region73: #{a_call__.1} parent=1 // pred_fallthru
      _
    // Predicated region
    $region74: #{a_call__.1} parent=1 // pred_check
      _
    $region75: #{a_call__.1} parent=1 // pred_check_branch
      %273 = sbr.rel (0) target = $region77
    $region76: #{a_call__.1} parent=1 // pred_region
      %s275 = ssub.s32 640, 640
      %276 = vsyncadd [#allocation21], %s275
      %s277 = sshll.u32 [#allocation20], 4
      %s278 = int_to_ptr.vmem [resolvable:$true] %s277
      %283 = dma.hbm_to_vmem [thread:$0]  %s37, 640, %s278, [#allocation21], 128, 128, 8
    $region77: #{a_call__.1} parent=1 // pred_fallthru
      _
    // Predicated region
    $region78: #{a_call__.1} parent=1 // pred_check
      _
    $region79: #{a_call__.1} parent=1 // pred_check_branch
      %285 = sbr.rel (0) target = $region81
    $region80: #{a_call__.1} parent=1 // pred_region
      %s287 = ssub.s32 16, 16
      %288 = vsyncadd [#allocation21], %s287
      %s290 = sshll.u32 [#allocation22], 4
      %s291 = int_to_ptr.vmem [resolvable:$true] %s290
      %293 = dma.hbm_to_vmem [thread:$0]  %s39, 16, %s291, [#allocation21]
    $region81: #{a_call__.1} parent=1 // pred_fallthru
      _
    // Predicated region
    $region82: #{a_call__.1} parent=1 // pred_check
      _
    $region83: #{a_call__.1} parent=1 // pred_check_branch
      %295 = sbr.rel (0) target = $region85
    $region84: #{a_call__.1} parent=1 // pred_region
      _
    $region85: #{a_call__.1} parent=1 // pred_fallthru
      _
    // Predicated region
    $region86: #{a_call__.1} parent=1 // pred_check
      _
    $region87: #{a_call__.1} parent=1 // pred_check_branch
      %297 = sbr.rel (0) target = $region89
    $region88: #{a_call__.1} parent=1 // pred_region
      %s299 = ssub.s32 640, 640
      %300 = vsyncadd [#allocation24], %s299
      %s301 = sshll.u32 [#allocation23], 4
      %s302 = int_to_ptr.vmem [resolvable:$true] %s301
      %307 = dma.hbm_to_vmem [thread:$0]  %s43, 640, %s302, [#allocation24], 128, 128, 8
    $region89: #{a_call__.1} parent=1 // pred_fallthru
      _
    // Predicated region
    $region90: #{a_call__.1} parent=1 // pred_check
      _
    $region91: #{a_call__.1} parent=1 // pred_check_branch
      %309 = sbr.rel (0) target = $region93
    $region92: #{a_call__.1} parent=1 // pred_region
      %s311 = ssub.s32 640, 640
      %312 = vsyncadd [#allocation24], %s311
      %s313 = sshll.u32 [#allocation25], 4
      %s314 = int_to_ptr.vmem [resolvable:$true] %s313
      %319 = dma.hbm_to_vmem [thread:$0]  %s45, 640, %s314, [#allocation24], 128, 128, 8
    $region93: #{a_call__.1} parent=1 // pred_fallthru
      _
    // Predicated region
    $region94: #{a_call__.1} parent=1 // pred_check
      _
    $region95: #{a_call__.1} parent=1 // pred_check_branch
      %321 = sbr.rel (0) target = $region97
    $region96: #{a_call__.1} parent=1 // pred_region
      %s323 = ssub.s32 640, 640
      %324 = vsyncadd [#allocation27], %s323
      %s325 = sshll.u32 [#allocation26], 4
      %s326 = int_to_ptr.vmem [resolvable:$true] %s325
      %331 = dma.hbm_to_vmem [thread:$0]  %s47, 640, %s326, [#allocation27], 128, 128, 8
    $region97: #{a_call__.1} parent=1 // pred_fallthru
      _
    // Predicated region
    $region98: #{a_call__.1} parent=1 // pred_check
      _
    $region99: #{a_call__.1} parent=1 // pred_check_branch
      %333 = sbr.rel (0) target = $region101
    $region100: #{a_call__.1} parent=1 // pred_region
      %s335 = ssub.s32 640, 640
      %336 = vsyncadd [#allocation27], %s335
      %s337 = sshll.u32 [#allocation28], 4
      %s338 = int_to_ptr.vmem [resolvable:$true] %s337
      %343 = dma.hbm_to_vmem [thread:$0]  %s49, 640, %s338, [#allocation27], 128, 128, 8
    $region101: #{a_call__.1} parent=1 // pred_fallthru
      _
    // Predicated region
    $region102: #{a_call__.1} parent=1 // pred_check
      _
    $region103: #{a_call__.1} parent=1 // pred_check_branch
      %345 = sbr.rel (0) target = $region105
    $region104: #{a_call__.1} parent=1 // pred_region
      _
    $region105: #{a_call__.1} parent=1 // pred_fallthru
      _
    // Predicated region
    $region106: #{a_call__.1} parent=1 // pred_check
      _
    $region107: #{a_call__.1} parent=1 // pred_check_branch
      %347 = sbr.rel (0) target = $region109
    $region108: #{a_call__.1} parent=1 // pred_region
      %s349 = ssub.s32 32, 32
      %350 = vsyncadd [#allocation30], %s349
      %s352 = sshll.u32 [#allocation29], 4
      %s353 = int_to_ptr.vmem [resolvable:$true] %s352
      %355 = dma.hbm_to_vmem [thread:$0]  %s53, 32, %s353, [#allocation30]
    $region109: #{a_call__.1} parent=1 // pred_fallthru
      _
    // Predicated region
    $region110: #{a_call__.1} parent=1 // pred_check
      _
    $region111: #{a_call__.1} parent=1 // pred_check_branch
      %357 = sbr.rel (0) target = $region113
    $region112: #{a_call__.1} parent=1 // pred_region
      %s359 = ssub.s32 3840, 3840
      %360 = vsyncadd [#allocation30], %s359
      %s361 = sshll.u32 [#allocation31], 4
      %s362 = int_to_ptr.vmem [resolvable:$true] %s361
      %367 = dma.hbm_to_vmem [thread:$0]  %s55, 3840, %s362, [#allocation30], 128, 128, 8
    $region113: #{a_call__.1} parent=1 // pred_fallthru
      _
    // Predicated region
    $region114: #{a_call__.1} parent=1 // pred_check
      _
    $region115: #{a_call__.1} parent=1 // pred_check_branch
      %369 = sbr.rel (0) target = $region117
    $region116: #{a_call__.1} parent=1 // pred_region
      _
    $region117: #{a_call__.1} parent=1 // pred_fallthru
      _
    // Predicated region
    $region118: #{a_call__.1} parent=1 // pred_check
      _
    $region119: #{a_call__.1} parent=1 // pred_check_branch
      %371 = sbr.rel (0) target = $region121
    $region120: #{a_call__.1} parent=1 // pred_region
      %s373 = ssub.s32 1920, 1920
      %374 = vsyncadd [#allocation33], %s373
      %s375 = sshll.u32 [#allocation32], 4
      %s376 = int_to_ptr.vmem [resolvable:$true] %s375
      %381 = dma.hbm_to_vmem [thread:$0]  %s59, 1920, %s376, [#allocation33], 128, 128, 8
    $region121: #{a_call__.1} parent=1 // pred_fallthru
      _
    // Predicated region
    $region122: #{a_call__.1} parent=1 // pred_check
      _
    $region123: #{a_call__.1} parent=1 // pred_check_branch
      %383 = sbr.rel (0) target = $region125
    $region124: #{a_call__.1} parent=1 // pred_region
      %s385 = ssub.s32 1920, 1920
      %386 = vsyncadd [#allocation33], %s385
      %s387 = sshll.u32 [#allocation34], 4
      %s388 = int_to_ptr.vmem [resolvable:$true] %s387
      %393 = dma.hbm_to_vmem [thread:$0]  %s61, 1920, %s388, [#allocation33], 128, 128, 8
    $region125: #{a_call__.1} parent=1 // pred_fallthru
      _
    // Predicated region
    $region126: #{a_call__.1} parent=1 // pred_check
      _
    $region127: #{a_call__.1} parent=1 // pred_check_branch
      %395 = sbr.rel (0) target = $region129
    $region128: #{a_call__.1} parent=1 // pred_region
      %s397 = ssub.s32 1920, 1920
      %398 = vsyncadd [#allocation36], %s397
      %s399 = sshll.u32 [#allocation35], 4
      %s400 = int_to_ptr.vmem [resolvable:$true] %s399
      %405 = dma.hbm_to_vmem [thread:$0]  %s63, 1920, %s400, [#allocation36], 128, 128, 8
    $region129: #{a_call__.1} parent=1 // pred_fallthru
      _
    // Predicated region
    $region130: #{a_call__.1} parent=1 // pred_check
      _
    $region131: #{a_call__.1} parent=1 // pred_check_branch
      %407 = sbr.rel (0) target = $region133
    $region132: #{a_call__.1} parent=1 // pred_region
      %s409 = ssub.s32 192, 192
      %410 = vsyncadd [#allocation36], %s409
      %s411 = sshll.u32 [#allocation37], 4
      %s412 = int_to_ptr.vmem [resolvable:$true] %s411
      %417 = dma.hbm_to_vmem [thread:$0]  %s65, 192, %s412, [#allocation36], 64, 64, 4
    $region133: #{a_call__.1} parent=1 // pred_fallthru
      _
    // Predicated region
    $region134: #{a_call__.1} parent=1 // pred_check
      _
    $region135: #{a_call__.1} parent=1 // pred_check_branch
      %419 = sbr.rel (0) target = $region137
    $region136: #{a_call__.1} parent=1 // pred_region
      %s421 = ssub.s32 192, 192
      %422 = vsyncadd [#allocation39], %s421
      %s423 = sshll.u32 [#allocation38], 4
      %s424 = int_to_ptr.vmem [resolvable:$true] %s423
      %429 = dma.hbm_to_vmem [thread:$0]  %s67, 192, %s424, [#allocation39], 64, 64, 4
    $region137: #{a_call__.1} parent=1 // pred_fallthru
      _
    // Predicated region
    $region138: #{a_call__.1} parent=1 // pred_check
      _
    $region139: #{a_call__.1} parent=1 // pred_check_branch
      %431 = sbr.rel (0) target = $region141
    $region140: #{a_call__.1} parent=1 // pred_region
      %s433 = ssub.s32 1920, 1920
      %434 = vsyncadd [#allocation39], %s433
      %s435 = sshll.u32 [#allocation40], 4
      %s436 = int_to_ptr.vmem [resolvable:$true] %s435
      %441 = dma.hbm_to_vmem [thread:$0]  %s69, 1920, %s436, [#allocation39], 128, 128, 8
    $region141: #{a_call__.1} parent=1 // pred_fallthru
      _
    // Predicated region
    $region142: #{a_call__.1} parent=1 // pred_check
      _
    $region143: #{a_call__.1} parent=1 // pred_check_branch
      %443 = sbr.rel (0) target = $region145
    $region144: #{a_call__.1} parent=1 // pred_region
      %s445 = ssub.s32 1920, 1920
      %446 = vsyncadd [#allocation42], %s445
      %s447 = sshll.u32 [#allocation41], 4
      %s448 = int_to_ptr.vmem [resolvable:$true] %s447
      %453 = dma.hbm_to_vmem [thread:$0]  %s71, 1920, %s448, [#allocation42], 128, 128, 8
    $region145: #{a_call__.1} parent=1 // pred_fallthru
      _
    // Predicated region
    $region146: #{a_call__.1} parent=1 // pred_check
      _
    $region147: #{a_call__.1} parent=1 // pred_check_branch
      %455 = sbr.rel (0) target = $region149
    $region148: #{a_call__.1} parent=1 // pred_region
      %s457 = ssub.s32 1920, 1920
      %458 = vsyncadd [#allocation42], %s457
      %s459 = sshll.u32 [#allocation43], 4
      %s460 = int_to_ptr.vmem [resolvable:$true] %s459
      %465 = dma.hbm_to_vmem [thread:$0]  %s73, 1920, %s460, [#allocation42], 128, 128, 8
    $region149: #{a_call__.1} parent=1 // pred_fallthru
      _
    // Predicated region
    $region150: #{a_call__.1} parent=1 // pred_check
      _
    $region151: #{a_call__.1} parent=1 // pred_check_branch
      %467 = sbr.rel (0) target = $region153
    $region152: #{a_call__.1} parent=1 // pred_region
      %s469 = ssub.s32 1920, 1920
      %470 = vsyncadd [#allocation45], %s469
      %s471 = sshll.u32 [#allocation44], 4
      %s472 = int_to_ptr.vmem [resolvable:$true] %s471
      %477 = dma.hbm_to_vmem [thread:$0]  %s75, 1920, %s472, [#allocation45], 128, 128, 8
    $region153: #{a_call__.1} parent=1 // pred_fallthru
      _
    // Predicated region
    $region154: #{a_call__.1} parent=1 // pred_check
      _
    $region155: #{a_call__.1} parent=1 // pred_check_branch
      %479 = sbr.rel (0) target = $region157
    $region156: #{a_call__.1} parent=1 // pred_region
      %s481 = ssub.s32 1920, 1920
      %482 = vsyncadd [#allocation45], %s481
      %s483 = sshll.u32 [#allocation46], 4
      %s484 = int_to_ptr.vmem [resolvable:$true] %s483
      %489 = dma.hbm_to_vmem [thread:$0]  %s77, 1920, %s484, [#allocation45], 128, 128, 8
    $region157: #{a_call__.1} parent=1 // pred_fallthru
      _
    // Predicated region
    $region158: #{a_call__.1} parent=1 // pred_check
      _
    $region159: #{a_call__.1} parent=1 // pred_check_branch
      %491 = sbr.rel (0) target = $region161
    $region160: #{a_call__.1} parent=1 // pred_region
      %s493 = ssub.s32 384, 384
      %494 = vsyncadd [#allocation48], %s493
      %s495 = sshll.u32 [#allocation47], 4
      %s496 = int_to_ptr.vmem [resolvable:$true] %s495
      %501 = dma.hbm_to_vmem [thread:$0]  %s79, 384, %s496, [#allocation48], 128, 128, 8
    $region161: #{a_call__.1} parent=1 // pred_fallthru
      _
    // Predicated region
    $region162: #{a_call__.1} parent=1 // pred_check
      _
    $region163: #{a_call__.1} parent=1 // pred_check_branch
      %503 = sbr.rel (0) target = $region165
    $region164: #{a_call__.1} parent=1 // pred_region
      %s505 = ssub.s32 384, 384
      %506 = vsyncadd [#allocation48], %s505
      %s507 = sshll.u32 [#allocation49], 4
      %s508 = int_to_ptr.vmem [resolvable:$true] %s507
      %513 = dma.hbm_to_vmem [thread:$0]  %s81, 384, %s508, [#allocation48], 128, 128, 8
    $region165: #{a_call__.1} parent=1 // pred_fallthru
      _
    // Predicated region
    $region166: #{a_call__.1} parent=1 // pred_check
      _
    $region167: #{a_call__.1} parent=1 // pred_check_branch
      %515 = sbr.rel (0) target = $region169
    $region168: #{a_call__.1} parent=1 // pred_region
      %s517 = ssub.s32 1280, 1280
      %518 = vsyncadd [#allocation51], %s517
      %s519 = sshll.u32 [#allocation50], 4
      %s520 = int_to_ptr.vmem [resolvable:$true] %s519
      %525 = dma.hbm_to_vmem [thread:$0]  %s83, 1280, %s520, [#allocation51], 128, 128, 8
    $region169: #{a_call__.1} parent=1 // pred_fallthru
      _
    // Predicated region
    $region170: #{a_call__.1} parent=1 // pred_check
      _
    $region171: #{a_call__.1} parent=1 // pred_check_branch
      %527 = sbr.rel (0) target = $region173
    $region172: #{a_call__.1} parent=1 // pred_region
      %s529 = ssub.s32 2560, 2560
      %530 = vsyncadd [#allocation51], %s529
      %s531 = sshll.u32 [#allocation52], 4
      %s532 = int_to_ptr.vmem [resolvable:$true] %s531
      %537 = dma.hbm_to_vmem [thread:$0]  %s85, 2560, %s532, [#allocation51], 128, 128, 8
    $region173: #{a_call__.1} parent=1 // pred_fallthru
      _
    // Predicated region
    $region174: #{a_call__.1} parent=1 // pred_check
      _
    $region175: #{a_call__.1} parent=1 // pred_check_branch
      %539 = sbr.rel (0) target = $region177
    $region176: #{a_call__.1} parent=1 // pred_region
      %s541 = ssub.s32 640, 640
      %542 = vsyncadd [#allocation54], %s541
      %s543 = sshll.u32 [#allocation53], 4
      %s544 = int_to_ptr.vmem [resolvable:$true] %s543
      %549 = dma.hbm_to_vmem [thread:$0]  %s87, 640, %s544, [#allocation54], 128, 128, 8
    $region177: #{a_call__.1} parent=1 // pred_fallthru
      _
    // Predicated region
    $region178: #{a_call__.1} parent=1 // pred_check
      _
    $region179: #{a_call__.1} parent=1 // pred_check_branch
      %551 = sbr.rel (0) target = $region181
    $region180: #{a_call__.1} parent=1 // pred_region
      %s553 = ssub.s32 640, 640
      %554 = vsyncadd [#allocation54], %s553
      %s555 = sshll.u32 [#allocation55], 4
      %s556 = int_to_ptr.vmem [resolvable:$true] %s555
      %561 = dma.hbm_to_vmem [thread:$0]  %s89, 640, %s556, [#allocation54], 128, 128, 8
    $region181: #{a_call__.1} parent=1 // pred_fallthru
      _
    // Predicated region
    $region182: #{a_call__.1} parent=1 // pred_check
      _
    $region183: #{a_call__.1} parent=1 // pred_check_branch
      %563 = sbr.rel (0) target = $region185
    $region184: #{a_call__.1} parent=1 // pred_region
      %s565 = ssub.s32 640, 640
      %566 = vsyncadd [#allocation57], %s565
      %s567 = sshll.u32 [#allocation56], 4
      %s568 = int_to_ptr.vmem [resolvable:$true] %s567
      %573 = dma.hbm_to_vmem [thread:$0]  %s91, 640, %s568, [#allocation57], 128, 128, 8
    $region185: #{a_call__.1} parent=1 // pred_fallthru
      _
    // Predicated region
    $region186: #{a_call__.1} parent=1 // pred_check
      _
    $region187: #{a_call__.1} parent=1 // pred_check_branch
      %575 = sbr.rel (0) target = $region189
    $region188: #{a_call__.1} parent=1 // pred_region
      %s577 = ssub.s32 16, 16
      %578 = vsyncadd [#allocation57], %s577
      %s580 = sshll.u32 [#allocation58], 4
      %s581 = int_to_ptr.vmem [resolvable:$true] %s580
      %583 = dma.hbm_to_vmem [thread:$0]  %s93, 16, %s581, [#allocation57]
    $region189: #{a_call__.1} parent=1 // pred_fallthru
      _
    // Predicated region
    $region190: #{a_call__.1} parent=1 // pred_check
      _
    $region191: #{a_call__.1} parent=1 // pred_check_branch
      %585 = sbr.rel (0) target = $region193
    $region192: #{a_call__.1} parent=1 // pred_region
      _
    $region193: #{a_call__.1} parent=1 // pred_fallthru
      _
    // Predicated region
    $region194: #{a_call__.1} parent=1 // pred_check
      _
    $region195: #{a_call__.1} parent=1 // pred_check_branch
      %587 = sbr.rel (0) target = $region197
    $region196: #{a_call__.1} parent=1 // pred_region
      %s589 = ssub.s32 640, 640
      %590 = vsyncadd [#allocation60], %s589
      %s591 = sshll.u32 [#allocation59], 4
      %s592 = int_to_ptr.vmem [resolvable:$true] %s591
      %597 = dma.hbm_to_vmem [thread:$0]  %s97, 640, %s592, [#allocation60], 128, 128, 8
    $region197: #{a_call__.1} parent=1 // pred_fallthru
      _
    // Predicated region
    $region198: #{a_call__.1} parent=1 // pred_check
      _
    $region199: #{a_call__.1} parent=1 // pred_check_branch
      %599 = sbr.rel (0) target = $region201
    $region200: #{a_call__.1} parent=1 // pred_region
      %s601 = ssub.s32 640, 640
      %602 = vsyncadd [#allocation60], %s601
      %s603 = sshll.u32 [#allocation61], 4
      %s604 = int_to_ptr.vmem [resolvable:$true] %s603
      %609 = dma.hbm_to_vmem [thread:$0]  %s99, 640, %s604, [#allocation60], 128, 128, 8
    $region201: #{a_call__.1} parent=1 // pred_fallthru
      _
    // Predicated region
    $region202: #{a_call__.1} parent=1 // pred_check
      _
    $region203: #{a_call__.1} parent=1 // pred_check_branch
      %611 = sbr.rel (0) target = $region205
    $region204: #{a_call__.1} parent=1 // pred_region
      %s613 = ssub.s32 640, 640
      %614 = vsyncadd [#allocation63], %s613
      %s615 = sshll.u32 [#allocation62], 4
      %s616 = int_to_ptr.vmem [resolvable:$true] %s615
      %621 = dma.hbm_to_vmem [thread:$0]  %s101, 640, %s616, [#allocation63], 128, 128, 8
    $region205: #{a_call__.1} parent=1 // pred_fallthru
      _
    // Predicated region
    $region206: #{a_call__.1} parent=1 // pred_check
      _
    $region207: #{a_call__.1} parent=1 // pred_check_branch
      %623 = sbr.rel (0) target = $region209
    $region208: #{a_call__.1} parent=1 // pred_region
      %s625 = ssub.s32 640, 640
      %626 = vsyncadd [#allocation63], %s625
      %s627 = sshll.u32 [#allocation64], 4
      %s628 = int_to_ptr.vmem [resolvable:$true] %s627
      %633 = dma.hbm_to_vmem [thread:$0]  %s103, 640, %s628, [#allocation63], 128, 128, 8
    $region209: #{a_call__.1} parent=1 // pred_fallthru
      _
    // Predicated region
    $region210: #{a_call__.1} parent=1 // pred_check
      _
    $region211: #{a_call__.1} parent=1 // pred_check_branch
      %635 = sbr.rel (0) target = $region213
    $region212: #{a_call__.1} parent=1 // pred_region
      %s637 = ssub.s32 640, 640
      %638 = vsyncadd [#allocation66], %s637
      %s639 = sshll.u32 [#allocation65], 4
      %s640 = int_to_ptr.vmem [resolvable:$true] %s639
      %645 = dma.hbm_to_vmem [thread:$0]  %s105, 640, %s640, [#allocation66], 128, 128, 8
    $region213: #{a_call__.1} parent=1 // pred_fallthru
      _
    // Predicated region
    $region214: #{a_call__.1} parent=1 // pred_check
      _
    $region215: #{a_call__.1} parent=1 // pred_check_branch
      %647 = sbr.rel (0) target = $region217
    $region216: #{a_call__.1} parent=1 // pred_region
      %s649 = ssub.s32 16, 16
      %650 = vsyncadd [#allocation66], %s649
      %s652 = sshll.u32 [#allocation67], 4
      %s653 = int_to_ptr.vmem [resolvable:$true] %s652
      %655 = dma.hbm_to_vmem [thread:$0]  %s107, 16, %s653, [#allocation66]
    $region217: #{a_call__.1} parent=1 // pred_fallthru
      _
    // Predicated region
    $region218: #{a_call__.1} parent=1 // pred_check
      _
    $region219: #{a_call__.1} parent=1 // pred_check_branch
      %657 = sbr.rel (0) target = $region221
    $region220: #{a_call__.1} parent=1 // pred_region
      _
    $region221: #{a_call__.1} parent=1 // pred_fallthru
      _
    // Predicated region
    $region222: #{a_call__.1} parent=1 // pred_check
      _
    $region223: #{a_call__.1} parent=1 // pred_check_branch
      %659 = sbr.rel (0) target = $region225
    $region224: #{a_call__.1} parent=1 // pred_region
      %660 = dma.done [#allocation7], 640
    $region225: #{a_call__.1} parent=1 // pred_fallthru
      _
    // Predicated region
    $region226: #{a_call__.1} parent=1 // pred_check
      _
    $region227: #{a_call__.1} parent=1 // pred_check_branch
      %662 = sbr.rel (0) target = $region229
    $region228: #{a_call__.1} parent=1 // pred_region
      %663 = dma.done [#allocation9], 640
    $region229: #{a_call__.1} parent=1 // pred_fallthru
      _
    // Predicated region
    $region230: #{a_call__.1} parent=1 // pred_check
      _
    $region231: #{a_call__.1} parent=1 // pred_check_branch
      %665 = sbr.rel (0) target = $region233
    $region232: #{a_call__.1} parent=1 // pred_region
      %666 = dma.done [#allocation9], 640
    $region233: #{a_call__.1} parent=1 // pred_fallthru
      _
    // Predicated region
    $region234: #{a_call__.1} parent=1 // pred_check
      _
    $region235: #{a_call__.1} parent=1 // pred_check_branch
      %668 = sbr.rel (0) target = $region237
    $region236: #{a_call__.1} parent=1 // pred_region
      %669 = dma.done [#allocation12], 640
    $region237: #{a_call__.1} parent=1 // pred_fallthru
      _
    // Predicated region
    $region238: #{a_call__.1} parent=1 // pred_check
      _
    $region239: #{a_call__.1} parent=1 // pred_check_branch
      %671 = sbr.rel (0) target = $region241
    $region240: #{a_call__.1} parent=1 // pred_region
      %672 = dma.done [#allocation12], 640
    $region241: #{a_call__.1} parent=1 // pred_fallthru
      _
    // Predicated region
    $region242: #{a_call__.1} parent=1 // pred_check
      _
    $region243: #{a_call__.1} parent=1 // pred_check_branch
      %674 = sbr.rel (0) target = $region245
    $region244: #{a_call__.1} parent=1 // pred_region
      %675 = dma.done [#allocation15], 64
    $region245: #{a_call__.1} parent=1 // pred_fallthru
      _
    // Predicated region
    $region246: #{a_call__.1} parent=1 // pred_check
      _
    $region247: #{a_call__.1} parent=1 // pred_check_branch
      %677 = sbr.rel (0) target = $region249
    $region248: #{a_call__.1} parent=1 // pred_region
      %678 = dma.done [#allocation15], 640
    $region249: #{a_call__.1} parent=1 // pred_fallthru
      _
    // Predicated region
    $region250: #{a_call__.1} parent=1 // pred_check
      _
    $region251: #{a_call__.1} parent=1 // pred_check_branch
      %680 = sbr.rel (0) target = $region253
    $region252: #{a_call__.1} parent=1 // pred_region
      %681 = dma.done [#allocation18], 640
    $region253: #{a_call__.1} parent=1 // pred_fallthru
      _
    // Predicated region
    $region254: #{a_call__.1} parent=1 // pred_check
      _
    $region255: #{a_call__.1} parent=1 // pred_check_branch
      %683 = sbr.rel (0) target = $region257
    $region256: #{a_call__.1} parent=1 // pred_region
      %684 = dma.done [#allocation18], 640
    $region257: #{a_call__.1} parent=1 // pred_fallthru
      _
    // Predicated region
    $region258: #{a_call__.1} parent=1 // pred_check
      _
    $region259: #{a_call__.1} parent=1 // pred_check_branch
      %686 = sbr.rel (0) target = $region261
    $region260: #{a_call__.1} parent=1 // pred_region
      %687 = dma.done [#allocation21], 640
    $region261: #{a_call__.1} parent=1 // pred_fallthru
      _
    // Predicated region
    $region262: #{a_call__.1} parent=1 // pred_check
      _
    $region263: #{a_call__.1} parent=1 // pred_check_branch
      %689 = sbr.rel (0) target = $region265
    $region264: #{a_call__.1} parent=1 // pred_region
      %690 = dma.done [#allocation21], 16
    $region265: #{a_call__.1} parent=1 // pred_fallthru
      _
    // Predicated region
    $region266: #{a_call__.1} parent=1 // pred_check
      _
    $region267: #{a_call__.1} parent=1 // pred_check_branch
      %692 = sbr.rel (0) target = $region269
    $region268: #{a_call__.1} parent=1 // pred_region
      %693 = dma.done [#allocation24], 640
    $region269: #{a_call__.1} parent=1 // pred_fallthru
      _
    // Predicated region
    $region270: #{a_call__.1} parent=1 // pred_check
      _
    $region271: #{a_call__.1} parent=1 // pred_check_branch
      %695 = sbr.rel (0) target = $region273
    $region272: #{a_call__.1} parent=1 // pred_region
      %696 = dma.done [#allocation24], 640
    $region273: #{a_call__.1} parent=1 // pred_fallthru
      _
    // Predicated region
    $region274: #{a_call__.1} parent=1 // pred_check
      _
    $region275: #{a_call__.1} parent=1 // pred_check_branch
      %698 = sbr.rel (0) target = $region277
    $region276: #{a_call__.1} parent=1 // pred_region
      %699 = dma.done [#allocation27], 640
    $region277: #{a_call__.1} parent=1 // pred_fallthru
      _
    // Predicated region
    $region278: #{a_call__.1} parent=1 // pred_check
      _
    $region279: #{a_call__.1} parent=1 // pred_check_branch
      %701 = sbr.rel (0) target = $region281
    $region280: #{a_call__.1} parent=1 // pred_region
      %702 = dma.done [#allocation27], 640
    $region281: #{a_call__.1} parent=1 // pred_fallthru
      _
    // Predicated region
    $region282: #{a_call__.1} parent=1 // pred_check
      _
    $region283: #{a_call__.1} parent=1 // pred_check_branch
      %704 = sbr.rel (0) target = $region285
    $region284: #{a_call__.1} parent=1 // pred_region
      %705 = dma.done [#allocation30], 32
    $region285: #{a_call__.1} parent=1 // pred_fallthru
      _
    // Predicated region
    $region286: #{a_call__.1} parent=1 // pred_check
      _
    $region287: #{a_call__.1} parent=1 // pred_check_branch
      %707 = sbr.rel (0) target = $region289
    $region288: #{a_call__.1} parent=1 // pred_region
      %708 = dma.done [#allocation30], 3840
    $region289: #{a_call__.1} parent=1 // pred_fallthru
      _
    // Predicated region
    $region290: #{a_call__.1} parent=1 // pred_check
      _
    $region291: #{a_call__.1} parent=1 // pred_check_branch
      %710 = sbr.rel (0) target = $region293
    $region292: #{a_call__.1} parent=1 // pred_region
      %711 = dma.done [#allocation33], 1920
    $region293: #{a_call__.1} parent=1 // pred_fallthru
      _
    // Predicated region
    $region294: #{a_call__.1} parent=1 // pred_check
      _
    $region295: #{a_call__.1} parent=1 // pred_check_branch
      %713 = sbr.rel (0) target = $region297
    $region296: #{a_call__.1} parent=1 // pred_region
      %714 = dma.done [#allocation33], 1920
    $region297: #{a_call__.1} parent=1 // pred_fallthru
      _
    // Predicated region
    $region298: #{a_call__.1} parent=1 // pred_check
      _
    $region299: #{a_call__.1} parent=1 // pred_check_branch
      %716 = sbr.rel (0) target = $region301
    $region300: #{a_call__.1} parent=1 // pred_region
      %717 = dma.done [#allocation36], 1920
    $region301: #{a_call__.1} parent=1 // pred_fallthru
      _
    // Predicated region
    $region302: #{a_call__.1} parent=1 // pred_check
      _
    $region303: #{a_call__.1} parent=1 // pred_check_branch
      %719 = sbr.rel (0) target = $region305
    $region304: #{a_call__.1} parent=1 // pred_region
      %720 = dma.done [#allocation36], 192
    $region305: #{a_call__.1} parent=1 // pred_fallthru
      _
    // Predicated region
    $region306: #{a_call__.1} parent=1 // pred_check
      _
    $region307: #{a_call__.1} parent=1 // pred_check_branch
      %722 = sbr.rel (0) target = $region309
    $region308: #{a_call__.1} parent=1 // pred_region
      %723 = dma.done [#allocation39], 192
    $region309: #{a_call__.1} parent=1 // pred_fallthru
      _
    // Predicated region
    $region310: #{a_call__.1} parent=1 // pred_check
      _
    $region311: #{a_call__.1} parent=1 // pred_check_branch
      %725 = sbr.rel (0) target = $region313
    $region312: #{a_call__.1} parent=1 // pred_region
      %726 = dma.done [#allocation39], 1920
    $region313: #{a_call__.1} parent=1 // pred_fallthru
      _
    // Predicated region
    $region314: #{a_call__.1} parent=1 // pred_check
      _
    $region315: #{a_call__.1} parent=1 // pred_check_branch
      %728 = sbr.rel (0) target = $region317
    $region316: #{a_call__.1} parent=1 // pred_region
      %729 = dma.done [#allocation42], 1920
    $region317: #{a_call__.1} parent=1 // pred_fallthru
      _
    // Predicated region
    $region318: #{a_call__.1} parent=1 // pred_check
      _
    $region319: #{a_call__.1} parent=1 // pred_check_branch
      %731 = sbr.rel (0) target = $region321
    $region320: #{a_call__.1} parent=1 // pred_region
      %732 = dma.done [#allocation42], 1920
    $region321: #{a_call__.1} parent=1 // pred_fallthru
      _
    // Predicated region
    $region322: #{a_call__.1} parent=1 // pred_check
      _
    $region323: #{a_call__.1} parent=1 // pred_check_branch
      %734 = sbr.rel (0) target = $region325
    $region324: #{a_call__.1} parent=1 // pred_region
      %735 = dma.done [#allocation45], 1920
    $region325: #{a_call__.1} parent=1 // pred_fallthru
      _
    // Predicated region
    $region326: #{a_call__.1} parent=1 // pred_check
      _
    $region327: #{a_call__.1} parent=1 // pred_check_branch
      %737 = sbr.rel (0) target = $region329
    $region328: #{a_call__.1} parent=1 // pred_region
      %738 = dma.done [#allocation45], 1920
    $region329: #{a_call__.1} parent=1 // pred_fallthru
      _
    // Predicated region
    $region330: #{a_call__.1} parent=1 // pred_check
      _
    $region331: #{a_call__.1} parent=1 // pred_check_branch
      %740 = sbr.rel (0) target = $region333
    $region332: #{a_call__.1} parent=1 // pred_region
      %741 = dma.done [#allocation48], 384
    $region333: #{a_call__.1} parent=1 // pred_fallthru
      _
    // Predicated region
    $region334: #{a_call__.1} parent=1 // pred_check
      _
    $region335: #{a_call__.1} parent=1 // pred_check_branch
      %743 = sbr.rel (0) target = $region337
    $region336: #{a_call__.1} parent=1 // pred_region
      %744 = dma.done [#allocation48], 384
    $region337: #{a_call__.1} parent=1 // pred_fallthru
      _
    // Predicated region
    $region338: #{a_call__.1} parent=1 // pred_check
      _
    $region339: #{a_call__.1} parent=1 // pred_check_branch
      %746 = sbr.rel (0) target = $region341
    $region340: #{a_call__.1} parent=1 // pred_region
      %747 = dma.done [#allocation51], 1280
    $region341: #{a_call__.1} parent=1 // pred_fallthru
      _
    // Predicated region
    $region342: #{a_call__.1} parent=1 // pred_check
      _
    $region343: #{a_call__.1} parent=1 // pred_check_branch
      %749 = sbr.rel (0) target = $region345
    $region344: #{a_call__.1} parent=1 // pred_region
      %750 = dma.done [#allocation51], 2560
    $region345: #{a_call__.1} parent=1 // pred_fallthru
      _
    // Predicated region
    $region346: #{a_call__.1} parent=1 // pred_check
      _
    $region347: #{a_call__.1} parent=1 // pred_check_branch
      %752 = sbr.rel (0) target = $region349
    $region348: #{a_call__.1} parent=1 // pred_region
      %753 = dma.done [#allocation54], 640
    $region349: #{a_call__.1} parent=1 // pred_fallthru
      _
    // Predicated region
    $region350: #{a_call__.1} parent=1 // pred_check
      _
    $region351: #{a_call__.1} parent=1 // pred_check_branch
      %755 = sbr.rel (0) target = $region353
    $region352: #{a_call__.1} parent=1 // pred_region
      %756 = dma.done [#allocation54], 640
    $region353: #{a_call__.1} parent=1 // pred_fallthru
      _
    // Predicated region
    $region354: #{a_call__.1} parent=1 // pred_check
      _
    $region355: #{a_call__.1} parent=1 // pred_check_branch
      %758 = sbr.rel (0) target = $region357
    $region356: #{a_call__.1} parent=1 // pred_region
      %759 = dma.done [#allocation57], 640
    $region357: #{a_call__.1} parent=1 // pred_fallthru
      _
    // Predicated region
    $region358: #{a_call__.1} parent=1 // pred_check
      _
    $region359: #{a_call__.1} parent=1 // pred_check_branch
      %761 = sbr.rel (0) target = $region361
    $region360: #{a_call__.1} parent=1 // pred_region
      %762 = dma.done [#allocation57], 16
    $region361: #{a_call__.1} parent=1 // pred_fallthru
      _
    // Predicated region
    $region362: #{a_call__.1} parent=1 // pred_check
      _
    $region363: #{a_call__.1} parent=1 // pred_check_branch
      %764 = sbr.rel (0) target = $region365
    $region364: #{a_call__.1} parent=1 // pred_region
      %765 = dma.done [#allocation60], 640
    $region365: #{a_call__.1} parent=1 // pred_fallthru
      _
    // Predicated region
    $region366: #{a_call__.1} parent=1 // pred_check
      _
    $region367: #{a_call__.1} parent=1 // pred_check_branch
      %767 = sbr.rel (0) target = $region369
    $region368: #{a_call__.1} parent=1 // pred_region
      %768 = dma.done [#allocation60], 640
    $region369: #{a_call__.1} parent=1 // pred_fallthru
      _
    // Predicated region
    $region370: #{a_call__.1} parent=1 // pred_check
      _
    $region371: #{a_call__.1} parent=1 // pred_check_branch
      %770 = sbr.rel (0) target = $region373
    $region372: #{a_call__.1} parent=1 // pred_region
      %771 = dma.done [#allocation63], 640
    $region373: #{a_call__.1} parent=1 // pred_fallthru
      _
    // Predicated region
    $region374: #{a_call__.1} parent=1 // pred_check
      _
    $region375: #{a_call__.1} parent=1 // pred_check_branch
      %773 = sbr.rel (0) target = $region377
    $region376: #{a_call__.1} parent=1 // pred_region
      %774 = dma.done [#allocation63], 640
    $region377: #{a_call__.1} parent=1 // pred_fallthru
      _
    // Predicated region
    $region378: #{a_call__.1} parent=1 // pred_check
      _
    $region379: #{a_call__.1} parent=1 // pred_check_branch
      %776 = sbr.rel (0) target = $region381
    $region380: #{a_call__.1} parent=1 // pred_region
      %777 = dma.done [#allocation66], 640
    $region381: #{a_call__.1} parent=1 // pred_fallthru
      _
    // Predicated region
    $region382: #{a_call__.1} parent=1 // pred_check
      _
    $region383: #{a_call__.1} parent=1 // pred_check_branch
      %779 = sbr.rel (0) target = $region385
    $region384: #{a_call__.1} parent=1 // pred_region
      %780 = dma.done [#allocation66], 16
    $region385: #{a_call__.1} parent=1 // pred_fallthru
      _
    %v782 = vld [vmem:[%s1] sm:$0x3f]
    %v783 = vld [vmem:[%s3] sm:$0xf]
    %v784 = vld [vmem:[%s5] sm:$0x1]
    %v785 = vld [vmem:[%s7] sm:$0x1]
    %v786 = vlaneseq
    %v787 = vshrl.u32 %v786, 7
    %v788 = vadd.s32 %v787, 8
    %v789 = vadd.s32 %v787, 16
    %v790 = vadd.s32 %v787, 24
    %v791 = vadd.s32 %v787, 32
    %v792 = vadd.s32 %v787, 40
    %v793 = vadd.s32 %v787, 48
    %v794 = vadd.s32 %v787, 56
    %v795 = vadd.s32 %v787, 64
    %v796 = vadd.s32 %v787, 72
    %v797 = vadd.s32 %v787, 80
    %v798 = vadd.s32 %v787, 88
    %v799 = vadd.s32 %v787, 96
    %v800 = vadd.s32 %v787, 104
    %v801 = vadd.s32 %v787, 112
    %v802 = vadd.s32 %v787, 120
    %v803 = vlaneseq
    %v804 = vshrl.u32 %v803, 7
    %v805 = vsub.s32 0, %v804
    %v806 = vrot.slane %v784, %v805
    %vm807 = vcmp.eq.s32.totalorder %v787, %v806
    %vm808 = vcmp.eq.s32.totalorder %v788, %v806
    %vm809 = vcmp.eq.s32.totalorder %v789, %v806
    %vm810 = vcmp.eq.s32.totalorder %v790, %v806
    %vm811 = vcmp.eq.s32.totalorder %v791, %v806
    %vm812 = vcmp.eq.s32.totalorder %v792, %v806
    %vm813 = vcmp.eq.s32.totalorder %v793, %v806
    %vm814 = vcmp.eq.s32.totalorder %v794, %v806
    %vm815 = vcmp.eq.s32.totalorder %v795, %v806
    %vm816 = vcmp.eq.s32.totalorder %v796, %v806
    %vm817 = vcmp.eq.s32.totalorder %v797, %v806
    %vm818 = vcmp.eq.s32.totalorder %v798, %v806
    %vm819 = vcmp.eq.s32.totalorder %v799, %v806
    %vm820 = vcmp.eq.s32.totalorder %v800, %v806
    %vm821 = vcmp.eq.s32.totalorder %v801, %v806
    %vm822 = vcmp.eq.s32.totalorder %v802, %v806
    %v823 = vsel %vm807, 1, 0
    %v824 = vsel %vm808, 1, 0
    %v825 = vsel %vm809, 1, 0
    %v826 = vsel %vm810, 1, 0
    %v827 = vsel %vm811, 1, 0
    %v828 = vsel %vm812, 1, 0
    %v829 = vsel %vm813, 1, 0
    %v830 = vsel %vm814, 1, 0
    %v831 = vsel %vm815, 1, 0
    %v832 = vsel %vm816, 1, 0
    %v833 = vsel %vm817, 1, 0
    %v834 = vsel %vm818, 1, 0
    %v835 = vsel %vm819, 1, 0
    %v836 = vsel %vm820, 1, 0
    %v837 = vsel %vm821, 1, 0
    %v838 = vsel %vm822, 1, 0
    %v839 = vcvt.s32.f32 %v823
    %v840 = vcvt.s32.f32 %v824
    %v841 = vcvt.s32.f32 %v825
    %v842 = vcvt.s32.f32 %v826
    %v843 = vcvt.s32.f32 %v827
    %v844 = vcvt.s32.f32 %v828
    %v845 = vcvt.s32.f32 %v829
    %v846 = vcvt.s32.f32 %v830
    %v847 = vcvt.s32.f32 %v831
    %v848 = vcvt.s32.f32 %v832
    %v849 = vcvt.s32.f32 %v833
    %v850 = vcvt.s32.f32 %v834
    %v851 = vcvt.s32.f32 %v835
    %v852 = vcvt.s32.f32 %v836
    %v853 = vcvt.s32.f32 %v837
    %v854 = vcvt.s32.f32 %v838
    %v855 = vpack.c.bf16 %v840, %v839
    %v856 = vpack.c.bf16 %v842, %v841
    %v857 = vpack.c.bf16 %v844, %v843
    %v858 = vpack.c.bf16 %v846, %v845
    %v859 = vpack.c.bf16 %v848, %v847
    %v860 = vpack.c.bf16 %v850, %v849
    %v861 = vpack.c.bf16 %v852, %v851
    %v862 = vpack.c.bf16 %v854, %v853
    %v863 = vlaneseq
    %v864 = vshrl.u32 %v863, 7
    %v865 = vsub.s32 0, %v864
    %v866 = vrot.slane %v785, %v865
    %vm867 = vcmp.eq.s32.totalorder %v787, %v866
    %vm868 = vcmp.eq.s32.totalorder %v788, %v866
    %vm869 = vcmp.eq.s32.totalorder %v789, %v866
    %vm870 = vcmp.eq.s32.totalorder %v790, %v866
    %vm871 = vcmp.eq.s32.totalorder %v791, %v866
    %vm872 = vcmp.eq.s32.totalorder %v792, %v866
    %vm873 = vcmp.eq.s32.totalorder %v793, %v866
    %vm874 = vcmp.eq.s32.totalorder %v794, %v866
    %vm875 = vcmp.eq.s32.totalorder %v795, %v866
    %vm876 = vcmp.eq.s32.totalorder %v796, %v866
    %vm877 = vcmp.eq.s32.totalorder %v797, %v866
    %vm878 = vcmp.eq.s32.totalorder %v798, %v866
    %vm879 = vcmp.eq.s32.totalorder %v799, %v866
    %vm880 = vcmp.eq.s32.totalorder %v800, %v866
    %vm881 = vcmp.eq.s32.totalorder %v801, %v866
    %vm882 = vcmp.eq.s32.totalorder %v802, %v866
    %v883 = vsel %vm867, 1, 0
    %v884 = vsel %vm868, 1, 0
    %v885 = vsel %vm869, 1, 0
    %v886 = vsel %vm870, 1, 0
    %v887 = vsel %vm871, 1, 0
    %v888 = vsel %vm872, 1, 0
    %v889 = vsel %vm873, 1, 0
    %v890 = vsel %vm874, 1, 0
    %v891 = vsel %vm875, 1, 0
    %v892 = vsel %vm876, 1, 0
    %v893 = vsel %vm877, 1, 0
    %v894 = vsel %vm878, 1, 0
    %v895 = vsel %vm879, 1, 0
    %v896 = vsel %vm880, 1, 0
    %v897 = vsel %vm881, 1, 0
    %v898 = vsel %vm882, 1, 0
    %v899 = vcvt.s32.f32 %v883
    %v900 = vcvt.s32.f32 %v884
    %v901 = vcvt.s32.f32 %v885
    %v902 = vcvt.s32.f32 %v886
    %v903 = vcvt.s32.f32 %v887
    %v904 = vcvt.s32.f32 %v888
    %v905 = vcvt.s32.f32 %v889
    %v906 = vcvt.s32.f32 %v890
    %v907 = vcvt.s32.f32 %v891
    %v908 = vcvt.s32.f32 %v892
    %v909 = vcvt.s32.f32 %v893
    %v910 = vcvt.s32.f32 %v894
    %v911 = vcvt.s32.f32 %v895
    %v912 = vcvt.s32.f32 %v896
    %v913 = vcvt.s32.f32 %v897
    %v914 = vcvt.s32.f32 %v898
    %v915 = vpack.c.bf16 %v900, %v899
    %v916 = vpack.c.bf16 %v902, %v901
    %v917 = vpack.c.bf16 %v904, %v903
    %v918 = vpack.c.bf16 %v906, %v905
    %v919 = vpack.c.bf16 %v908, %v907
    %v920 = vpack.c.bf16 %v910, %v909
    %v921 = vpack.c.bf16 %v912, %v911
    %v922 = vpack.c.bf16 %v914, %v913
    %923 = vxpose.xlu0.b32.start [1/16] %v899, 128
    %924 = vxpose.xlu0.b32.cont [2/16] %v900, 128
    %925 = vxpose.xlu0.b32.cont [3/16] %v901, 128
    %926 = vxpose.xlu0.b32.cont [4/16] %v902, 128
    %927 = vxpose.xlu0.b32.cont [5/16] %v903, 128
    %928 = vxpose.xlu0.b32.cont [6/16] %v904, 128
    %929 = vxpose.xlu0.b32.cont [7/16] %v905, 128
    %930 = vxpose.xlu0.b32.cont [8/16] %v906, 128
    %931 = vxpose.xlu0.b32.cont [9/16] %v907, 128
    %932 = vxpose.xlu0.b32.cont [10/16] %v908, 128
    %933 = vxpose.xlu0.b32.cont [11/16] %v909, 128
    %934 = vxpose.xlu0.b32.cont [12/16] %v910, 128
    %935 = vxpose.xlu0.b32.cont [13/16] %v911, 128
    %936 = vxpose.xlu0.b32.cont [14/16] %v912, 128
    %937 = vxpose.xlu0.b32.cont [15/16] %v913, 128
    %938 = vxpose.xlu0.b32.end [16/16] %v914, 128
    %v939 = vpop.trf.xlu0
    %v940 = vpop.trf.xlu0
    %v941 = vpop.trf.xlu0
    %v942 = vpop.trf.xlu0
    %v943 = vpop.trf.xlu0
    %v944 = vpop.trf.xlu0
    %v945 = vpop.trf.xlu0
    %v946 = vpop.trf.xlu0
    %v947 = vpop.trf.xlu0
    %v948 = vpop.trf.xlu0
    %v949 = vpop.trf.xlu0
    %v950 = vpop.trf.xlu0
    %v951 = vpop.trf.xlu0
    %v952 = vpop.trf.xlu0
    %v953 = vpop.trf.xlu0
    %v954 = vpop.trf.xlu0
    %v955 = vpack.c.bf16 %v940, %v939
    %v956 = vpack.c.bf16 %v942, %v941
    %v957 = vpack.c.bf16 %v944, %v943
    %v958 = vpack.c.bf16 %v946, %v945
    %v959 = vpack.c.bf16 %v948, %v947
    %v960 = vpack.c.bf16 %v950, %v949
    %v961 = vpack.c.bf16 %v952, %v951
    %v962 = vpack.c.bf16 %v954, %v953
    %v963 = vld [vmem:[%s9] sm:$0xff]
    %v964 = vld [vmem:[%s9 + $0x8] sm:$0xff]
    %v965 = vld [vmem:[%s9 + $0x10] sm:$0xff]
    %v966 = vld [vmem:[%s9 + $0x18] sm:$0xff]
    %v967 = vld [vmem:[%s9 + $0x20] sm:$0xff]
    %v968 = vld [vmem:[%s9 + $0x28] sm:$0xff]
    %v969 = vld [vmem:[%s9 + $0x30] sm:$0xff]
    %v970 = vld [vmem:[%s9 + $0x38] sm:$0xff]
    %v971 = vld [vmem:[%s9 + $0x40] sm:$0xff]
    %v972 = vld [vmem:[%s9 + $0x48] sm:$0xff]
    %vm973 = vcmask 48128
    %v975 = vsel %vm973, %v963, 0
    %v978 = vsel %vm973, %v964, 0
    %v981 = vsel %vm973, %v965, 0
    %v984 = vsel %vm973, %v966, 0
    %v987 = vsel %vm973, %v967, 0
    %v990 = vsel %vm973, %v968, 0
    %v993 = vsel %vm973, %v969, 0
    %v996 = vsel %vm973, %v970, 0
    %v999 = vsel %vm973, %v971, 0
    %v1002 = vsel %vm973, %v972, 0
    %vm1004 = vcmask 1045504
    %v1006 = vsel %vm1004, %v782, 0
    %1008 = vmatprep.subr.mxu0 0.0
    %1009 = vmatpush1.msra.mxu0 %v1006
    %1010 = vmatprep.subr.mxu0 0.0
    %1011 = vmatpush1.msra.mxu0 0.0
    %1012 = vmatprep.subr.mxu0 0.0
    %1013 = vmatpush1.msra.mxu0 0.0
    %1014 = vmatprep.subr.mxu0 0.0
    %1015 = vmatpush1.msra.mxu0 0.0
    %1016 = vmatprep.subr.mxu0 0.0
    %1017 = vmatpush1.msra.mxu0 0.0
    %1018 = vmatprep.subr.mxu0 0.0
    %1019 = vmatpush1.msra.mxu0 0.0
    %1020 = vmatprep.subr.mxu0 0.0
    %1021 = vmatpush1.msra.mxu0 0.0
    %1022 = vmatprep.subr.mxu0 0.0
    %1023 = vmatpush1.msra.mxu0 0.0
    %1024 = vmatprep.subr.mxu0 0.0
    %1025 = vmatpush1.msra.mxu0 0.0
    %1026 = vmatprep.subr.mxu0 0.0
    %1027 = vmatpush1.msra.mxu0 0.0
    %1028 = vmatprep.subr.mxu0 0.0
    %1029 = vmatpush1.msra.mxu0 0.0
    %1030 = vmatprep.subr.mxu0 0.0
    %1031 = vmatpush1.msra.mxu0 0.0
    %1032 = vmatprep.subr.mxu0 0.0
    %1033 = vmatpush1.msra.mxu0 0.0
    %1034 = vmatprep.subr.mxu0 0.0
    %1035 = vmatpush1.msra.mxu0 0.0
    %1036 = vmatprep.subr.mxu0 0.0
    %1037 = vmatpush1.msra.mxu0 0.0
    %1038 = vmatprep.subr.mxu0 0.0
    %1039 = vmatpush1.msra.mxu0 0.0
    %1040 = vmatprep.subr.mxu0 0.0
    %1041 = vmatpush1.msra.mxu0 0.0
    %1042 = vmatprep.subr.mxu0 0.0
    %1043 = vmatpush1.msra.mxu0 0.0
    %1044 = vmatprep.subr.mxu0 0.0
    %1045 = vmatpush1.msra.mxu0 0.0
    %1046 = vmatprep.subr.mxu0 0.0
    %1047 = vmatpush1.msra.mxu0 0.0
    %1048 = vmatprep.subr.mxu0 0.0
    %1049 = vmatpush1.msra.mxu0 0.0
    %1050 = vmatprep.subr.mxu0 0.0
    %1051 = vmatpush1.msra.mxu0 0.0
    %1052 = vmatprep.subr.mxu0 0.0
    %1053 = vmatpush1.msra.mxu0 0.0
    %1054 = vmatprep.subr.mxu0 0.0
    %1055 = vmatpush1.msra.mxu0 0.0
    %1056 = vmatprep.subr.mxu0 0.0
    %1057 = vmatpush1.msra.mxu0 0.0
    %1058 = vmatprep.subr.mxu0 0.0
    %1059 = vmatpush1.msra.mxu0 0.0
    %1060 = vmatprep.subr.mxu0 0.0
    %1061 = vmatpush1.msra.mxu0 0.0
    %1062 = vmatprep.subr.mxu0 0.0
    %1063 = vmatpush1.msra.mxu0 0.0
    %1064 = vmatprep.subr.mxu0 0.0
    %1065 = vmatpush1.msra.mxu0 0.0
    %1066 = vmatprep.subr.mxu0 0.0
    %1067 = vmatpush1.msra.mxu0 0.0
    %1068 = vmatprep.subr.mxu0 0.0
    %1069 = vmatpush1.msra.mxu0 0.0
    %1070 = vmatprep.subr.mxu0 0.0
    %1071 = vmatpush1.msra.mxu0 0.0
    %1072 = vmatprep.mubr.f32.mxu0 0.0
    %1073 = vmatmul.mubr.f32.gmra.mrb[0].mxu0 %v975
    %v1074 = vpop.f32.mrb[0].mxu0
    %v1075 = vadd.f32 0.0, %v1074
    %v1076 = vpop.f32.mrb[0].mxu0
    %1077 = vmatprep.mubr.f32.mxu0 0.0
    %1078 = vmatmul.mubr.f32.gmra.mrb[0].mxu0 %v978
    %v1079 = vpop.f32.mrb[0].mxu0
    %v1080 = vadd.f32 0.0, %v1079
    %v1081 = vpop.f32.mrb[0].mxu0
    %1082 = vmatprep.mubr.f32.mxu0 0.0
    %1083 = vmatmul.mubr.f32.gmra.mrb[0].mxu0 %v981
    %v1084 = vpop.f32.mrb[0].mxu0
    %v1085 = vadd.f32 0.0, %v1084
    %v1086 = vpop.f32.mrb[0].mxu0
    %1087 = vmatprep.mubr.f32.mxu0 0.0
    %1088 = vmatmul.mubr.f32.gmra.mrb[0].mxu0 %v984
    %v1089 = vpop.f32.mrb[0].mxu0
    %v1090 = vadd.f32 0.0, %v1089
    %v1091 = vpop.f32.mrb[0].mxu0
    %1092 = vmatprep.mubr.f32.mxu0 0.0
    %1093 = vmatmul.mubr.f32.gmra.mrb[0].mxu0 %v987
    %v1094 = vpop.f32.mrb[0].mxu0
    %v1095 = vadd.f32 0.0, %v1094
    %v1096 = vpop.f32.mrb[0].mxu0
    %1097 = vmatprep.mubr.f32.mxu0 0.0
    %1098 = vmatmul.mubr.f32.gmra.mrb[0].mxu0 %v990
    %v1099 = vpop.f32.mrb[0].mxu0
    %v1100 = vadd.f32 0.0, %v1099
    %v1101 = vpop.f32.mrb[0].mxu0
    %1102 = vmatprep.mubr.f32.mxu0 0.0
    %1103 = vmatmul.mubr.f32.gmra.mrb[0].mxu0 %v993
    %v1104 = vpop.f32.mrb[0].mxu0
    %v1105 = vadd.f32 0.0, %v1104
    %v1106 = vpop.f32.mrb[0].mxu0
    %1107 = vmatprep.mubr.f32.mxu0 0.0
    %1108 = vmatmul.mubr.f32.gmra.mrb[0].mxu0 %v996
    %v1109 = vpop.f32.mrb[0].mxu0
    %v1110 = vadd.f32 0.0, %v1109
    %v1111 = vpop.f32.mrb[0].mxu0
    %1112 = vmatprep.mubr.f32.mxu0 0.0
    %1113 = vmatmul.mubr.f32.gmra.mrb[0].mxu0 %v999
    %v1114 = vpop.f32.mrb[0].mxu0
    %v1115 = vadd.f32 0.0, %v1114
    %v1116 = vpop.f32.mrb[0].mxu0
    %1117 = vmatprep.mubr.f32.mxu0 0.0
    %1118 = vmatmul.mubr.f32.gmra.mrb[0].mxu0 %v1002
    %v1119 = vpop.f32.mrb[0].mxu0
    %v1120 = vadd.f32 0.0, %v1119
    %v1121 = vpop.f32.mrb[0].mxu0
    %1122 = vdwg.mxu0
    %v1123 = vpack.c.bf16 %v1080, %v1075
    %v1124 = vpack.c.bf16 %v1090, %v1085
    %v1125 = vpack.c.bf16 %v1095, %v1095
    %v1126 = vpack.c.bf16 %v1105, %v1100
    %v1127 = vpack.c.bf16 %v1115, %v1110
    %v1128 = vpack.c.bf16 %v1120, %v1120
    %1129 = vmatprep.subr.bf16.mxu0 0
    %1130 = vmatpush1.bf16.msra.mxu0 %v915
    %1131 = vmatprep.subr.bf16.mxu0 0
    %1132 = vmatpush1.bf16.msra.mxu0 %v916
    %1133 = vmatprep.subr.bf16.mxu0 0
    %1134 = vmatpush1.bf16.msra.mxu0 %v917
    %1135 = vmatprep.subr.bf16.mxu0 0
    %1136 = vmatpush1.bf16.msra.mxu0 %v918
    %1137 = vmatprep.subr.bf16.mxu0 0
    %1138 = vmatpush1.bf16.msra.mxu0 %v919
    %1139 = vmatprep.subr.bf16.mxu0 0
    %1140 = vmatpush1.bf16.msra.mxu0 %v920
    %1141 = vmatprep.subr.bf16.mxu0 0
    %1142 = vmatpush1.bf16.msra.mxu0 %v921
    %1143 = vmatprep.subr.bf16.mxu0 0
    %1144 = vmatpush1.bf16.msra.mxu0 %v922
    %1145 = vmatprep.subr.bf16.mxu0 0
    %1146 = vmatpush1.bf16.msra.mxu0 0
    %1147 = vmatprep.subr.bf16.mxu0 0
    %1148 = vmatpush1.bf16.msra.mxu0 0
    %1149 = vmatprep.subr.bf16.mxu0 0
    %1150 = vmatpush1.bf16.msra.mxu0 0
    %1151 = vmatprep.subr.bf16.mxu0 0
    %1152 = vmatpush1.bf16.msra.mxu0 0
    %1153 = vmatprep.subr.bf16.mxu0 0
    %1154 = vmatpush1.bf16.msra.mxu0 0
    %1155 = vmatprep.subr.bf16.mxu0 0
    %1156 = vmatpush1.bf16.msra.mxu0 0
    %1157 = vmatprep.subr.bf16.mxu0 0
    %1158 = vmatpush1.bf16.msra.mxu0 0
    %1159 = vmatprep.subr.bf16.mxu0 0
    %1160 = vmatpush1.bf16.msra.mxu0 0
    %1161 = vmatprep.mubr.bf16.mxu0 0
    %1162 = vmatmul.mubr.bf16.gmra.mrb[0].mxu0 %v1126
    %v1163 = vpop.f32.mrb[0].mxu0
    %v1164 = vadd.f32 0.0, %v1163
    %v1165 = vpop.f32.mrb[0].mxu0
    %v1166 = vpop.f32.mrb[0].mxu0
    %v1167 = vadd.f32 0.0, %v1166
    %v1168 = vpop.f32.mrb[0].mxu0
    %1169 = vmatprep.mubr.bf16.mxu0 0
    %1170 = vmatmul.mubr.bf16.gmra.mrb[0].mxu0 %v1127
    %v1171 = vpop.f32.mrb[0].mxu0
    %v1172 = vadd.f32 0.0, %v1171
    %v1173 = vpop.f32.mrb[0].mxu0
    %v1174 = vpop.f32.mrb[0].mxu0
    %v1175 = vadd.f32 0.0, %v1174
    %v1176 = vpop.f32.mrb[0].mxu0
    %1177 = vmatprep.mubr.bf16.mxu0 0
    %1178 = vmatmul.mubr.bf16.gmra.mrb[0].mxu0 %v1128
    %v1179 = vpop.f32.mrb[0].mxu0
    %v1180 = vadd.f32 0.0, %v1179
    %v1181 = vpop.f32.mrb[0].mxu0
    %v1182 = vpop.f32.mrb[0].mxu0
    %v1183 = vpop.f32.mrb[0].mxu0
    %1184 = vdwg.mxu0
    %1185 = vmatprep.subr.bf16.mxu0 0
    %1186 = vmatpush1.bf16.msra.mxu0 %v855
    %1187 = vmatprep.subr.bf16.mxu0 0
    %1188 = vmatpush1.bf16.msra.mxu0 %v856
    %1189 = vmatprep.subr.bf16.mxu0 0
    %1190 = vmatpush1.bf16.msra.mxu0 %v857
    %1191 = vmatprep.subr.bf16.mxu0 0
    %1192 = vmatpush1.bf16.msra.mxu0 %v858
    %1193 = vmatprep.subr.bf16.mxu0 0
    %1194 = vmatpush1.bf16.msra.mxu0 %v859
    %1195 = vmatprep.subr.bf16.mxu0 0
    %1196 = vmatpush1.bf16.msra.mxu0 %v860
    %1197 = vmatprep.subr.bf16.mxu0 0
    %1198 = vmatpush1.bf16.msra.mxu0 %v861
    %1199 = vmatprep.subr.bf16.mxu0 0
    %1200 = vmatpush1.bf16.msra.mxu0 %v862
    %1201 = vmatprep.subr.bf16.mxu0 0
    %1202 = vmatpush1.bf16.msra.mxu0 0
    %1203 = vmatprep.subr.bf16.mxu0 0
    %1204 = vmatpush1.bf16.msra.mxu0 0
    %1205 = vmatprep.subr.bf16.mxu0 0
    %1206 = vmatpush1.bf16.msra.mxu0 0
    %1207 = vmatprep.subr.bf16.mxu0 0
    %1208 = vmatpush1.bf16.msra.mxu0 0
    %1209 = vmatprep.subr.bf16.mxu0 0
    %1210 = vmatpush1.bf16.msra.mxu0 0
    %1211 = vmatprep.subr.bf16.mxu0 0
    %1212 = vmatpush1.bf16.msra.mxu0 0
    %1213 = vmatprep.subr.bf16.mxu0 0
    %1214 = vmatpush1.bf16.msra.mxu0 0
    %1215 = vmatprep.subr.bf16.mxu0 0
    %1216 = vmatpush1.bf16.msra.mxu0 0
    %1217 = vmatprep.mubr.bf16.mxu0 0
    %1218 = vmatmul.mubr.bf16.gmra.mrb[0].mxu0 %v1123
    %v1219 = vpop.f32.mrb[0].mxu0
    %v1220 = vadd.f32 %v1164, %v1219
    %v1221 = vpop.f32.mrb[0].mxu0
    %v1222 = vpop.f32.mrb[0].mxu0
    %v1223 = vadd.f32 %v1167, %v1222
    %v1224 = vpop.f32.mrb[0].mxu0
    %1225 = vmatprep.mubr.bf16.mxu0 0
    %1226 = vmatmul.mubr.bf16.gmra.mrb[0].mxu0 %v1124
    %v1227 = vpop.f32.mrb[0].mxu0
    %v1228 = vadd.f32 %v1172, %v1227
    %v1229 = vpop.f32.mrb[0].mxu0
    %v1230 = vpop.f32.mrb[0].mxu0
    %v1231 = vadd.f32 %v1175, %v1230
    %v1232 = vpop.f32.mrb[0].mxu0
    %1233 = vmatprep.mubr.bf16.mxu0 0
    %1234 = vmatmul.mubr.bf16.gmra.mrb[0].mxu0 %v1125
    %v1235 = vpop.f32.mrb[0].mxu0
    %v1236 = vadd.f32 %v1180, %v1235
    %v1237 = vpop.f32.mrb[0].mxu0
    %v1238 = vpop.f32.mrb[0].mxu0
    %v1239 = vpop.f32.mrb[0].mxu0
    %1240 = vdwg.mxu0
    %v1241 = vld [vmem:[%s11] sm:$0xff]
    %v1242 = vld [vmem:[%s11 + $0x8] sm:$0xff]
    %v1243 = vld [vmem:[%s11 + $0x10] sm:$0xff]
    %v1244 = vld [vmem:[%s11 + $0x18] sm:$0xff]
    %v1245 = vld [vmem:[%s11 + $0x20] sm:$0xff]
    %vm1246 = vcmask 31744
    %v1248 = vsel %vm1246, %v1241, 0
    %v1251 = vsel %vm1246, %v1242, 0
    %v1254 = vsel %vm1246, %v1243, 0
    %v1257 = vsel %vm1246, %v1244, 0
    %v1260 = vsel %vm1246, %v1245, 0
    %vm1262 = vcmask 1043456
    %v1264 = vsel %vm1262, %v783, 0
    %1266 = vmatprep.subr.mxu0 0.0
    %1267 = vmatpush1.msra.mxu0 %v1264
    %1268 = vmatprep.subr.mxu0 0.0
    %1269 = vmatpush1.msra.mxu0 0.0
    %1270 = vmatprep.subr.mxu0 0.0
    %1271 = vmatpush1.msra.mxu0 0.0
    %1272 = vmatprep.subr.mxu0 0.0
    %1273 = vmatpush1.msra.mxu0 0.0
    %1274 = vmatprep.subr.mxu0 0.0
    %1275 = vmatpush1.msra.mxu0 0.0
    %1276 = vmatprep.subr.mxu0 0.0
    %1277 = vmatpush1.msra.mxu0 0.0
    %1278 = vmatprep.subr.mxu0 0.0
    %1279 = vmatpush1.msra.mxu0 0.0
    %1280 = vmatprep.subr.mxu0 0.0
    %1281 = vmatpush1.msra.mxu0 0.0
    %1282 = vmatprep.subr.mxu0 0.0
    %1283 = vmatpush1.msra.mxu0 0.0
    %1284 = vmatprep.subr.mxu0 0.0
    %1285 = vmatpush1.msra.mxu0 0.0
    %1286 = vmatprep.subr.mxu0 0.0
    %1287 = vmatpush1.msra.mxu0 0.0
    %1288 = vmatprep.subr.mxu0 0.0
    %1289 = vmatpush1.msra.mxu0 0.0
    %1290 = vmatprep.subr.mxu0 0.0
    %1291 = vmatpush1.msra.mxu0 0.0
    %1292 = vmatprep.subr.mxu0 0.0
    %1293 = vmatpush1.msra.mxu0 0.0
    %1294 = vmatprep.subr.mxu0 0.0
    %1295 = vmatpush1.msra.mxu0 0.0
    %1296 = vmatprep.subr.mxu0 0.0
    %1297 = vmatpush1.msra.mxu0 0.0
    %1298 = vmatprep.subr.mxu0 0.0
    %1299 = vmatpush1.msra.mxu0 0.0
    %1300 = vmatprep.subr.mxu0 0.0
    %1301 = vmatpush1.msra.mxu0 0.0
    %1302 = vmatprep.subr.mxu0 0.0
    %1303 = vmatpush1.msra.mxu0 0.0
    %1304 = vmatprep.subr.mxu0 0.0
    %1305 = vmatpush1.msra.mxu0 0.0
    %1306 = vmatprep.subr.mxu0 0.0
    %1307 = vmatpush1.msra.mxu0 0.0
    %1308 = vmatprep.subr.mxu0 0.0
    %1309 = vmatpush1.msra.mxu0 0.0
    %1310 = vmatprep.subr.mxu0 0.0
    %1311 = vmatpush1.msra.mxu0 0.0
    %1312 = vmatprep.subr.mxu0 0.0
    %1313 = vmatpush1.msra.mxu0 0.0
    %1314 = vmatprep.subr.mxu0 0.0
    %1315 = vmatpush1.msra.mxu0 0.0
    %1316 = vmatprep.subr.mxu0 0.0
    %1317 = vmatpush1.msra.mxu0 0.0
    %1318 = vmatprep.subr.mxu0 0.0
    %1319 = vmatpush1.msra.mxu0 0.0
    %1320 = vmatprep.subr.mxu0 0.0
    %1321 = vmatpush1.msra.mxu0 0.0
    %1322 = vmatprep.subr.mxu0 0.0
    %1323 = vmatpush1.msra.mxu0 0.0
    %1324 = vmatprep.subr.mxu0 0.0
    %1325 = vmatpush1.msra.mxu0 0.0
    %1326 = vmatprep.subr.mxu0 0.0
    %1327 = vmatpush1.msra.mxu0 0.0
    %1328 = vmatprep.subr.mxu0 0.0
    %1329 = vmatpush1.msra.mxu0 0.0
    %1330 = vmatprep.mubr.f32.mxu0 0.0
    %1331 = vmatmul.mubr.f32.gmra.mrb[0].mxu0 %v1248
    %v1332 = vpop.f32.mrb[0].mxu0
    %v1333 = vadd.f32 0.0, %v1332
    %v1334 = vpop.f32.mrb[0].mxu0
    %1335 = vmatprep.mubr.f32.mxu0 0.0
    %1336 = vmatmul.mubr.f32.gmra.mrb[0].mxu0 %v1251
    %v1337 = vpop.f32.mrb[0].mxu0
    %v1338 = vadd.f32 0.0, %v1337
    %v1339 = vpop.f32.mrb[0].mxu0
    %1340 = vmatprep.mubr.f32.mxu0 0.0
    %1341 = vmatmul.mubr.f32.gmra.mrb[0].mxu0 %v1254
    %v1342 = vpop.f32.mrb[0].mxu0
    %v1343 = vadd.f32 0.0, %v1342
    %v1344 = vpop.f32.mrb[0].mxu0
    %1345 = vmatprep.mubr.f32.mxu0 0.0
    %1346 = vmatmul.mubr.f32.gmra.mrb[0].mxu0 %v1257
    %v1347 = vpop.f32.mrb[0].mxu0
    %v1348 = vadd.f32 0.0, %v1347
    %v1349 = vpop.f32.mrb[0].mxu0
    %1350 = vmatprep.mubr.f32.mxu0 0.0
    %1351 = vmatmul.mubr.f32.gmra.mrb[0].mxu0 %v1260
    %v1352 = vpop.f32.mrb[0].mxu0
    %v1353 = vadd.f32 0.0, %v1352
    %v1354 = vpop.f32.mrb[0].mxu0
    %1355 = vdwg.mxu0
    %v1356 = vadd.f32 %v1220, %v1333
    %v1357 = vadd.f32 %v1223, %v1338
    %v1358 = vadd.f32 %v1228, %v1343
    %v1359 = vadd.f32 %v1231, %v1348
    %v1360 = vadd.f32 %v1236, %v1353
    %v1361 = vld [vmem:[#allocation6] sm:$0xff]
    %v1362 = vld [vmem:[#allocation6 + $0x8] sm:$0xff]
    %v1363 = vld [vmem:[#allocation6 + $0x10] sm:$0xff]
    %v1364 = vld [vmem:[#allocation6 + $0x18] sm:$0xff]
    %v1365 = vld [vmem:[#allocation6 + $0x20] sm:$0xff]
    %1367 = vset.pattern.permute.xlu0 0
    %1368 = vperm.xlu0 %1367, %v1361
    %v1369 = vpop.permute.xlu0 %1368
    %1372 = vset.pattern.permute.xlu0 0
    %1373 = vperm.xlu0 %1372, %v1362
    %v1374 = vpop.permute.xlu0 %1373
    %1377 = vset.pattern.permute.xlu0 0
    %1378 = vperm.xlu0 %1377, %v1363
    %v1379 = vpop.permute.xlu0 %1378
    %1382 = vset.pattern.permute.xlu0 0
    %1383 = vperm.xlu0 %1382, %v1364
    %v1384 = vpop.permute.xlu0 %1383
    %1387 = vset.pattern.permute.xlu0 0
    %1388 = vperm.xlu0 %1387, %v1365
    %v1389 = vpop.permute.xlu0 %1388
    %v1391 = vadd.f32 %v1356, %v1369
    %v1392 = vadd.f32 %v1357, %v1374
    %v1393 = vadd.f32 %v1358, %v1379
    %v1394 = vadd.f32 %v1359, %v1384
    %v1395 = vadd.f32 %v1360, %v1389
    %v1396 = vmax.f32 %v1391, 0.0
    %v1397 = vmax.f32 %v1392, 0.0
    %v1398 = vmax.f32 %v1393, 0.0
    %v1399 = vmax.f32 %v1394, 0.0
    %v1400 = vmax.f32 %v1395, 0.0
    %v1401 = vld [vmem:[#allocation8] sm:$0xff]
    %v1402 = vld [vmem:[#allocation8 + $0x8] sm:$0xff]
    %v1403 = vld [vmem:[#allocation8 + $0x10] sm:$0xff]
    %v1404 = vld [vmem:[#allocation8 + $0x18] sm:$0xff]
    %v1405 = vld [vmem:[#allocation8 + $0x20] sm:$0xff]
    %v1406 = vld [vmem:[#allocation10] sm:$0xff]
    %v1407 = vld [vmem:[#allocation10 + $0x8] sm:$0xff]
    %v1408 = vld [vmem:[#allocation10 + $0x10] sm:$0xff]
    %v1409 = vld [vmem:[#allocation10 + $0x18] sm:$0xff]
    %v1410 = vld [vmem:[#allocation10 + $0x20] sm:$0xff]
    %1412 = vset.pattern.permute.xlu0 0
    %1413 = vperm.xlu0 %1412, %v1406
    %v1414 = vpop.permute.xlu0 %1413
    %1417 = vset.pattern.permute.xlu0 0
    %1418 = vperm.xlu0 %1417, %v1407
    %v1419 = vpop.permute.xlu0 %1418
    %1422 = vset.pattern.permute.xlu0 0
    %1423 = vperm.xlu0 %1422, %v1408
    %v1424 = vpop.permute.xlu0 %1423
    %1427 = vset.pattern.permute.xlu0 0
    %1428 = vperm.xlu0 %1427, %v1409
    %v1429 = vpop.permute.xlu0 %1428
    %1432 = vset.pattern.permute.xlu0 0
    %1433 = vperm.xlu0 %1432, %v1410
    %v1434 = vpop.permute.xlu0 %1433
    %vm1436 = vcmask 326656
    %v1438 = vsel %vm1436, %v1401, 0
    %v1441 = vsel %vm1436, %v1402, 0
    %v1444 = vsel %vm1436, %v1403, 0
    %v1447 = vsel %vm1436, %v1404, 0
    %v1450 = vsel %vm1436, %v1405, 0
    %1452 = vmatprep.subr.mxu0 0.0
    %1453 = vmatpush1.msra.mxu0 %v1396
    %1454 = vmatprep.subr.mxu0 0.0
    %1455 = vmatpush1.msra.mxu0 %v1397
    %1456 = vmatprep.subr.mxu0 0.0
    %1457 = vmatpush1.msra.mxu0 %v1398
    %1458 = vmatprep.subr.mxu0 0.0
    %1459 = vmatpush1.msra.mxu0 %v1399
    %1460 = vmatprep.subr.mxu0 0.0
    %1461 = vmatpush1.msra.mxu0 %v1400
    %1462 = vmatprep.subr.mxu0 0.0
    %1463 = vmatpush1.msra.mxu0 0.0
    %1464 = vmatprep.subr.mxu0 0.0
    %1465 = vmatpush1.msra.mxu0 0.0
    %1466 = vmatprep.subr.mxu0 0.0
    %1467 = vmatpush1.msra.mxu0 0.0
    %1468 = vmatprep.subr.mxu0 0.0
    %1469 = vmatpush1.msra.mxu0 0.0
    %1470 = vmatprep.subr.mxu0 0.0
    %1471 = vmatpush1.msra.mxu0 0.0
    %1472 = vmatprep.subr.mxu0 0.0
    %1473 = vmatpush1.msra.mxu0 0.0
    %1474 = vmatprep.subr.mxu0 0.0
    %1475 = vmatpush1.msra.mxu0 0.0
    %1476 = vmatprep.subr.mxu0 0.0
    %1477 = vmatpush1.msra.mxu0 0.0
    %1478 = vmatprep.subr.mxu0 0.0
    %1479 = vmatpush1.msra.mxu0 0.0
    %1480 = vmatprep.subr.mxu0 0.0
    %1481 = vmatpush1.msra.mxu0 0.0
    %1482 = vmatprep.subr.mxu0 0.0
    %1483 = vmatpush1.msra.mxu0 0.0
    %1484 = vmatprep.subr.mxu0 0.0
    %1485 = vmatpush1.msra.mxu0 0.0
    %1486 = vmatprep.subr.mxu0 0.0
    %1487 = vmatpush1.msra.mxu0 0.0
    %1488 = vmatprep.subr.mxu0 0.0
    %1489 = vmatpush1.msra.mxu0 0.0
    %1490 = vmatprep.subr.mxu0 0.0
    %1491 = vmatpush1.msra.mxu0 0.0
    %1492 = vmatprep.subr.mxu0 0.0
    %1493 = vmatpush1.msra.mxu0 0.0
    %1494 = vmatprep.subr.mxu0 0.0
    %1495 = vmatpush1.msra.mxu0 0.0
    %1496 = vmatprep.subr.mxu0 0.0
    %1497 = vmatpush1.msra.mxu0 0.0
    %1498 = vmatprep.subr.mxu0 0.0
    %1499 = vmatpush1.msra.mxu0 0.0
    %1500 = vmatprep.subr.mxu0 0.0
    %1501 = vmatpush1.msra.mxu0 0.0
    %1502 = vmatprep.subr.mxu0 0.0
    %1503 = vmatpush1.msra.mxu0 0.0
    %1504 = vmatprep.subr.mxu0 0.0
    %1505 = vmatpush1.msra.mxu0 0.0
    %1506 = vmatprep.subr.mxu0 0.0
    %1507 = vmatpush1.msra.mxu0 0.0
    %1508 = vmatprep.subr.mxu0 0.0
    %1509 = vmatpush1.msra.mxu0 0.0
    %1510 = vmatprep.subr.mxu0 0.0
    %1511 = vmatpush1.msra.mxu0 0.0
    %1512 = vmatprep.subr.mxu0 0.0
    %1513 = vmatpush1.msra.mxu0 0.0
    %1514 = vmatprep.subr.mxu0 0.0
    %1515 = vmatpush1.msra.mxu0 0.0
    %1516 = vmatprep.mubr.f32.mxu0 0.0
    %1517 = vmatmul.mubr.f32.gmra.mrb[0].mxu0 %v1438
    %v1518 = vpop.f32.mrb[0].mxu0
    %v1519 = vadd.f32 %v1414, %v1518
    %v1520 = vpop.f32.mrb[0].mxu0
    %1521 = vmatprep.mubr.f32.mxu0 0.0
    %1522 = vmatmul.mubr.f32.gmra.mrb[0].mxu0 %v1441
    %v1523 = vpop.f32.mrb[0].mxu0
    %v1524 = vadd.f32 %v1419, %v1523
    %v1525 = vpop.f32.mrb[0].mxu0
    %1526 = vmatprep.mubr.f32.mxu0 0.0
    %1527 = vmatmul.mubr.f32.gmra.mrb[0].mxu0 %v1444
    %v1528 = vpop.f32.mrb[0].mxu0
    %v1529 = vadd.f32 %v1424, %v1528
    %v1530 = vpop.f32.mrb[0].mxu0
    %1531 = vmatprep.mubr.f32.mxu0 0.0
    %1532 = vmatmul.mubr.f32.gmra.mrb[0].mxu0 %v1447
    %v1533 = vpop.f32.mrb[0].mxu0
    %v1534 = vadd.f32 %v1429, %v1533
    %v1535 = vpop.f32.mrb[0].mxu0
    %1536 = vmatprep.mubr.f32.mxu0 0.0
    %1537 = vmatmul.mubr.f32.gmra.mrb[0].mxu0 %v1450
    %v1538 = vpop.f32.mrb[0].mxu0
    %v1539 = vadd.f32 %v1434, %v1538
    %v1540 = vpop.f32.mrb[0].mxu0
    %1541 = vdwg.mxu0
    %v1542 = vmax.f32 %v1519, 0.0
    %v1543 = vmax.f32 %v1524, 0.0
    %v1544 = vmax.f32 %v1529, 0.0
    %v1545 = vmax.f32 %v1534, 0.0
    %v1546 = vmax.f32 %v1539, 0.0
    %v1547 = vld [vmem:[%s19] sm:$0x1]
    %v1548 = vld [vmem:[#allocation2] sm:$0x1]
    %1550 = vset.pattern.permute.xlu0 0
    %1551 = vperm.xlu0 %1550, %v1548
    %v1552 = vpop.permute.xlu0 %1551
    %v1554 = vlaneseq
    %v1555 = vshrl.u32 %v1554, 7
    %v1556 = vsub.s32 0, %v1555
    %v1557 = vrot.slane %v1552, %v1556
    %v1559 = vsel %vm1436, %v1547, 0
    %1561 = vmatprep.subr.mxu0 0.0
    %1562 = vmatpush1.msra.mxu0 %v1542
    %1563 = vmatprep.subr.mxu0 0.0
    %1564 = vmatpush1.msra.mxu0 %v1543
    %1565 = vmatprep.subr.mxu0 0.0
    %1566 = vmatpush1.msra.mxu0 %v1544
    %1567 = vmatprep.subr.mxu0 0.0
    %1568 = vmatpush1.msra.mxu0 %v1545
    %1569 = vmatprep.subr.mxu0 0.0
    %1570 = vmatpush1.msra.mxu0 %v1546
    %1571 = vmatprep.subr.mxu0 0.0
    %1572 = vmatpush1.msra.mxu0 0.0
    %1573 = vmatprep.subr.mxu0 0.0
    %1574 = vmatpush1.msra.mxu0 0.0
    %1575 = vmatprep.subr.mxu0 0.0
    %1576 = vmatpush1.msra.mxu0 0.0
    %1577 = vmatprep.subr.mxu0 0.0
    %1578 = vmatpush1.msra.mxu0 0.0
    %1579 = vmatprep.subr.mxu0 0.0
    %1580 = vmatpush1.msra.mxu0 0.0
    %1581 = vmatprep.subr.mxu0 0.0
    %1582 = vmatpush1.msra.mxu0 0.0
    %1583 = vmatprep.subr.mxu0 0.0
    %1584 = vmatpush1.msra.mxu0 0.0
    %1585 = vmatprep.subr.mxu0 0.0
    %1586 = vmatpush1.msra.mxu0 0.0
    %1587 = vmatprep.subr.mxu0 0.0
    %1588 = vmatpush1.msra.mxu0 0.0
    %1589 = vmatprep.subr.mxu0 0.0
    %1590 = vmatpush1.msra.mxu0 0.0
    %1591 = vmatprep.subr.mxu0 0.0
    %1592 = vmatpush1.msra.mxu0 0.0
    %1593 = vmatprep.subr.mxu0 0.0
    %1594 = vmatpush1.msra.mxu0 0.0
    %1595 = vmatprep.subr.mxu0 0.0
    %1596 = vmatpush1.msra.mxu0 0.0
    %1597 = vmatprep.subr.mxu0 0.0
    %1598 = vmatpush1.msra.mxu0 0.0
    %1599 = vmatprep.subr.mxu0 0.0
    %1600 = vmatpush1.msra.mxu0 0.0
    %1601 = vmatprep.subr.mxu0 0.0
    %1602 = vmatpush1.msra.mxu0 0.0
    %1603 = vmatprep.subr.mxu0 0.0
    %1604 = vmatpush1.msra.mxu0 0.0
    %1605 = vmatprep.subr.mxu0 0.0
    %1606 = vmatpush1.msra.mxu0 0.0
    %1607 = vmatprep.subr.mxu0 0.0
    %1608 = vmatpush1.msra.mxu0 0.0
    %1609 = vmatprep.subr.mxu0 0.0
    %1610 = vmatpush1.msra.mxu0 0.0
    %1611 = vmatprep.subr.mxu0 0.0
    %1612 = vmatpush1.msra.mxu0 0.0
    %1613 = vmatprep.subr.mxu0 0.0
    %1614 = vmatpush1.msra.mxu0 0.0
    %1615 = vmatprep.subr.mxu0 0.0
    %1616 = vmatpush1.msra.mxu0 0.0
    %1617 = vmatprep.subr.mxu0 0.0
    %1618 = vmatpush1.msra.mxu0 0.0
    %1619 = vmatprep.subr.mxu0 0.0
    %1620 = vmatpush1.msra.mxu0 0.0
    %1621 = vmatprep.subr.mxu0 0.0
    %1622 = vmatpush1.msra.mxu0 0.0
    %1623 = vmatprep.subr.mxu0 0.0
    %1624 = vmatpush1.msra.mxu0 0.0
    %1625 = vmatprep.mubr.f32.mxu0 0.0
    %1626 = vmatmul.mubr.f32.gmra.mrb[0].mxu0 %v1559
    %v1627 = vpop.f32.mrb[0].mxu0
    %v1628 = vadd.f32 %v1557, %v1627
    %v1629 = vpop.f32.mrb[0].mxu0
    %1630 = vdwg.mxu0
    %v1631 = vxor.u32 %v1628, 2147483648
    %v1632 = vmul.f32 %v1631, 1.442695
    %v1633 = vpow.pop %v1632
    %v1634 = vadd.f32 %v1633, 1.0
    %v1635 = vrcp.pop %v1634
    %v1636 = vmul.f32 1.0, %v1635
    %1637 = vst [vmem:[%s111] sm:$0x1] %v1636
    %vm1638 = vcmp.gt.f32.partialorder %v1636, 0.5
    %v1639 = vsel %vm1638, 1, 0
    %v1640 = vcvt.s32.f32 %v1639
    %v1641 = vld [vmem:[%s25] sm:$0x1f]
    %v1642 = vld [vmem:[#allocation11] sm:$0xff]
    %v1643 = vld [vmem:[#allocation11 + $0x8] sm:$0xff]
    %v1644 = vld [vmem:[#allocation11 + $0x10] sm:$0xff]
    %v1645 = vld [vmem:[#allocation11 + $0x18] sm:$0xff]
    %v1646 = vld [vmem:[#allocation11 + $0x20] sm:$0xff]
    %v1648 = vsel %vm973, %v1642, 0
    %v1651 = vsel %vm973, %v1643, 0
    %v1654 = vsel %vm973, %v1644, 0
    %v1657 = vsel %vm973, %v1645, 0
    %v1660 = vsel %vm973, %v1646, 0
    %1662 = vmatprep.subr.mxu0 0.0
    %1663 = vmatpush1.msra.mxu0 %v1006
    %1664 = vmatprep.subr.mxu0 0.0
    %1665 = vmatpush1.msra.mxu0 0.0
    %1666 = vmatprep.subr.mxu0 0.0
    %1667 = vmatpush1.msra.mxu0 0.0
    %1668 = vmatprep.subr.mxu0 0.0
    %1669 = vmatpush1.msra.mxu0 0.0
    %1670 = vmatprep.subr.mxu0 0.0
    %1671 = vmatpush1.msra.mxu0 0.0
    %1672 = vmatprep.subr.mxu0 0.0
    %1673 = vmatpush1.msra.mxu0 0.0
    %1674 = vmatprep.subr.mxu0 0.0
    %1675 = vmatpush1.msra.mxu0 0.0
    %1676 = vmatprep.subr.mxu0 0.0
    %1677 = vmatpush1.msra.mxu0 0.0
    %1678 = vmatprep.subr.mxu0 0.0
    %1679 = vmatpush1.msra.mxu0 0.0
    %1680 = vmatprep.subr.mxu0 0.0
    %1681 = vmatpush1.msra.mxu0 0.0
    %1682 = vmatprep.subr.mxu0 0.0
    %1683 = vmatpush1.msra.mxu0 0.0
    %1684 = vmatprep.subr.mxu0 0.0
    %1685 = vmatpush1.msra.mxu0 0.0
    %1686 = vmatprep.subr.mxu0 0.0
    %1687 = vmatpush1.msra.mxu0 0.0
    %1688 = vmatprep.subr.mxu0 0.0
    %1689 = vmatpush1.msra.mxu0 0.0
    %1690 = vmatprep.subr.mxu0 0.0
    %1691 = vmatpush1.msra.mxu0 0.0
    %1692 = vmatprep.subr.mxu0 0.0
    %1693 = vmatpush1.msra.mxu0 0.0
    %1694 = vmatprep.subr.mxu0 0.0
    %1695 = vmatpush1.msra.mxu0 0.0
    %1696 = vmatprep.subr.mxu0 0.0
    %1697 = vmatpush1.msra.mxu0 0.0
    %1698 = vmatprep.subr.mxu0 0.0
    %1699 = vmatpush1.msra.mxu0 0.0
    %1700 = vmatprep.subr.mxu0 0.0
    %1701 = vmatpush1.msra.mxu0 0.0
    %1702 = vmatprep.subr.mxu0 0.0
    %1703 = vmatpush1.msra.mxu0 0.0
    %1704 = vmatprep.subr.mxu0 0.0
    %1705 = vmatpush1.msra.mxu0 0.0
    %1706 = vmatprep.subr.mxu0 0.0
    %1707 = vmatpush1.msra.mxu0 0.0
    %1708 = vmatprep.subr.mxu0 0.0
    %1709 = vmatpush1.msra.mxu0 0.0
    %1710 = vmatprep.subr.mxu0 0.0
    %1711 = vmatpush1.msra.mxu0 0.0
    %1712 = vmatprep.subr.mxu0 0.0
    %1713 = vmatpush1.msra.mxu0 0.0
    %1714 = vmatprep.subr.mxu0 0.0
    %1715 = vmatpush1.msra.mxu0 0.0
    %1716 = vmatprep.subr.mxu0 0.0
    %1717 = vmatpush1.msra.mxu0 0.0
    %1718 = vmatprep.subr.mxu0 0.0
    %1719 = vmatpush1.msra.mxu0 0.0
    %1720 = vmatprep.subr.mxu0 0.0
    %1721 = vmatpush1.msra.mxu0 0.0
    %1722 = vmatprep.subr.mxu0 0.0
    %1723 = vmatpush1.msra.mxu0 0.0
    %1724 = vmatprep.subr.mxu0 0.0
    %1725 = vmatpush1.msra.mxu0 0.0
    %1726 = vmatprep.mubr.f32.mxu0 0.0
    %1727 = vmatmul.mubr.f32.gmra.mrb[0].mxu0 %v1648
    %v1728 = vpop.f32.mrb[0].mxu0
    %v1729 = vadd.f32 0.0, %v1728
    %v1730 = vpop.f32.mrb[0].mxu0
    %1731 = vmatprep.mubr.f32.mxu0 0.0
    %1732 = vmatmul.mubr.f32.gmra.mrb[0].mxu0 %v1651
    %v1733 = vpop.f32.mrb[0].mxu0
    %v1734 = vadd.f32 0.0, %v1733
    %v1735 = vpop.f32.mrb[0].mxu0
    %1736 = vmatprep.mubr.f32.mxu0 0.0
    %1737 = vmatmul.mubr.f32.gmra.mrb[0].mxu0 %v1654
    %v1738 = vpop.f32.mrb[0].mxu0
    %v1739 = vadd.f32 0.0, %v1738
    %v1740 = vpop.f32.mrb[0].mxu0
    %1741 = vmatprep.mubr.f32.mxu0 0.0
    %1742 = vmatmul.mubr.f32.gmra.mrb[0].mxu0 %v1657
    %v1743 = vpop.f32.mrb[0].mxu0
    %v1744 = vadd.f32 0.0, %v1743
    %v1745 = vpop.f32.mrb[0].mxu0
    %1746 = vmatprep.mubr.f32.mxu0 0.0
    %1747 = vmatmul.mubr.f32.gmra.mrb[0].mxu0 %v1660
    %v1748 = vpop.f32.mrb[0].mxu0
    %v1749 = vadd.f32 0.0, %v1748
    %v1750 = vpop.f32.mrb[0].mxu0
    %1751 = vdwg.mxu0
    %v1752 = vmax.f32 %v1729, 0.0
    %v1753 = vmax.f32 %v1734, 0.0
    %v1754 = vmax.f32 %v1739, 0.0
    %v1755 = vmax.f32 %v1744, 0.0
    %v1756 = vmax.f32 %v1749, 0.0
    %v1758 = vsel %vm1436, %v1641, 0
    %1760 = vmatprep.subr.mxu0 0.0
    %1761 = vmatpush1.msra.mxu0 %v1752
    %1762 = vmatprep.subr.mxu0 0.0
    %1763 = vmatpush1.msra.mxu0 %v1753
    %1764 = vmatprep.subr.mxu0 0.0
    %1765 = vmatpush1.msra.mxu0 %v1754
    %1766 = vmatprep.subr.mxu0 0.0
    %1767 = vmatpush1.msra.mxu0 %v1755
    %1768 = vmatprep.subr.mxu0 0.0
    %1769 = vmatpush1.msra.mxu0 %v1756
    %1770 = vmatprep.subr.mxu0 0.0
    %1771 = vmatpush1.msra.mxu0 0.0
    %1772 = vmatprep.subr.mxu0 0.0
    %1773 = vmatpush1.msra.mxu0 0.0
    %1774 = vmatprep.subr.mxu0 0.0
    %1775 = vmatpush1.msra.mxu0 0.0
    %1776 = vmatprep.subr.mxu0 0.0
    %1777 = vmatpush1.msra.mxu0 0.0
    %1778 = vmatprep.subr.mxu0 0.0
    %1779 = vmatpush1.msra.mxu0 0.0
    %1780 = vmatprep.subr.mxu0 0.0
    %1781 = vmatpush1.msra.mxu0 0.0
    %1782 = vmatprep.subr.mxu0 0.0
    %1783 = vmatpush1.msra.mxu0 0.0
    %1784 = vmatprep.subr.mxu0 0.0
    %1785 = vmatpush1.msra.mxu0 0.0
    %1786 = vmatprep.subr.mxu0 0.0
    %1787 = vmatpush1.msra.mxu0 0.0
    %1788 = vmatprep.subr.mxu0 0.0
    %1789 = vmatpush1.msra.mxu0 0.0
    %1790 = vmatprep.subr.mxu0 0.0
    %1791 = vmatpush1.msra.mxu0 0.0
    %1792 = vmatprep.subr.mxu0 0.0
    %1793 = vmatpush1.msra.mxu0 0.0
    %1794 = vmatprep.subr.mxu0 0.0
    %1795 = vmatpush1.msra.mxu0 0.0
    %1796 = vmatprep.subr.mxu0 0.0
    %1797 = vmatpush1.msra.mxu0 0.0
    %1798 = vmatprep.subr.mxu0 0.0
    %1799 = vmatpush1.msra.mxu0 0.0
    %1800 = vmatprep.subr.mxu0 0.0
    %1801 = vmatpush1.msra.mxu0 0.0
    %1802 = vmatprep.subr.mxu0 0.0
    %1803 = vmatpush1.msra.mxu0 0.0
    %1804 = vmatprep.subr.mxu0 0.0
    %1805 = vmatpush1.msra.mxu0 0.0
    %1806 = vmatprep.subr.mxu0 0.0
    %1807 = vmatpush1.msra.mxu0 0.0
    %1808 = vmatprep.subr.mxu0 0.0
    %1809 = vmatpush1.msra.mxu0 0.0
    %1810 = vmatprep.subr.mxu0 0.0
    %1811 = vmatpush1.msra.mxu0 0.0
    %1812 = vmatprep.subr.mxu0 0.0
    %1813 = vmatpush1.msra.mxu0 0.0
    %1814 = vmatprep.subr.mxu0 0.0
    %1815 = vmatpush1.msra.mxu0 0.0
    %1816 = vmatprep.subr.mxu0 0.0
    %1817 = vmatpush1.msra.mxu0 0.0
    %1818 = vmatprep.subr.mxu0 0.0
    %1819 = vmatpush1.msra.mxu0 0.0
    %1820 = vmatprep.subr.mxu0 0.0
    %1821 = vmatpush1.msra.mxu0 0.0
    %1822 = vmatprep.subr.mxu0 0.0
    %1823 = vmatpush1.msra.mxu0 0.0
    %1824 = vmatprep.mubr.f32.mxu0 0.0
    %1825 = vmatmul.mubr.f32.gmra.mrb[0].mxu0 %v1758
    %v1826 = vpop.f32.mrb[0].mxu0
    %v1827 = vadd.f32 0.0, %v1826
    %v1828 = vpop.f32.mrb[0].mxu0
    %1829 = vdwg.mxu0
    %v1830 = vmax.f32 %v1827, 0.0
    %v1831 = vld [vmem:[#allocation14] sm:$0xf]
    %v1832 = vld [vmem:[#allocation13] sm:$0xff]
    %v1833 = vld [vmem:[#allocation13 + $0x8] sm:$0xff]
    %v1834 = vld [vmem:[#allocation13 + $0x10] sm:$0xff]
    %v1835 = vld [vmem:[#allocation13 + $0x18] sm:$0xff]
    %v1836 = vld [vmem:[#allocation13 + $0x20] sm:$0xff]
    %v1838 = vsel %vm1246, %v1832, 0
    %v1841 = vsel %vm1246, %v1833, 0
    %v1844 = vsel %vm1246, %v1834, 0
    %v1847 = vsel %vm1246, %v1835, 0
    %v1850 = vsel %vm1246, %v1836, 0
    %1852 = vmatprep.subr.mxu0 0.0
    %1853 = vmatpush1.msra.mxu0 %v1264
    %1854 = vmatprep.subr.mxu0 0.0
    %1855 = vmatpush1.msra.mxu0 0.0
    %1856 = vmatprep.subr.mxu0 0.0
    %1857 = vmatpush1.msra.mxu0 0.0
    %1858 = vmatprep.subr.mxu0 0.0
    %1859 = vmatpush1.msra.mxu0 0.0
    %1860 = vmatprep.subr.mxu0 0.0
    %1861 = vmatpush1.msra.mxu0 0.0
    %1862 = vmatprep.subr.mxu0 0.0
    %1863 = vmatpush1.msra.mxu0 0.0
    %1864 = vmatprep.subr.mxu0 0.0
    %1865 = vmatpush1.msra.mxu0 0.0
    %1866 = vmatprep.subr.mxu0 0.0
    %1867 = vmatpush1.msra.mxu0 0.0
    %1868 = vmatprep.subr.mxu0 0.0
    %1869 = vmatpush1.msra.mxu0 0.0
    %1870 = vmatprep.subr.mxu0 0.0
    %1871 = vmatpush1.msra.mxu0 0.0
    %1872 = vmatprep.subr.mxu0 0.0
    %1873 = vmatpush1.msra.mxu0 0.0
    %1874 = vmatprep.subr.mxu0 0.0
    %1875 = vmatpush1.msra.mxu0 0.0
    %1876 = vmatprep.subr.mxu0 0.0
    %1877 = vmatpush1.msra.mxu0 0.0
    %1878 = vmatprep.subr.mxu0 0.0
    %1879 = vmatpush1.msra.mxu0 0.0
    %1880 = vmatprep.subr.mxu0 0.0
    %1881 = vmatpush1.msra.mxu0 0.0
    %1882 = vmatprep.subr.mxu0 0.0
    %1883 = vmatpush1.msra.mxu0 0.0
    %1884 = vmatprep.subr.mxu0 0.0
    %1885 = vmatpush1.msra.mxu0 0.0
    %1886 = vmatprep.subr.mxu0 0.0
    %1887 = vmatpush1.msra.mxu0 0.0
    %1888 = vmatprep.subr.mxu0 0.0
    %1889 = vmatpush1.msra.mxu0 0.0
    %1890 = vmatprep.subr.mxu0 0.0
    %1891 = vmatpush1.msra.mxu0 0.0
    %1892 = vmatprep.subr.mxu0 0.0
    %1893 = vmatpush1.msra.mxu0 0.0
    %1894 = vmatprep.subr.mxu0 0.0
    %1895 = vmatpush1.msra.mxu0 0.0
    %1896 = vmatprep.subr.mxu0 0.0
    %1897 = vmatpush1.msra.mxu0 0.0
    %1898 = vmatprep.subr.mxu0 0.0
    %1899 = vmatpush1.msra.mxu0 0.0
    %1900 = vmatprep.subr.mxu0 0.0
    %1901 = vmatpush1.msra.mxu0 0.0
    %1902 = vmatprep.subr.mxu0 0.0
    %1903 = vmatpush1.msra.mxu0 0.0
    %1904 = vmatprep.subr.mxu0 0.0
    %1905 = vmatpush1.msra.mxu0 0.0
    %1906 = vmatprep.subr.mxu0 0.0
    %1907 = vmatpush1.msra.mxu0 0.0
    %1908 = vmatprep.subr.mxu0 0.0
    %1909 = vmatpush1.msra.mxu0 0.0
    %1910 = vmatprep.subr.mxu0 0.0
    %1911 = vmatpush1.msra.mxu0 0.0
    %1912 = vmatprep.subr.mxu0 0.0
    %1913 = vmatpush1.msra.mxu0 0.0
    %1914 = vmatprep.subr.mxu0 0.0
    %1915 = vmatpush1.msra.mxu0 0.0
    %1916 = vmatprep.mubr.f32.mxu0 0.0
    %1917 = vmatmul.mubr.f32.gmra.mrb[0].mxu0 %v1838
    %v1918 = vpop.f32.mrb[0].mxu0
    %v1919 = vadd.f32 0.0, %v1918
    %v1920 = vpop.f32.mrb[0].mxu0
    %1921 = vmatprep.mubr.f32.mxu0 0.0
    %1922 = vmatmul.mubr.f32.gmra.mrb[0].mxu0 %v1841
    %v1923 = vpop.f32.mrb[0].mxu0
    %v1924 = vadd.f32 0.0, %v1923
    %v1925 = vpop.f32.mrb[0].mxu0
    %1926 = vmatprep.mubr.f32.mxu0 0.0
    %1927 = vmatmul.mubr.f32.gmra.mrb[0].mxu0 %v1844
    %v1928 = vpop.f32.mrb[0].mxu0
    %v1929 = vadd.f32 0.0, %v1928
    %v1930 = vpop.f32.mrb[0].mxu0
    %1931 = vmatprep.mubr.f32.mxu0 0.0
    %1932 = vmatmul.mubr.f32.gmra.mrb[0].mxu0 %v1847
    %v1933 = vpop.f32.mrb[0].mxu0
    %v1934 = vadd.f32 0.0, %v1933
    %v1935 = vpop.f32.mrb[0].mxu0
    %1936 = vmatprep.mubr.f32.mxu0 0.0
    %1937 = vmatmul.mubr.f32.gmra.mrb[0].mxu0 %v1850
    %v1938 = vpop.f32.mrb[0].mxu0
    %v1939 = vadd.f32 0.0, %v1938
    %v1940 = vpop.f32.mrb[0].mxu0
    %1941 = vdwg.mxu0
    %v1942 = vmax.f32 %v1919, 0.0
    %v1943 = vmax.f32 %v1924, 0.0
    %v1944 = vmax.f32 %v1929, 0.0
    %v1945 = vmax.f32 %v1934, 0.0
    %v1946 = vmax.f32 %v1939, 0.0
    %v1948 = vsel %vm1436, %v1831, 0
    %1950 = vmatprep.subr.mxu0 0.0
    %1951 = vmatpush1.msra.mxu0 %v1942
    %1952 = vmatprep.subr.mxu0 0.0
    %1953 = vmatpush1.msra.mxu0 %v1943
    %1954 = vmatprep.subr.mxu0 0.0
    %1955 = vmatpush1.msra.mxu0 %v1944
    %1956 = vmatprep.subr.mxu0 0.0
    %1957 = vmatpush1.msra.mxu0 %v1945
    %1958 = vmatprep.subr.mxu0 0.0
    %1959 = vmatpush1.msra.mxu0 %v1946
    %1960 = vmatprep.subr.mxu0 0.0
    %1961 = vmatpush1.msra.mxu0 0.0
    %1962 = vmatprep.subr.mxu0 0.0
    %1963 = vmatpush1.msra.mxu0 0.0
    %1964 = vmatprep.subr.mxu0 0.0
    %1965 = vmatpush1.msra.mxu0 0.0
    %1966 = vmatprep.subr.mxu0 0.0
    %1967 = vmatpush1.msra.mxu0 0.0
    %1968 = vmatprep.subr.mxu0 0.0
    %1969 = vmatpush1.msra.mxu0 0.0
    %1970 = vmatprep.subr.mxu0 0.0
    %1971 = vmatpush1.msra.mxu0 0.0
    %1972 = vmatprep.subr.mxu0 0.0
    %1973 = vmatpush1.msra.mxu0 0.0
    %1974 = vmatprep.subr.mxu0 0.0
    %1975 = vmatpush1.msra.mxu0 0.0
    %1976 = vmatprep.subr.mxu0 0.0
    %1977 = vmatpush1.msra.mxu0 0.0
    %1978 = vmatprep.subr.mxu0 0.0
    %1979 = vmatpush1.msra.mxu0 0.0
    %1980 = vmatprep.subr.mxu0 0.0
    %1981 = vmatpush1.msra.mxu0 0.0
    %1982 = vmatprep.subr.mxu0 0.0
    %1983 = vmatpush1.msra.mxu0 0.0
    %1984 = vmatprep.subr.mxu0 0.0
    %1985 = vmatpush1.msra.mxu0 0.0
    %1986 = vmatprep.subr.mxu0 0.0
    %1987 = vmatpush1.msra.mxu0 0.0
    %1988 = vmatprep.subr.mxu0 0.0
    %1989 = vmatpush1.msra.mxu0 0.0
    %1990 = vmatprep.subr.mxu0 0.0
    %1991 = vmatpush1.msra.mxu0 0.0
    %1992 = vmatprep.subr.mxu0 0.0
    %1993 = vmatpush1.msra.mxu0 0.0
    %1994 = vmatprep.subr.mxu0 0.0
    %1995 = vmatpush1.msra.mxu0 0.0
    %1996 = vmatprep.subr.mxu0 0.0
    %1997 = vmatpush1.msra.mxu0 0.0
    %1998 = vmatprep.subr.mxu0 0.0
    %1999 = vmatpush1.msra.mxu0 0.0
    %2000 = vmatprep.subr.mxu0 0.0
    %2001 = vmatpush1.msra.mxu0 0.0
    %2002 = vmatprep.subr.mxu0 0.0
    %2003 = vmatpush1.msra.mxu0 0.0
    %2004 = vmatprep.subr.mxu0 0.0
    %2005 = vmatpush1.msra.mxu0 0.0
    %2006 = vmatprep.subr.mxu0 0.0
    %2007 = vmatpush1.msra.mxu0 0.0
    %2008 = vmatprep.subr.mxu0 0.0
    %2009 = vmatpush1.msra.mxu0 0.0
    %2010 = vmatprep.subr.mxu0 0.0
    %2011 = vmatpush1.msra.mxu0 0.0
    %2012 = vmatprep.subr.mxu0 0.0
    %2013 = vmatpush1.msra.mxu0 0.0
    %2014 = vmatprep.mubr.f32.mxu0 0.0
    %2015 = vmatmul.mubr.f32.gmra.mrb[0].mxu0 %v1948
    %v2016 = vpop.f32.mrb[0].mxu0
    %v2017 = vadd.f32 0.0, %v2016
    %v2018 = vpop.f32.mrb[0].mxu0
    %2019 = vdwg.mxu0
    %v2020 = vmax.f32 %v2017, 0.0
    %v2021 = vld [vmem:[#allocation52] sm:$0xff]
    %v2022 = vld [vmem:[#allocation52 + $0x8] sm:$0xff]
    %v2023 = vld [vmem:[#allocation52 + $0x10] sm:$0xff]
    %v2024 = vld [vmem:[#allocation52 + $0x18] sm:$0xff]
    %v2025 = vld [vmem:[#allocation52 + $0x20] sm:$0xff]
    %v2026 = vld [vmem:[#allocation31] sm:$0xff]
    %v2027 = vld [vmem:[#allocation31 + $0x8] sm:$0xff]
    %v2028 = vld [vmem:[#allocation31 + $0x10] sm:$0xff]
    %v2029 = vld [vmem:[#allocation31 + $0x18] sm:$0xff]
    %v2030 = vld [vmem:[#allocation31 + $0x20] sm:$0xff]
    %v2031 = vld [vmem:[#allocation31 + $0x28] sm:$0xff]
    %v2032 = vld [vmem:[#allocation31 + $0x30] sm:$0xff]
    %v2033 = vld [vmem:[#allocation31 + $0x38] sm:$0xff]
    %v2034 = vld [vmem:[#allocation31 + $0x40] sm:$0xff]
    %v2035 = vld [vmem:[#allocation31 + $0x48] sm:$0xff]
    %vm2036 = vcmask 39936
    %v2038 = vsel %vm2036, %v2026, 0
    %v2041 = vsel %vm2036, %v2027, 0
    %v2044 = vsel %vm2036, %v2028, 0
    %v2047 = vsel %vm2036, %v2029, 0
    %v2050 = vsel %vm2036, %v2030, 0
    %v2053 = vsel %vm2036, %v2031, 0
    %v2056 = vsel %vm2036, %v2032, 0
    %v2059 = vsel %vm2036, %v2033, 0
    %v2062 = vsel %vm2036, %v2034, 0
    %v2065 = vsel %vm2036, %v2035, 0
    %vm2067 = vcmask 1044480
    %v2069 = vsel %vm2067, %v1830, 0
    %2071 = vmatprep.subr.mxu0 0.0
    %2072 = vmatpush1.msra.mxu0 %v2069
    %2073 = vmatprep.subr.mxu0 0.0
    %2074 = vmatpush1.msra.mxu0 0.0
    %2075 = vmatprep.subr.mxu0 0.0
    %2076 = vmatpush1.msra.mxu0 0.0
    %2077 = vmatprep.subr.mxu0 0.0
    %2078 = vmatpush1.msra.mxu0 0.0
    %2079 = vmatprep.subr.mxu0 0.0
    %2080 = vmatpush1.msra.mxu0 0.0
    %2081 = vmatprep.subr.mxu0 0.0
    %2082 = vmatpush1.msra.mxu0 0.0
    %2083 = vmatprep.subr.mxu0 0.0
    %2084 = vmatpush1.msra.mxu0 0.0
    %2085 = vmatprep.subr.mxu0 0.0
    %2086 = vmatpush1.msra.mxu0 0.0
    %2087 = vmatprep.subr.mxu0 0.0
    %2088 = vmatpush1.msra.mxu0 0.0
    %2089 = vmatprep.subr.mxu0 0.0
    %2090 = vmatpush1.msra.mxu0 0.0
    %2091 = vmatprep.subr.mxu0 0.0
    %2092 = vmatpush1.msra.mxu0 0.0
    %2093 = vmatprep.subr.mxu0 0.0
    %2094 = vmatpush1.msra.mxu0 0.0
    %2095 = vmatprep.subr.mxu0 0.0
    %2096 = vmatpush1.msra.mxu0 0.0
    %2097 = vmatprep.subr.mxu0 0.0
    %2098 = vmatpush1.msra.mxu0 0.0
    %2099 = vmatprep.subr.mxu0 0.0
    %2100 = vmatpush1.msra.mxu0 0.0
    %2101 = vmatprep.subr.mxu0 0.0
    %2102 = vmatpush1.msra.mxu0 0.0
    %2103 = vmatprep.subr.mxu0 0.0
    %2104 = vmatpush1.msra.mxu0 0.0
    %2105 = vmatprep.subr.mxu0 0.0
    %2106 = vmatpush1.msra.mxu0 0.0
    %2107 = vmatprep.subr.mxu0 0.0
    %2108 = vmatpush1.msra.mxu0 0.0
    %2109 = vmatprep.subr.mxu0 0.0
    %2110 = vmatpush1.msra.mxu0 0.0
    %2111 = vmatprep.subr.mxu0 0.0
    %2112 = vmatpush1.msra.mxu0 0.0
    %2113 = vmatprep.subr.mxu0 0.0
    %2114 = vmatpush1.msra.mxu0 0.0
    %2115 = vmatprep.subr.mxu0 0.0
    %2116 = vmatpush1.msra.mxu0 0.0
    %2117 = vmatprep.subr.mxu0 0.0
    %2118 = vmatpush1.msra.mxu0 0.0
    %2119 = vmatprep.subr.mxu0 0.0
    %2120 = vmatpush1.msra.mxu0 0.0
    %2121 = vmatprep.subr.mxu0 0.0
    %2122 = vmatpush1.msra.mxu0 0.0
    %2123 = vmatprep.subr.mxu0 0.0
    %2124 = vmatpush1.msra.mxu0 0.0
    %2125 = vmatprep.subr.mxu0 0.0
    %2126 = vmatpush1.msra.mxu0 0.0
    %2127 = vmatprep.subr.mxu0 0.0
    %2128 = vmatpush1.msra.mxu0 0.0
    %2129 = vmatprep.subr.mxu0 0.0
    %2130 = vmatpush1.msra.mxu0 0.0
    %2131 = vmatprep.subr.mxu0 0.0
    %2132 = vmatpush1.msra.mxu0 0.0
    %2133 = vmatprep.subr.mxu0 0.0
    %2134 = vmatpush1.msra.mxu0 0.0
    %2135 = vmatprep.mubr.f32.mxu0 0.0
    %2136 = vmatmul.mubr.f32.gmra.mrb[0].mxu0 %v2038
    %v2137 = vpop.f32.mrb[0].mxu0
    %v2138 = vadd.f32 0.0, %v2137
    %v2139 = vpop.f32.mrb[0].mxu0
    %2140 = vmatprep.mubr.f32.mxu0 0.0
    %2141 = vmatmul.mubr.f32.gmra.mrb[0].mxu0 %v2041
    %v2142 = vpop.f32.mrb[0].mxu0
    %v2143 = vadd.f32 0.0, %v2142
    %v2144 = vpop.f32.mrb[0].mxu0
    %2145 = vmatprep.mubr.f32.mxu0 0.0
    %2146 = vmatmul.mubr.f32.gmra.mrb[0].mxu0 %v2044
    %v2147 = vpop.f32.mrb[0].mxu0
    %v2148 = vadd.f32 0.0, %v2147
    %v2149 = vpop.f32.mrb[0].mxu0
    %2150 = vmatprep.mubr.f32.mxu0 0.0
    %2151 = vmatmul.mubr.f32.gmra.mrb[0].mxu0 %v2047
    %v2152 = vpop.f32.mrb[0].mxu0
    %v2153 = vadd.f32 0.0, %v2152
    %v2154 = vpop.f32.mrb[0].mxu0
    %2155 = vmatprep.mubr.f32.mxu0 0.0
    %2156 = vmatmul.mubr.f32.gmra.mrb[0].mxu0 %v2050
    %v2157 = vpop.f32.mrb[0].mxu0
    %v2158 = vadd.f32 0.0, %v2157
    %v2159 = vpop.f32.mrb[0].mxu0
    %2160 = vmatprep.mubr.f32.mxu0 0.0
    %2161 = vmatmul.mubr.f32.gmra.mrb[0].mxu0 %v2053
    %v2162 = vpop.f32.mrb[0].mxu0
    %v2163 = vadd.f32 0.0, %v2162
    %v2164 = vpop.f32.mrb[0].mxu0
    %2165 = vmatprep.mubr.f32.mxu0 0.0
    %2166 = vmatmul.mubr.f32.gmra.mrb[0].mxu0 %v2056
    %v2167 = vpop.f32.mrb[0].mxu0
    %v2168 = vadd.f32 0.0, %v2167
    %v2169 = vpop.f32.mrb[0].mxu0
    %2170 = vmatprep.mubr.f32.mxu0 0.0
    %2171 = vmatmul.mubr.f32.gmra.mrb[0].mxu0 %v2059
    %v2172 = vpop.f32.mrb[0].mxu0
    %v2173 = vadd.f32 0.0, %v2172
    %v2174 = vpop.f32.mrb[0].mxu0
    %2175 = vmatprep.mubr.f32.mxu0 0.0
    %2176 = vmatmul.mubr.f32.gmra.mrb[0].mxu0 %v2062
    %v2177 = vpop.f32.mrb[0].mxu0
    %v2178 = vadd.f32 0.0, %v2177
    %v2179 = vpop.f32.mrb[0].mxu0
    %2180 = vmatprep.mubr.f32.mxu0 0.0
    %2181 = vmatmul.mubr.f32.gmra.mrb[0].mxu0 %v2065
    %v2182 = vpop.f32.mrb[0].mxu0
    %v2183 = vadd.f32 0.0, %v2182
    %v2184 = vpop.f32.mrb[0].mxu0
    %2185 = vdwg.mxu0
    %v2186 = vpack.c.bf16 %v2143, %v2138
    %v2187 = vpack.c.bf16 %v2153, %v2148
    %v2188 = vpack.c.bf16 %v2158, %v2158
    %v2189 = vpack.c.bf16 %v2168, %v2163
    %v2190 = vpack.c.bf16 %v2178, %v2173
    %v2191 = vpack.c.bf16 %v2183, %v2183
    %2192 = vmatprep.subr.bf16.mxu0 0
    %2193 = vmatpush1.bf16.msra.mxu0 %v855
    %2194 = vmatprep.subr.bf16.mxu0 0
    %2195 = vmatpush1.bf16.msra.mxu0 %v856
    %2196 = vmatprep.subr.bf16.mxu0 0
    %2197 = vmatpush1.bf16.msra.mxu0 %v857
    %2198 = vmatprep.subr.bf16.mxu0 0
    %2199 = vmatpush1.bf16.msra.mxu0 %v858
    %2200 = vmatprep.subr.bf16.mxu0 0
    %2201 = vmatpush1.bf16.msra.mxu0 %v859
    %2202 = vmatprep.subr.bf16.mxu0 0
    %2203 = vmatpush1.bf16.msra.mxu0 %v860
    %2204 = vmatprep.subr.bf16.mxu0 0
    %2205 = vmatpush1.bf16.msra.mxu0 %v861
    %2206 = vmatprep.subr.bf16.mxu0 0
    %2207 = vmatpush1.bf16.msra.mxu0 %v862
    %2208 = vmatprep.subr.bf16.mxu0 0
    %2209 = vmatpush1.bf16.msra.mxu0 0
    %2210 = vmatprep.subr.bf16.mxu0 0
    %2211 = vmatpush1.bf16.msra.mxu0 0
    %2212 = vmatprep.subr.bf16.mxu0 0
    %2213 = vmatpush1.bf16.msra.mxu0 0
    %2214 = vmatprep.subr.bf16.mxu0 0
    %2215 = vmatpush1.bf16.msra.mxu0 0
    %2216 = vmatprep.subr.bf16.mxu0 0
    %2217 = vmatpush1.bf16.msra.mxu0 0
    %2218 = vmatprep.subr.bf16.mxu0 0
    %2219 = vmatpush1.bf16.msra.mxu0 0
    %2220 = vmatprep.subr.bf16.mxu0 0
    %2221 = vmatpush1.bf16.msra.mxu0 0
    %2222 = vmatprep.subr.bf16.mxu0 0
    %2223 = vmatpush1.bf16.msra.mxu0 0
    %2224 = vmatprep.mubr.bf16.mxu0 0
    %2225 = vmatmul.mubr.bf16.gmra.mrb[0].mxu0 %v2189
    %v2226 = vpop.f32.mrb[0].mxu0
    %v2227 = vadd.f32 0.0, %v2226
    %v2228 = vpop.f32.mrb[0].mxu0
    %v2229 = vpop.f32.mrb[0].mxu0
    %v2230 = vadd.f32 0.0, %v2229
    %v2231 = vpop.f32.mrb[0].mxu0
    %2232 = vmatprep.mubr.bf16.mxu0 0
    %2233 = vmatmul.mubr.bf16.gmra.mrb[0].mxu0 %v2190
    %v2234 = vpop.f32.mrb[0].mxu0
    %v2235 = vadd.f32 0.0, %v2234
    %v2236 = vpop.f32.mrb[0].mxu0
    %v2237 = vpop.f32.mrb[0].mxu0
    %v2238 = vadd.f32 0.0, %v2237
    %v2239 = vpop.f32.mrb[0].mxu0
    %2240 = vmatprep.mubr.bf16.mxu0 0
    %2241 = vmatmul.mubr.bf16.gmra.mrb[0].mxu0 %v2191
    %v2242 = vpop.f32.mrb[0].mxu0
    %v2243 = vadd.f32 0.0, %v2242
    %v2244 = vpop.f32.mrb[0].mxu0
    %v2245 = vpop.f32.mrb[0].mxu0
    %v2246 = vpop.f32.mrb[0].mxu0
    %2247 = vdwg.mxu0
    %2248 = vmatprep.subr.bf16.mxu0 0
    %2249 = vmatpush1.bf16.msra.mxu0 %v915
    %2250 = vmatprep.subr.bf16.mxu0 0
    %2251 = vmatpush1.bf16.msra.mxu0 %v916
    %2252 = vmatprep.subr.bf16.mxu0 0
    %2253 = vmatpush1.bf16.msra.mxu0 %v917
    %2254 = vmatprep.subr.bf16.mxu0 0
    %2255 = vmatpush1.bf16.msra.mxu0 %v918
    %2256 = vmatprep.subr.bf16.mxu0 0
    %2257 = vmatpush1.bf16.msra.mxu0 %v919
    %2258 = vmatprep.subr.bf16.mxu0 0
    %2259 = vmatpush1.bf16.msra.mxu0 %v920
    %2260 = vmatprep.subr.bf16.mxu0 0
    %2261 = vmatpush1.bf16.msra.mxu0 %v921
    %2262 = vmatprep.subr.bf16.mxu0 0
    %2263 = vmatpush1.bf16.msra.mxu0 %v922
    %2264 = vmatprep.subr.bf16.mxu0 0
    %2265 = vmatpush1.bf16.msra.mxu0 0
    %2266 = vmatprep.subr.bf16.mxu0 0
    %2267 = vmatpush1.bf16.msra.mxu0 0
    %2268 = vmatprep.subr.bf16.mxu0 0
    %2269 = vmatpush1.bf16.msra.mxu0 0
    %2270 = vmatprep.subr.bf16.mxu0 0
    %2271 = vmatpush1.bf16.msra.mxu0 0
    %2272 = vmatprep.subr.bf16.mxu0 0
    %2273 = vmatpush1.bf16.msra.mxu0 0
    %2274 = vmatprep.subr.bf16.mxu0 0
    %2275 = vmatpush1.bf16.msra.mxu0 0
    %2276 = vmatprep.subr.bf16.mxu0 0
    %2277 = vmatpush1.bf16.msra.mxu0 0
    %2278 = vmatprep.subr.bf16.mxu0 0
    %2279 = vmatpush1.bf16.msra.mxu0 0
    %2280 = vmatprep.mubr.bf16.mxu0 0
    %2281 = vmatmul.mubr.bf16.gmra.mrb[0].mxu0 %v2186
    %v2282 = vpop.f32.mrb[0].mxu0
    %v2283 = vadd.f32 %v2227, %v2282
    %v2284 = vpop.f32.mrb[0].mxu0
    %v2285 = vpop.f32.mrb[0].mxu0
    %v2286 = vadd.f32 %v2230, %v2285
    %v2287 = vpop.f32.mrb[0].mxu0
    %2288 = vmatprep.mubr.bf16.mxu0 0
    %2289 = vmatmul.mubr.bf16.gmra.mrb[0].mxu0 %v2187
    %v2290 = vpop.f32.mrb[0].mxu0
    %v2291 = vadd.f32 %v2235, %v2290
    %v2292 = vpop.f32.mrb[0].mxu0
    %v2293 = vpop.f32.mrb[0].mxu0
    %v2294 = vadd.f32 %v2238, %v2293
    %v2295 = vpop.f32.mrb[0].mxu0
    %2296 = vmatprep.mubr.bf16.mxu0 0
    %2297 = vmatmul.mubr.bf16.gmra.mrb[0].mxu0 %v2188
    %v2298 = vpop.f32.mrb[0].mxu0
    %v2299 = vadd.f32 %v2243, %v2298
    %v2300 = vpop.f32.mrb[0].mxu0
    %v2301 = vpop.f32.mrb[0].mxu0
    %v2302 = vpop.f32.mrb[0].mxu0
    %2303 = vdwg.mxu0
    %v2304 = vld [vmem:[%s57] sm:$0xff]
    %v2305 = vld [vmem:[%s57 + $0x8] sm:$0xff]
    %v2306 = vld [vmem:[%s57 + $0x10] sm:$0xff]
    %v2307 = vld [vmem:[%s57 + $0x18] sm:$0xff]
    %v2308 = vld [vmem:[%s57 + $0x20] sm:$0xff]
    %v2310 = vsel %vm1246, %v2304, 0
    %v2313 = vsel %vm1246, %v2305, 0
    %v2316 = vsel %vm1246, %v2306, 0
    %v2319 = vsel %vm1246, %v2307, 0
    %v2322 = vsel %vm1246, %v2308, 0
    %v2325 = vsel %vm1262, %v2020, 0
    %2327 = vmatprep.subr.mxu0 0.0
    %2328 = vmatpush1.msra.mxu0 %v2325
    %2329 = vmatprep.subr.mxu0 0.0
    %2330 = vmatpush1.msra.mxu0 0.0
    %2331 = vmatprep.subr.mxu0 0.0
    %2332 = vmatpush1.msra.mxu0 0.0
    %2333 = vmatprep.subr.mxu0 0.0
    %2334 = vmatpush1.msra.mxu0 0.0
    %2335 = vmatprep.subr.mxu0 0.0
    %2336 = vmatpush1.msra.mxu0 0.0
    %2337 = vmatprep.subr.mxu0 0.0
    %2338 = vmatpush1.msra.mxu0 0.0
    %2339 = vmatprep.subr.mxu0 0.0
    %2340 = vmatpush1.msra.mxu0 0.0
    %2341 = vmatprep.subr.mxu0 0.0
    %2342 = vmatpush1.msra.mxu0 0.0
    %2343 = vmatprep.subr.mxu0 0.0
    %2344 = vmatpush1.msra.mxu0 0.0
    %2345 = vmatprep.subr.mxu0 0.0
    %2346 = vmatpush1.msra.mxu0 0.0
    %2347 = vmatprep.subr.mxu0 0.0
    %2348 = vmatpush1.msra.mxu0 0.0
    %2349 = vmatprep.subr.mxu0 0.0
    %2350 = vmatpush1.msra.mxu0 0.0
    %2351 = vmatprep.subr.mxu0 0.0
    %2352 = vmatpush1.msra.mxu0 0.0
    %2353 = vmatprep.subr.mxu0 0.0
    %2354 = vmatpush1.msra.mxu0 0.0
    %2355 = vmatprep.subr.mxu0 0.0
    %2356 = vmatpush1.msra.mxu0 0.0
    %2357 = vmatprep.subr.mxu0 0.0
    %2358 = vmatpush1.msra.mxu0 0.0
    %2359 = vmatprep.subr.mxu0 0.0
    %2360 = vmatpush1.msra.mxu0 0.0
    %2361 = vmatprep.subr.mxu0 0.0
    %2362 = vmatpush1.msra.mxu0 0.0
    %2363 = vmatprep.subr.mxu0 0.0
    %2364 = vmatpush1.msra.mxu0 0.0
    %2365 = vmatprep.subr.mxu0 0.0
    %2366 = vmatpush1.msra.mxu0 0.0
    %2367 = vmatprep.subr.mxu0 0.0
    %2368 = vmatpush1.msra.mxu0 0.0
    %2369 = vmatprep.subr.mxu0 0.0
    %2370 = vmatpush1.msra.mxu0 0.0
    %2371 = vmatprep.subr.mxu0 0.0
    %2372 = vmatpush1.msra.mxu0 0.0
    %2373 = vmatprep.subr.mxu0 0.0
    %2374 = vmatpush1.msra.mxu0 0.0
    %2375 = vmatprep.subr.mxu0 0.0
    %2376 = vmatpush1.msra.mxu0 0.0
    %2377 = vmatprep.subr.mxu0 0.0
    %2378 = vmatpush1.msra.mxu0 0.0
    %2379 = vmatprep.subr.mxu0 0.0
    %2380 = vmatpush1.msra.mxu0 0.0
    %2381 = vmatprep.subr.mxu0 0.0
    %2382 = vmatpush1.msra.mxu0 0.0
    %2383 = vmatprep.subr.mxu0 0.0
    %2384 = vmatpush1.msra.mxu0 0.0
    %2385 = vmatprep.subr.mxu0 0.0
    %2386 = vmatpush1.msra.mxu0 0.0
    %2387 = vmatprep.subr.mxu0 0.0
    %2388 = vmatpush1.msra.mxu0 0.0
    %2389 = vmatprep.subr.mxu0 0.0
    %2390 = vmatpush1.msra.mxu0 0.0
    %2391 = vmatprep.mubr.f32.mxu0 0.0
    %2392 = vmatmul.mubr.f32.gmra.mrb[0].mxu0 %v2310
    %v2393 = vpop.f32.mrb[0].mxu0
    %v2394 = vadd.f32 0.0, %v2393
    %v2395 = vpop.f32.mrb[0].mxu0
    %2396 = vmatprep.mubr.f32.mxu0 0.0
    %2397 = vmatmul.mubr.f32.gmra.mrb[0].mxu0 %v2313
    %v2398 = vpop.f32.mrb[0].mxu0
    %v2399 = vadd.f32 0.0, %v2398
    %v2400 = vpop.f32.mrb[0].mxu0
    %2401 = vmatprep.mubr.f32.mxu0 0.0
    %2402 = vmatmul.mubr.f32.gmra.mrb[0].mxu0 %v2316
    %v2403 = vpop.f32.mrb[0].mxu0
    %v2404 = vadd.f32 0.0, %v2403
    %v2405 = vpop.f32.mrb[0].mxu0
    %2406 = vmatprep.mubr.f32.mxu0 0.0
    %2407 = vmatmul.mubr.f32.gmra.mrb[0].mxu0 %v2319
    %v2408 = vpop.f32.mrb[0].mxu0
    %v2409 = vadd.f32 0.0, %v2408
    %v2410 = vpop.f32.mrb[0].mxu0
    %2411 = vmatprep.mubr.f32.mxu0 0.0
    %2412 = vmatmul.mubr.f32.gmra.mrb[0].mxu0 %v2322
    %v2413 = vpop.f32.mrb[0].mxu0
    %v2414 = vadd.f32 0.0, %v2413
    %v2415 = vpop.f32.mrb[0].mxu0
    %2416 = vdwg.mxu0
    %v2417 = vadd.f32 %v2283, %v2394
    %v2418 = vadd.f32 %v2286, %v2399
    %v2419 = vadd.f32 %v2291, %v2404
    %v2420 = vadd.f32 %v2294, %v2409
    %v2421 = vadd.f32 %v2299, %v2414
    %v2422 = vld [vmem:[#allocation32] sm:$0xff]
    %v2423 = vld [vmem:[#allocation32 + $0x8] sm:$0xff]
    %v2424 = vld [vmem:[#allocation32 + $0x10] sm:$0xff]
    %v2425 = vld [vmem:[#allocation32 + $0x18] sm:$0xff]
    %v2426 = vld [vmem:[#allocation32 + $0x20] sm:$0xff]
    %2428 = vset.pattern.permute.xlu0 0
    %2429 = vperm.xlu0 %2428, %v2422
    %v2430 = vpop.permute.xlu0 %2429
    %2433 = vset.pattern.permute.xlu0 0
    %2434 = vperm.xlu0 %2433, %v2423
    %v2435 = vpop.permute.xlu0 %2434
    %2438 = vset.pattern.permute.xlu0 0
    %2439 = vperm.xlu0 %2438, %v2424
    %v2440 = vpop.permute.xlu0 %2439
    %2443 = vset.pattern.permute.xlu0 0
    %2444 = vperm.xlu0 %2443, %v2425
    %v2445 = vpop.permute.xlu0 %2444
    %2448 = vset.pattern.permute.xlu0 0
    %2449 = vperm.xlu0 %2448, %v2426
    %v2450 = vpop.permute.xlu0 %2449
    %v2452 = vadd.f32 %v2417, %v2430
    %v2453 = vadd.f32 %v2418, %v2435
    %v2454 = vadd.f32 %v2419, %v2440
    %v2455 = vadd.f32 %v2420, %v2445
    %v2456 = vadd.f32 %v2421, %v2450
    %v2457 = vmax.f32 %v2452, 0.0
    %v2458 = vmax.f32 %v2453, 0.0
    %v2459 = vmax.f32 %v2454, 0.0
    %v2460 = vmax.f32 %v2455, 0.0
    %v2461 = vmax.f32 %v2456, 0.0
    %v2462 = vld [vmem:[#allocation34] sm:$0xff]
    %v2463 = vld [vmem:[#allocation34 + $0x8] sm:$0xff]
    %v2464 = vld [vmem:[#allocation34 + $0x10] sm:$0xff]
    %v2465 = vld [vmem:[#allocation34 + $0x18] sm:$0xff]
    %v2466 = vld [vmem:[#allocation34 + $0x20] sm:$0xff]
    %v2467 = vld [vmem:[#allocation35] sm:$0xff]
    %v2468 = vld [vmem:[#allocation35 + $0x8] sm:$0xff]
    %v2469 = vld [vmem:[#allocation35 + $0x10] sm:$0xff]
    %v2470 = vld [vmem:[#allocation35 + $0x18] sm:$0xff]
    %v2471 = vld [vmem:[#allocation35 + $0x20] sm:$0xff]
    %2473 = vset.pattern.permute.xlu0 0
    %2474 = vperm.xlu0 %2473, %v2467
    %v2475 = vpop.permute.xlu0 %2474
    %2478 = vset.pattern.permute.xlu0 0
    %2479 = vperm.xlu0 %2478, %v2468
    %v2480 = vpop.permute.xlu0 %2479
    %2483 = vset.pattern.permute.xlu0 0
    %2484 = vperm.xlu0 %2483, %v2469
    %v2485 = vpop.permute.xlu0 %2484
    %2488 = vset.pattern.permute.xlu0 0
    %2489 = vperm.xlu0 %2488, %v2470
    %v2490 = vpop.permute.xlu0 %2489
    %2493 = vset.pattern.permute.xlu0 0
    %2494 = vperm.xlu0 %2493, %v2471
    %v2495 = vpop.permute.xlu0 %2494
    %v2498 = vsel %vm1436, %v2462, 0
    %v2501 = vsel %vm1436, %v2463, 0
    %v2504 = vsel %vm1436, %v2464, 0
    %v2507 = vsel %vm1436, %v2465, 0
    %v2510 = vsel %vm1436, %v2466, 0
    %2512 = vmatprep.subr.mxu0 0.0
    %2513 = vmatpush1.msra.mxu0 %v2457
    %2514 = vmatprep.subr.mxu0 0.0
    %2515 = vmatpush1.msra.mxu0 %v2458
    %2516 = vmatprep.subr.mxu0 0.0
    %2517 = vmatpush1.msra.mxu0 %v2459
    %2518 = vmatprep.subr.mxu0 0.0
    %2519 = vmatpush1.msra.mxu0 %v2460
    %2520 = vmatprep.subr.mxu0 0.0
    %2521 = vmatpush1.msra.mxu0 %v2461
    %2522 = vmatprep.subr.mxu0 0.0
    %2523 = vmatpush1.msra.mxu0 0.0
    %2524 = vmatprep.subr.mxu0 0.0
    %2525 = vmatpush1.msra.mxu0 0.0
    %2526 = vmatprep.subr.mxu0 0.0
    %2527 = vmatpush1.msra.mxu0 0.0
    %2528 = vmatprep.subr.mxu0 0.0
    %2529 = vmatpush1.msra.mxu0 0.0
    %2530 = vmatprep.subr.mxu0 0.0
    %2531 = vmatpush1.msra.mxu0 0.0
    %2532 = vmatprep.subr.mxu0 0.0
    %2533 = vmatpush1.msra.mxu0 0.0
    %2534 = vmatprep.subr.mxu0 0.0
    %2535 = vmatpush1.msra.mxu0 0.0
    %2536 = vmatprep.subr.mxu0 0.0
    %2537 = vmatpush1.msra.mxu0 0.0
    %2538 = vmatprep.subr.mxu0 0.0
    %2539 = vmatpush1.msra.mxu0 0.0
    %2540 = vmatprep.subr.mxu0 0.0
    %2541 = vmatpush1.msra.mxu0 0.0
    %2542 = vmatprep.subr.mxu0 0.0
    %2543 = vmatpush1.msra.mxu0 0.0
    %2544 = vmatprep.subr.mxu0 0.0
    %2545 = vmatpush1.msra.mxu0 0.0
    %2546 = vmatprep.subr.mxu0 0.0
    %2547 = vmatpush1.msra.mxu0 0.0
    %2548 = vmatprep.subr.mxu0 0.0
    %2549 = vmatpush1.msra.mxu0 0.0
    %2550 = vmatprep.subr.mxu0 0.0
    %2551 = vmatpush1.msra.mxu0 0.0
    %2552 = vmatprep.subr.mxu0 0.0
    %2553 = vmatpush1.msra.mxu0 0.0
    %2554 = vmatprep.subr.mxu0 0.0
    %2555 = vmatpush1.msra.mxu0 0.0
    %2556 = vmatprep.subr.mxu0 0.0
    %2557 = vmatpush1.msra.mxu0 0.0
    %2558 = vmatprep.subr.mxu0 0.0
    %2559 = vmatpush1.msra.mxu0 0.0
    %2560 = vmatprep.subr.mxu0 0.0
    %2561 = vmatpush1.msra.mxu0 0.0
    %2562 = vmatprep.subr.mxu0 0.0
    %2563 = vmatpush1.msra.mxu0 0.0
    %2564 = vmatprep.subr.mxu0 0.0
    %2565 = vmatpush1.msra.mxu0 0.0
    %2566 = vmatprep.subr.mxu0 0.0
    %2567 = vmatpush1.msra.mxu0 0.0
    %2568 = vmatprep.subr.mxu0 0.0
    %2569 = vmatpush1.msra.mxu0 0.0
    %2570 = vmatprep.subr.mxu0 0.0
    %2571 = vmatpush1.msra.mxu0 0.0
    %2572 = vmatprep.subr.mxu0 0.0
    %2573 = vmatpush1.msra.mxu0 0.0
    %2574 = vmatprep.subr.mxu0 0.0
    %2575 = vmatpush1.msra.mxu0 0.0
    %2576 = vmatprep.mubr.f32.mxu0 0.0
    %2577 = vmatmul.mubr.f32.gmra.mrb[0].mxu0 %v2498
    %v2578 = vpop.f32.mrb[0].mxu0
    %v2579 = vadd.f32 %v2475, %v2578
    %v2580 = vpop.f32.mrb[0].mxu0
    %2581 = vmatprep.mubr.f32.mxu0 0.0
    %2582 = vmatmul.mubr.f32.gmra.mrb[0].mxu0 %v2501
    %v2583 = vpop.f32.mrb[0].mxu0
    %v2584 = vadd.f32 %v2480, %v2583
    %v2585 = vpop.f32.mrb[0].mxu0
    %2586 = vmatprep.mubr.f32.mxu0 0.0
    %2587 = vmatmul.mubr.f32.gmra.mrb[0].mxu0 %v2504
    %v2588 = vpop.f32.mrb[0].mxu0
    %v2589 = vadd.f32 %v2485, %v2588
    %v2590 = vpop.f32.mrb[0].mxu0
    %2591 = vmatprep.mubr.f32.mxu0 0.0
    %2592 = vmatmul.mubr.f32.gmra.mrb[0].mxu0 %v2507
    %v2593 = vpop.f32.mrb[0].mxu0
    %v2594 = vadd.f32 %v2490, %v2593
    %v2595 = vpop.f32.mrb[0].mxu0
    %2596 = vmatprep.mubr.f32.mxu0 0.0
    %2597 = vmatmul.mubr.f32.gmra.mrb[0].mxu0 %v2510
    %v2598 = vpop.f32.mrb[0].mxu0
    %v2599 = vadd.f32 %v2495, %v2598
    %v2600 = vpop.f32.mrb[0].mxu0
    %2601 = vdwg.mxu0
    %v2602 = vmax.f32 %v2579, 0.0
    %v2603 = vmax.f32 %v2584, 0.0
    %v2604 = vmax.f32 %v2589, 0.0
    %v2605 = vmax.f32 %v2594, 0.0
    %v2606 = vmax.f32 %v2599, 0.0
    %v2607 = vld [vmem:[#allocation37] sm:$0xf]
    %v2608 = vld [vmem:[#allocation38] sm:$0xf]
    %2610 = vset.pattern.permute.xlu0 0
    %2611 = vperm.xlu0 %2610, %v2608
    %v2612 = vpop.permute.xlu0 %2611
    %v2615 = vsel %vm1436, %v2607, 0
    %2617 = vmatprep.subr.mxu0 0.0
    %2618 = vmatpush1.msra.mxu0 %v2602
    %2619 = vmatprep.subr.mxu0 0.0
    %2620 = vmatpush1.msra.mxu0 %v2603
    %2621 = vmatprep.subr.mxu0 0.0
    %2622 = vmatpush1.msra.mxu0 %v2604
    %2623 = vmatprep.subr.mxu0 0.0
    %2624 = vmatpush1.msra.mxu0 %v2605
    %2625 = vmatprep.subr.mxu0 0.0
    %2626 = vmatpush1.msra.mxu0 %v2606
    %2627 = vmatprep.subr.mxu0 0.0
    %2628 = vmatpush1.msra.mxu0 0.0
    %2629 = vmatprep.subr.mxu0 0.0
    %2630 = vmatpush1.msra.mxu0 0.0
    %2631 = vmatprep.subr.mxu0 0.0
    %2632 = vmatpush1.msra.mxu0 0.0
    %2633 = vmatprep.subr.mxu0 0.0
    %2634 = vmatpush1.msra.mxu0 0.0
    %2635 = vmatprep.subr.mxu0 0.0
    %2636 = vmatpush1.msra.mxu0 0.0
    %2637 = vmatprep.subr.mxu0 0.0
    %2638 = vmatpush1.msra.mxu0 0.0
    %2639 = vmatprep.subr.mxu0 0.0
    %2640 = vmatpush1.msra.mxu0 0.0
    %2641 = vmatprep.subr.mxu0 0.0
    %2642 = vmatpush1.msra.mxu0 0.0
    %2643 = vmatprep.subr.mxu0 0.0
    %2644 = vmatpush1.msra.mxu0 0.0
    %2645 = vmatprep.subr.mxu0 0.0
    %2646 = vmatpush1.msra.mxu0 0.0
    %2647 = vmatprep.subr.mxu0 0.0
    %2648 = vmatpush1.msra.mxu0 0.0
    %2649 = vmatprep.subr.mxu0 0.0
    %2650 = vmatpush1.msra.mxu0 0.0
    %2651 = vmatprep.subr.mxu0 0.0
    %2652 = vmatpush1.msra.mxu0 0.0
    %2653 = vmatprep.subr.mxu0 0.0
    %2654 = vmatpush1.msra.mxu0 0.0
    %2655 = vmatprep.subr.mxu0 0.0
    %2656 = vmatpush1.msra.mxu0 0.0
    %2657 = vmatprep.subr.mxu0 0.0
    %2658 = vmatpush1.msra.mxu0 0.0
    %2659 = vmatprep.subr.mxu0 0.0
    %2660 = vmatpush1.msra.mxu0 0.0
    %2661 = vmatprep.subr.mxu0 0.0
    %2662 = vmatpush1.msra.mxu0 0.0
    %2663 = vmatprep.subr.mxu0 0.0
    %2664 = vmatpush1.msra.mxu0 0.0
    %2665 = vmatprep.subr.mxu0 0.0
    %2666 = vmatpush1.msra.mxu0 0.0
    %2667 = vmatprep.subr.mxu0 0.0
    %2668 = vmatpush1.msra.mxu0 0.0
    %2669 = vmatprep.subr.mxu0 0.0
    %2670 = vmatpush1.msra.mxu0 0.0
    %2671 = vmatprep.subr.mxu0 0.0
    %2672 = vmatpush1.msra.mxu0 0.0
    %2673 = vmatprep.subr.mxu0 0.0
    %2674 = vmatpush1.msra.mxu0 0.0
    %2675 = vmatprep.subr.mxu0 0.0
    %2676 = vmatpush1.msra.mxu0 0.0
    %2677 = vmatprep.subr.mxu0 0.0
    %2678 = vmatpush1.msra.mxu0 0.0
    %2679 = vmatprep.subr.mxu0 0.0
    %2680 = vmatpush1.msra.mxu0 0.0
    %2681 = vmatprep.mubr.f32.mxu0 0.0
    %2682 = vmatmul.mubr.f32.gmra.mrb[0].mxu0 %v2615
    %v2683 = vpop.f32.mrb[0].mxu0
    %v2684 = vadd.f32 %v2612, %v2683
    %v2685 = vpop.f32.mrb[0].mxu0
    %2686 = vdwg.mxu0
    %s2687 = scalar_lea.vmem [#allocation52], 40
    %v2688 = vld [vmem:[%s2687] sm:$0xff]
    %v2689 = vld [vmem:[%s2687 + $0x8] sm:$0xff]
    %v2690 = vld [vmem:[%s2687 + $0x10] sm:$0xff]
    %v2691 = vld [vmem:[%s2687 + $0x18] sm:$0xff]
    %v2692 = vld [vmem:[%s2687 + $0x20] sm:$0xff]
    %v2694 = vsel %vm1246, %v2688, 0
    %v2697 = vsel %vm1246, %v2689, 0
    %v2700 = vsel %vm1246, %v2690, 0
    %v2703 = vsel %vm1246, %v2691, 0
    %v2706 = vsel %vm1246, %v2692, 0
    %v2709 = vsel %vm1262, %v2684, 0
    %2711 = vmatprep.subr.mxu0 0.0
    %2712 = vmatpush1.msra.mxu0 %v2709
    %2713 = vmatprep.subr.mxu0 0.0
    %2714 = vmatpush1.msra.mxu0 0.0
    %2715 = vmatprep.subr.mxu0 0.0
    %2716 = vmatpush1.msra.mxu0 0.0
    %2717 = vmatprep.subr.mxu0 0.0
    %2718 = vmatpush1.msra.mxu0 0.0
    %2719 = vmatprep.subr.mxu0 0.0
    %2720 = vmatpush1.msra.mxu0 0.0
    %2721 = vmatprep.subr.mxu0 0.0
    %2722 = vmatpush1.msra.mxu0 0.0
    %2723 = vmatprep.subr.mxu0 0.0
    %2724 = vmatpush1.msra.mxu0 0.0
    %2725 = vmatprep.subr.mxu0 0.0
    %2726 = vmatpush1.msra.mxu0 0.0
    %2727 = vmatprep.subr.mxu0 0.0
    %2728 = vmatpush1.msra.mxu0 0.0
    %2729 = vmatprep.subr.mxu0 0.0
    %2730 = vmatpush1.msra.mxu0 0.0
    %2731 = vmatprep.subr.mxu0 0.0
    %2732 = vmatpush1.msra.mxu0 0.0
    %2733 = vmatprep.subr.mxu0 0.0
    %2734 = vmatpush1.msra.mxu0 0.0
    %2735 = vmatprep.subr.mxu0 0.0
    %2736 = vmatpush1.msra.mxu0 0.0
    %2737 = vmatprep.subr.mxu0 0.0
    %2738 = vmatpush1.msra.mxu0 0.0
    %2739 = vmatprep.subr.mxu0 0.0
    %2740 = vmatpush1.msra.mxu0 0.0
    %2741 = vmatprep.subr.mxu0 0.0
    %2742 = vmatpush1.msra.mxu0 0.0
    %2743 = vmatprep.subr.mxu0 0.0
    %2744 = vmatpush1.msra.mxu0 0.0
    %2745 = vmatprep.subr.mxu0 0.0
    %2746 = vmatpush1.msra.mxu0 0.0
    %2747 = vmatprep.subr.mxu0 0.0
    %2748 = vmatpush1.msra.mxu0 0.0
    %2749 = vmatprep.subr.mxu0 0.0
    %2750 = vmatpush1.msra.mxu0 0.0
    %2751 = vmatprep.subr.mxu0 0.0
    %2752 = vmatpush1.msra.mxu0 0.0
    %2753 = vmatprep.subr.mxu0 0.0
    %2754 = vmatpush1.msra.mxu0 0.0
    %2755 = vmatprep.subr.mxu0 0.0
    %2756 = vmatpush1.msra.mxu0 0.0
    %2757 = vmatprep.subr.mxu0 0.0
    %2758 = vmatpush1.msra.mxu0 0.0
    %2759 = vmatprep.subr.mxu0 0.0
    %2760 = vmatpush1.msra.mxu0 0.0
    %2761 = vmatprep.subr.mxu0 0.0
    %2762 = vmatpush1.msra.mxu0 0.0
    %2763 = vmatprep.subr.mxu0 0.0
    %2764 = vmatpush1.msra.mxu0 0.0
    %2765 = vmatprep.subr.mxu0 0.0
    %2766 = vmatpush1.msra.mxu0 0.0
    %2767 = vmatprep.subr.mxu0 0.0
    %2768 = vmatpush1.msra.mxu0 0.0
    %2769 = vmatprep.subr.mxu0 0.0
    %2770 = vmatpush1.msra.mxu0 0.0
    %2771 = vmatprep.subr.mxu0 0.0
    %2772 = vmatpush1.msra.mxu0 0.0
    %2773 = vmatprep.subr.mxu0 0.0
    %2774 = vmatpush1.msra.mxu0 0.0
    %2775 = vmatprep.mubr.f32.mxu0 0.0
    %2776 = vmatmul.mubr.f32.gmra.mrb[0].mxu0 %v2694
    %v2777 = vpop.f32.mrb[0].mxu0
    %v2778 = vadd.f32 0.0, %v2777
    %v2779 = vpop.f32.mrb[0].mxu0
    %2780 = vmatprep.mubr.f32.mxu0 0.0
    %2781 = vmatmul.mubr.f32.gmra.mrb[0].mxu0 %v2697
    %v2782 = vpop.f32.mrb[0].mxu0
    %v2783 = vadd.f32 0.0, %v2782
    %v2784 = vpop.f32.mrb[0].mxu0
    %2785 = vmatprep.mubr.f32.mxu0 0.0
    %2786 = vmatmul.mubr.f32.gmra.mrb[0].mxu0 %v2700
    %v2787 = vpop.f32.mrb[0].mxu0
    %v2788 = vadd.f32 0.0, %v2787
    %v2789 = vpop.f32.mrb[0].mxu0
    %2790 = vmatprep.mubr.f32.mxu0 0.0
    %2791 = vmatmul.mubr.f32.gmra.mrb[0].mxu0 %v2703
    %v2792 = vpop.f32.mrb[0].mxu0
    %v2793 = vadd.f32 0.0, %v2792
    %v2794 = vpop.f32.mrb[0].mxu0
    %2795 = vmatprep.mubr.f32.mxu0 0.0
    %2796 = vmatmul.mubr.f32.gmra.mrb[0].mxu0 %v2706
    %v2797 = vpop.f32.mrb[0].mxu0
    %v2798 = vadd.f32 0.0, %v2797
    %v2799 = vpop.f32.mrb[0].mxu0
    %2800 = vdwg.mxu0
    %v2802 = vsel %vm1246, %v2021, 0
    %v2805 = vsel %vm1246, %v2022, 0
    %v2808 = vsel %vm1246, %v2023, 0
    %v2811 = vsel %vm1246, %v2024, 0
    %v2814 = vsel %vm1246, %v2025, 0
    %2816 = vmatprep.subr.mxu0 0.0
    %2817 = vmatpush1.msra.mxu0 %v2325
    %2818 = vmatprep.subr.mxu0 0.0
    %2819 = vmatpush1.msra.mxu0 0.0
    %2820 = vmatprep.subr.mxu0 0.0
    %2821 = vmatpush1.msra.mxu0 0.0
    %2822 = vmatprep.subr.mxu0 0.0
    %2823 = vmatpush1.msra.mxu0 0.0
    %2824 = vmatprep.subr.mxu0 0.0
    %2825 = vmatpush1.msra.mxu0 0.0
    %2826 = vmatprep.subr.mxu0 0.0
    %2827 = vmatpush1.msra.mxu0 0.0
    %2828 = vmatprep.subr.mxu0 0.0
    %2829 = vmatpush1.msra.mxu0 0.0
    %2830 = vmatprep.subr.mxu0 0.0
    %2831 = vmatpush1.msra.mxu0 0.0
    %2832 = vmatprep.subr.mxu0 0.0
    %2833 = vmatpush1.msra.mxu0 0.0
    %2834 = vmatprep.subr.mxu0 0.0
    %2835 = vmatpush1.msra.mxu0 0.0
    %2836 = vmatprep.subr.mxu0 0.0
    %2837 = vmatpush1.msra.mxu0 0.0
    %2838 = vmatprep.subr.mxu0 0.0
    %2839 = vmatpush1.msra.mxu0 0.0
    %2840 = vmatprep.subr.mxu0 0.0
    %2841 = vmatpush1.msra.mxu0 0.0
    %2842 = vmatprep.subr.mxu0 0.0
    %2843 = vmatpush1.msra.mxu0 0.0
    %2844 = vmatprep.subr.mxu0 0.0
    %2845 = vmatpush1.msra.mxu0 0.0
    %2846 = vmatprep.subr.mxu0 0.0
    %2847 = vmatpush1.msra.mxu0 0.0
    %2848 = vmatprep.subr.mxu0 0.0
    %2849 = vmatpush1.msra.mxu0 0.0
    %2850 = vmatprep.subr.mxu0 0.0
    %2851 = vmatpush1.msra.mxu0 0.0
    %2852 = vmatprep.subr.mxu0 0.0
    %2853 = vmatpush1.msra.mxu0 0.0
    %2854 = vmatprep.subr.mxu0 0.0
    %2855 = vmatpush1.msra.mxu0 0.0
    %2856 = vmatprep.subr.mxu0 0.0
    %2857 = vmatpush1.msra.mxu0 0.0
    %2858 = vmatprep.subr.mxu0 0.0
    %2859 = vmatpush1.msra.mxu0 0.0
    %2860 = vmatprep.subr.mxu0 0.0
    %2861 = vmatpush1.msra.mxu0 0.0
    %2862 = vmatprep.subr.mxu0 0.0
    %2863 = vmatpush1.msra.mxu0 0.0
    %2864 = vmatprep.subr.mxu0 0.0
    %2865 = vmatpush1.msra.mxu0 0.0
    %2866 = vmatprep.subr.mxu0 0.0
    %2867 = vmatpush1.msra.mxu0 0.0
    %2868 = vmatprep.subr.mxu0 0.0
    %2869 = vmatpush1.msra.mxu0 0.0
    %2870 = vmatprep.subr.mxu0 0.0
    %2871 = vmatpush1.msra.mxu0 0.0
    %2872 = vmatprep.subr.mxu0 0.0
    %2873 = vmatpush1.msra.mxu0 0.0
    %2874 = vmatprep.subr.mxu0 0.0
    %2875 = vmatpush1.msra.mxu0 0.0
    %2876 = vmatprep.subr.mxu0 0.0
    %2877 = vmatpush1.msra.mxu0 0.0
    %2878 = vmatprep.subr.mxu0 0.0
    %2879 = vmatpush1.msra.mxu0 0.0
    %2880 = vmatprep.mubr.f32.mxu0 0.0
    %2881 = vmatmul.mubr.f32.gmra.mrb[0].mxu0 %v2802
    %v2882 = vpop.f32.mrb[0].mxu0
    %v2883 = vadd.f32 %v2778, %v2882
    %v2884 = vpop.f32.mrb[0].mxu0
    %2885 = vmatprep.mubr.f32.mxu0 0.0
    %2886 = vmatmul.mubr.f32.gmra.mrb[0].mxu0 %v2805
    %v2887 = vpop.f32.mrb[0].mxu0
    %v2888 = vadd.f32 %v2783, %v2887
    %v2889 = vpop.f32.mrb[0].mxu0
    %2890 = vmatprep.mubr.f32.mxu0 0.0
    %2891 = vmatmul.mubr.f32.gmra.mrb[0].mxu0 %v2808
    %v2892 = vpop.f32.mrb[0].mxu0
    %v2893 = vadd.f32 %v2788, %v2892
    %v2894 = vpop.f32.mrb[0].mxu0
    %2895 = vmatprep.mubr.f32.mxu0 0.0
    %2896 = vmatmul.mubr.f32.gmra.mrb[0].mxu0 %v2811
    %v2897 = vpop.f32.mrb[0].mxu0
    %v2898 = vadd.f32 %v2793, %v2897
    %v2899 = vpop.f32.mrb[0].mxu0
    %2900 = vmatprep.mubr.f32.mxu0 0.0
    %2901 = vmatmul.mubr.f32.gmra.mrb[0].mxu0 %v2814
    %v2902 = vpop.f32.mrb[0].mxu0
    %v2903 = vadd.f32 %v2798, %v2902
    %v2904 = vpop.f32.mrb[0].mxu0
    %2905 = vdwg.mxu0
    %v2906 = vld [vmem:[#allocation41] sm:$0xff]
    %v2907 = vld [vmem:[#allocation41 + $0x8] sm:$0xff]
    %v2908 = vld [vmem:[#allocation41 + $0x10] sm:$0xff]
    %v2909 = vld [vmem:[#allocation41 + $0x18] sm:$0xff]
    %v2910 = vld [vmem:[#allocation41 + $0x20] sm:$0xff]
    %v2911 = vlaneseq
    %v2912 = vshrl.u32 %v2911, 7
    %v2913 = vsub.s32 0, %v2912
    %v2914 = vrot.slane %v1640, %v2913
    %v2915 = vmul.f32 %v2684, %v2914
    %v2917 = vsel %vm1246, %v2906, 0
    %v2920 = vsel %vm1246, %v2907, 0
    %v2923 = vsel %vm1246, %v2908, 0
    %v2926 = vsel %vm1246, %v2909, 0
    %v2929 = vsel %vm1246, %v2910, 0
    %v2932 = vsel %vm1262, %v2915, 0
    %2934 = vmatprep.subr.mxu0 0.0
    %2935 = vmatpush1.msra.mxu0 %v2932
    %2936 = vmatprep.subr.mxu0 0.0
    %2937 = vmatpush1.msra.mxu0 0.0
    %2938 = vmatprep.subr.mxu0 0.0
    %2939 = vmatpush1.msra.mxu0 0.0
    %2940 = vmatprep.subr.mxu0 0.0
    %2941 = vmatpush1.msra.mxu0 0.0
    %2942 = vmatprep.subr.mxu0 0.0
    %2943 = vmatpush1.msra.mxu0 0.0
    %2944 = vmatprep.subr.mxu0 0.0
    %2945 = vmatpush1.msra.mxu0 0.0
    %2946 = vmatprep.subr.mxu0 0.0
    %2947 = vmatpush1.msra.mxu0 0.0
    %2948 = vmatprep.subr.mxu0 0.0
    %2949 = vmatpush1.msra.mxu0 0.0
    %2950 = vmatprep.subr.mxu0 0.0
    %2951 = vmatpush1.msra.mxu0 0.0
    %2952 = vmatprep.subr.mxu0 0.0
    %2953 = vmatpush1.msra.mxu0 0.0
    %2954 = vmatprep.subr.mxu0 0.0
    %2955 = vmatpush1.msra.mxu0 0.0
    %2956 = vmatprep.subr.mxu0 0.0
    %2957 = vmatpush1.msra.mxu0 0.0
    %2958 = vmatprep.subr.mxu0 0.0
    %2959 = vmatpush1.msra.mxu0 0.0
    %2960 = vmatprep.subr.mxu0 0.0
    %2961 = vmatpush1.msra.mxu0 0.0
    %2962 = vmatprep.subr.mxu0 0.0
    %2963 = vmatpush1.msra.mxu0 0.0
    %2964 = vmatprep.subr.mxu0 0.0
    %2965 = vmatpush1.msra.mxu0 0.0
    %2966 = vmatprep.subr.mxu0 0.0
    %2967 = vmatpush1.msra.mxu0 0.0
    %2968 = vmatprep.subr.mxu0 0.0
    %2969 = vmatpush1.msra.mxu0 0.0
    %2970 = vmatprep.subr.mxu0 0.0
    %2971 = vmatpush1.msra.mxu0 0.0
    %2972 = vmatprep.subr.mxu0 0.0
    %2973 = vmatpush1.msra.mxu0 0.0
    %2974 = vmatprep.subr.mxu0 0.0
    %2975 = vmatpush1.msra.mxu0 0.0
    %2976 = vmatprep.subr.mxu0 0.0
    %2977 = vmatpush1.msra.mxu0 0.0
    %2978 = vmatprep.subr.mxu0 0.0
    %2979 = vmatpush1.msra.mxu0 0.0
    %2980 = vmatprep.subr.mxu0 0.0
    %2981 = vmatpush1.msra.mxu0 0.0
    %2982 = vmatprep.subr.mxu0 0.0
    %2983 = vmatpush1.msra.mxu0 0.0
    %2984 = vmatprep.subr.mxu0 0.0
    %2985 = vmatpush1.msra.mxu0 0.0
    %2986 = vmatprep.subr.mxu0 0.0
    %2987 = vmatpush1.msra.mxu0 0.0
    %2988 = vmatprep.subr.mxu0 0.0
    %2989 = vmatpush1.msra.mxu0 0.0
    %2990 = vmatprep.subr.mxu0 0.0
    %2991 = vmatpush1.msra.mxu0 0.0
    %2992 = vmatprep.subr.mxu0 0.0
    %2993 = vmatpush1.msra.mxu0 0.0
    %2994 = vmatprep.subr.mxu0 0.0
    %2995 = vmatpush1.msra.mxu0 0.0
    %2996 = vmatprep.subr.mxu0 0.0
    %2997 = vmatpush1.msra.mxu0 0.0
    %2998 = vmatprep.mubr.f32.mxu0 0.0
    %2999 = vmatmul.mubr.f32.gmra.mrb[0].mxu0 %v2917
    %v3000 = vpop.f32.mrb[0].mxu0
    %v3001 = vadd.f32 0.0, %v3000
    %v3002 = vpop.f32.mrb[0].mxu0
    %3003 = vmatprep.mubr.f32.mxu0 0.0
    %3004 = vmatmul.mubr.f32.gmra.mrb[0].mxu0 %v2920
    %v3005 = vpop.f32.mrb[0].mxu0
    %v3006 = vadd.f32 0.0, %v3005
    %v3007 = vpop.f32.mrb[0].mxu0
    %3008 = vmatprep.mubr.f32.mxu0 0.0
    %3009 = vmatmul.mubr.f32.gmra.mrb[0].mxu0 %v2923
    %v3010 = vpop.f32.mrb[0].mxu0
    %v3011 = vadd.f32 0.0, %v3010
    %v3012 = vpop.f32.mrb[0].mxu0
    %3013 = vmatprep.mubr.f32.mxu0 0.0
    %3014 = vmatmul.mubr.f32.gmra.mrb[0].mxu0 %v2926
    %v3015 = vpop.f32.mrb[0].mxu0
    %v3016 = vadd.f32 0.0, %v3015
    %v3017 = vpop.f32.mrb[0].mxu0
    %3018 = vmatprep.mubr.f32.mxu0 0.0
    %3019 = vmatmul.mubr.f32.gmra.mrb[0].mxu0 %v2929
    %v3020 = vpop.f32.mrb[0].mxu0
    %v3021 = vadd.f32 0.0, %v3020
    %v3022 = vpop.f32.mrb[0].mxu0
    %3023 = vdwg.mxu0
    %v3024 = vpack.c.bf16 %v3006, %v3001
    %v3025 = vpack.c.bf16 %v3016, %v3011
    %v3026 = vpack.c.bf16 %v3021, %v3021
    %3027 = vmatprep.subr.bf16.mxu0 0
    %3028 = vmatpush1.bf16.msra.mxu0 %v955
    %3029 = vmatprep.subr.bf16.mxu0 0
    %3030 = vmatpush1.bf16.msra.mxu0 %v956
    %3031 = vmatprep.subr.bf16.mxu0 0
    %3032 = vmatpush1.bf16.msra.mxu0 %v957
    %3033 = vmatprep.subr.bf16.mxu0 0
    %3034 = vmatpush1.bf16.msra.mxu0 %v958
    %3035 = vmatprep.subr.bf16.mxu0 0
    %3036 = vmatpush1.bf16.msra.mxu0 %v959
    %3037 = vmatprep.subr.bf16.mxu0 0
    %3038 = vmatpush1.bf16.msra.mxu0 %v960
    %3039 = vmatprep.subr.bf16.mxu0 0
    %3040 = vmatpush1.bf16.msra.mxu0 %v961
    %3041 = vmatprep.subr.bf16.mxu0 0
    %3042 = vmatpush1.bf16.msra.mxu0 %v962
    %3043 = vmatprep.subr.bf16.mxu0 0
    %3044 = vmatpush1.bf16.msra.mxu0 0
    %3045 = vmatprep.subr.bf16.mxu0 0
    %3046 = vmatpush1.bf16.msra.mxu0 0
    %3047 = vmatprep.subr.bf16.mxu0 0
    %3048 = vmatpush1.bf16.msra.mxu0 0
    %3049 = vmatprep.subr.bf16.mxu0 0
    %3050 = vmatpush1.bf16.msra.mxu0 0
    %3051 = vmatprep.subr.bf16.mxu0 0
    %3052 = vmatpush1.bf16.msra.mxu0 0
    %3053 = vmatprep.subr.bf16.mxu0 0
    %3054 = vmatpush1.bf16.msra.mxu0 0
    %3055 = vmatprep.subr.bf16.mxu0 0
    %3056 = vmatpush1.bf16.msra.mxu0 0
    %3057 = vmatprep.subr.bf16.mxu0 0
    %3058 = vmatpush1.bf16.msra.mxu0 0
    %3059 = vmatprep.mubr.bf16.mxu0 0
    %3060 = vmatmul.mubr.bf16.gmra.mrb[0].mxu0 %v3024
    %v3061 = vpop.f32.mrb[0].mxu0
    %v3062 = vadd.f32 0.0, %v3061
    %v3063 = vpop.f32.mrb[0].mxu0
    %v3064 = vpop.f32.mrb[0].mxu0
    %v3065 = vadd.f32 0.0, %v3064
    %v3066 = vpop.f32.mrb[0].mxu0
    %3067 = vmatprep.mubr.bf16.mxu0 0
    %3068 = vmatmul.mubr.bf16.gmra.mrb[0].mxu0 %v3025
    %v3069 = vpop.f32.mrb[0].mxu0
    %v3070 = vadd.f32 0.0, %v3069
    %v3071 = vpop.f32.mrb[0].mxu0
    %v3072 = vpop.f32.mrb[0].mxu0
    %v3073 = vadd.f32 0.0, %v3072
    %v3074 = vpop.f32.mrb[0].mxu0
    %3075 = vmatprep.mubr.bf16.mxu0 0
    %3076 = vmatmul.mubr.bf16.gmra.mrb[0].mxu0 %v3026
    %v3077 = vpop.f32.mrb[0].mxu0
    %v3078 = vadd.f32 0.0, %v3077
    %v3079 = vpop.f32.mrb[0].mxu0
    %v3080 = vpop.f32.mrb[0].mxu0
    %v3081 = vpop.f32.mrb[0].mxu0
    %3082 = vdwg.mxu0
    %v3083 = vld [vmem:[#allocation40] sm:$0xff]
    %v3084 = vld [vmem:[#allocation40 + $0x8] sm:$0xff]
    %v3085 = vld [vmem:[#allocation40 + $0x10] sm:$0xff]
    %v3086 = vld [vmem:[#allocation40 + $0x18] sm:$0xff]
    %v3087 = vld [vmem:[#allocation40 + $0x20] sm:$0xff]
    %v3089 = vsel %vm2036, %v3083, 0
    %v3092 = vsel %vm2036, %v3084, 0
    %v3095 = vsel %vm2036, %v3085, 0
    %v3098 = vsel %vm2036, %v3086, 0
    %v3101 = vsel %vm2036, %v3087, 0
    %3103 = vmatprep.subr.mxu0 0.0
    %3104 = vmatpush1.msra.mxu0 %v2069
    %3105 = vmatprep.subr.mxu0 0.0
    %3106 = vmatpush1.msra.mxu0 0.0
    %3107 = vmatprep.subr.mxu0 0.0
    %3108 = vmatpush1.msra.mxu0 0.0
    %3109 = vmatprep.subr.mxu0 0.0
    %3110 = vmatpush1.msra.mxu0 0.0
    %3111 = vmatprep.subr.mxu0 0.0
    %3112 = vmatpush1.msra.mxu0 0.0
    %3113 = vmatprep.subr.mxu0 0.0
    %3114 = vmatpush1.msra.mxu0 0.0
    %3115 = vmatprep.subr.mxu0 0.0
    %3116 = vmatpush1.msra.mxu0 0.0
    %3117 = vmatprep.subr.mxu0 0.0
    %3118 = vmatpush1.msra.mxu0 0.0
    %3119 = vmatprep.subr.mxu0 0.0
    %3120 = vmatpush1.msra.mxu0 0.0
    %3121 = vmatprep.subr.mxu0 0.0
    %3122 = vmatpush1.msra.mxu0 0.0
    %3123 = vmatprep.subr.mxu0 0.0
    %3124 = vmatpush1.msra.mxu0 0.0
    %3125 = vmatprep.subr.mxu0 0.0
    %3126 = vmatpush1.msra.mxu0 0.0
    %3127 = vmatprep.subr.mxu0 0.0
    %3128 = vmatpush1.msra.mxu0 0.0
    %3129 = vmatprep.subr.mxu0 0.0
    %3130 = vmatpush1.msra.mxu0 0.0
    %3131 = vmatprep.subr.mxu0 0.0
    %3132 = vmatpush1.msra.mxu0 0.0
    %3133 = vmatprep.subr.mxu0 0.0
    %3134 = vmatpush1.msra.mxu0 0.0
    %3135 = vmatprep.subr.mxu0 0.0
    %3136 = vmatpush1.msra.mxu0 0.0
    %3137 = vmatprep.subr.mxu0 0.0
    %3138 = vmatpush1.msra.mxu0 0.0
    %3139 = vmatprep.subr.mxu0 0.0
    %3140 = vmatpush1.msra.mxu0 0.0
    %3141 = vmatprep.subr.mxu0 0.0
    %3142 = vmatpush1.msra.mxu0 0.0
    %3143 = vmatprep.subr.mxu0 0.0
    %3144 = vmatpush1.msra.mxu0 0.0
    %3145 = vmatprep.subr.mxu0 0.0
    %3146 = vmatpush1.msra.mxu0 0.0
    %3147 = vmatprep.subr.mxu0 0.0
    %3148 = vmatpush1.msra.mxu0 0.0
    %3149 = vmatprep.subr.mxu0 0.0
    %3150 = vmatpush1.msra.mxu0 0.0
    %3151 = vmatprep.subr.mxu0 0.0
    %3152 = vmatpush1.msra.mxu0 0.0
    %3153 = vmatprep.subr.mxu0 0.0
    %3154 = vmatpush1.msra.mxu0 0.0
    %3155 = vmatprep.subr.mxu0 0.0
    %3156 = vmatpush1.msra.mxu0 0.0
    %3157 = vmatprep.subr.mxu0 0.0
    %3158 = vmatpush1.msra.mxu0 0.0
    %3159 = vmatprep.subr.mxu0 0.0
    %3160 = vmatpush1.msra.mxu0 0.0
    %3161 = vmatprep.subr.mxu0 0.0
    %3162 = vmatpush1.msra.mxu0 0.0
    %3163 = vmatprep.subr.mxu0 0.0
    %3164 = vmatpush1.msra.mxu0 0.0
    %3165 = vmatprep.subr.mxu0 0.0
    %3166 = vmatpush1.msra.mxu0 0.0
    %3167 = vmatprep.mubr.f32.mxu0 0.0
    %3168 = vmatmul.mubr.f32.gmra.mrb[0].mxu0 %v3089
    %v3169 = vpop.f32.mrb[0].mxu0
    %v3170 = vadd.f32 %v3062, %v3169
    %v3171 = vpop.f32.mrb[0].mxu0
    %3172 = vmatprep.mubr.f32.mxu0 0.0
    %3173 = vmatmul.mubr.f32.gmra.mrb[0].mxu0 %v3092
    %v3174 = vpop.f32.mrb[0].mxu0
    %v3175 = vadd.f32 %v3065, %v3174
    %v3176 = vpop.f32.mrb[0].mxu0
    %3177 = vmatprep.mubr.f32.mxu0 0.0
    %3178 = vmatmul.mubr.f32.gmra.mrb[0].mxu0 %v3095
    %v3179 = vpop.f32.mrb[0].mxu0
    %v3180 = vadd.f32 %v3070, %v3179
    %v3181 = vpop.f32.mrb[0].mxu0
    %3182 = vmatprep.mubr.f32.mxu0 0.0
    %3183 = vmatmul.mubr.f32.gmra.mrb[0].mxu0 %v3098
    %v3184 = vpop.f32.mrb[0].mxu0
    %v3185 = vadd.f32 %v3073, %v3184
    %v3186 = vpop.f32.mrb[0].mxu0
    %3187 = vmatprep.mubr.f32.mxu0 0.0
    %3188 = vmatmul.mubr.f32.gmra.mrb[0].mxu0 %v3101
    %v3189 = vpop.f32.mrb[0].mxu0
    %v3190 = vadd.f32 %v3078, %v3189
    %v3191 = vpop.f32.mrb[0].mxu0
    %3192 = vdwg.mxu0
    %v3193 = vld [vmem:[#allocation43] sm:$0xff]
    %v3194 = vld [vmem:[#allocation43 + $0x8] sm:$0xff]
    %v3195 = vld [vmem:[#allocation43 + $0x10] sm:$0xff]
    %v3196 = vld [vmem:[#allocation43 + $0x18] sm:$0xff]
    %v3197 = vld [vmem:[#allocation43 + $0x20] sm:$0xff]
    %3199 = vset.pattern.permute.xlu0 0
    %3200 = vperm.xlu0 %3199, %v3193
    %v3201 = vpop.permute.xlu0 %3200
    %3204 = vset.pattern.permute.xlu0 0
    %3205 = vperm.xlu0 %3204, %v3194
    %v3206 = vpop.permute.xlu0 %3205
    %3209 = vset.pattern.permute.xlu0 0
    %3210 = vperm.xlu0 %3209, %v3195
    %v3211 = vpop.permute.xlu0 %3210
    %3214 = vset.pattern.permute.xlu0 0
    %3215 = vperm.xlu0 %3214, %v3196
    %v3216 = vpop.permute.xlu0 %3215
    %3219 = vset.pattern.permute.xlu0 0
    %3220 = vperm.xlu0 %3219, %v3197
    %v3221 = vpop.permute.xlu0 %3220
    %v3223 = vadd.f32 %v3170, %v3201
    %v3224 = vadd.f32 %v3175, %v3206
    %v3225 = vadd.f32 %v3180, %v3211
    %v3226 = vadd.f32 %v3185, %v3216
    %v3227 = vadd.f32 %v3190, %v3221
    %v3228 = vmax.f32 %v3223, 0.0
    %v3229 = vmax.f32 %v3224, 0.0
    %v3230 = vmax.f32 %v3225, 0.0
    %v3231 = vmax.f32 %v3226, 0.0
    %v3232 = vmax.f32 %v3227, 0.0
    %v3233 = vld [vmem:[#allocation44] sm:$0xff]
    %v3234 = vld [vmem:[#allocation44 + $0x8] sm:$0xff]
    %v3235 = vld [vmem:[#allocation44 + $0x10] sm:$0xff]
    %v3236 = vld [vmem:[#allocation44 + $0x18] sm:$0xff]
    %v3237 = vld [vmem:[#allocation44 + $0x20] sm:$0xff]
    %v3238 = vld [vmem:[#allocation46] sm:$0xff]
    %v3239 = vld [vmem:[#allocation46 + $0x8] sm:$0xff]
    %v3240 = vld [vmem:[#allocation46 + $0x10] sm:$0xff]
    %v3241 = vld [vmem:[#allocation46 + $0x18] sm:$0xff]
    %v3242 = vld [vmem:[#allocation46 + $0x20] sm:$0xff]
    %3244 = vset.pattern.permute.xlu0 0
    %3245 = vperm.xlu0 %3244, %v3238
    %v3246 = vpop.permute.xlu0 %3245
    %3249 = vset.pattern.permute.xlu0 0
    %3250 = vperm.xlu0 %3249, %v3239
    %v3251 = vpop.permute.xlu0 %3250
    %3254 = vset.pattern.permute.xlu0 0
    %3255 = vperm.xlu0 %3254, %v3240
    %v3256 = vpop.permute.xlu0 %3255
    %3259 = vset.pattern.permute.xlu0 0
    %3260 = vperm.xlu0 %3259, %v3241
    %v3261 = vpop.permute.xlu0 %3260
    %3264 = vset.pattern.permute.xlu0 0
    %3265 = vperm.xlu0 %3264, %v3242
    %v3266 = vpop.permute.xlu0 %3265
    %v3269 = vsel %vm1436, %v3233, 0
    %v3272 = vsel %vm1436, %v3234, 0
    %v3275 = vsel %vm1436, %v3235, 0
    %v3278 = vsel %vm1436, %v3236, 0
    %v3281 = vsel %vm1436, %v3237, 0
    %3283 = vmatprep.subr.mxu0 0.0
    %3284 = vmatpush1.msra.mxu0 %v3228
    %3285 = vmatprep.subr.mxu0 0.0
    %3286 = vmatpush1.msra.mxu0 %v3229
    %3287 = vmatprep.subr.mxu0 0.0
    %3288 = vmatpush1.msra.mxu0 %v3230
    %3289 = vmatprep.subr.mxu0 0.0
    %3290 = vmatpush1.msra.mxu0 %v3231
    %3291 = vmatprep.subr.mxu0 0.0
    %3292 = vmatpush1.msra.mxu0 %v3232
    %3293 = vmatprep.subr.mxu0 0.0
    %3294 = vmatpush1.msra.mxu0 0.0
    %3295 = vmatprep.subr.mxu0 0.0
    %3296 = vmatpush1.msra.mxu0 0.0
    %3297 = vmatprep.subr.mxu0 0.0
    %3298 = vmatpush1.msra.mxu0 0.0
    %3299 = vmatprep.subr.mxu0 0.0
    %3300 = vmatpush1.msra.mxu0 0.0
    %3301 = vmatprep.subr.mxu0 0.0
    %3302 = vmatpush1.msra.mxu0 0.0
    %3303 = vmatprep.subr.mxu0 0.0
    %3304 = vmatpush1.msra.mxu0 0.0
    %3305 = vmatprep.subr.mxu0 0.0
    %3306 = vmatpush1.msra.mxu0 0.0
    %3307 = vmatprep.subr.mxu0 0.0
    %3308 = vmatpush1.msra.mxu0 0.0
    %3309 = vmatprep.subr.mxu0 0.0
    %3310 = vmatpush1.msra.mxu0 0.0
    %3311 = vmatprep.subr.mxu0 0.0
    %3312 = vmatpush1.msra.mxu0 0.0
    %3313 = vmatprep.subr.mxu0 0.0
    %3314 = vmatpush1.msra.mxu0 0.0
    %3315 = vmatprep.subr.mxu0 0.0
    %3316 = vmatpush1.msra.mxu0 0.0
    %3317 = vmatprep.subr.mxu0 0.0
    %3318 = vmatpush1.msra.mxu0 0.0
    %3319 = vmatprep.subr.mxu0 0.0
    %3320 = vmatpush1.msra.mxu0 0.0
    %3321 = vmatprep.subr.mxu0 0.0
    %3322 = vmatpush1.msra.mxu0 0.0
    %3323 = vmatprep.subr.mxu0 0.0
    %3324 = vmatpush1.msra.mxu0 0.0
    %3325 = vmatprep.subr.mxu0 0.0
    %3326 = vmatpush1.msra.mxu0 0.0
    %3327 = vmatprep.subr.mxu0 0.0
    %3328 = vmatpush1.msra.mxu0 0.0
    %3329 = vmatprep.subr.mxu0 0.0
    %3330 = vmatpush1.msra.mxu0 0.0
    %3331 = vmatprep.subr.mxu0 0.0
    %3332 = vmatpush1.msra.mxu0 0.0
    %3333 = vmatprep.subr.mxu0 0.0
    %3334 = vmatpush1.msra.mxu0 0.0
    %3335 = vmatprep.subr.mxu0 0.0
    %3336 = vmatpush1.msra.mxu0 0.0
    %3337 = vmatprep.subr.mxu0 0.0
    %3338 = vmatpush1.msra.mxu0 0.0
    %3339 = vmatprep.subr.mxu0 0.0
    %3340 = vmatpush1.msra.mxu0 0.0
    %3341 = vmatprep.subr.mxu0 0.0
    %3342 = vmatpush1.msra.mxu0 0.0
    %3343 = vmatprep.subr.mxu0 0.0
    %3344 = vmatpush1.msra.mxu0 0.0
    %3345 = vmatprep.subr.mxu0 0.0
    %3346 = vmatpush1.msra.mxu0 0.0
    %3347 = vmatprep.mubr.f32.mxu0 0.0
    %3348 = vmatmul.mubr.f32.gmra.mrb[0].mxu0 %v3269
    %v3349 = vpop.f32.mrb[0].mxu0
    %v3350 = vadd.f32 %v3246, %v3349
    %v3351 = vpop.f32.mrb[0].mxu0
    %3352 = vmatprep.mubr.f32.mxu0 0.0
    %3353 = vmatmul.mubr.f32.gmra.mrb[0].mxu0 %v3272
    %v3354 = vpop.f32.mrb[0].mxu0
    %v3355 = vadd.f32 %v3251, %v3354
    %v3356 = vpop.f32.mrb[0].mxu0
    %3357 = vmatprep.mubr.f32.mxu0 0.0
    %3358 = vmatmul.mubr.f32.gmra.mrb[0].mxu0 %v3275
    %v3359 = vpop.f32.mrb[0].mxu0
    %v3360 = vadd.f32 %v3256, %v3359
    %v3361 = vpop.f32.mrb[0].mxu0
    %3362 = vmatprep.mubr.f32.mxu0 0.0
    %3363 = vmatmul.mubr.f32.gmra.mrb[0].mxu0 %v3278
    %v3364 = vpop.f32.mrb[0].mxu0
    %v3365 = vadd.f32 %v3261, %v3364
    %v3366 = vpop.f32.mrb[0].mxu0
    %3367 = vmatprep.mubr.f32.mxu0 0.0
    %3368 = vmatmul.mubr.f32.gmra.mrb[0].mxu0 %v3281
    %v3369 = vpop.f32.mrb[0].mxu0
    %v3370 = vadd.f32 %v3266, %v3369
    %v3371 = vpop.f32.mrb[0].mxu0
    %3372 = vdwg.mxu0
    %v3373 = vmax.f32 %v3350, 0.0
    %v3374 = vmax.f32 %v3355, 0.0
    %v3375 = vmax.f32 %v3360, 0.0
    %v3376 = vmax.f32 %v3365, 0.0
    %v3377 = vmax.f32 %v3370, 0.0
    %v3378 = vld [vmem:[#allocation47] sm:$0x1f]
    %v3379 = vld [vmem:[#allocation49] sm:$0x1f]
    %3381 = vset.pattern.permute.xlu0 0
    %3382 = vperm.xlu0 %3381, %v3379
    %v3383 = vpop.permute.xlu0 %3382
    %v3386 = vsel %vm1436, %v3378, 0
    %3388 = vmatprep.subr.mxu0 0.0
    %3389 = vmatpush1.msra.mxu0 %v3373
    %3390 = vmatprep.subr.mxu0 0.0
    %3391 = vmatpush1.msra.mxu0 %v3374
    %3392 = vmatprep.subr.mxu0 0.0
    %3393 = vmatpush1.msra.mxu0 %v3375
    %3394 = vmatprep.subr.mxu0 0.0
    %3395 = vmatpush1.msra.mxu0 %v3376
    %3396 = vmatprep.subr.mxu0 0.0
    %3397 = vmatpush1.msra.mxu0 %v3377
    %3398 = vmatprep.subr.mxu0 0.0
    %3399 = vmatpush1.msra.mxu0 0.0
    %3400 = vmatprep.subr.mxu0 0.0
    %3401 = vmatpush1.msra.mxu0 0.0
    %3402 = vmatprep.subr.mxu0 0.0
    %3403 = vmatpush1.msra.mxu0 0.0
    %3404 = vmatprep.subr.mxu0 0.0
    %3405 = vmatpush1.msra.mxu0 0.0
    %3406 = vmatprep.subr.mxu0 0.0
    %3407 = vmatpush1.msra.mxu0 0.0
    %3408 = vmatprep.subr.mxu0 0.0
    %3409 = vmatpush1.msra.mxu0 0.0
    %3410 = vmatprep.subr.mxu0 0.0
    %3411 = vmatpush1.msra.mxu0 0.0
    %3412 = vmatprep.subr.mxu0 0.0
    %3413 = vmatpush1.msra.mxu0 0.0
    %3414 = vmatprep.subr.mxu0 0.0
    %3415 = vmatpush1.msra.mxu0 0.0
    %3416 = vmatprep.subr.mxu0 0.0
    %3417 = vmatpush1.msra.mxu0 0.0
    %3418 = vmatprep.subr.mxu0 0.0
    %3419 = vmatpush1.msra.mxu0 0.0
    %3420 = vmatprep.subr.mxu0 0.0
    %3421 = vmatpush1.msra.mxu0 0.0
    %3422 = vmatprep.subr.mxu0 0.0
    %3423 = vmatpush1.msra.mxu0 0.0
    %3424 = vmatprep.subr.mxu0 0.0
    %3425 = vmatpush1.msra.mxu0 0.0
    %3426 = vmatprep.subr.mxu0 0.0
    %3427 = vmatpush1.msra.mxu0 0.0
    %3428 = vmatprep.subr.mxu0 0.0
    %3429 = vmatpush1.msra.mxu0 0.0
    %3430 = vmatprep.subr.mxu0 0.0
    %3431 = vmatpush1.msra.mxu0 0.0
    %3432 = vmatprep.subr.mxu0 0.0
    %3433 = vmatpush1.msra.mxu0 0.0
    %3434 = vmatprep.subr.mxu0 0.0
    %3435 = vmatpush1.msra.mxu0 0.0
    %3436 = vmatprep.subr.mxu0 0.0
    %3437 = vmatpush1.msra.mxu0 0.0
    %3438 = vmatprep.subr.mxu0 0.0
    %3439 = vmatpush1.msra.mxu0 0.0
    %3440 = vmatprep.subr.mxu0 0.0
    %3441 = vmatpush1.msra.mxu0 0.0
    %3442 = vmatprep.subr.mxu0 0.0
    %3443 = vmatpush1.msra.mxu0 0.0
    %3444 = vmatprep.subr.mxu0 0.0
    %3445 = vmatpush1.msra.mxu0 0.0
    %3446 = vmatprep.subr.mxu0 0.0
    %3447 = vmatpush1.msra.mxu0 0.0
    %3448 = vmatprep.subr.mxu0 0.0
    %3449 = vmatpush1.msra.mxu0 0.0
    %3450 = vmatprep.subr.mxu0 0.0
    %3451 = vmatpush1.msra.mxu0 0.0
    %3452 = vmatprep.mubr.f32.mxu0 0.0
    %3453 = vmatmul.mubr.f32.gmra.mrb[0].mxu0 %v3386
    %v3454 = vpop.f32.mrb[0].mxu0
    %v3455 = vadd.f32 %v3383, %v3454
    %v3456 = vpop.f32.mrb[0].mxu0
    %3457 = vdwg.mxu0
    %v3458 = vmul.f32 %v1830, 0.5
    %v3459 = vmax.f32 %v3455, 0.0
    %v3460 = vmul.f32 %v3459, 0.5
    %v3461 = vadd.f32 %v3458, %v3460
    %s3462 = scalar_lea.vmem [#allocation31], 80
    %v3463 = vld [vmem:[%s3462] sm:$0xff]
    %v3464 = vld [vmem:[%s3462 + $0x8] sm:$0xff]
    %v3465 = vld [vmem:[%s3462 + $0x10] sm:$0xff]
    %v3466 = vld [vmem:[%s3462 + $0x18] sm:$0xff]
    %v3467 = vld [vmem:[%s3462 + $0x20] sm:$0xff]
    %v3468 = vld [vmem:[%s3462 + $0x28] sm:$0xff]
    %v3469 = vld [vmem:[%s3462 + $0x30] sm:$0xff]
    %v3470 = vld [vmem:[%s3462 + $0x38] sm:$0xff]
    %v3471 = vld [vmem:[%s3462 + $0x40] sm:$0xff]
    %v3472 = vld [vmem:[%s3462 + $0x48] sm:$0xff]
    %v3474 = vsel %vm2036, %v3463, 0
    %v3477 = vsel %vm2036, %v3464, 0
    %v3480 = vsel %vm2036, %v3465, 0
    %v3483 = vsel %vm2036, %v3466, 0
    %v3486 = vsel %vm2036, %v3467, 0
    %v3489 = vsel %vm2036, %v3468, 0
    %v3492 = vsel %vm2036, %v3469, 0
    %v3495 = vsel %vm2036, %v3470, 0
    %v3498 = vsel %vm2036, %v3471, 0
    %v3501 = vsel %vm2036, %v3472, 0
    %v3504 = vsel %vm2067, %v3461, 0
    %3506 = vmatprep.subr.mxu0 0.0
    %3507 = vmatpush1.msra.mxu0 %v3504
    %3508 = vmatprep.subr.mxu0 0.0
    %3509 = vmatpush1.msra.mxu0 0.0
    %3510 = vmatprep.subr.mxu0 0.0
    %3511 = vmatpush1.msra.mxu0 0.0
    %3512 = vmatprep.subr.mxu0 0.0
    %3513 = vmatpush1.msra.mxu0 0.0
    %3514 = vmatprep.subr.mxu0 0.0
    %3515 = vmatpush1.msra.mxu0 0.0
    %3516 = vmatprep.subr.mxu0 0.0
    %3517 = vmatpush1.msra.mxu0 0.0
    %3518 = vmatprep.subr.mxu0 0.0
    %3519 = vmatpush1.msra.mxu0 0.0
    %3520 = vmatprep.subr.mxu0 0.0
    %3521 = vmatpush1.msra.mxu0 0.0
    %3522 = vmatprep.subr.mxu0 0.0
    %3523 = vmatpush1.msra.mxu0 0.0
    %3524 = vmatprep.subr.mxu0 0.0
    %3525 = vmatpush1.msra.mxu0 0.0
    %3526 = vmatprep.subr.mxu0 0.0
    %3527 = vmatpush1.msra.mxu0 0.0
    %3528 = vmatprep.subr.mxu0 0.0
    %3529 = vmatpush1.msra.mxu0 0.0
    %3530 = vmatprep.subr.mxu0 0.0
    %3531 = vmatpush1.msra.mxu0 0.0
    %3532 = vmatprep.subr.mxu0 0.0
    %3533 = vmatpush1.msra.mxu0 0.0
    %3534 = vmatprep.subr.mxu0 0.0
    %3535 = vmatpush1.msra.mxu0 0.0
    %3536 = vmatprep.subr.mxu0 0.0
    %3537 = vmatpush1.msra.mxu0 0.0
    %3538 = vmatprep.subr.mxu0 0.0
    %3539 = vmatpush1.msra.mxu0 0.0
    %3540 = vmatprep.subr.mxu0 0.0
    %3541 = vmatpush1.msra.mxu0 0.0
    %3542 = vmatprep.subr.mxu0 0.0
    %3543 = vmatpush1.msra.mxu0 0.0
    %3544 = vmatprep.subr.mxu0 0.0
    %3545 = vmatpush1.msra.mxu0 0.0
    %3546 = vmatprep.subr.mxu0 0.0
    %3547 = vmatpush1.msra.mxu0 0.0
    %3548 = vmatprep.subr.mxu0 0.0
    %3549 = vmatpush1.msra.mxu0 0.0
    %3550 = vmatprep.subr.mxu0 0.0
    %3551 = vmatpush1.msra.mxu0 0.0
    %3552 = vmatprep.subr.mxu0 0.0
    %3553 = vmatpush1.msra.mxu0 0.0
    %3554 = vmatprep.subr.mxu0 0.0
    %3555 = vmatpush1.msra.mxu0 0.0
    %3556 = vmatprep.subr.mxu0 0.0
    %3557 = vmatpush1.msra.mxu0 0.0
    %3558 = vmatprep.subr.mxu0 0.0
    %3559 = vmatpush1.msra.mxu0 0.0
    %3560 = vmatprep.subr.mxu0 0.0
    %3561 = vmatpush1.msra.mxu0 0.0
    %3562 = vmatprep.subr.mxu0 0.0
    %3563 = vmatpush1.msra.mxu0 0.0
    %3564 = vmatprep.subr.mxu0 0.0
    %3565 = vmatpush1.msra.mxu0 0.0
    %3566 = vmatprep.subr.mxu0 0.0
    %3567 = vmatpush1.msra.mxu0 0.0
    %3568 = vmatprep.subr.mxu0 0.0
    %3569 = vmatpush1.msra.mxu0 0.0
    %3570 = vmatprep.mubr.f32.mxu0 0.0
    %3571 = vmatmul.mubr.f32.gmra.mrb[0].mxu0 %v3474
    %v3572 = vpop.f32.mrb[0].mxu0
    %v3573 = vadd.f32 0.0, %v3572
    %v3574 = vpop.f32.mrb[0].mxu0
    %3575 = vmatprep.mubr.f32.mxu0 0.0
    %3576 = vmatmul.mubr.f32.gmra.mrb[0].mxu0 %v3477
    %v3577 = vpop.f32.mrb[0].mxu0
    %v3578 = vadd.f32 0.0, %v3577
    %v3579 = vpop.f32.mrb[0].mxu0
    %3580 = vmatprep.mubr.f32.mxu0 0.0
    %3581 = vmatmul.mubr.f32.gmra.mrb[0].mxu0 %v3480
    %v3582 = vpop.f32.mrb[0].mxu0
    %v3583 = vadd.f32 0.0, %v3582
    %v3584 = vpop.f32.mrb[0].mxu0
    %3585 = vmatprep.mubr.f32.mxu0 0.0
    %3586 = vmatmul.mubr.f32.gmra.mrb[0].mxu0 %v3483
    %v3587 = vpop.f32.mrb[0].mxu0
    %v3588 = vadd.f32 0.0, %v3587
    %v3589 = vpop.f32.mrb[0].mxu0
    %3590 = vmatprep.mubr.f32.mxu0 0.0
    %3591 = vmatmul.mubr.f32.gmra.mrb[0].mxu0 %v3486
    %v3592 = vpop.f32.mrb[0].mxu0
    %v3593 = vadd.f32 0.0, %v3592
    %v3594 = vpop.f32.mrb[0].mxu0
    %3595 = vmatprep.mubr.f32.mxu0 0.0
    %3596 = vmatmul.mubr.f32.gmra.mrb[0].mxu0 %v3489
    %v3597 = vpop.f32.mrb[0].mxu0
    %v3598 = vadd.f32 0.0, %v3597
    %v3599 = vpop.f32.mrb[0].mxu0
    %3600 = vmatprep.mubr.f32.mxu0 0.0
    %3601 = vmatmul.mubr.f32.gmra.mrb[0].mxu0 %v3492
    %v3602 = vpop.f32.mrb[0].mxu0
    %v3603 = vadd.f32 0.0, %v3602
    %v3604 = vpop.f32.mrb[0].mxu0
    %3605 = vmatprep.mubr.f32.mxu0 0.0
    %3606 = vmatmul.mubr.f32.gmra.mrb[0].mxu0 %v3495
    %v3607 = vpop.f32.mrb[0].mxu0
    %v3608 = vadd.f32 0.0, %v3607
    %v3609 = vpop.f32.mrb[0].mxu0
    %3610 = vmatprep.mubr.f32.mxu0 0.0
    %3611 = vmatmul.mubr.f32.gmra.mrb[0].mxu0 %v3498
    %v3612 = vpop.f32.mrb[0].mxu0
    %v3613 = vadd.f32 0.0, %v3612
    %v3614 = vpop.f32.mrb[0].mxu0
    %3615 = vmatprep.mubr.f32.mxu0 0.0
    %3616 = vmatmul.mubr.f32.gmra.mrb[0].mxu0 %v3501
    %v3617 = vpop.f32.mrb[0].mxu0
    %v3618 = vadd.f32 0.0, %v3617
    %v3619 = vpop.f32.mrb[0].mxu0
    %3620 = vdwg.mxu0
    %v3621 = vpack.c.bf16 %v3578, %v3573
    %v3622 = vpack.c.bf16 %v3588, %v3583
    %v3623 = vpack.c.bf16 %v3593, %v3593
    %v3624 = vpack.c.bf16 %v3603, %v3598
    %v3625 = vpack.c.bf16 %v3613, %v3608
    %v3626 = vpack.c.bf16 %v3618, %v3618
    %3627 = vmatprep.subr.bf16.mxu0 0
    %3628 = vmatpush1.bf16.msra.mxu0 %v855
    %3629 = vmatprep.subr.bf16.mxu0 0
    %3630 = vmatpush1.bf16.msra.mxu0 %v856
    %3631 = vmatprep.subr.bf16.mxu0 0
    %3632 = vmatpush1.bf16.msra.mxu0 %v857
    %3633 = vmatprep.subr.bf16.mxu0 0
    %3634 = vmatpush1.bf16.msra.mxu0 %v858
    %3635 = vmatprep.subr.bf16.mxu0 0
    %3636 = vmatpush1.bf16.msra.mxu0 %v859
    %3637 = vmatprep.subr.bf16.mxu0 0
    %3638 = vmatpush1.bf16.msra.mxu0 %v860
    %3639 = vmatprep.subr.bf16.mxu0 0
    %3640 = vmatpush1.bf16.msra.mxu0 %v861
    %3641 = vmatprep.subr.bf16.mxu0 0
    %3642 = vmatpush1.bf16.msra.mxu0 %v862
    %3643 = vmatprep.subr.bf16.mxu0 0
    %3644 = vmatpush1.bf16.msra.mxu0 0
    %3645 = vmatprep.subr.bf16.mxu0 0
    %3646 = vmatpush1.bf16.msra.mxu0 0
    %3647 = vmatprep.subr.bf16.mxu0 0
    %3648 = vmatpush1.bf16.msra.mxu0 0
    %3649 = vmatprep.subr.bf16.mxu0 0
    %3650 = vmatpush1.bf16.msra.mxu0 0
    %3651 = vmatprep.subr.bf16.mxu0 0
    %3652 = vmatpush1.bf16.msra.mxu0 0
    %3653 = vmatprep.subr.bf16.mxu0 0
    %3654 = vmatpush1.bf16.msra.mxu0 0
    %3655 = vmatprep.subr.bf16.mxu0 0
    %3656 = vmatpush1.bf16.msra.mxu0 0
    %3657 = vmatprep.subr.bf16.mxu0 0
    %3658 = vmatpush1.bf16.msra.mxu0 0
    %3659 = vmatprep.mubr.bf16.mxu0 0
    %3660 = vmatmul.mubr.bf16.gmra.mrb[0].mxu0 %v3624
    %v3661 = vpop.f32.mrb[0].mxu0
    %v3662 = vadd.f32 0.0, %v3661
    %v3663 = vpop.f32.mrb[0].mxu0
    %v3664 = vpop.f32.mrb[0].mxu0
    %v3665 = vadd.f32 0.0, %v3664
    %v3666 = vpop.f32.mrb[0].mxu0
    %3667 = vmatprep.mubr.bf16.mxu0 0
    %3668 = vmatmul.mubr.bf16.gmra.mrb[0].mxu0 %v3625
    %v3669 = vpop.f32.mrb[0].mxu0
    %v3670 = vadd.f32 0.0, %v3669
    %v3671 = vpop.f32.mrb[0].mxu0
    %v3672 = vpop.f32.mrb[0].mxu0
    %v3673 = vadd.f32 0.0, %v3672
    %v3674 = vpop.f32.mrb[0].mxu0
    %3675 = vmatprep.mubr.bf16.mxu0 0
    %3676 = vmatmul.mubr.bf16.gmra.mrb[0].mxu0 %v3626
    %v3677 = vpop.f32.mrb[0].mxu0
    %v3678 = vadd.f32 0.0, %v3677
    %v3679 = vpop.f32.mrb[0].mxu0
    %v3680 = vpop.f32.mrb[0].mxu0
    %v3681 = vpop.f32.mrb[0].mxu0
    %3682 = vdwg.mxu0
    %3683 = vmatprep.subr.bf16.mxu0 0
    %3684 = vmatpush1.bf16.msra.mxu0 %v915
    %3685 = vmatprep.subr.bf16.mxu0 0
    %3686 = vmatpush1.bf16.msra.mxu0 %v916
    %3687 = vmatprep.subr.bf16.mxu0 0
    %3688 = vmatpush1.bf16.msra.mxu0 %v917
    %3689 = vmatprep.subr.bf16.mxu0 0
    %3690 = vmatpush1.bf16.msra.mxu0 %v918
    %3691 = vmatprep.subr.bf16.mxu0 0
    %3692 = vmatpush1.bf16.msra.mxu0 %v919
    %3693 = vmatprep.subr.bf16.mxu0 0
    %3694 = vmatpush1.bf16.msra.mxu0 %v920
    %3695 = vmatprep.subr.bf16.mxu0 0
    %3696 = vmatpush1.bf16.msra.mxu0 %v921
    %3697 = vmatprep.subr.bf16.mxu0 0
    %3698 = vmatpush1.bf16.msra.mxu0 %v922
    %3699 = vmatprep.subr.bf16.mxu0 0
    %3700 = vmatpush1.bf16.msra.mxu0 0
    %3701 = vmatprep.subr.bf16.mxu0 0
    %3702 = vmatpush1.bf16.msra.mxu0 0
    %3703 = vmatprep.subr.bf16.mxu0 0
    %3704 = vmatpush1.bf16.msra.mxu0 0
    %3705 = vmatprep.subr.bf16.mxu0 0
    %3706 = vmatpush1.bf16.msra.mxu0 0
    %3707 = vmatprep.subr.bf16.mxu0 0
    %3708 = vmatpush1.bf16.msra.mxu0 0
    %3709 = vmatprep.subr.bf16.mxu0 0
    %3710 = vmatpush1.bf16.msra.mxu0 0
    %3711 = vmatprep.subr.bf16.mxu0 0
    %3712 = vmatpush1.bf16.msra.mxu0 0
    %3713 = vmatprep.subr.bf16.mxu0 0
    %3714 = vmatpush1.bf16.msra.mxu0 0
    %3715 = vmatprep.mubr.bf16.mxu0 0
    %3716 = vmatmul.mubr.bf16.gmra.mrb[0].mxu0 %v3621
    %v3717 = vpop.f32.mrb[0].mxu0
    %v3718 = vadd.f32 %v3662, %v3717
    %v3719 = vpop.f32.mrb[0].mxu0
    %v3720 = vpop.f32.mrb[0].mxu0
    %v3721 = vadd.f32 %v3665, %v3720
    %v3722 = vpop.f32.mrb[0].mxu0
    %3723 = vmatprep.mubr.bf16.mxu0 0
    %3724 = vmatmul.mubr.bf16.gmra.mrb[0].mxu0 %v3622
    %v3725 = vpop.f32.mrb[0].mxu0
    %v3726 = vadd.f32 %v3670, %v3725
    %v3727 = vpop.f32.mrb[0].mxu0
    %v3728 = vpop.f32.mrb[0].mxu0
    %v3729 = vadd.f32 %v3673, %v3728
    %v3730 = vpop.f32.mrb[0].mxu0
    %3731 = vmatprep.mubr.bf16.mxu0 0
    %3732 = vmatmul.mubr.bf16.gmra.mrb[0].mxu0 %v3623
    %v3733 = vpop.f32.mrb[0].mxu0
    %v3734 = vadd.f32 %v3678, %v3733
    %v3735 = vpop.f32.mrb[0].mxu0
    %v3736 = vpop.f32.mrb[0].mxu0
    %v3737 = vpop.f32.mrb[0].mxu0
    %3738 = vdwg.mxu0
    %s3739 = scalar_lea.vmem %s57, 40
    %v3740 = vld [vmem:[%s3739] sm:$0xff]
    %v3741 = vld [vmem:[%s3739 + $0x8] sm:$0xff]
    %v3742 = vld [vmem:[%s3739 + $0x10] sm:$0xff]
    %v3743 = vld [vmem:[%s3739 + $0x18] sm:$0xff]
    %v3744 = vld [vmem:[%s3739 + $0x20] sm:$0xff]
    %v3746 = vsel %vm1246, %v3740, 0
    %v3749 = vsel %vm1246, %v3741, 0
    %v3752 = vsel %vm1246, %v3742, 0
    %v3755 = vsel %vm1246, %v3743, 0
    %v3758 = vsel %vm1246, %v3744, 0
    %3760 = vmatprep.subr.mxu0 0.0
    %3761 = vmatpush1.msra.mxu0 %v2709
    %3762 = vmatprep.subr.mxu0 0.0
    %3763 = vmatpush1.msra.mxu0 0.0
    %3764 = vmatprep.subr.mxu0 0.0
    %3765 = vmatpush1.msra.mxu0 0.0
    %3766 = vmatprep.subr.mxu0 0.0
    %3767 = vmatpush1.msra.mxu0 0.0
    %3768 = vmatprep.subr.mxu0 0.0
    %3769 = vmatpush1.msra.mxu0 0.0
    %3770 = vmatprep.subr.mxu0 0.0
    %3771 = vmatpush1.msra.mxu0 0.0
    %3772 = vmatprep.subr.mxu0 0.0
    %3773 = vmatpush1.msra.mxu0 0.0
    %3774 = vmatprep.subr.mxu0 0.0
    %3775 = vmatpush1.msra.mxu0 0.0
    %3776 = vmatprep.subr.mxu0 0.0
    %3777 = vmatpush1.msra.mxu0 0.0
    %3778 = vmatprep.subr.mxu0 0.0
    %3779 = vmatpush1.msra.mxu0 0.0
    %3780 = vmatprep.subr.mxu0 0.0
    %3781 = vmatpush1.msra.mxu0 0.0
    %3782 = vmatprep.subr.mxu0 0.0
    %3783 = vmatpush1.msra.mxu0 0.0
    %3784 = vmatprep.subr.mxu0 0.0
    %3785 = vmatpush1.msra.mxu0 0.0
    %3786 = vmatprep.subr.mxu0 0.0
    %3787 = vmatpush1.msra.mxu0 0.0
    %3788 = vmatprep.subr.mxu0 0.0
    %3789 = vmatpush1.msra.mxu0 0.0
    %3790 = vmatprep.subr.mxu0 0.0
    %3791 = vmatpush1.msra.mxu0 0.0
    %3792 = vmatprep.subr.mxu0 0.0
    %3793 = vmatpush1.msra.mxu0 0.0
    %3794 = vmatprep.subr.mxu0 0.0
    %3795 = vmatpush1.msra.mxu0 0.0
    %3796 = vmatprep.subr.mxu0 0.0
    %3797 = vmatpush1.msra.mxu0 0.0
    %3798 = vmatprep.subr.mxu0 0.0
    %3799 = vmatpush1.msra.mxu0 0.0
    %3800 = vmatprep.subr.mxu0 0.0
    %3801 = vmatpush1.msra.mxu0 0.0
    %3802 = vmatprep.subr.mxu0 0.0
    %3803 = vmatpush1.msra.mxu0 0.0
    %3804 = vmatprep.subr.mxu0 0.0
    %3805 = vmatpush1.msra.mxu0 0.0
    %3806 = vmatprep.subr.mxu0 0.0
    %3807 = vmatpush1.msra.mxu0 0.0
    %3808 = vmatprep.subr.mxu0 0.0
    %3809 = vmatpush1.msra.mxu0 0.0
    %3810 = vmatprep.subr.mxu0 0.0
    %3811 = vmatpush1.msra.mxu0 0.0
    %3812 = vmatprep.subr.mxu0 0.0
    %3813 = vmatpush1.msra.mxu0 0.0
    %3814 = vmatprep.subr.mxu0 0.0
    %3815 = vmatpush1.msra.mxu0 0.0
    %3816 = vmatprep.subr.mxu0 0.0
    %3817 = vmatpush1.msra.mxu0 0.0
    %3818 = vmatprep.subr.mxu0 0.0
    %3819 = vmatpush1.msra.mxu0 0.0
    %3820 = vmatprep.subr.mxu0 0.0
    %3821 = vmatpush1.msra.mxu0 0.0
    %3822 = vmatprep.subr.mxu0 0.0
    %3823 = vmatpush1.msra.mxu0 0.0
    %3824 = vmatprep.mubr.f32.mxu0 0.0
    %3825 = vmatmul.mubr.f32.gmra.mrb[0].mxu0 %v3746
    %v3826 = vpop.f32.mrb[0].mxu0
    %v3827 = vadd.f32 0.0, %v3826
    %v3828 = vpop.f32.mrb[0].mxu0
    %3829 = vmatprep.mubr.f32.mxu0 0.0
    %3830 = vmatmul.mubr.f32.gmra.mrb[0].mxu0 %v3749
    %v3831 = vpop.f32.mrb[0].mxu0
    %v3832 = vadd.f32 0.0, %v3831
    %v3833 = vpop.f32.mrb[0].mxu0
    %3834 = vmatprep.mubr.f32.mxu0 0.0
    %3835 = vmatmul.mubr.f32.gmra.mrb[0].mxu0 %v3752
    %v3836 = vpop.f32.mrb[0].mxu0
    %v3837 = vadd.f32 0.0, %v3836
    %v3838 = vpop.f32.mrb[0].mxu0
    %3839 = vmatprep.mubr.f32.mxu0 0.0
    %3840 = vmatmul.mubr.f32.gmra.mrb[0].mxu0 %v3755
    %v3841 = vpop.f32.mrb[0].mxu0
    %v3842 = vadd.f32 0.0, %v3841
    %v3843 = vpop.f32.mrb[0].mxu0
    %3844 = vmatprep.mubr.f32.mxu0 0.0
    %3845 = vmatmul.mubr.f32.gmra.mrb[0].mxu0 %v3758
    %v3846 = vpop.f32.mrb[0].mxu0
    %v3847 = vadd.f32 0.0, %v3846
    %v3848 = vpop.f32.mrb[0].mxu0
    %3849 = vdwg.mxu0
    %v3850 = vadd.f32 %v3718, %v3827
    %v3851 = vadd.f32 %v3721, %v3832
    %v3852 = vadd.f32 %v3726, %v3837
    %v3853 = vadd.f32 %v3729, %v3842
    %v3854 = vadd.f32 %v3734, %v3847
    %s3855 = scalar_lea.vmem [#allocation32], 40
    %v3856 = vld [vmem:[%s3855] sm:$0xff]
    %v3857 = vld [vmem:[%s3855 + $0x8] sm:$0xff]
    %v3858 = vld [vmem:[%s3855 + $0x10] sm:$0xff]
    %v3859 = vld [vmem:[%s3855 + $0x18] sm:$0xff]
    %v3860 = vld [vmem:[%s3855 + $0x20] sm:$0xff]
    %3862 = vset.pattern.permute.xlu0 0
    %3863 = vperm.xlu0 %3862, %v3856
    %v3864 = vpop.permute.xlu0 %3863
    %3867 = vset.pattern.permute.xlu0 0
    %3868 = vperm.xlu0 %3867, %v3857
    %v3869 = vpop.permute.xlu0 %3868
    %3872 = vset.pattern.permute.xlu0 0
    %3873 = vperm.xlu0 %3872, %v3858
    %v3874 = vpop.permute.xlu0 %3873
    %3877 = vset.pattern.permute.xlu0 0
    %3878 = vperm.xlu0 %3877, %v3859
    %v3879 = vpop.permute.xlu0 %3878
    %3882 = vset.pattern.permute.xlu0 0
    %3883 = vperm.xlu0 %3882, %v3860
    %v3884 = vpop.permute.xlu0 %3883
    %v3886 = vadd.f32 %v3850, %v3864
    %v3887 = vadd.f32 %v3851, %v3869
    %v3888 = vadd.f32 %v3852, %v3874
    %v3889 = vadd.f32 %v3853, %v3879
    %v3890 = vadd.f32 %v3854, %v3884
    %v3891 = vmax.f32 %v3886, 0.0
    %v3892 = vmax.f32 %v3887, 0.0
    %v3893 = vmax.f32 %v3888, 0.0
    %v3894 = vmax.f32 %v3889, 0.0
    %v3895 = vmax.f32 %v3890, 0.0
    %s3896 = scalar_lea.vmem [#allocation34], 40
    %v3897 = vld [vmem:[%s3896] sm:$0xff]
    %v3898 = vld [vmem:[%s3896 + $0x8] sm:$0xff]
    %v3899 = vld [vmem:[%s3896 + $0x10] sm:$0xff]
    %v3900 = vld [vmem:[%s3896 + $0x18] sm:$0xff]
    %v3901 = vld [vmem:[%s3896 + $0x20] sm:$0xff]
    %s3902 = scalar_lea.vmem [#allocation35], 40
    %v3903 = vld [vmem:[%s3902] sm:$0xff]
    %v3904 = vld [vmem:[%s3902 + $0x8] sm:$0xff]
    %v3905 = vld [vmem:[%s3902 + $0x10] sm:$0xff]
    %v3906 = vld [vmem:[%s3902 + $0x18] sm:$0xff]
    %v3907 = vld [vmem:[%s3902 + $0x20] sm:$0xff]
    %3909 = vset.pattern.permute.xlu0 0
    %3910 = vperm.xlu0 %3909, %v3903
    %v3911 = vpop.permute.xlu0 %3910
    %3914 = vset.pattern.permute.xlu0 0
    %3915 = vperm.xlu0 %3914, %v3904
    %v3916 = vpop.permute.xlu0 %3915
    %3919 = vset.pattern.permute.xlu0 0
    %3920 = vperm.xlu0 %3919, %v3905
    %v3921 = vpop.permute.xlu0 %3920
    %3924 = vset.pattern.permute.xlu0 0
    %3925 = vperm.xlu0 %3924, %v3906
    %v3926 = vpop.permute.xlu0 %3925
    %3929 = vset.pattern.permute.xlu0 0
    %3930 = vperm.xlu0 %3929, %v3907
    %v3931 = vpop.permute.xlu0 %3930
    %v3934 = vsel %vm1436, %v3897, 0
    %v3937 = vsel %vm1436, %v3898, 0
    %v3940 = vsel %vm1436, %v3899, 0
    %v3943 = vsel %vm1436, %v3900, 0
    %v3946 = vsel %vm1436, %v3901, 0
    %3948 = vmatprep.subr.mxu0 0.0
    %3949 = vmatpush1.msra.mxu0 %v3891
    %3950 = vmatprep.subr.mxu0 0.0
    %3951 = vmatpush1.msra.mxu0 %v3892
    %3952 = vmatprep.subr.mxu0 0.0
    %3953 = vmatpush1.msra.mxu0 %v3893
    %3954 = vmatprep.subr.mxu0 0.0
    %3955 = vmatpush1.msra.mxu0 %v3894
    %3956 = vmatprep.subr.mxu0 0.0
    %3957 = vmatpush1.msra.mxu0 %v3895
    %3958 = vmatprep.subr.mxu0 0.0
    %3959 = vmatpush1.msra.mxu0 0.0
    %3960 = vmatprep.subr.mxu0 0.0
    %3961 = vmatpush1.msra.mxu0 0.0
    %3962 = vmatprep.subr.mxu0 0.0
    %3963 = vmatpush1.msra.mxu0 0.0
    %3964 = vmatprep.subr.mxu0 0.0
    %3965 = vmatpush1.msra.mxu0 0.0
    %3966 = vmatprep.subr.mxu0 0.0
    %3967 = vmatpush1.msra.mxu0 0.0
    %3968 = vmatprep.subr.mxu0 0.0
    %3969 = vmatpush1.msra.mxu0 0.0
    %3970 = vmatprep.subr.mxu0 0.0
    %3971 = vmatpush1.msra.mxu0 0.0
    %3972 = vmatprep.subr.mxu0 0.0
    %3973 = vmatpush1.msra.mxu0 0.0
    %3974 = vmatprep.subr.mxu0 0.0
    %3975 = vmatpush1.msra.mxu0 0.0
    %3976 = vmatprep.subr.mxu0 0.0
    %3977 = vmatpush1.msra.mxu0 0.0
    %3978 = vmatprep.subr.mxu0 0.0
    %3979 = vmatpush1.msra.mxu0 0.0
    %3980 = vmatprep.subr.mxu0 0.0
    %3981 = vmatpush1.msra.mxu0 0.0
    %3982 = vmatprep.subr.mxu0 0.0
    %3983 = vmatpush1.msra.mxu0 0.0
    %3984 = vmatprep.subr.mxu0 0.0
    %3985 = vmatpush1.msra.mxu0 0.0
    %3986 = vmatprep.subr.mxu0 0.0
    %3987 = vmatpush1.msra.mxu0 0.0
    %3988 = vmatprep.subr.mxu0 0.0
    %3989 = vmatpush1.msra.mxu0 0.0
    %3990 = vmatprep.subr.mxu0 0.0
    %3991 = vmatpush1.msra.mxu0 0.0
    %3992 = vmatprep.subr.mxu0 0.0
    %3993 = vmatpush1.msra.mxu0 0.0
    %3994 = vmatprep.subr.mxu0 0.0
    %3995 = vmatpush1.msra.mxu0 0.0
    %3996 = vmatprep.subr.mxu0 0.0
    %3997 = vmatpush1.msra.mxu0 0.0
    %3998 = vmatprep.subr.mxu0 0.0
    %3999 = vmatpush1.msra.mxu0 0.0
    %4000 = vmatprep.subr.mxu0 0.0
    %4001 = vmatpush1.msra.mxu0 0.0
    %4002 = vmatprep.subr.mxu0 0.0
    %4003 = vmatpush1.msra.mxu0 0.0
    %4004 = vmatprep.subr.mxu0 0.0
    %4005 = vmatpush1.msra.mxu0 0.0
    %4006 = vmatprep.subr.mxu0 0.0
    %4007 = vmatpush1.msra.mxu0 0.0
    %4008 = vmatprep.subr.mxu0 0.0
    %4009 = vmatpush1.msra.mxu0 0.0
    %4010 = vmatprep.subr.mxu0 0.0
    %4011 = vmatpush1.msra.mxu0 0.0
    %4012 = vmatprep.mubr.f32.mxu0 0.0
    %4013 = vmatmul.mubr.f32.gmra.mrb[0].mxu0 %v3934
    %v4014 = vpop.f32.mrb[0].mxu0
    %v4015 = vadd.f32 %v3911, %v4014
    %v4016 = vpop.f32.mrb[0].mxu0
    %4017 = vmatprep.mubr.f32.mxu0 0.0
    %4018 = vmatmul.mubr.f32.gmra.mrb[0].mxu0 %v3937
    %v4019 = vpop.f32.mrb[0].mxu0
    %v4020 = vadd.f32 %v3916, %v4019
    %v4021 = vpop.f32.mrb[0].mxu0
    %4022 = vmatprep.mubr.f32.mxu0 0.0
    %4023 = vmatmul.mubr.f32.gmra.mrb[0].mxu0 %v3940
    %v4024 = vpop.f32.mrb[0].mxu0
    %v4025 = vadd.f32 %v3921, %v4024
    %v4026 = vpop.f32.mrb[0].mxu0
    %4027 = vmatprep.mubr.f32.mxu0 0.0
    %4028 = vmatmul.mubr.f32.gmra.mrb[0].mxu0 %v3943
    %v4029 = vpop.f32.mrb[0].mxu0
    %v4030 = vadd.f32 %v3926, %v4029
    %v4031 = vpop.f32.mrb[0].mxu0
    %4032 = vmatprep.mubr.f32.mxu0 0.0
    %4033 = vmatmul.mubr.f32.gmra.mrb[0].mxu0 %v3946
    %v4034 = vpop.f32.mrb[0].mxu0
    %v4035 = vadd.f32 %v3931, %v4034
    %v4036 = vpop.f32.mrb[0].mxu0
    %4037 = vdwg.mxu0
    %v4038 = vmax.f32 %v4015, 0.0
    %v4039 = vmax.f32 %v4020, 0.0
    %v4040 = vmax.f32 %v4025, 0.0
    %v4041 = vmax.f32 %v4030, 0.0
    %v4042 = vmax.f32 %v4035, 0.0
    %s4043 = scalar_lea.vmem [#allocation37], 4
    %v4044 = vld [vmem:[%s4043] sm:$0xf]
    %s4045 = scalar_lea.vmem [#allocation38], 4
    %v4046 = vld [vmem:[%s4045] sm:$0xf]
    %4048 = vset.pattern.permute.xlu0 0
    %4049 = vperm.xlu0 %4048, %v4046
    %v4050 = vpop.permute.xlu0 %4049
    %v4053 = vsel %vm1436, %v4044, 0
    %4055 = vmatprep.subr.mxu0 0.0
    %4056 = vmatpush1.msra.mxu0 %v4038
    %4057 = vmatprep.subr.mxu0 0.0
    %4058 = vmatpush1.msra.mxu0 %v4039
    %4059 = vmatprep.subr.mxu0 0.0
    %4060 = vmatpush1.msra.mxu0 %v4040
    %4061 = vmatprep.subr.mxu0 0.0
    %4062 = vmatpush1.msra.mxu0 %v4041
    %4063 = vmatprep.subr.mxu0 0.0
    %4064 = vmatpush1.msra.mxu0 %v4042
    %4065 = vmatprep.subr.mxu0 0.0
    %4066 = vmatpush1.msra.mxu0 0.0
    %4067 = vmatprep.subr.mxu0 0.0
    %4068 = vmatpush1.msra.mxu0 0.0
    %4069 = vmatprep.subr.mxu0 0.0
    %4070 = vmatpush1.msra.mxu0 0.0
    %4071 = vmatprep.subr.mxu0 0.0
    %4072 = vmatpush1.msra.mxu0 0.0
    %4073 = vmatprep.subr.mxu0 0.0
    %4074 = vmatpush1.msra.mxu0 0.0
    %4075 = vmatprep.subr.mxu0 0.0
    %4076 = vmatpush1.msra.mxu0 0.0
    %4077 = vmatprep.subr.mxu0 0.0
    %4078 = vmatpush1.msra.mxu0 0.0
    %4079 = vmatprep.subr.mxu0 0.0
    %4080 = vmatpush1.msra.mxu0 0.0
    %4081 = vmatprep.subr.mxu0 0.0
    %4082 = vmatpush1.msra.mxu0 0.0
    %4083 = vmatprep.subr.mxu0 0.0
    %4084 = vmatpush1.msra.mxu0 0.0
    %4085 = vmatprep.subr.mxu0 0.0
    %4086 = vmatpush1.msra.mxu0 0.0
    %4087 = vmatprep.subr.mxu0 0.0
    %4088 = vmatpush1.msra.mxu0 0.0
    %4089 = vmatprep.subr.mxu0 0.0
    %4090 = vmatpush1.msra.mxu0 0.0
    %4091 = vmatprep.subr.mxu0 0.0
    %4092 = vmatpush1.msra.mxu0 0.0
    %4093 = vmatprep.subr.mxu0 0.0
    %4094 = vmatpush1.msra.mxu0 0.0
    %4095 = vmatprep.subr.mxu0 0.0
    %4096 = vmatpush1.msra.mxu0 0.0
    %4097 = vmatprep.subr.mxu0 0.0
    %4098 = vmatpush1.msra.mxu0 0.0
    %4099 = vmatprep.subr.mxu0 0.0
    %4100 = vmatpush1.msra.mxu0 0.0
    %4101 = vmatprep.subr.mxu0 0.0
    %4102 = vmatpush1.msra.mxu0 0.0
    %4103 = vmatprep.subr.mxu0 0.0
    %4104 = vmatpush1.msra.mxu0 0.0
    %4105 = vmatprep.subr.mxu0 0.0
    %4106 = vmatpush1.msra.mxu0 0.0
    %4107 = vmatprep.subr.mxu0 0.0
    %4108 = vmatpush1.msra.mxu0 0.0
    %4109 = vmatprep.subr.mxu0 0.0
    %4110 = vmatpush1.msra.mxu0 0.0
    %4111 = vmatprep.subr.mxu0 0.0
    %4112 = vmatpush1.msra.mxu0 0.0
    %4113 = vmatprep.subr.mxu0 0.0
    %4114 = vmatpush1.msra.mxu0 0.0
    %4115 = vmatprep.subr.mxu0 0.0
    %4116 = vmatpush1.msra.mxu0 0.0
    %4117 = vmatprep.subr.mxu0 0.0
    %4118 = vmatpush1.msra.mxu0 0.0
    %4119 = vmatprep.mubr.f32.mxu0 0.0
    %4120 = vmatmul.mubr.f32.gmra.mrb[0].mxu0 %v4053
    %v4121 = vpop.f32.mrb[0].mxu0
    %v4122 = vadd.f32 %v4050, %v4121
    %v4123 = vpop.f32.mrb[0].mxu0
    %4124 = vdwg.mxu0
    %s4125 = scalar_lea.vmem [#allocation52], 80
    %v4126 = vld [vmem:[%s4125] sm:$0xff]
    %v4127 = vld [vmem:[%s4125 + $0x8] sm:$0xff]
    %v4128 = vld [vmem:[%s4125 + $0x10] sm:$0xff]
    %v4129 = vld [vmem:[%s4125 + $0x18] sm:$0xff]
    %v4130 = vld [vmem:[%s4125 + $0x20] sm:$0xff]
    %v4132 = vsel %vm1246, %v4126, 0
    %v4135 = vsel %vm1246, %v4127, 0
    %v4138 = vsel %vm1246, %v4128, 0
    %v4141 = vsel %vm1246, %v4129, 0
    %v4144 = vsel %vm1246, %v4130, 0
    %v4147 = vsel %vm1262, %v4122, 0
    %4149 = vmatprep.subr.mxu0 0.0
    %4150 = vmatpush1.msra.mxu0 %v4147
    %4151 = vmatprep.subr.mxu0 0.0
    %4152 = vmatpush1.msra.mxu0 0.0
    %4153 = vmatprep.subr.mxu0 0.0
    %4154 = vmatpush1.msra.mxu0 0.0
    %4155 = vmatprep.subr.mxu0 0.0
    %4156 = vmatpush1.msra.mxu0 0.0
    %4157 = vmatprep.subr.mxu0 0.0
    %4158 = vmatpush1.msra.mxu0 0.0
    %4159 = vmatprep.subr.mxu0 0.0
    %4160 = vmatpush1.msra.mxu0 0.0
    %4161 = vmatprep.subr.mxu0 0.0
    %4162 = vmatpush1.msra.mxu0 0.0
    %4163 = vmatprep.subr.mxu0 0.0
    %4164 = vmatpush1.msra.mxu0 0.0
    %4165 = vmatprep.subr.mxu0 0.0
    %4166 = vmatpush1.msra.mxu0 0.0
    %4167 = vmatprep.subr.mxu0 0.0
    %4168 = vmatpush1.msra.mxu0 0.0
    %4169 = vmatprep.subr.mxu0 0.0
    %4170 = vmatpush1.msra.mxu0 0.0
    %4171 = vmatprep.subr.mxu0 0.0
    %4172 = vmatpush1.msra.mxu0 0.0
    %4173 = vmatprep.subr.mxu0 0.0
    %4174 = vmatpush1.msra.mxu0 0.0
    %4175 = vmatprep.subr.mxu0 0.0
    %4176 = vmatpush1.msra.mxu0 0.0
    %4177 = vmatprep.subr.mxu0 0.0
    %4178 = vmatpush1.msra.mxu0 0.0
    %4179 = vmatprep.subr.mxu0 0.0
    %4180 = vmatpush1.msra.mxu0 0.0
    %4181 = vmatprep.subr.mxu0 0.0
    %4182 = vmatpush1.msra.mxu0 0.0
    %4183 = vmatprep.subr.mxu0 0.0
    %4184 = vmatpush1.msra.mxu0 0.0
    %4185 = vmatprep.subr.mxu0 0.0
    %4186 = vmatpush1.msra.mxu0 0.0
    %4187 = vmatprep.subr.mxu0 0.0
    %4188 = vmatpush1.msra.mxu0 0.0
    %4189 = vmatprep.subr.mxu0 0.0
    %4190 = vmatpush1.msra.mxu0 0.0
    %4191 = vmatprep.subr.mxu0 0.0
    %4192 = vmatpush1.msra.mxu0 0.0
    %4193 = vmatprep.subr.mxu0 0.0
    %4194 = vmatpush1.msra.mxu0 0.0
    %4195 = vmatprep.subr.mxu0 0.0
    %4196 = vmatpush1.msra.mxu0 0.0
    %4197 = vmatprep.subr.mxu0 0.0
    %4198 = vmatpush1.msra.mxu0 0.0
    %4199 = vmatprep.subr.mxu0 0.0
    %4200 = vmatpush1.msra.mxu0 0.0
    %4201 = vmatprep.subr.mxu0 0.0
    %4202 = vmatpush1.msra.mxu0 0.0
    %4203 = vmatprep.subr.mxu0 0.0
    %4204 = vmatpush1.msra.mxu0 0.0
    %4205 = vmatprep.subr.mxu0 0.0
    %4206 = vmatpush1.msra.mxu0 0.0
    %4207 = vmatprep.subr.mxu0 0.0
    %4208 = vmatpush1.msra.mxu0 0.0
    %4209 = vmatprep.subr.mxu0 0.0
    %4210 = vmatpush1.msra.mxu0 0.0
    %4211 = vmatprep.subr.mxu0 0.0
    %4212 = vmatpush1.msra.mxu0 0.0
    %4213 = vmatprep.mubr.f32.mxu0 0.0
    %4214 = vmatmul.mubr.f32.gmra.mrb[0].mxu0 %v4132
    %v4215 = vpop.f32.mrb[0].mxu0
    %v4216 = vadd.f32 0.0, %v4215
    %v4217 = vpop.f32.mrb[0].mxu0
    %4218 = vmatprep.mubr.f32.mxu0 0.0
    %4219 = vmatmul.mubr.f32.gmra.mrb[0].mxu0 %v4135
    %v4220 = vpop.f32.mrb[0].mxu0
    %v4221 = vadd.f32 0.0, %v4220
    %v4222 = vpop.f32.mrb[0].mxu0
    %4223 = vmatprep.mubr.f32.mxu0 0.0
    %4224 = vmatmul.mubr.f32.gmra.mrb[0].mxu0 %v4138
    %v4225 = vpop.f32.mrb[0].mxu0
    %v4226 = vadd.f32 0.0, %v4225
    %v4227 = vpop.f32.mrb[0].mxu0
    %4228 = vmatprep.mubr.f32.mxu0 0.0
    %4229 = vmatmul.mubr.f32.gmra.mrb[0].mxu0 %v4141
    %v4230 = vpop.f32.mrb[0].mxu0
    %v4231 = vadd.f32 0.0, %v4230
    %v4232 = vpop.f32.mrb[0].mxu0
    %4233 = vmatprep.mubr.f32.mxu0 0.0
    %4234 = vmatmul.mubr.f32.gmra.mrb[0].mxu0 %v4144
    %v4235 = vpop.f32.mrb[0].mxu0
    %v4236 = vadd.f32 0.0, %v4235
    %v4237 = vpop.f32.mrb[0].mxu0
    %4238 = vdwg.mxu0
    %v4239 = vadd.f32 %v2883, %v4216
    %v4240 = vadd.f32 %v2888, %v4221
    %v4241 = vadd.f32 %v2893, %v4226
    %v4242 = vadd.f32 %v2898, %v4231
    %v4243 = vadd.f32 %v2903, %v4236
    %s4244 = scalar_lea.vmem [#allocation41], 40
    %v4245 = vld [vmem:[%s4244] sm:$0xff]
    %v4246 = vld [vmem:[%s4244 + $0x8] sm:$0xff]
    %v4247 = vld [vmem:[%s4244 + $0x10] sm:$0xff]
    %v4248 = vld [vmem:[%s4244 + $0x18] sm:$0xff]
    %v4249 = vld [vmem:[%s4244 + $0x20] sm:$0xff]
    %v4250 = vmul.f32 %v4122, %v2914
    %v4252 = vsel %vm1246, %v4245, 0
    %v4255 = vsel %vm1246, %v4246, 0
    %v4258 = vsel %vm1246, %v4247, 0
    %v4261 = vsel %vm1246, %v4248, 0
    %v4264 = vsel %vm1246, %v4249, 0
    %v4267 = vsel %vm1262, %v4250, 0
    %4269 = vmatprep.subr.mxu0 0.0
    %4270 = vmatpush1.msra.mxu0 %v4267
    %4271 = vmatprep.subr.mxu0 0.0
    %4272 = vmatpush1.msra.mxu0 0.0
    %4273 = vmatprep.subr.mxu0 0.0
    %4274 = vmatpush1.msra.mxu0 0.0
    %4275 = vmatprep.subr.mxu0 0.0
    %4276 = vmatpush1.msra.mxu0 0.0
    %4277 = vmatprep.subr.mxu0 0.0
    %4278 = vmatpush1.msra.mxu0 0.0
    %4279 = vmatprep.subr.mxu0 0.0
    %4280 = vmatpush1.msra.mxu0 0.0
    %4281 = vmatprep.subr.mxu0 0.0
    %4282 = vmatpush1.msra.mxu0 0.0
    %4283 = vmatprep.subr.mxu0 0.0
    %4284 = vmatpush1.msra.mxu0 0.0
    %4285 = vmatprep.subr.mxu0 0.0
    %4286 = vmatpush1.msra.mxu0 0.0
    %4287 = vmatprep.subr.mxu0 0.0
    %4288 = vmatpush1.msra.mxu0 0.0
    %4289 = vmatprep.subr.mxu0 0.0
    %4290 = vmatpush1.msra.mxu0 0.0
    %4291 = vmatprep.subr.mxu0 0.0
    %4292 = vmatpush1.msra.mxu0 0.0
    %4293 = vmatprep.subr.mxu0 0.0
    %4294 = vmatpush1.msra.mxu0 0.0
    %4295 = vmatprep.subr.mxu0 0.0
    %4296 = vmatpush1.msra.mxu0 0.0
    %4297 = vmatprep.subr.mxu0 0.0
    %4298 = vmatpush1.msra.mxu0 0.0
    %4299 = vmatprep.subr.mxu0 0.0
    %4300 = vmatpush1.msra.mxu0 0.0
    %4301 = vmatprep.subr.mxu0 0.0
    %4302 = vmatpush1.msra.mxu0 0.0
    %4303 = vmatprep.subr.mxu0 0.0
    %4304 = vmatpush1.msra.mxu0 0.0
    %4305 = vmatprep.subr.mxu0 0.0
    %4306 = vmatpush1.msra.mxu0 0.0
    %4307 = vmatprep.subr.mxu0 0.0
    %4308 = vmatpush1.msra.mxu0 0.0
    %4309 = vmatprep.subr.mxu0 0.0
    %4310 = vmatpush1.msra.mxu0 0.0
    %4311 = vmatprep.subr.mxu0 0.0
    %4312 = vmatpush1.msra.mxu0 0.0
    %4313 = vmatprep.subr.mxu0 0.0
    %4314 = vmatpush1.msra.mxu0 0.0
    %4315 = vmatprep.subr.mxu0 0.0
    %4316 = vmatpush1.msra.mxu0 0.0
    %4317 = vmatprep.subr.mxu0 0.0
    %4318 = vmatpush1.msra.mxu0 0.0
    %4319 = vmatprep.subr.mxu0 0.0
    %4320 = vmatpush1.msra.mxu0 0.0
    %4321 = vmatprep.subr.mxu0 0.0
    %4322 = vmatpush1.msra.mxu0 0.0
    %4323 = vmatprep.subr.mxu0 0.0
    %4324 = vmatpush1.msra.mxu0 0.0
    %4325 = vmatprep.subr.mxu0 0.0
    %4326 = vmatpush1.msra.mxu0 0.0
    %4327 = vmatprep.subr.mxu0 0.0
    %4328 = vmatpush1.msra.mxu0 0.0
    %4329 = vmatprep.subr.mxu0 0.0
    %4330 = vmatpush1.msra.mxu0 0.0
    %4331 = vmatprep.subr.mxu0 0.0
    %4332 = vmatpush1.msra.mxu0 0.0
    %4333 = vmatprep.mubr.f32.mxu0 0.0
    %4334 = vmatmul.mubr.f32.gmra.mrb[0].mxu0 %v4252
    %v4335 = vpop.f32.mrb[0].mxu0
    %v4336 = vadd.f32 0.0, %v4335
    %v4337 = vpop.f32.mrb[0].mxu0
    %4338 = vmatprep.mubr.f32.mxu0 0.0
    %4339 = vmatmul.mubr.f32.gmra.mrb[0].mxu0 %v4255
    %v4340 = vpop.f32.mrb[0].mxu0
    %v4341 = vadd.f32 0.0, %v4340
    %v4342 = vpop.f32.mrb[0].mxu0
    %4343 = vmatprep.mubr.f32.mxu0 0.0
    %4344 = vmatmul.mubr.f32.gmra.mrb[0].mxu0 %v4258
    %v4345 = vpop.f32.mrb[0].mxu0
    %v4346 = vadd.f32 0.0, %v4345
    %v4347 = vpop.f32.mrb[0].mxu0
    %4348 = vmatprep.mubr.f32.mxu0 0.0
    %4349 = vmatmul.mubr.f32.gmra.mrb[0].mxu0 %v4261
    %v4350 = vpop.f32.mrb[0].mxu0
    %v4351 = vadd.f32 0.0, %v4350
    %v4352 = vpop.f32.mrb[0].mxu0
    %4353 = vmatprep.mubr.f32.mxu0 0.0
    %4354 = vmatmul.mubr.f32.gmra.mrb[0].mxu0 %v4264
    %v4355 = vpop.f32.mrb[0].mxu0
    %v4356 = vadd.f32 0.0, %v4355
    %v4357 = vpop.f32.mrb[0].mxu0
    %4358 = vdwg.mxu0
    %v4359 = vpack.c.bf16 %v4341, %v4336
    %v4360 = vpack.c.bf16 %v4351, %v4346
    %v4361 = vpack.c.bf16 %v4356, %v4356
    %4362 = vmatprep.subr.bf16.mxu0 0
    %4363 = vmatpush1.bf16.msra.mxu0 %v955
    %4364 = vmatprep.subr.bf16.mxu0 0
    %4365 = vmatpush1.bf16.msra.mxu0 %v956
    %4366 = vmatprep.subr.bf16.mxu0 0
    %4367 = vmatpush1.bf16.msra.mxu0 %v957
    %4368 = vmatprep.subr.bf16.mxu0 0
    %4369 = vmatpush1.bf16.msra.mxu0 %v958
    %4370 = vmatprep.subr.bf16.mxu0 0
    %4371 = vmatpush1.bf16.msra.mxu0 %v959
    %4372 = vmatprep.subr.bf16.mxu0 0
    %4373 = vmatpush1.bf16.msra.mxu0 %v960
    %4374 = vmatprep.subr.bf16.mxu0 0
    %4375 = vmatpush1.bf16.msra.mxu0 %v961
    %4376 = vmatprep.subr.bf16.mxu0 0
    %4377 = vmatpush1.bf16.msra.mxu0 %v962
    %4378 = vmatprep.subr.bf16.mxu0 0
    %4379 = vmatpush1.bf16.msra.mxu0 0
    %4380 = vmatprep.subr.bf16.mxu0 0
    %4381 = vmatpush1.bf16.msra.mxu0 0
    %4382 = vmatprep.subr.bf16.mxu0 0
    %4383 = vmatpush1.bf16.msra.mxu0 0
    %4384 = vmatprep.subr.bf16.mxu0 0
    %4385 = vmatpush1.bf16.msra.mxu0 0
    %4386 = vmatprep.subr.bf16.mxu0 0
    %4387 = vmatpush1.bf16.msra.mxu0 0
    %4388 = vmatprep.subr.bf16.mxu0 0
    %4389 = vmatpush1.bf16.msra.mxu0 0
    %4390 = vmatprep.subr.bf16.mxu0 0
    %4391 = vmatpush1.bf16.msra.mxu0 0
    %4392 = vmatprep.subr.bf16.mxu0 0
    %4393 = vmatpush1.bf16.msra.mxu0 0
    %4394 = vmatprep.mubr.bf16.mxu0 0
    %4395 = vmatmul.mubr.bf16.gmra.mrb[0].mxu0 %v4359
    %v4396 = vpop.f32.mrb[0].mxu0
    %v4397 = vadd.f32 0.0, %v4396
    %v4398 = vpop.f32.mrb[0].mxu0
    %v4399 = vpop.f32.mrb[0].mxu0
    %v4400 = vadd.f32 0.0, %v4399
    %v4401 = vpop.f32.mrb[0].mxu0
    %4402 = vmatprep.mubr.bf16.mxu0 0
    %4403 = vmatmul.mubr.bf16.gmra.mrb[0].mxu0 %v4360
    %v4404 = vpop.f32.mrb[0].mxu0
    %v4405 = vadd.f32 0.0, %v4404
    %v4406 = vpop.f32.mrb[0].mxu0
    %v4407 = vpop.f32.mrb[0].mxu0
    %v4408 = vadd.f32 0.0, %v4407
    %v4409 = vpop.f32.mrb[0].mxu0
    %4410 = vmatprep.mubr.bf16.mxu0 0
    %4411 = vmatmul.mubr.bf16.gmra.mrb[0].mxu0 %v4361
    %v4412 = vpop.f32.mrb[0].mxu0
    %v4413 = vadd.f32 0.0, %v4412
    %v4414 = vpop.f32.mrb[0].mxu0
    %v4415 = vpop.f32.mrb[0].mxu0
    %v4416 = vpop.f32.mrb[0].mxu0
    %4417 = vdwg.mxu0
    %s4418 = scalar_lea.vmem [#allocation40], 40
    %v4419 = vld [vmem:[%s4418] sm:$0xff]
    %v4420 = vld [vmem:[%s4418 + $0x8] sm:$0xff]
    %v4421 = vld [vmem:[%s4418 + $0x10] sm:$0xff]
    %v4422 = vld [vmem:[%s4418 + $0x18] sm:$0xff]
    %v4423 = vld [vmem:[%s4418 + $0x20] sm:$0xff]
    %v4425 = vsel %vm2036, %v4419, 0
    %v4428 = vsel %vm2036, %v4420, 0
    %v4431 = vsel %vm2036, %v4421, 0
    %v4434 = vsel %vm2036, %v4422, 0
    %v4437 = vsel %vm2036, %v4423, 0
    %4439 = vmatprep.subr.mxu0 0.0
    %4440 = vmatpush1.msra.mxu0 %v3504
    %4441 = vmatprep.subr.mxu0 0.0
    %4442 = vmatpush1.msra.mxu0 0.0
    %4443 = vmatprep.subr.mxu0 0.0
    %4444 = vmatpush1.msra.mxu0 0.0
    %4445 = vmatprep.subr.mxu0 0.0
    %4446 = vmatpush1.msra.mxu0 0.0
    %4447 = vmatprep.subr.mxu0 0.0
    %4448 = vmatpush1.msra.mxu0 0.0
    %4449 = vmatprep.subr.mxu0 0.0
    %4450 = vmatpush1.msra.mxu0 0.0
    %4451 = vmatprep.subr.mxu0 0.0
    %4452 = vmatpush1.msra.mxu0 0.0
    %4453 = vmatprep.subr.mxu0 0.0
    %4454 = vmatpush1.msra.mxu0 0.0
    %4455 = vmatprep.subr.mxu0 0.0
    %4456 = vmatpush1.msra.mxu0 0.0
    %4457 = vmatprep.subr.mxu0 0.0
    %4458 = vmatpush1.msra.mxu0 0.0
    %4459 = vmatprep.subr.mxu0 0.0
    %4460 = vmatpush1.msra.mxu0 0.0
    %4461 = vmatprep.subr.mxu0 0.0
    %4462 = vmatpush1.msra.mxu0 0.0
    %4463 = vmatprep.subr.mxu0 0.0
    %4464 = vmatpush1.msra.mxu0 0.0
    %4465 = vmatprep.subr.mxu0 0.0
    %4466 = vmatpush1.msra.mxu0 0.0
    %4467 = vmatprep.subr.mxu0 0.0
    %4468 = vmatpush1.msra.mxu0 0.0
    %4469 = vmatprep.subr.mxu0 0.0
    %4470 = vmatpush1.msra.mxu0 0.0
    %4471 = vmatprep.subr.mxu0 0.0
    %4472 = vmatpush1.msra.mxu0 0.0
    %4473 = vmatprep.subr.mxu0 0.0
    %4474 = vmatpush1.msra.mxu0 0.0
    %4475 = vmatprep.subr.mxu0 0.0
    %4476 = vmatpush1.msra.mxu0 0.0
    %4477 = vmatprep.subr.mxu0 0.0
    %4478 = vmatpush1.msra.mxu0 0.0
    %4479 = vmatprep.subr.mxu0 0.0
    %4480 = vmatpush1.msra.mxu0 0.0
    %4481 = vmatprep.subr.mxu0 0.0
    %4482 = vmatpush1.msra.mxu0 0.0
    %4483 = vmatprep.subr.mxu0 0.0
    %4484 = vmatpush1.msra.mxu0 0.0
    %4485 = vmatprep.subr.mxu0 0.0
    %4486 = vmatpush1.msra.mxu0 0.0
    %4487 = vmatprep.subr.mxu0 0.0
    %4488 = vmatpush1.msra.mxu0 0.0
    %4489 = vmatprep.subr.mxu0 0.0
    %4490 = vmatpush1.msra.mxu0 0.0
    %4491 = vmatprep.subr.mxu0 0.0
    %4492 = vmatpush1.msra.mxu0 0.0
    %4493 = vmatprep.subr.mxu0 0.0
    %4494 = vmatpush1.msra.mxu0 0.0
    %4495 = vmatprep.subr.mxu0 0.0
    %4496 = vmatpush1.msra.mxu0 0.0
    %4497 = vmatprep.subr.mxu0 0.0
    %4498 = vmatpush1.msra.mxu0 0.0
    %4499 = vmatprep.subr.mxu0 0.0
    %4500 = vmatpush1.msra.mxu0 0.0
    %4501 = vmatprep.subr.mxu0 0.0
    %4502 = vmatpush1.msra.mxu0 0.0
    %4503 = vmatprep.mubr.f32.mxu0 0.0
    %4504 = vmatmul.mubr.f32.gmra.mrb[0].mxu0 %v4425
    %v4505 = vpop.f32.mrb[0].mxu0
    %v4506 = vadd.f32 %v4397, %v4505
    %v4507 = vpop.f32.mrb[0].mxu0
    %4508 = vmatprep.mubr.f32.mxu0 0.0
    %4509 = vmatmul.mubr.f32.gmra.mrb[0].mxu0 %v4428
    %v4510 = vpop.f32.mrb[0].mxu0
    %v4511 = vadd.f32 %v4400, %v4510
    %v4512 = vpop.f32.mrb[0].mxu0
    %4513 = vmatprep.mubr.f32.mxu0 0.0
    %4514 = vmatmul.mubr.f32.gmra.mrb[0].mxu0 %v4431
    %v4515 = vpop.f32.mrb[0].mxu0
    %v4516 = vadd.f32 %v4405, %v4515
    %v4517 = vpop.f32.mrb[0].mxu0
    %4518 = vmatprep.mubr.f32.mxu0 0.0
    %4519 = vmatmul.mubr.f32.gmra.mrb[0].mxu0 %v4434
    %v4520 = vpop.f32.mrb[0].mxu0
    %v4521 = vadd.f32 %v4408, %v4520
    %v4522 = vpop.f32.mrb[0].mxu0
    %4523 = vmatprep.mubr.f32.mxu0 0.0
    %4524 = vmatmul.mubr.f32.gmra.mrb[0].mxu0 %v4437
    %v4525 = vpop.f32.mrb[0].mxu0
    %v4526 = vadd.f32 %v4413, %v4525
    %v4527 = vpop.f32.mrb[0].mxu0
    %4528 = vdwg.mxu0
    %s4529 = scalar_lea.vmem [#allocation43], 40
    %v4530 = vld [vmem:[%s4529] sm:$0xff]
    %v4531 = vld [vmem:[%s4529 + $0x8] sm:$0xff]
    %v4532 = vld [vmem:[%s4529 + $0x10] sm:$0xff]
    %v4533 = vld [vmem:[%s4529 + $0x18] sm:$0xff]
    %v4534 = vld [vmem:[%s4529 + $0x20] sm:$0xff]
    %4536 = vset.pattern.permute.xlu0 0
    %4537 = vperm.xlu0 %4536, %v4530
    %v4538 = vpop.permute.xlu0 %4537
    %4541 = vset.pattern.permute.xlu0 0
    %4542 = vperm.xlu0 %4541, %v4531
    %v4543 = vpop.permute.xlu0 %4542
    %4546 = vset.pattern.permute.xlu0 0
    %4547 = vperm.xlu0 %4546, %v4532
    %v4548 = vpop.permute.xlu0 %4547
    %4551 = vset.pattern.permute.xlu0 0
    %4552 = vperm.xlu0 %4551, %v4533
    %v4553 = vpop.permute.xlu0 %4552
    %4556 = vset.pattern.permute.xlu0 0
    %4557 = vperm.xlu0 %4556, %v4534
    %v4558 = vpop.permute.xlu0 %4557
    %v4560 = vadd.f32 %v4506, %v4538
    %v4561 = vadd.f32 %v4511, %v4543
    %v4562 = vadd.f32 %v4516, %v4548
    %v4563 = vadd.f32 %v4521, %v4553
    %v4564 = vadd.f32 %v4526, %v4558
    %v4565 = vmax.f32 %v4560, 0.0
    %v4566 = vmax.f32 %v4561, 0.0
    %v4567 = vmax.f32 %v4562, 0.0
    %v4568 = vmax.f32 %v4563, 0.0
    %v4569 = vmax.f32 %v4564, 0.0
    %s4570 = scalar_lea.vmem [#allocation44], 40
    %v4571 = vld [vmem:[%s4570] sm:$0xff]
    %v4572 = vld [vmem:[%s4570 + $0x8] sm:$0xff]
    %v4573 = vld [vmem:[%s4570 + $0x10] sm:$0xff]
    %v4574 = vld [vmem:[%s4570 + $0x18] sm:$0xff]
    %v4575 = vld [vmem:[%s4570 + $0x20] sm:$0xff]
    %s4576 = scalar_lea.vmem [#allocation46], 40
    %v4577 = vld [vmem:[%s4576] sm:$0xff]
    %v4578 = vld [vmem:[%s4576 + $0x8] sm:$0xff]
    %v4579 = vld [vmem:[%s4576 + $0x10] sm:$0xff]
    %v4580 = vld [vmem:[%s4576 + $0x18] sm:$0xff]
    %v4581 = vld [vmem:[%s4576 + $0x20] sm:$0xff]
    %4583 = vset.pattern.permute.xlu0 0
    %4584 = vperm.xlu0 %4583, %v4577
    %v4585 = vpop.permute.xlu0 %4584
    %4588 = vset.pattern.permute.xlu0 0
    %4589 = vperm.xlu0 %4588, %v4578
    %v4590 = vpop.permute.xlu0 %4589
    %4593 = vset.pattern.permute.xlu0 0
    %4594 = vperm.xlu0 %4593, %v4579
    %v4595 = vpop.permute.xlu0 %4594
    %4598 = vset.pattern.permute.xlu0 0
    %4599 = vperm.xlu0 %4598, %v4580
    %v4600 = vpop.permute.xlu0 %4599
    %4603 = vset.pattern.permute.xlu0 0
    %4604 = vperm.xlu0 %4603, %v4581
    %v4605 = vpop.permute.xlu0 %4604
    %v4608 = vsel %vm1436, %v4571, 0
    %v4611 = vsel %vm1436, %v4572, 0
    %v4614 = vsel %vm1436, %v4573, 0
    %v4617 = vsel %vm1436, %v4574, 0
    %v4620 = vsel %vm1436, %v4575, 0
    %4622 = vmatprep.subr.mxu0 0.0
    %4623 = vmatpush1.msra.mxu0 %v4565
    %4624 = vmatprep.subr.mxu0 0.0
    %4625 = vmatpush1.msra.mxu0 %v4566
    %4626 = vmatprep.subr.mxu0 0.0
    %4627 = vmatpush1.msra.mxu0 %v4567
    %4628 = vmatprep.subr.mxu0 0.0
    %4629 = vmatpush1.msra.mxu0 %v4568
    %4630 = vmatprep.subr.mxu0 0.0
    %4631 = vmatpush1.msra.mxu0 %v4569
    %4632 = vmatprep.subr.mxu0 0.0
    %4633 = vmatpush1.msra.mxu0 0.0
    %4634 = vmatprep.subr.mxu0 0.0
    %4635 = vmatpush1.msra.mxu0 0.0
    %4636 = vmatprep.subr.mxu0 0.0
    %4637 = vmatpush1.msra.mxu0 0.0
    %4638 = vmatprep.subr.mxu0 0.0
    %4639 = vmatpush1.msra.mxu0 0.0
    %4640 = vmatprep.subr.mxu0 0.0
    %4641 = vmatpush1.msra.mxu0 0.0
    %4642 = vmatprep.subr.mxu0 0.0
    %4643 = vmatpush1.msra.mxu0 0.0
    %4644 = vmatprep.subr.mxu0 0.0
    %4645 = vmatpush1.msra.mxu0 0.0
    %4646 = vmatprep.subr.mxu0 0.0
    %4647 = vmatpush1.msra.mxu0 0.0
    %4648 = vmatprep.subr.mxu0 0.0
    %4649 = vmatpush1.msra.mxu0 0.0
    %4650 = vmatprep.subr.mxu0 0.0
    %4651 = vmatpush1.msra.mxu0 0.0
    %4652 = vmatprep.subr.mxu0 0.0
    %4653 = vmatpush1.msra.mxu0 0.0
    %4654 = vmatprep.subr.mxu0 0.0
    %4655 = vmatpush1.msra.mxu0 0.0
    %4656 = vmatprep.subr.mxu0 0.0
    %4657 = vmatpush1.msra.mxu0 0.0
    %4658 = vmatprep.subr.mxu0 0.0
    %4659 = vmatpush1.msra.mxu0 0.0
    %4660 = vmatprep.subr.mxu0 0.0
    %4661 = vmatpush1.msra.mxu0 0.0
    %4662 = vmatprep.subr.mxu0 0.0
    %4663 = vmatpush1.msra.mxu0 0.0
    %4664 = vmatprep.subr.mxu0 0.0
    %4665 = vmatpush1.msra.mxu0 0.0
    %4666 = vmatprep.subr.mxu0 0.0
    %4667 = vmatpush1.msra.mxu0 0.0
    %4668 = vmatprep.subr.mxu0 0.0
    %4669 = vmatpush1.msra.mxu0 0.0
    %4670 = vmatprep.subr.mxu0 0.0
    %4671 = vmatpush1.msra.mxu0 0.0
    %4672 = vmatprep.subr.mxu0 0.0
    %4673 = vmatpush1.msra.mxu0 0.0
    %4674 = vmatprep.subr.mxu0 0.0
    %4675 = vmatpush1.msra.mxu0 0.0
    %4676 = vmatprep.subr.mxu0 0.0
    %4677 = vmatpush1.msra.mxu0 0.0
    %4678 = vmatprep.subr.mxu0 0.0
    %4679 = vmatpush1.msra.mxu0 0.0
    %4680 = vmatprep.subr.mxu0 0.0
    %4681 = vmatpush1.msra.mxu0 0.0
    %4682 = vmatprep.subr.mxu0 0.0
    %4683 = vmatpush1.msra.mxu0 0.0
    %4684 = vmatprep.subr.mxu0 0.0
    %4685 = vmatpush1.msra.mxu0 0.0
    %4686 = vmatprep.mubr.f32.mxu0 0.0
    %4687 = vmatmul.mubr.f32.gmra.mrb[0].mxu0 %v4608
    %v4688 = vpop.f32.mrb[0].mxu0
    %v4689 = vadd.f32 %v4585, %v4688
    %v4690 = vpop.f32.mrb[0].mxu0
    %4691 = vmatprep.mubr.f32.mxu0 0.0
    %4692 = vmatmul.mubr.f32.gmra.mrb[0].mxu0 %v4611
    %v4693 = vpop.f32.mrb[0].mxu0
    %v4694 = vadd.f32 %v4590, %v4693
    %v4695 = vpop.f32.mrb[0].mxu0
    %4696 = vmatprep.mubr.f32.mxu0 0.0
    %4697 = vmatmul.mubr.f32.gmra.mrb[0].mxu0 %v4614
    %v4698 = vpop.f32.mrb[0].mxu0
    %v4699 = vadd.f32 %v4595, %v4698
    %v4700 = vpop.f32.mrb[0].mxu0
    %4701 = vmatprep.mubr.f32.mxu0 0.0
    %4702 = vmatmul.mubr.f32.gmra.mrb[0].mxu0 %v4617
    %v4703 = vpop.f32.mrb[0].mxu0
    %v4704 = vadd.f32 %v4600, %v4703
    %v4705 = vpop.f32.mrb[0].mxu0
    %4706 = vmatprep.mubr.f32.mxu0 0.0
    %4707 = vmatmul.mubr.f32.gmra.mrb[0].mxu0 %v4620
    %v4708 = vpop.f32.mrb[0].mxu0
    %v4709 = vadd.f32 %v4605, %v4708
    %v4710 = vpop.f32.mrb[0].mxu0
    %4711 = vdwg.mxu0
    %v4712 = vmax.f32 %v4689, 0.0
    %v4713 = vmax.f32 %v4694, 0.0
    %v4714 = vmax.f32 %v4699, 0.0
    %v4715 = vmax.f32 %v4704, 0.0
    %v4716 = vmax.f32 %v4709, 0.0
    %s4717 = scalar_lea.vmem [#allocation47], 8
    %v4718 = vld [vmem:[%s4717] sm:$0x1f]
    %s4719 = scalar_lea.vmem [#allocation49], 8
    %v4720 = vld [vmem:[%s4719] sm:$0x1f]
    %4722 = vset.pattern.permute.xlu0 0
    %4723 = vperm.xlu0 %4722, %v4720
    %v4724 = vpop.permute.xlu0 %4723
    %v4727 = vsel %vm1436, %v4718, 0
    %4729 = vmatprep.subr.mxu0 0.0
    %4730 = vmatpush1.msra.mxu0 %v4712
    %4731 = vmatprep.subr.mxu0 0.0
    %4732 = vmatpush1.msra.mxu0 %v4713
    %4733 = vmatprep.subr.mxu0 0.0
    %4734 = vmatpush1.msra.mxu0 %v4714
    %4735 = vmatprep.subr.mxu0 0.0
    %4736 = vmatpush1.msra.mxu0 %v4715
    %4737 = vmatprep.subr.mxu0 0.0
    %4738 = vmatpush1.msra.mxu0 %v4716
    %4739 = vmatprep.subr.mxu0 0.0
    %4740 = vmatpush1.msra.mxu0 0.0
    %4741 = vmatprep.subr.mxu0 0.0
    %4742 = vmatpush1.msra.mxu0 0.0
    %4743 = vmatprep.subr.mxu0 0.0
    %4744 = vmatpush1.msra.mxu0 0.0
    %4745 = vmatprep.subr.mxu0 0.0
    %4746 = vmatpush1.msra.mxu0 0.0
    %4747 = vmatprep.subr.mxu0 0.0
    %4748 = vmatpush1.msra.mxu0 0.0
    %4749 = vmatprep.subr.mxu0 0.0
    %4750 = vmatpush1.msra.mxu0 0.0
    %4751 = vmatprep.subr.mxu0 0.0
    %4752 = vmatpush1.msra.mxu0 0.0
    %4753 = vmatprep.subr.mxu0 0.0
    %4754 = vmatpush1.msra.mxu0 0.0
    %4755 = vmatprep.subr.mxu0 0.0
    %4756 = vmatpush1.msra.mxu0 0.0
    %4757 = vmatprep.subr.mxu0 0.0
    %4758 = vmatpush1.msra.mxu0 0.0
    %4759 = vmatprep.subr.mxu0 0.0
    %4760 = vmatpush1.msra.mxu0 0.0
    %4761 = vmatprep.subr.mxu0 0.0
    %4762 = vmatpush1.msra.mxu0 0.0
    %4763 = vmatprep.subr.mxu0 0.0
    %4764 = vmatpush1.msra.mxu0 0.0
    %4765 = vmatprep.subr.mxu0 0.0
    %4766 = vmatpush1.msra.mxu0 0.0
    %4767 = vmatprep.subr.mxu0 0.0
    %4768 = vmatpush1.msra.mxu0 0.0
    %4769 = vmatprep.subr.mxu0 0.0
    %4770 = vmatpush1.msra.mxu0 0.0
    %4771 = vmatprep.subr.mxu0 0.0
    %4772 = vmatpush1.msra.mxu0 0.0
    %4773 = vmatprep.subr.mxu0 0.0
    %4774 = vmatpush1.msra.mxu0 0.0
    %4775 = vmatprep.subr.mxu0 0.0
    %4776 = vmatpush1.msra.mxu0 0.0
    %4777 = vmatprep.subr.mxu0 0.0
    %4778 = vmatpush1.msra.mxu0 0.0
    %4779 = vmatprep.subr.mxu0 0.0
    %4780 = vmatpush1.msra.mxu0 0.0
    %4781 = vmatprep.subr.mxu0 0.0
    %4782 = vmatpush1.msra.mxu0 0.0
    %4783 = vmatprep.subr.mxu0 0.0
    %4784 = vmatpush1.msra.mxu0 0.0
    %4785 = vmatprep.subr.mxu0 0.0
    %4786 = vmatpush1.msra.mxu0 0.0
    %4787 = vmatprep.subr.mxu0 0.0
    %4788 = vmatpush1.msra.mxu0 0.0
    %4789 = vmatprep.subr.mxu0 0.0
    %4790 = vmatpush1.msra.mxu0 0.0
    %4791 = vmatprep.subr.mxu0 0.0
    %4792 = vmatpush1.msra.mxu0 0.0
    %4793 = vmatprep.mubr.f32.mxu0 0.0
    %4794 = vmatmul.mubr.f32.gmra.mrb[0].mxu0 %v4727
    %v4795 = vpop.f32.mrb[0].mxu0
    %v4796 = vadd.f32 %v4724, %v4795
    %v4797 = vpop.f32.mrb[0].mxu0
    %4798 = vdwg.mxu0
    %v4799 = vmul.f32 %v3461, 0.5
    %v4800 = vmax.f32 %v4796, 0.0
    %v4801 = vmul.f32 %v4800, 0.5
    %v4802 = vadd.f32 %v4799, %v4801
    %s4803 = scalar_lea.vmem [#allocation31], 160
    %v4804 = vld [vmem:[%s4803] sm:$0xff]
    %v4805 = vld [vmem:[%s4803 + $0x8] sm:$0xff]
    %v4806 = vld [vmem:[%s4803 + $0x10] sm:$0xff]
    %v4807 = vld [vmem:[%s4803 + $0x18] sm:$0xff]
    %v4808 = vld [vmem:[%s4803 + $0x20] sm:$0xff]
    %v4809 = vld [vmem:[%s4803 + $0x28] sm:$0xff]
    %v4810 = vld [vmem:[%s4803 + $0x30] sm:$0xff]
    %v4811 = vld [vmem:[%s4803 + $0x38] sm:$0xff]
    %v4812 = vld [vmem:[%s4803 + $0x40] sm:$0xff]
    %v4813 = vld [vmem:[%s4803 + $0x48] sm:$0xff]
    %v4815 = vsel %vm2036, %v4804, 0
    %v4818 = vsel %vm2036, %v4805, 0
    %v4821 = vsel %vm2036, %v4806, 0
    %v4824 = vsel %vm2036, %v4807, 0
    %v4827 = vsel %vm2036, %v4808, 0
    %v4830 = vsel %vm2036, %v4809, 0
    %v4833 = vsel %vm2036, %v4810, 0
    %v4836 = vsel %vm2036, %v4811, 0
    %v4839 = vsel %vm2036, %v4812, 0
    %v4842 = vsel %vm2036, %v4813, 0
    %v4845 = vsel %vm2067, %v4802, 0
    %4847 = vmatprep.subr.mxu0 0.0
    %4848 = vmatpush1.msra.mxu0 %v4845
    %4849 = vmatprep.subr.mxu0 0.0
    %4850 = vmatpush1.msra.mxu0 0.0
    %4851 = vmatprep.subr.mxu0 0.0
    %4852 = vmatpush1.msra.mxu0 0.0
    %4853 = vmatprep.subr.mxu0 0.0
    %4854 = vmatpush1.msra.mxu0 0.0
    %4855 = vmatprep.subr.mxu0 0.0
    %4856 = vmatpush1.msra.mxu0 0.0
    %4857 = vmatprep.subr.mxu0 0.0
    %4858 = vmatpush1.msra.mxu0 0.0
    %4859 = vmatprep.subr.mxu0 0.0
    %4860 = vmatpush1.msra.mxu0 0.0
    %4861 = vmatprep.subr.mxu0 0.0
    %4862 = vmatpush1.msra.mxu0 0.0
    %4863 = vmatprep.subr.mxu0 0.0
    %4864 = vmatpush1.msra.mxu0 0.0
    %4865 = vmatprep.subr.mxu0 0.0
    %4866 = vmatpush1.msra.mxu0 0.0
    %4867 = vmatprep.subr.mxu0 0.0
    %4868 = vmatpush1.msra.mxu0 0.0
    %4869 = vmatprep.subr.mxu0 0.0
    %4870 = vmatpush1.msra.mxu0 0.0
    %4871 = vmatprep.subr.mxu0 0.0
    %4872 = vmatpush1.msra.mxu0 0.0
    %4873 = vmatprep.subr.mxu0 0.0
    %4874 = vmatpush1.msra.mxu0 0.0
    %4875 = vmatprep.subr.mxu0 0.0
    %4876 = vmatpush1.msra.mxu0 0.0
    %4877 = vmatprep.subr.mxu0 0.0
    %4878 = vmatpush1.msra.mxu0 0.0
    %4879 = vmatprep.subr.mxu0 0.0
    %4880 = vmatpush1.msra.mxu0 0.0
    %4881 = vmatprep.subr.mxu0 0.0
    %4882 = vmatpush1.msra.mxu0 0.0
    %4883 = vmatprep.subr.mxu0 0.0
    %4884 = vmatpush1.msra.mxu0 0.0
    %4885 = vmatprep.subr.mxu0 0.0
    %4886 = vmatpush1.msra.mxu0 0.0
    %4887 = vmatprep.subr.mxu0 0.0
    %4888 = vmatpush1.msra.mxu0 0.0
    %4889 = vmatprep.subr.mxu0 0.0
    %4890 = vmatpush1.msra.mxu0 0.0
    %4891 = vmatprep.subr.mxu0 0.0
    %4892 = vmatpush1.msra.mxu0 0.0
    %4893 = vmatprep.subr.mxu0 0.0
    %4894 = vmatpush1.msra.mxu0 0.0
    %4895 = vmatprep.subr.mxu0 0.0
    %4896 = vmatpush1.msra.mxu0 0.0
    %4897 = vmatprep.subr.mxu0 0.0
    %4898 = vmatpush1.msra.mxu0 0.0
    %4899 = vmatprep.subr.mxu0 0.0
    %4900 = vmatpush1.msra.mxu0 0.0
    %4901 = vmatprep.subr.mxu0 0.0
    %4902 = vmatpush1.msra.mxu0 0.0
    %4903 = vmatprep.subr.mxu0 0.0
    %4904 = vmatpush1.msra.mxu0 0.0
    %4905 = vmatprep.subr.mxu0 0.0
    %4906 = vmatpush1.msra.mxu0 0.0
    %4907 = vmatprep.subr.mxu0 0.0
    %4908 = vmatpush1.msra.mxu0 0.0
    %4909 = vmatprep.subr.mxu0 0.0
    %4910 = vmatpush1.msra.mxu0 0.0
    %4911 = vmatprep.mubr.f32.mxu0 0.0
    %4912 = vmatmul.mubr.f32.gmra.mrb[0].mxu0 %v4815
    %v4913 = vpop.f32.mrb[0].mxu0
    %v4914 = vadd.f32 0.0, %v4913
    %v4915 = vpop.f32.mrb[0].mxu0
    %4916 = vmatprep.mubr.f32.mxu0 0.0
    %4917 = vmatmul.mubr.f32.gmra.mrb[0].mxu0 %v4818
    %v4918 = vpop.f32.mrb[0].mxu0
    %v4919 = vadd.f32 0.0, %v4918
    %v4920 = vpop.f32.mrb[0].mxu0
    %4921 = vmatprep.mubr.f32.mxu0 0.0
    %4922 = vmatmul.mubr.f32.gmra.mrb[0].mxu0 %v4821
    %v4923 = vpop.f32.mrb[0].mxu0
    %v4924 = vadd.f32 0.0, %v4923
    %v4925 = vpop.f32.mrb[0].mxu0
    %4926 = vmatprep.mubr.f32.mxu0 0.0
    %4927 = vmatmul.mubr.f32.gmra.mrb[0].mxu0 %v4824
    %v4928 = vpop.f32.mrb[0].mxu0
    %v4929 = vadd.f32 0.0, %v4928
    %v4930 = vpop.f32.mrb[0].mxu0
    %4931 = vmatprep.mubr.f32.mxu0 0.0
    %4932 = vmatmul.mubr.f32.gmra.mrb[0].mxu0 %v4827
    %v4933 = vpop.f32.mrb[0].mxu0
    %v4934 = vadd.f32 0.0, %v4933
    %v4935 = vpop.f32.mrb[0].mxu0
    %4936 = vmatprep.mubr.f32.mxu0 0.0
    %4937 = vmatmul.mubr.f32.gmra.mrb[0].mxu0 %v4830
    %v4938 = vpop.f32.mrb[0].mxu0
    %v4939 = vadd.f32 0.0, %v4938
    %v4940 = vpop.f32.mrb[0].mxu0
    %4941 = vmatprep.mubr.f32.mxu0 0.0
    %4942 = vmatmul.mubr.f32.gmra.mrb[0].mxu0 %v4833
    %v4943 = vpop.f32.mrb[0].mxu0
    %v4944 = vadd.f32 0.0, %v4943
    %v4945 = vpop.f32.mrb[0].mxu0
    %4946 = vmatprep.mubr.f32.mxu0 0.0
    %4947 = vmatmul.mubr.f32.gmra.mrb[0].mxu0 %v4836
    %v4948 = vpop.f32.mrb[0].mxu0
    %v4949 = vadd.f32 0.0, %v4948
    %v4950 = vpop.f32.mrb[0].mxu0
    %4951 = vmatprep.mubr.f32.mxu0 0.0
    %4952 = vmatmul.mubr.f32.gmra.mrb[0].mxu0 %v4839
    %v4953 = vpop.f32.mrb[0].mxu0
    %v4954 = vadd.f32 0.0, %v4953
    %v4955 = vpop.f32.mrb[0].mxu0
    %4956 = vmatprep.mubr.f32.mxu0 0.0
    %4957 = vmatmul.mubr.f32.gmra.mrb[0].mxu0 %v4842
    %v4958 = vpop.f32.mrb[0].mxu0
    %v4959 = vadd.f32 0.0, %v4958
    %v4960 = vpop.f32.mrb[0].mxu0
    %4961 = vdwg.mxu0
    %v4962 = vpack.c.bf16 %v4919, %v4914
    %v4963 = vpack.c.bf16 %v4929, %v4924
    %v4964 = vpack.c.bf16 %v4934, %v4934
    %v4965 = vpack.c.bf16 %v4944, %v4939
    %v4966 = vpack.c.bf16 %v4954, %v4949
    %v4967 = vpack.c.bf16 %v4959, %v4959
    %4968 = vmatprep.subr.bf16.mxu0 0
    %4969 = vmatpush1.bf16.msra.mxu0 %v855
    %4970 = vmatprep.subr.bf16.mxu0 0
    %4971 = vmatpush1.bf16.msra.mxu0 %v856
    %4972 = vmatprep.subr.bf16.mxu0 0
    %4973 = vmatpush1.bf16.msra.mxu0 %v857
    %4974 = vmatprep.subr.bf16.mxu0 0
    %4975 = vmatpush1.bf16.msra.mxu0 %v858
    %4976 = vmatprep.subr.bf16.mxu0 0
    %4977 = vmatpush1.bf16.msra.mxu0 %v859
    %4978 = vmatprep.subr.bf16.mxu0 0
    %4979 = vmatpush1.bf16.msra.mxu0 %v860
    %4980 = vmatprep.subr.bf16.mxu0 0
    %4981 = vmatpush1.bf16.msra.mxu0 %v861
    %4982 = vmatprep.subr.bf16.mxu0 0
    %4983 = vmatpush1.bf16.msra.mxu0 %v862
    %4984 = vmatprep.subr.bf16.mxu0 0
    %4985 = vmatpush1.bf16.msra.mxu0 0
    %4986 = vmatprep.subr.bf16.mxu0 0
    %4987 = vmatpush1.bf16.msra.mxu0 0
    %4988 = vmatprep.subr.bf16.mxu0 0
    %4989 = vmatpush1.bf16.msra.mxu0 0
    %4990 = vmatprep.subr.bf16.mxu0 0
    %4991 = vmatpush1.bf16.msra.mxu0 0
    %4992 = vmatprep.subr.bf16.mxu0 0
    %4993 = vmatpush1.bf16.msra.mxu0 0
    %4994 = vmatprep.subr.bf16.mxu0 0
    %4995 = vmatpush1.bf16.msra.mxu0 0
    %4996 = vmatprep.subr.bf16.mxu0 0
    %4997 = vmatpush1.bf16.msra.mxu0 0
    %4998 = vmatprep.subr.bf16.mxu0 0
    %4999 = vmatpush1.bf16.msra.mxu0 0
    %5000 = vmatprep.mubr.bf16.mxu0 0
    %5001 = vmatmul.mubr.bf16.gmra.mrb[0].mxu0 %v4965
    %v5002 = vpop.f32.mrb[0].mxu0
    %v5003 = vadd.f32 0.0, %v5002
    %v5004 = vpop.f32.mrb[0].mxu0
    %v5005 = vpop.f32.mrb[0].mxu0
    %v5006 = vadd.f32 0.0, %v5005
    %v5007 = vpop.f32.mrb[0].mxu0
    %5008 = vmatprep.mubr.bf16.mxu0 0
    %5009 = vmatmul.mubr.bf16.gmra.mrb[0].mxu0 %v4966
    %v5010 = vpop.f32.mrb[0].mxu0
    %v5011 = vadd.f32 0.0, %v5010
    %v5012 = vpop.f32.mrb[0].mxu0
    %v5013 = vpop.f32.mrb[0].mxu0
    %v5014 = vadd.f32 0.0, %v5013
    %v5015 = vpop.f32.mrb[0].mxu0
    %5016 = vmatprep.mubr.bf16.mxu0 0
    %5017 = vmatmul.mubr.bf16.gmra.mrb[0].mxu0 %v4967
    %v5018 = vpop.f32.mrb[0].mxu0
    %v5019 = vadd.f32 0.0, %v5018
    %v5020 = vpop.f32.mrb[0].mxu0
    %v5021 = vpop.f32.mrb[0].mxu0
    %v5022 = vpop.f32.mrb[0].mxu0
    %5023 = vdwg.mxu0
    %5024 = vmatprep.subr.bf16.mxu0 0
    %5025 = vmatpush1.bf16.msra.mxu0 %v915
    %5026 = vmatprep.subr.bf16.mxu0 0
    %5027 = vmatpush1.bf16.msra.mxu0 %v916
    %5028 = vmatprep.subr.bf16.mxu0 0
    %5029 = vmatpush1.bf16.msra.mxu0 %v917
    %5030 = vmatprep.subr.bf16.mxu0 0
    %5031 = vmatpush1.bf16.msra.mxu0 %v918
    %5032 = vmatprep.subr.bf16.mxu0 0
    %5033 = vmatpush1.bf16.msra.mxu0 %v919
    %5034 = vmatprep.subr.bf16.mxu0 0
    %5035 = vmatpush1.bf16.msra.mxu0 %v920
    %5036 = vmatprep.subr.bf16.mxu0 0
    %5037 = vmatpush1.bf16.msra.mxu0 %v921
    %5038 = vmatprep.subr.bf16.mxu0 0
    %5039 = vmatpush1.bf16.msra.mxu0 %v922
    %5040 = vmatprep.subr.bf16.mxu0 0
    %5041 = vmatpush1.bf16.msra.mxu0 0
    %5042 = vmatprep.subr.bf16.mxu0 0
    %5043 = vmatpush1.bf16.msra.mxu0 0
    %5044 = vmatprep.subr.bf16.mxu0 0
    %5045 = vmatpush1.bf16.msra.mxu0 0
    %5046 = vmatprep.subr.bf16.mxu0 0
    %5047 = vmatpush1.bf16.msra.mxu0 0
    %5048 = vmatprep.subr.bf16.mxu0 0
    %5049 = vmatpush1.bf16.msra.mxu0 0
    %5050 = vmatprep.subr.bf16.mxu0 0
    %5051 = vmatpush1.bf16.msra.mxu0 0
    %5052 = vmatprep.subr.bf16.mxu0 0
    %5053 = vmatpush1.bf16.msra.mxu0 0
    %5054 = vmatprep.subr.bf16.mxu0 0
    %5055 = vmatpush1.bf16.msra.mxu0 0
    %5056 = vmatprep.mubr.bf16.mxu0 0
    %5057 = vmatmul.mubr.bf16.gmra.mrb[0].mxu0 %v4962
    %v5058 = vpop.f32.mrb[0].mxu0
    %v5059 = vadd.f32 %v5003, %v5058
    %v5060 = vpop.f32.mrb[0].mxu0
    %v5061 = vpop.f32.mrb[0].mxu0
    %v5062 = vadd.f32 %v5006, %v5061
    %v5063 = vpop.f32.mrb[0].mxu0
    %5064 = vmatprep.mubr.bf16.mxu0 0
    %5065 = vmatmul.mubr.bf16.gmra.mrb[0].mxu0 %v4963
    %v5066 = vpop.f32.mrb[0].mxu0
    %v5067 = vadd.f32 %v5011, %v5066
    %v5068 = vpop.f32.mrb[0].mxu0
    %v5069 = vpop.f32.mrb[0].mxu0
    %v5070 = vadd.f32 %v5014, %v5069
    %v5071 = vpop.f32.mrb[0].mxu0
    %5072 = vmatprep.mubr.bf16.mxu0 0
    %5073 = vmatmul.mubr.bf16.gmra.mrb[0].mxu0 %v4964
    %v5074 = vpop.f32.mrb[0].mxu0
    %v5075 = vadd.f32 %v5019, %v5074
    %v5076 = vpop.f32.mrb[0].mxu0
    %v5077 = vpop.f32.mrb[0].mxu0
    %v5078 = vpop.f32.mrb[0].mxu0
    %5079 = vdwg.mxu0
    %s5080 = scalar_lea.vmem %s57, 80
    %v5081 = vld [vmem:[%s5080] sm:$0xff]
    %v5082 = vld [vmem:[%s5080 + $0x8] sm:$0xff]
    %v5083 = vld [vmem:[%s5080 + $0x10] sm:$0xff]
    %v5084 = vld [vmem:[%s5080 + $0x18] sm:$0xff]
    %v5085 = vld [vmem:[%s5080 + $0x20] sm:$0xff]
    %v5087 = vsel %vm1246, %v5081, 0
    %v5090 = vsel %vm1246, %v5082, 0
    %v5093 = vsel %vm1246, %v5083, 0
    %v5096 = vsel %vm1246, %v5084, 0
    %v5099 = vsel %vm1246, %v5085, 0
    %5101 = vmatprep.subr.mxu0 0.0
    %5102 = vmatpush1.msra.mxu0 %v4147
    %5103 = vmatprep.subr.mxu0 0.0
    %5104 = vmatpush1.msra.mxu0 0.0
    %5105 = vmatprep.subr.mxu0 0.0
    %5106 = vmatpush1.msra.mxu0 0.0
    %5107 = vmatprep.subr.mxu0 0.0
    %5108 = vmatpush1.msra.mxu0 0.0
    %5109 = vmatprep.subr.mxu0 0.0
    %5110 = vmatpush1.msra.mxu0 0.0
    %5111 = vmatprep.subr.mxu0 0.0
    %5112 = vmatpush1.msra.mxu0 0.0
    %5113 = vmatprep.subr.mxu0 0.0
    %5114 = vmatpush1.msra.mxu0 0.0
    %5115 = vmatprep.subr.mxu0 0.0
    %5116 = vmatpush1.msra.mxu0 0.0
    %5117 = vmatprep.subr.mxu0 0.0
    %5118 = vmatpush1.msra.mxu0 0.0
    %5119 = vmatprep.subr.mxu0 0.0
    %5120 = vmatpush1.msra.mxu0 0.0
    %5121 = vmatprep.subr.mxu0 0.0
    %5122 = vmatpush1.msra.mxu0 0.0
    %5123 = vmatprep.subr.mxu0 0.0
    %5124 = vmatpush1.msra.mxu0 0.0
    %5125 = vmatprep.subr.mxu0 0.0
    %5126 = vmatpush1.msra.mxu0 0.0
    %5127 = vmatprep.subr.mxu0 0.0
    %5128 = vmatpush1.msra.mxu0 0.0
    %5129 = vmatprep.subr.mxu0 0.0
    %5130 = vmatpush1.msra.mxu0 0.0
    %5131 = vmatprep.subr.mxu0 0.0
    %5132 = vmatpush1.msra.mxu0 0.0
    %5133 = vmatprep.subr.mxu0 0.0
    %5134 = vmatpush1.msra.mxu0 0.0
    %5135 = vmatprep.subr.mxu0 0.0
    %5136 = vmatpush1.msra.mxu0 0.0
    %5137 = vmatprep.subr.mxu0 0.0
    %5138 = vmatpush1.msra.mxu0 0.0
    %5139 = vmatprep.subr.mxu0 0.0
    %5140 = vmatpush1.msra.mxu0 0.0
    %5141 = vmatprep.subr.mxu0 0.0
    %5142 = vmatpush1.msra.mxu0 0.0
    %5143 = vmatprep.subr.mxu0 0.0
    %5144 = vmatpush1.msra.mxu0 0.0
    %5145 = vmatprep.subr.mxu0 0.0
    %5146 = vmatpush1.msra.mxu0 0.0
    %5147 = vmatprep.subr.mxu0 0.0
    %5148 = vmatpush1.msra.mxu0 0.0
    %5149 = vmatprep.subr.mxu0 0.0
    %5150 = vmatpush1.msra.mxu0 0.0
    %5151 = vmatprep.subr.mxu0 0.0
    %5152 = vmatpush1.msra.mxu0 0.0
    %5153 = vmatprep.subr.mxu0 0.0
    %5154 = vmatpush1.msra.mxu0 0.0
    %5155 = vmatprep.subr.mxu0 0.0
    %5156 = vmatpush1.msra.mxu0 0.0
    %5157 = vmatprep.subr.mxu0 0.0
    %5158 = vmatpush1.msra.mxu0 0.0
    %5159 = vmatprep.subr.mxu0 0.0
    %5160 = vmatpush1.msra.mxu0 0.0
    %5161 = vmatprep.subr.mxu0 0.0
    %5162 = vmatpush1.msra.mxu0 0.0
    %5163 = vmatprep.subr.mxu0 0.0
    %5164 = vmatpush1.msra.mxu0 0.0
    %5165 = vmatprep.mubr.f32.mxu0 0.0
    %5166 = vmatmul.mubr.f32.gmra.mrb[0].mxu0 %v5087
    %v5167 = vpop.f32.mrb[0].mxu0
    %v5168 = vadd.f32 0.0, %v5167
    %v5169 = vpop.f32.mrb[0].mxu0
    %5170 = vmatprep.mubr.f32.mxu0 0.0
    %5171 = vmatmul.mubr.f32.gmra.mrb[0].mxu0 %v5090
    %v5172 = vpop.f32.mrb[0].mxu0
    %v5173 = vadd.f32 0.0, %v5172
    %v5174 = vpop.f32.mrb[0].mxu0
    %5175 = vmatprep.mubr.f32.mxu0 0.0
    %5176 = vmatmul.mubr.f32.gmra.mrb[0].mxu0 %v5093
    %v5177 = vpop.f32.mrb[0].mxu0
    %v5178 = vadd.f32 0.0, %v5177
    %v5179 = vpop.f32.mrb[0].mxu0
    %5180 = vmatprep.mubr.f32.mxu0 0.0
    %5181 = vmatmul.mubr.f32.gmra.mrb[0].mxu0 %v5096
    %v5182 = vpop.f32.mrb[0].mxu0
    %v5183 = vadd.f32 0.0, %v5182
    %v5184 = vpop.f32.mrb[0].mxu0
    %5185 = vmatprep.mubr.f32.mxu0 0.0
    %5186 = vmatmul.mubr.f32.gmra.mrb[0].mxu0 %v5099
    %v5187 = vpop.f32.mrb[0].mxu0
    %v5188 = vadd.f32 0.0, %v5187
    %v5189 = vpop.f32.mrb[0].mxu0
    %5190 = vdwg.mxu0
    %v5191 = vadd.f32 %v5059, %v5168
    %v5192 = vadd.f32 %v5062, %v5173
    %v5193 = vadd.f32 %v5067, %v5178
    %v5194 = vadd.f32 %v5070, %v5183
    %v5195 = vadd.f32 %v5075, %v5188
    %s5196 = scalar_lea.vmem [#allocation32], 80
    %v5197 = vld [vmem:[%s5196] sm:$0xff]
    %v5198 = vld [vmem:[%s5196 + $0x8] sm:$0xff]
    %v5199 = vld [vmem:[%s5196 + $0x10] sm:$0xff]
    %v5200 = vld [vmem:[%s5196 + $0x18] sm:$0xff]
    %v5201 = vld [vmem:[%s5196 + $0x20] sm:$0xff]
    %5203 = vset.pattern.permute.xlu0 0
    %5204 = vperm.xlu0 %5203, %v5197
    %v5205 = vpop.permute.xlu0 %5204
    %5208 = vset.pattern.permute.xlu0 0
    %5209 = vperm.xlu0 %5208, %v5198
    %v5210 = vpop.permute.xlu0 %5209
    %5213 = vset.pattern.permute.xlu0 0
    %5214 = vperm.xlu0 %5213, %v5199
    %v5215 = vpop.permute.xlu0 %5214
    %5218 = vset.pattern.permute.xlu0 0
    %5219 = vperm.xlu0 %5218, %v5200
    %v5220 = vpop.permute.xlu0 %5219
    %5223 = vset.pattern.permute.xlu0 0
    %5224 = vperm.xlu0 %5223, %v5201
    %v5225 = vpop.permute.xlu0 %5224
    %v5227 = vadd.f32 %v5191, %v5205
    %v5228 = vadd.f32 %v5192, %v5210
    %v5229 = vadd.f32 %v5193, %v5215
    %v5230 = vadd.f32 %v5194, %v5220
    %v5231 = vadd.f32 %v5195, %v5225
    %v5232 = vmax.f32 %v5227, 0.0
    %v5233 = vmax.f32 %v5228, 0.0
    %v5234 = vmax.f32 %v5229, 0.0
    %v5235 = vmax.f32 %v5230, 0.0
    %v5236 = vmax.f32 %v5231, 0.0
    %s5237 = scalar_lea.vmem [#allocation34], 80
    %v5238 = vld [vmem:[%s5237] sm:$0xff]
    %v5239 = vld [vmem:[%s5237 + $0x8] sm:$0xff]
    %v5240 = vld [vmem:[%s5237 + $0x10] sm:$0xff]
    %v5241 = vld [vmem:[%s5237 + $0x18] sm:$0xff]
    %v5242 = vld [vmem:[%s5237 + $0x20] sm:$0xff]
    %s5243 = scalar_lea.vmem [#allocation35], 80
    %v5244 = vld [vmem:[%s5243] sm:$0xff]
    %v5245 = vld [vmem:[%s5243 + $0x8] sm:$0xff]
    %v5246 = vld [vmem:[%s5243 + $0x10] sm:$0xff]
    %v5247 = vld [vmem:[%s5243 + $0x18] sm:$0xff]
    %v5248 = vld [vmem:[%s5243 + $0x20] sm:$0xff]
    %5250 = vset.pattern.permute.xlu0 0
    %5251 = vperm.xlu0 %5250, %v5244
    %v5252 = vpop.permute.xlu0 %5251
    %5255 = vset.pattern.permute.xlu0 0
    %5256 = vperm.xlu0 %5255, %v5245
    %v5257 = vpop.permute.xlu0 %5256
    %5260 = vset.pattern.permute.xlu0 0
    %5261 = vperm.xlu0 %5260, %v5246
    %v5262 = vpop.permute.xlu0 %5261
    %5265 = vset.pattern.permute.xlu0 0
    %5266 = vperm.xlu0 %5265, %v5247
    %v5267 = vpop.permute.xlu0 %5266
    %5270 = vset.pattern.permute.xlu0 0
    %5271 = vperm.xlu0 %5270, %v5248
    %v5272 = vpop.permute.xlu0 %5271
    %v5275 = vsel %vm1436, %v5238, 0
    %v5278 = vsel %vm1436, %v5239, 0
    %v5281 = vsel %vm1436, %v5240, 0
    %v5284 = vsel %vm1436, %v5241, 0
    %v5287 = vsel %vm1436, %v5242, 0
    %5289 = vmatprep.subr.mxu0 0.0
    %5290 = vmatpush1.msra.mxu0 %v5232
    %5291 = vmatprep.subr.mxu0 0.0
    %5292 = vmatpush1.msra.mxu0 %v5233
    %5293 = vmatprep.subr.mxu0 0.0
    %5294 = vmatpush1.msra.mxu0 %v5234
    %5295 = vmatprep.subr.mxu0 0.0
    %5296 = vmatpush1.msra.mxu0 %v5235
    %5297 = vmatprep.subr.mxu0 0.0
    %5298 = vmatpush1.msra.mxu0 %v5236
    %5299 = vmatprep.subr.mxu0 0.0
    %5300 = vmatpush1.msra.mxu0 0.0
    %5301 = vmatprep.subr.mxu0 0.0
    %5302 = vmatpush1.msra.mxu0 0.0
    %5303 = vmatprep.subr.mxu0 0.0
    %5304 = vmatpush1.msra.mxu0 0.0
    %5305 = vmatprep.subr.mxu0 0.0
    %5306 = vmatpush1.msra.mxu0 0.0
    %5307 = vmatprep.subr.mxu0 0.0
    %5308 = vmatpush1.msra.mxu0 0.0
    %5309 = vmatprep.subr.mxu0 0.0
    %5310 = vmatpush1.msra.mxu0 0.0
    %5311 = vmatprep.subr.mxu0 0.0
    %5312 = vmatpush1.msra.mxu0 0.0
    %5313 = vmatprep.subr.mxu0 0.0
    %5314 = vmatpush1.msra.mxu0 0.0
    %5315 = vmatprep.subr.mxu0 0.0
    %5316 = vmatpush1.msra.mxu0 0.0
    %5317 = vmatprep.subr.mxu0 0.0
    %5318 = vmatpush1.msra.mxu0 0.0
    %5319 = vmatprep.subr.mxu0 0.0
    %5320 = vmatpush1.msra.mxu0 0.0
    %5321 = vmatprep.subr.mxu0 0.0
    %5322 = vmatpush1.msra.mxu0 0.0
    %5323 = vmatprep.subr.mxu0 0.0
    %5324 = vmatpush1.msra.mxu0 0.0
    %5325 = vmatprep.subr.mxu0 0.0
    %5326 = vmatpush1.msra.mxu0 0.0
    %5327 = vmatprep.subr.mxu0 0.0
    %5328 = vmatpush1.msra.mxu0 0.0
    %5329 = vmatprep.subr.mxu0 0.0
    %5330 = vmatpush1.msra.mxu0 0.0
    %5331 = vmatprep.subr.mxu0 0.0
    %5332 = vmatpush1.msra.mxu0 0.0
    %5333 = vmatprep.subr.mxu0 0.0
    %5334 = vmatpush1.msra.mxu0 0.0
    %5335 = vmatprep.subr.mxu0 0.0
    %5336 = vmatpush1.msra.mxu0 0.0
    %5337 = vmatprep.subr.mxu0 0.0
    %5338 = vmatpush1.msra.mxu0 0.0
    %5339 = vmatprep.subr.mxu0 0.0
    %5340 = vmatpush1.msra.mxu0 0.0
    %5341 = vmatprep.subr.mxu0 0.0
    %5342 = vmatpush1.msra.mxu0 0.0
    %5343 = vmatprep.subr.mxu0 0.0
    %5344 = vmatpush1.msra.mxu0 0.0
    %5345 = vmatprep.subr.mxu0 0.0
    %5346 = vmatpush1.msra.mxu0 0.0
    %5347 = vmatprep.subr.mxu0 0.0
    %5348 = vmatpush1.msra.mxu0 0.0
    %5349 = vmatprep.subr.mxu0 0.0
    %5350 = vmatpush1.msra.mxu0 0.0
    %5351 = vmatprep.subr.mxu0 0.0
    %5352 = vmatpush1.msra.mxu0 0.0
    %5353 = vmatprep.mubr.f32.mxu0 0.0
    %5354 = vmatmul.mubr.f32.gmra.mrb[0].mxu0 %v5275
    %v5355 = vpop.f32.mrb[0].mxu0
    %v5356 = vadd.f32 %v5252, %v5355
    %v5357 = vpop.f32.mrb[0].mxu0
    %5358 = vmatprep.mubr.f32.mxu0 0.0
    %5359 = vmatmul.mubr.f32.gmra.mrb[0].mxu0 %v5278
    %v5360 = vpop.f32.mrb[0].mxu0
    %v5361 = vadd.f32 %v5257, %v5360
    %v5362 = vpop.f32.mrb[0].mxu0
    %5363 = vmatprep.mubr.f32.mxu0 0.0
    %5364 = vmatmul.mubr.f32.gmra.mrb[0].mxu0 %v5281
    %v5365 = vpop.f32.mrb[0].mxu0
    %v5366 = vadd.f32 %v5262, %v5365
    %v5367 = vpop.f32.mrb[0].mxu0
    %5368 = vmatprep.mubr.f32.mxu0 0.0
    %5369 = vmatmul.mubr.f32.gmra.mrb[0].mxu0 %v5284
    %v5370 = vpop.f32.mrb[0].mxu0
    %v5371 = vadd.f32 %v5267, %v5370
    %v5372 = vpop.f32.mrb[0].mxu0
    %5373 = vmatprep.mubr.f32.mxu0 0.0
    %5374 = vmatmul.mubr.f32.gmra.mrb[0].mxu0 %v5287
    %v5375 = vpop.f32.mrb[0].mxu0
    %v5376 = vadd.f32 %v5272, %v5375
    %v5377 = vpop.f32.mrb[0].mxu0
    %5378 = vdwg.mxu0
    %v5379 = vmax.f32 %v5356, 0.0
    %v5380 = vmax.f32 %v5361, 0.0
    %v5381 = vmax.f32 %v5366, 0.0
    %v5382 = vmax.f32 %v5371, 0.0
    %v5383 = vmax.f32 %v5376, 0.0
    %s5384 = scalar_lea.vmem [#allocation37], 8
    %v5385 = vld [vmem:[%s5384] sm:$0xf]
    %s5386 = scalar_lea.vmem [#allocation38], 8
    %v5387 = vld [vmem:[%s5386] sm:$0xf]
    %5389 = vset.pattern.permute.xlu0 0
    %5390 = vperm.xlu0 %5389, %v5387
    %v5391 = vpop.permute.xlu0 %5390
    %v5394 = vsel %vm1436, %v5385, 0
    %5396 = vmatprep.subr.mxu0 0.0
    %5397 = vmatpush1.msra.mxu0 %v5379
    %5398 = vmatprep.subr.mxu0 0.0
    %5399 = vmatpush1.msra.mxu0 %v5380
    %5400 = vmatprep.subr.mxu0 0.0
    %5401 = vmatpush1.msra.mxu0 %v5381
    %5402 = vmatprep.subr.mxu0 0.0
    %5403 = vmatpush1.msra.mxu0 %v5382
    %5404 = vmatprep.subr.mxu0 0.0
    %5405 = vmatpush1.msra.mxu0 %v5383
    %5406 = vmatprep.subr.mxu0 0.0
    %5407 = vmatpush1.msra.mxu0 0.0
    %5408 = vmatprep.subr.mxu0 0.0
    %5409 = vmatpush1.msra.mxu0 0.0
    %5410 = vmatprep.subr.mxu0 0.0
    %5411 = vmatpush1.msra.mxu0 0.0
    %5412 = vmatprep.subr.mxu0 0.0
    %5413 = vmatpush1.msra.mxu0 0.0
    %5414 = vmatprep.subr.mxu0 0.0
    %5415 = vmatpush1.msra.mxu0 0.0
    %5416 = vmatprep.subr.mxu0 0.0
    %5417 = vmatpush1.msra.mxu0 0.0
    %5418 = vmatprep.subr.mxu0 0.0
    %5419 = vmatpush1.msra.mxu0 0.0
    %5420 = vmatprep.subr.mxu0 0.0
    %5421 = vmatpush1.msra.mxu0 0.0
    %5422 = vmatprep.subr.mxu0 0.0
    %5423 = vmatpush1.msra.mxu0 0.0
    %5424 = vmatprep.subr.mxu0 0.0
    %5425 = vmatpush1.msra.mxu0 0.0
    %5426 = vmatprep.subr.mxu0 0.0
    %5427 = vmatpush1.msra.mxu0 0.0
    %5428 = vmatprep.subr.mxu0 0.0
    %5429 = vmatpush1.msra.mxu0 0.0
    %5430 = vmatprep.subr.mxu0 0.0
    %5431 = vmatpush1.msra.mxu0 0.0
    %5432 = vmatprep.subr.mxu0 0.0
    %5433 = vmatpush1.msra.mxu0 0.0
    %5434 = vmatprep.subr.mxu0 0.0
    %5435 = vmatpush1.msra.mxu0 0.0
    %5436 = vmatprep.subr.mxu0 0.0
    %5437 = vmatpush1.msra.mxu0 0.0
    %5438 = vmatprep.subr.mxu0 0.0
    %5439 = vmatpush1.msra.mxu0 0.0
    %5440 = vmatprep.subr.mxu0 0.0
    %5441 = vmatpush1.msra.mxu0 0.0
    %5442 = vmatprep.subr.mxu0 0.0
    %5443 = vmatpush1.msra.mxu0 0.0
    %5444 = vmatprep.subr.mxu0 0.0
    %5445 = vmatpush1.msra.mxu0 0.0
    %5446 = vmatprep.subr.mxu0 0.0
    %5447 = vmatpush1.msra.mxu0 0.0
    %5448 = vmatprep.subr.mxu0 0.0
    %5449 = vmatpush1.msra.mxu0 0.0
    %5450 = vmatprep.subr.mxu0 0.0
    %5451 = vmatpush1.msra.mxu0 0.0
    %5452 = vmatprep.subr.mxu0 0.0
    %5453 = vmatpush1.msra.mxu0 0.0
    %5454 = vmatprep.subr.mxu0 0.0
    %5455 = vmatpush1.msra.mxu0 0.0
    %5456 = vmatprep.subr.mxu0 0.0
    %5457 = vmatpush1.msra.mxu0 0.0
    %5458 = vmatprep.subr.mxu0 0.0
    %5459 = vmatpush1.msra.mxu0 0.0
    %5460 = vmatprep.mubr.f32.mxu0 0.0
    %5461 = vmatmul.mubr.f32.gmra.mrb[0].mxu0 %v5394
    %v5462 = vpop.f32.mrb[0].mxu0
    %v5463 = vadd.f32 %v5391, %v5462
    %v5464 = vpop.f32.mrb[0].mxu0
    %5465 = vdwg.mxu0
    %s5466 = scalar_lea.vmem [#allocation52], 120
    %v5467 = vld [vmem:[%s5466] sm:$0xff]
    %v5468 = vld [vmem:[%s5466 + $0x8] sm:$0xff]
    %v5469 = vld [vmem:[%s5466 + $0x10] sm:$0xff]
    %v5470 = vld [vmem:[%s5466 + $0x18] sm:$0xff]
    %v5471 = vld [vmem:[%s5466 + $0x20] sm:$0xff]
    %v5473 = vsel %vm1246, %v5467, 0
    %v5476 = vsel %vm1246, %v5468, 0
    %v5479 = vsel %vm1246, %v5469, 0
    %v5482 = vsel %vm1246, %v5470, 0
    %v5485 = vsel %vm1246, %v5471, 0
    %v5488 = vsel %vm1262, %v5463, 0
    %5490 = vmatprep.subr.mxu0 0.0
    %5491 = vmatpush1.msra.mxu0 %v5488
    %5492 = vmatprep.subr.mxu0 0.0
    %5493 = vmatpush1.msra.mxu0 0.0
    %5494 = vmatprep.subr.mxu0 0.0
    %5495 = vmatpush1.msra.mxu0 0.0
    %5496 = vmatprep.subr.mxu0 0.0
    %5497 = vmatpush1.msra.mxu0 0.0
    %5498 = vmatprep.subr.mxu0 0.0
    %5499 = vmatpush1.msra.mxu0 0.0
    %5500 = vmatprep.subr.mxu0 0.0
    %5501 = vmatpush1.msra.mxu0 0.0
    %5502 = vmatprep.subr.mxu0 0.0
    %5503 = vmatpush1.msra.mxu0 0.0
    %5504 = vmatprep.subr.mxu0 0.0
    %5505 = vmatpush1.msra.mxu0 0.0
    %5506 = vmatprep.subr.mxu0 0.0
    %5507 = vmatpush1.msra.mxu0 0.0
    %5508 = vmatprep.subr.mxu0 0.0
    %5509 = vmatpush1.msra.mxu0 0.0
    %5510 = vmatprep.subr.mxu0 0.0
    %5511 = vmatpush1.msra.mxu0 0.0
    %5512 = vmatprep.subr.mxu0 0.0
    %5513 = vmatpush1.msra.mxu0 0.0
    %5514 = vmatprep.subr.mxu0 0.0
    %5515 = vmatpush1.msra.mxu0 0.0
    %5516 = vmatprep.subr.mxu0 0.0
    %5517 = vmatpush1.msra.mxu0 0.0
    %5518 = vmatprep.subr.mxu0 0.0
    %5519 = vmatpush1.msra.mxu0 0.0
    %5520 = vmatprep.subr.mxu0 0.0
    %5521 = vmatpush1.msra.mxu0 0.0
    %5522 = vmatprep.subr.mxu0 0.0
    %5523 = vmatpush1.msra.mxu0 0.0
    %5524 = vmatprep.subr.mxu0 0.0
    %5525 = vmatpush1.msra.mxu0 0.0
    %5526 = vmatprep.subr.mxu0 0.0
    %5527 = vmatpush1.msra.mxu0 0.0
    %5528 = vmatprep.subr.mxu0 0.0
    %5529 = vmatpush1.msra.mxu0 0.0
    %5530 = vmatprep.subr.mxu0 0.0
    %5531 = vmatpush1.msra.mxu0 0.0
    %5532 = vmatprep.subr.mxu0 0.0
    %5533 = vmatpush1.msra.mxu0 0.0
    %5534 = vmatprep.subr.mxu0 0.0
    %5535 = vmatpush1.msra.mxu0 0.0
    %5536 = vmatprep.subr.mxu0 0.0
    %5537 = vmatpush1.msra.mxu0 0.0
    %5538 = vmatprep.subr.mxu0 0.0
    %5539 = vmatpush1.msra.mxu0 0.0
    %5540 = vmatprep.subr.mxu0 0.0
    %5541 = vmatpush1.msra.mxu0 0.0
    %5542 = vmatprep.subr.mxu0 0.0
    %5543 = vmatpush1.msra.mxu0 0.0
    %5544 = vmatprep.subr.mxu0 0.0
    %5545 = vmatpush1.msra.mxu0 0.0
    %5546 = vmatprep.subr.mxu0 0.0
    %5547 = vmatpush1.msra.mxu0 0.0
    %5548 = vmatprep.subr.mxu0 0.0
    %5549 = vmatpush1.msra.mxu0 0.0
    %5550 = vmatprep.subr.mxu0 0.0
    %5551 = vmatpush1.msra.mxu0 0.0
    %5552 = vmatprep.subr.mxu0 0.0
    %5553 = vmatpush1.msra.mxu0 0.0
    %5554 = vmatprep.mubr.f32.mxu0 0.0
    %5555 = vmatmul.mubr.f32.gmra.mrb[0].mxu0 %v5473
    %v5556 = vpop.f32.mrb[0].mxu0
    %v5557 = vadd.f32 0.0, %v5556
    %v5558 = vpop.f32.mrb[0].mxu0
    %5559 = vmatprep.mubr.f32.mxu0 0.0
    %5560 = vmatmul.mubr.f32.gmra.mrb[0].mxu0 %v5476
    %v5561 = vpop.f32.mrb[0].mxu0
    %v5562 = vadd.f32 0.0, %v5561
    %v5563 = vpop.f32.mrb[0].mxu0
    %5564 = vmatprep.mubr.f32.mxu0 0.0
    %5565 = vmatmul.mubr.f32.gmra.mrb[0].mxu0 %v5479
    %v5566 = vpop.f32.mrb[0].mxu0
    %v5567 = vadd.f32 0.0, %v5566
    %v5568 = vpop.f32.mrb[0].mxu0
    %5569 = vmatprep.mubr.f32.mxu0 0.0
    %5570 = vmatmul.mubr.f32.gmra.mrb[0].mxu0 %v5482
    %v5571 = vpop.f32.mrb[0].mxu0
    %v5572 = vadd.f32 0.0, %v5571
    %v5573 = vpop.f32.mrb[0].mxu0
    %5574 = vmatprep.mubr.f32.mxu0 0.0
    %5575 = vmatmul.mubr.f32.gmra.mrb[0].mxu0 %v5485
    %v5576 = vpop.f32.mrb[0].mxu0
    %v5577 = vadd.f32 0.0, %v5576
    %v5578 = vpop.f32.mrb[0].mxu0
    %5579 = vdwg.mxu0
    %v5580 = vadd.f32 %v4239, %v5557
    %v5581 = vadd.f32 %v4240, %v5562
    %v5582 = vadd.f32 %v4241, %v5567
    %v5583 = vadd.f32 %v4242, %v5572
    %v5584 = vadd.f32 %v4243, %v5577
    %s5585 = scalar_lea.vmem [#allocation41], 80
    %v5586 = vld [vmem:[%s5585] sm:$0xff]
    %v5587 = vld [vmem:[%s5585 + $0x8] sm:$0xff]
    %v5588 = vld [vmem:[%s5585 + $0x10] sm:$0xff]
    %v5589 = vld [vmem:[%s5585 + $0x18] sm:$0xff]
    %v5590 = vld [vmem:[%s5585 + $0x20] sm:$0xff]
    %v5591 = vmul.f32 %v5463, %v2914
    %v5593 = vsel %vm1246, %v5586, 0
    %v5596 = vsel %vm1246, %v5587, 0
    %v5599 = vsel %vm1246, %v5588, 0
    %v5602 = vsel %vm1246, %v5589, 0
    %v5605 = vsel %vm1246, %v5590, 0
    %v5608 = vsel %vm1262, %v5591, 0
    %5610 = vmatprep.subr.mxu0 0.0
    %5611 = vmatpush1.msra.mxu0 %v5608
    %5612 = vmatprep.subr.mxu0 0.0
    %5613 = vmatpush1.msra.mxu0 0.0
    %5614 = vmatprep.subr.mxu0 0.0
    %5615 = vmatpush1.msra.mxu0 0.0
    %5616 = vmatprep.subr.mxu0 0.0
    %5617 = vmatpush1.msra.mxu0 0.0
    %5618 = vmatprep.subr.mxu0 0.0
    %5619 = vmatpush1.msra.mxu0 0.0
    %5620 = vmatprep.subr.mxu0 0.0
    %5621 = vmatpush1.msra.mxu0 0.0
    %5622 = vmatprep.subr.mxu0 0.0
    %5623 = vmatpush1.msra.mxu0 0.0
    %5624 = vmatprep.subr.mxu0 0.0
    %5625 = vmatpush1.msra.mxu0 0.0
    %5626 = vmatprep.subr.mxu0 0.0
    %5627 = vmatpush1.msra.mxu0 0.0
    %5628 = vmatprep.subr.mxu0 0.0
    %5629 = vmatpush1.msra.mxu0 0.0
    %5630 = vmatprep.subr.mxu0 0.0
    %5631 = vmatpush1.msra.mxu0 0.0
    %5632 = vmatprep.subr.mxu0 0.0
    %5633 = vmatpush1.msra.mxu0 0.0
    %5634 = vmatprep.subr.mxu0 0.0
    %5635 = vmatpush1.msra.mxu0 0.0
    %5636 = vmatprep.subr.mxu0 0.0
    %5637 = vmatpush1.msra.mxu0 0.0
    %5638 = vmatprep.subr.mxu0 0.0
    %5639 = vmatpush1.msra.mxu0 0.0
    %5640 = vmatprep.subr.mxu0 0.0
    %5641 = vmatpush1.msra.mxu0 0.0
    %5642 = vmatprep.subr.mxu0 0.0
    %5643 = vmatpush1.msra.mxu0 0.0
    %5644 = vmatprep.subr.mxu0 0.0
    %5645 = vmatpush1.msra.mxu0 0.0
    %5646 = vmatprep.subr.mxu0 0.0
    %5647 = vmatpush1.msra.mxu0 0.0
    %5648 = vmatprep.subr.mxu0 0.0
    %5649 = vmatpush1.msra.mxu0 0.0
    %5650 = vmatprep.subr.mxu0 0.0
    %5651 = vmatpush1.msra.mxu0 0.0
    %5652 = vmatprep.subr.mxu0 0.0
    %5653 = vmatpush1.msra.mxu0 0.0
    %5654 = vmatprep.subr.mxu0 0.0
    %5655 = vmatpush1.msra.mxu0 0.0
    %5656 = vmatprep.subr.mxu0 0.0
    %5657 = vmatpush1.msra.mxu0 0.0
    %5658 = vmatprep.subr.mxu0 0.0
    %5659 = vmatpush1.msra.mxu0 0.0
    %5660 = vmatprep.subr.mxu0 0.0
    %5661 = vmatpush1.msra.mxu0 0.0
    %5662 = vmatprep.subr.mxu0 0.0
    %5663 = vmatpush1.msra.mxu0 0.0
    %5664 = vmatprep.subr.mxu0 0.0
    %5665 = vmatpush1.msra.mxu0 0.0
    %5666 = vmatprep.subr.mxu0 0.0
    %5667 = vmatpush1.msra.mxu0 0.0
    %5668 = vmatprep.subr.mxu0 0.0
    %5669 = vmatpush1.msra.mxu0 0.0
    %5670 = vmatprep.subr.mxu0 0.0
    %5671 = vmatpush1.msra.mxu0 0.0
    %5672 = vmatprep.subr.mxu0 0.0
    %5673 = vmatpush1.msra.mxu0 0.0
    %5674 = vmatprep.mubr.f32.mxu0 0.0
    %5675 = vmatmul.mubr.f32.gmra.mrb[0].mxu0 %v5593
    %v5676 = vpop.f32.mrb[0].mxu0
    %v5677 = vadd.f32 0.0, %v5676
    %v5678 = vpop.f32.mrb[0].mxu0
    %5679 = vmatprep.mubr.f32.mxu0 0.0
    %5680 = vmatmul.mubr.f32.gmra.mrb[0].mxu0 %v5596
    %v5681 = vpop.f32.mrb[0].mxu0
    %v5682 = vadd.f32 0.0, %v5681
    %v5683 = vpop.f32.mrb[0].mxu0
    %5684 = vmatprep.mubr.f32.mxu0 0.0
    %5685 = vmatmul.mubr.f32.gmra.mrb[0].mxu0 %v5599
    %v5686 = vpop.f32.mrb[0].mxu0
    %v5687 = vadd.f32 0.0, %v5686
    %v5688 = vpop.f32.mrb[0].mxu0
    %5689 = vmatprep.mubr.f32.mxu0 0.0
    %5690 = vmatmul.mubr.f32.gmra.mrb[0].mxu0 %v5602
    %v5691 = vpop.f32.mrb[0].mxu0
    %v5692 = vadd.f32 0.0, %v5691
    %v5693 = vpop.f32.mrb[0].mxu0
    %5694 = vmatprep.mubr.f32.mxu0 0.0
    %5695 = vmatmul.mubr.f32.gmra.mrb[0].mxu0 %v5605
    %v5696 = vpop.f32.mrb[0].mxu0
    %v5697 = vadd.f32 0.0, %v5696
    %v5698 = vpop.f32.mrb[0].mxu0
    %5699 = vdwg.mxu0
    %v5700 = vpack.c.bf16 %v5682, %v5677
    %v5701 = vpack.c.bf16 %v5692, %v5687
    %v5702 = vpack.c.bf16 %v5697, %v5697
    %5703 = vmatprep.subr.bf16.mxu0 0
    %5704 = vmatpush1.bf16.msra.mxu0 %v955
    %5705 = vmatprep.subr.bf16.mxu0 0
    %5706 = vmatpush1.bf16.msra.mxu0 %v956
    %5707 = vmatprep.subr.bf16.mxu0 0
    %5708 = vmatpush1.bf16.msra.mxu0 %v957
    %5709 = vmatprep.subr.bf16.mxu0 0
    %5710 = vmatpush1.bf16.msra.mxu0 %v958
    %5711 = vmatprep.subr.bf16.mxu0 0
    %5712 = vmatpush1.bf16.msra.mxu0 %v959
    %5713 = vmatprep.subr.bf16.mxu0 0
    %5714 = vmatpush1.bf16.msra.mxu0 %v960
    %5715 = vmatprep.subr.bf16.mxu0 0
    %5716 = vmatpush1.bf16.msra.mxu0 %v961
    %5717 = vmatprep.subr.bf16.mxu0 0
    %5718 = vmatpush1.bf16.msra.mxu0 %v962
    %5719 = vmatprep.subr.bf16.mxu0 0
    %5720 = vmatpush1.bf16.msra.mxu0 0
    %5721 = vmatprep.subr.bf16.mxu0 0
    %5722 = vmatpush1.bf16.msra.mxu0 0
    %5723 = vmatprep.subr.bf16.mxu0 0
    %5724 = vmatpush1.bf16.msra.mxu0 0
    %5725 = vmatprep.subr.bf16.mxu0 0
    %5726 = vmatpush1.bf16.msra.mxu0 0
    %5727 = vmatprep.subr.bf16.mxu0 0
    %5728 = vmatpush1.bf16.msra.mxu0 0
    %5729 = vmatprep.subr.bf16.mxu0 0
    %5730 = vmatpush1.bf16.msra.mxu0 0
    %5731 = vmatprep.subr.bf16.mxu0 0
    %5732 = vmatpush1.bf16.msra.mxu0 0
    %5733 = vmatprep.subr.bf16.mxu0 0
    %5734 = vmatpush1.bf16.msra.mxu0 0
    %5735 = vmatprep.mubr.bf16.mxu0 0
    %5736 = vmatmul.mubr.bf16.gmra.mrb[0].mxu0 %v5700
    %v5737 = vpop.f32.mrb[0].mxu0
    %v5738 = vadd.f32 0.0, %v5737
    %v5739 = vpop.f32.mrb[0].mxu0
    %v5740 = vpop.f32.mrb[0].mxu0
    %v5741 = vadd.f32 0.0, %v5740
    %v5742 = vpop.f32.mrb[0].mxu0
    %5743 = vmatprep.mubr.bf16.mxu0 0
    %5744 = vmatmul.mubr.bf16.gmra.mrb[0].mxu0 %v5701
    %v5745 = vpop.f32.mrb[0].mxu0
    %v5746 = vadd.f32 0.0, %v5745
    %v5747 = vpop.f32.mrb[0].mxu0
    %v5748 = vpop.f32.mrb[0].mxu0
    %v5749 = vadd.f32 0.0, %v5748
    %v5750 = vpop.f32.mrb[0].mxu0
    %5751 = vmatprep.mubr.bf16.mxu0 0
    %5752 = vmatmul.mubr.bf16.gmra.mrb[0].mxu0 %v5702
    %v5753 = vpop.f32.mrb[0].mxu0
    %v5754 = vadd.f32 0.0, %v5753
    %v5755 = vpop.f32.mrb[0].mxu0
    %v5756 = vpop.f32.mrb[0].mxu0
    %v5757 = vpop.f32.mrb[0].mxu0
    %5758 = vdwg.mxu0
    %s5759 = scalar_lea.vmem [#allocation40], 80
    %v5760 = vld [vmem:[%s5759] sm:$0xff]
    %v5761 = vld [vmem:[%s5759 + $0x8] sm:$0xff]
    %v5762 = vld [vmem:[%s5759 + $0x10] sm:$0xff]
    %v5763 = vld [vmem:[%s5759 + $0x18] sm:$0xff]
    %v5764 = vld [vmem:[%s5759 + $0x20] sm:$0xff]
    %v5766 = vsel %vm2036, %v5760, 0
    %v5769 = vsel %vm2036, %v5761, 0
    %v5772 = vsel %vm2036, %v5762, 0
    %v5775 = vsel %vm2036, %v5763, 0
    %v5778 = vsel %vm2036, %v5764, 0
    %5780 = vmatprep.subr.mxu0 0.0
    %5781 = vmatpush1.msra.mxu0 %v4845
    %5782 = vmatprep.subr.mxu0 0.0
    %5783 = vmatpush1.msra.mxu0 0.0
    %5784 = vmatprep.subr.mxu0 0.0
    %5785 = vmatpush1.msra.mxu0 0.0
    %5786 = vmatprep.subr.mxu0 0.0
    %5787 = vmatpush1.msra.mxu0 0.0
    %5788 = vmatprep.subr.mxu0 0.0
    %5789 = vmatpush1.msra.mxu0 0.0
    %5790 = vmatprep.subr.mxu0 0.0
    %5791 = vmatpush1.msra.mxu0 0.0
    %5792 = vmatprep.subr.mxu0 0.0
    %5793 = vmatpush1.msra.mxu0 0.0
    %5794 = vmatprep.subr.mxu0 0.0
    %5795 = vmatpush1.msra.mxu0 0.0
    %5796 = vmatprep.subr.mxu0 0.0
    %5797 = vmatpush1.msra.mxu0 0.0
    %5798 = vmatprep.subr.mxu0 0.0
    %5799 = vmatpush1.msra.mxu0 0.0
    %5800 = vmatprep.subr.mxu0 0.0
    %5801 = vmatpush1.msra.mxu0 0.0
    %5802 = vmatprep.subr.mxu0 0.0
    %5803 = vmatpush1.msra.mxu0 0.0
    %5804 = vmatprep.subr.mxu0 0.0
    %5805 = vmatpush1.msra.mxu0 0.0
    %5806 = vmatprep.subr.mxu0 0.0
    %5807 = vmatpush1.msra.mxu0 0.0
    %5808 = vmatprep.subr.mxu0 0.0
    %5809 = vmatpush1.msra.mxu0 0.0
    %5810 = vmatprep.subr.mxu0 0.0
    %5811 = vmatpush1.msra.mxu0 0.0
    %5812 = vmatprep.subr.mxu0 0.0
    %5813 = vmatpush1.msra.mxu0 0.0
    %5814 = vmatprep.subr.mxu0 0.0
    %5815 = vmatpush1.msra.mxu0 0.0
    %5816 = vmatprep.subr.mxu0 0.0
    %5817 = vmatpush1.msra.mxu0 0.0
    %5818 = vmatprep.subr.mxu0 0.0
    %5819 = vmatpush1.msra.mxu0 0.0
    %5820 = vmatprep.subr.mxu0 0.0
    %5821 = vmatpush1.msra.mxu0 0.0
    %5822 = vmatprep.subr.mxu0 0.0
    %5823 = vmatpush1.msra.mxu0 0.0
    %5824 = vmatprep.subr.mxu0 0.0
    %5825 = vmatpush1.msra.mxu0 0.0
    %5826 = vmatprep.subr.mxu0 0.0
    %5827 = vmatpush1.msra.mxu0 0.0
    %5828 = vmatprep.subr.mxu0 0.0
    %5829 = vmatpush1.msra.mxu0 0.0
    %5830 = vmatprep.subr.mxu0 0.0
    %5831 = vmatpush1.msra.mxu0 0.0
    %5832 = vmatprep.subr.mxu0 0.0
    %5833 = vmatpush1.msra.mxu0 0.0
    %5834 = vmatprep.subr.mxu0 0.0
    %5835 = vmatpush1.msra.mxu0 0.0
    %5836 = vmatprep.subr.mxu0 0.0
    %5837 = vmatpush1.msra.mxu0 0.0
    %5838 = vmatprep.subr.mxu0 0.0
    %5839 = vmatpush1.msra.mxu0 0.0
    %5840 = vmatprep.subr.mxu0 0.0
    %5841 = vmatpush1.msra.mxu0 0.0
    %5842 = vmatprep.subr.mxu0 0.0
    %5843 = vmatpush1.msra.mxu0 0.0
    %5844 = vmatprep.mubr.f32.mxu0 0.0
    %5845 = vmatmul.mubr.f32.gmra.mrb[0].mxu0 %v5766
    %v5846 = vpop.f32.mrb[0].mxu0
    %v5847 = vadd.f32 %v5738, %v5846
    %v5848 = vpop.f32.mrb[0].mxu0
    %5849 = vmatprep.mubr.f32.mxu0 0.0
    %5850 = vmatmul.mubr.f32.gmra.mrb[0].mxu0 %v5769
    %v5851 = vpop.f32.mrb[0].mxu0
    %v5852 = vadd.f32 %v5741, %v5851
    %v5853 = vpop.f32.mrb[0].mxu0
    %5854 = vmatprep.mubr.f32.mxu0 0.0
    %5855 = vmatmul.mubr.f32.gmra.mrb[0].mxu0 %v5772
    %v5856 = vpop.f32.mrb[0].mxu0
    %v5857 = vadd.f32 %v5746, %v5856
    %v5858 = vpop.f32.mrb[0].mxu0
    %5859 = vmatprep.mubr.f32.mxu0 0.0
    %5860 = vmatmul.mubr.f32.gmra.mrb[0].mxu0 %v5775
    %v5861 = vpop.f32.mrb[0].mxu0
    %v5862 = vadd.f32 %v5749, %v5861
    %v5863 = vpop.f32.mrb[0].mxu0
    %5864 = vmatprep.mubr.f32.mxu0 0.0
    %5865 = vmatmul.mubr.f32.gmra.mrb[0].mxu0 %v5778
    %v5866 = vpop.f32.mrb[0].mxu0
    %v5867 = vadd.f32 %v5754, %v5866
    %v5868 = vpop.f32.mrb[0].mxu0
    %5869 = vdwg.mxu0
    %s5870 = scalar_lea.vmem [#allocation43], 80
    %v5871 = vld [vmem:[%s5870] sm:$0xff]
    %v5872 = vld [vmem:[%s5870 + $0x8] sm:$0xff]
    %v5873 = vld [vmem:[%s5870 + $0x10] sm:$0xff]
    %v5874 = vld [vmem:[%s5870 + $0x18] sm:$0xff]
    %v5875 = vld [vmem:[%s5870 + $0x20] sm:$0xff]
    %5877 = vset.pattern.permute.xlu0 0
    %5878 = vperm.xlu0 %5877, %v5871
    %v5879 = vpop.permute.xlu0 %5878
    %5882 = vset.pattern.permute.xlu0 0
    %5883 = vperm.xlu0 %5882, %v5872
    %v5884 = vpop.permute.xlu0 %5883
    %5887 = vset.pattern.permute.xlu0 0
    %5888 = vperm.xlu0 %5887, %v5873
    %v5889 = vpop.permute.xlu0 %5888
    %5892 = vset.pattern.permute.xlu0 0
    %5893 = vperm.xlu0 %5892, %v5874
    %v5894 = vpop.permute.xlu0 %5893
    %5897 = vset.pattern.permute.xlu0 0
    %5898 = vperm.xlu0 %5897, %v5875
    %v5899 = vpop.permute.xlu0 %5898
    %v5901 = vadd.f32 %v5847, %v5879
    %v5902 = vadd.f32 %v5852, %v5884
    %v5903 = vadd.f32 %v5857, %v5889
    %v5904 = vadd.f32 %v5862, %v5894
    %v5905 = vadd.f32 %v5867, %v5899
    %v5906 = vmax.f32 %v5901, 0.0
    %v5907 = vmax.f32 %v5902, 0.0
    %v5908 = vmax.f32 %v5903, 0.0
    %v5909 = vmax.f32 %v5904, 0.0
    %v5910 = vmax.f32 %v5905, 0.0
    %s5911 = scalar_lea.vmem [#allocation44], 80
    %v5912 = vld [vmem:[%s5911] sm:$0xff]
    %v5913 = vld [vmem:[%s5911 + $0x8] sm:$0xff]
    %v5914 = vld [vmem:[%s5911 + $0x10] sm:$0xff]
    %v5915 = vld [vmem:[%s5911 + $0x18] sm:$0xff]
    %v5916 = vld [vmem:[%s5911 + $0x20] sm:$0xff]
    %s5917 = scalar_lea.vmem [#allocation46], 80
    %v5918 = vld [vmem:[%s5917] sm:$0xff]
    %v5919 = vld [vmem:[%s5917 + $0x8] sm:$0xff]
    %v5920 = vld [vmem:[%s5917 + $0x10] sm:$0xff]
    %v5921 = vld [vmem:[%s5917 + $0x18] sm:$0xff]
    %v5922 = vld [vmem:[%s5917 + $0x20] sm:$0xff]
    %5924 = vset.pattern.permute.xlu0 0
    %5925 = vperm.xlu0 %5924, %v5918
    %v5926 = vpop.permute.xlu0 %5925
    %5929 = vset.pattern.permute.xlu0 0
    %5930 = vperm.xlu0 %5929, %v5919
    %v5931 = vpop.permute.xlu0 %5930
    %5934 = vset.pattern.permute.xlu0 0
    %5935 = vperm.xlu0 %5934, %v5920
    %v5936 = vpop.permute.xlu0 %5935
    %5939 = vset.pattern.permute.xlu0 0
    %5940 = vperm.xlu0 %5939, %v5921
    %v5941 = vpop.permute.xlu0 %5940
    %5944 = vset.pattern.permute.xlu0 0
    %5945 = vperm.xlu0 %5944, %v5922
    %v5946 = vpop.permute.xlu0 %5945
    %v5949 = vsel %vm1436, %v5912, 0
    %v5952 = vsel %vm1436, %v5913, 0
    %v5955 = vsel %vm1436, %v5914, 0
    %v5958 = vsel %vm1436, %v5915, 0
    %v5961 = vsel %vm1436, %v5916, 0
    %5963 = vmatprep.subr.mxu0 0.0
    %5964 = vmatpush1.msra.mxu0 %v5906
    %5965 = vmatprep.subr.mxu0 0.0
    %5966 = vmatpush1.msra.mxu0 %v5907
    %5967 = vmatprep.subr.mxu0 0.0
    %5968 = vmatpush1.msra.mxu0 %v5908
    %5969 = vmatprep.subr.mxu0 0.0
    %5970 = vmatpush1.msra.mxu0 %v5909
    %5971 = vmatprep.subr.mxu0 0.0
    %5972 = vmatpush1.msra.mxu0 %v5910
    %5973 = vmatprep.subr.mxu0 0.0
    %5974 = vmatpush1.msra.mxu0 0.0
    %5975 = vmatprep.subr.mxu0 0.0
    %5976 = vmatpush1.msra.mxu0 0.0
    %5977 = vmatprep.subr.mxu0 0.0
    %5978 = vmatpush1.msra.mxu0 0.0
    %5979 = vmatprep.subr.mxu0 0.0
    %5980 = vmatpush1.msra.mxu0 0.0
    %5981 = vmatprep.subr.mxu0 0.0
    %5982 = vmatpush1.msra.mxu0 0.0
    %5983 = vmatprep.subr.mxu0 0.0
    %5984 = vmatpush1.msra.mxu0 0.0
    %5985 = vmatprep.subr.mxu0 0.0
    %5986 = vmatpush1.msra.mxu0 0.0
    %5987 = vmatprep.subr.mxu0 0.0
    %5988 = vmatpush1.msra.mxu0 0.0
    %5989 = vmatprep.subr.mxu0 0.0
    %5990 = vmatpush1.msra.mxu0 0.0
    %5991 = vmatprep.subr.mxu0 0.0
    %5992 = vmatpush1.msra.mxu0 0.0
    %5993 = vmatprep.subr.mxu0 0.0
    %5994 = vmatpush1.msra.mxu0 0.0
    %5995 = vmatprep.subr.mxu0 0.0
    %5996 = vmatpush1.msra.mxu0 0.0
    %5997 = vmatprep.subr.mxu0 0.0
    %5998 = vmatpush1.msra.mxu0 0.0
    %5999 = vmatprep.subr.mxu0 0.0
    %6000 = vmatpush1.msra.mxu0 0.0
    %6001 = vmatprep.subr.mxu0 0.0
    %6002 = vmatpush1.msra.mxu0 0.0
    %6003 = vmatprep.subr.mxu0 0.0
    %6004 = vmatpush1.msra.mxu0 0.0
    %6005 = vmatprep.subr.mxu0 0.0
    %6006 = vmatpush1.msra.mxu0 0.0
    %6007 = vmatprep.subr.mxu0 0.0
    %6008 = vmatpush1.msra.mxu0 0.0
    %6009 = vmatprep.subr.mxu0 0.0
    %6010 = vmatpush1.msra.mxu0 0.0
    %6011 = vmatprep.subr.mxu0 0.0
    %6012 = vmatpush1.msra.mxu0 0.0
    %6013 = vmatprep.subr.mxu0 0.0
    %6014 = vmatpush1.msra.mxu0 0.0
    %6015 = vmatprep.subr.mxu0 0.0
    %6016 = vmatpush1.msra.mxu0 0.0
    %6017 = vmatprep.subr.mxu0 0.0
    %6018 = vmatpush1.msra.mxu0 0.0
    %6019 = vmatprep.subr.mxu0 0.0
    %6020 = vmatpush1.msra.mxu0 0.0
    %6021 = vmatprep.subr.mxu0 0.0
    %6022 = vmatpush1.msra.mxu0 0.0
    %6023 = vmatprep.subr.mxu0 0.0
    %6024 = vmatpush1.msra.mxu0 0.0
    %6025 = vmatprep.subr.mxu0 0.0
    %6026 = vmatpush1.msra.mxu0 0.0
    %6027 = vmatprep.mubr.f32.mxu0 0.0
    %6028 = vmatmul.mubr.f32.gmra.mrb[0].mxu0 %v5949
    %v6029 = vpop.f32.mrb[0].mxu0
    %v6030 = vadd.f32 %v5926, %v6029
    %v6031 = vpop.f32.mrb[0].mxu0
    %6032 = vmatprep.mubr.f32.mxu0 0.0
    %6033 = vmatmul.mubr.f32.gmra.mrb[0].mxu0 %v5952
    %v6034 = vpop.f32.mrb[0].mxu0
    %v6035 = vadd.f32 %v5931, %v6034
    %v6036 = vpop.f32.mrb[0].mxu0
    %6037 = vmatprep.mubr.f32.mxu0 0.0
    %6038 = vmatmul.mubr.f32.gmra.mrb[0].mxu0 %v5955
    %v6039 = vpop.f32.mrb[0].mxu0
    %v6040 = vadd.f32 %v5936, %v6039
    %v6041 = vpop.f32.mrb[0].mxu0
    %6042 = vmatprep.mubr.f32.mxu0 0.0
    %6043 = vmatmul.mubr.f32.gmra.mrb[0].mxu0 %v5958
    %v6044 = vpop.f32.mrb[0].mxu0
    %v6045 = vadd.f32 %v5941, %v6044
    %v6046 = vpop.f32.mrb[0].mxu0
    %6047 = vmatprep.mubr.f32.mxu0 0.0
    %6048 = vmatmul.mubr.f32.gmra.mrb[0].mxu0 %v5961
    %v6049 = vpop.f32.mrb[0].mxu0
    %v6050 = vadd.f32 %v5946, %v6049
    %v6051 = vpop.f32.mrb[0].mxu0
    %6052 = vdwg.mxu0
    %v6053 = vmax.f32 %v6030, 0.0
    %v6054 = vmax.f32 %v6035, 0.0
    %v6055 = vmax.f32 %v6040, 0.0
    %v6056 = vmax.f32 %v6045, 0.0
    %v6057 = vmax.f32 %v6050, 0.0
    %s6058 = scalar_lea.vmem [#allocation47], 16
    %v6059 = vld [vmem:[%s6058] sm:$0x1f]
    %s6060 = scalar_lea.vmem [#allocation49], 16
    %v6061 = vld [vmem:[%s6060] sm:$0x1f]
    %6063 = vset.pattern.permute.xlu0 0
    %6064 = vperm.xlu0 %6063, %v6061
    %v6065 = vpop.permute.xlu0 %6064
    %v6068 = vsel %vm1436, %v6059, 0
    %6070 = vmatprep.subr.mxu0 0.0
    %6071 = vmatpush1.msra.mxu0 %v6053
    %6072 = vmatprep.subr.mxu0 0.0
    %6073 = vmatpush1.msra.mxu0 %v6054
    %6074 = vmatprep.subr.mxu0 0.0
    %6075 = vmatpush1.msra.mxu0 %v6055
    %6076 = vmatprep.subr.mxu0 0.0
    %6077 = vmatpush1.msra.mxu0 %v6056
    %6078 = vmatprep.subr.mxu0 0.0
    %6079 = vmatpush1.msra.mxu0 %v6057
    %6080 = vmatprep.subr.mxu0 0.0
    %6081 = vmatpush1.msra.mxu0 0.0
    %6082 = vmatprep.subr.mxu0 0.0
    %6083 = vmatpush1.msra.mxu0 0.0
    %6084 = vmatprep.subr.mxu0 0.0
    %6085 = vmatpush1.msra.mxu0 0.0
    %6086 = vmatprep.subr.mxu0 0.0
    %6087 = vmatpush1.msra.mxu0 0.0
    %6088 = vmatprep.subr.mxu0 0.0
    %6089 = vmatpush1.msra.mxu0 0.0
    %6090 = vmatprep.subr.mxu0 0.0
    %6091 = vmatpush1.msra.mxu0 0.0
    %6092 = vmatprep.subr.mxu0 0.0
    %6093 = vmatpush1.msra.mxu0 0.0
    %6094 = vmatprep.subr.mxu0 0.0
    %6095 = vmatpush1.msra.mxu0 0.0
    %6096 = vmatprep.subr.mxu0 0.0
    %6097 = vmatpush1.msra.mxu0 0.0
    %6098 = vmatprep.subr.mxu0 0.0
    %6099 = vmatpush1.msra.mxu0 0.0
    %6100 = vmatprep.subr.mxu0 0.0
    %6101 = vmatpush1.msra.mxu0 0.0
    %6102 = vmatprep.subr.mxu0 0.0
    %6103 = vmatpush1.msra.mxu0 0.0
    %6104 = vmatprep.subr.mxu0 0.0
    %6105 = vmatpush1.msra.mxu0 0.0
    %6106 = vmatprep.subr.mxu0 0.0
    %6107 = vmatpush1.msra.mxu0 0.0
    %6108 = vmatprep.subr.mxu0 0.0
    %6109 = vmatpush1.msra.mxu0 0.0
    %6110 = vmatprep.subr.mxu0 0.0
    %6111 = vmatpush1.msra.mxu0 0.0
    %6112 = vmatprep.subr.mxu0 0.0
    %6113 = vmatpush1.msra.mxu0 0.0
    %6114 = vmatprep.subr.mxu0 0.0
    %6115 = vmatpush1.msra.mxu0 0.0
    %6116 = vmatprep.subr.mxu0 0.0
    %6117 = vmatpush1.msra.mxu0 0.0
    %6118 = vmatprep.subr.mxu0 0.0
    %6119 = vmatpush1.msra.mxu0 0.0
    %6120 = vmatprep.subr.mxu0 0.0
    %6121 = vmatpush1.msra.mxu0 0.0
    %6122 = vmatprep.subr.mxu0 0.0
    %6123 = vmatpush1.msra.mxu0 0.0
    %6124 = vmatprep.subr.mxu0 0.0
    %6125 = vmatpush1.msra.mxu0 0.0
    %6126 = vmatprep.subr.mxu0 0.0
    %6127 = vmatpush1.msra.mxu0 0.0
    %6128 = vmatprep.subr.mxu0 0.0
    %6129 = vmatpush1.msra.mxu0 0.0
    %6130 = vmatprep.subr.mxu0 0.0
    %6131 = vmatpush1.msra.mxu0 0.0
    %6132 = vmatprep.subr.mxu0 0.0
    %6133 = vmatpush1.msra.mxu0 0.0
    %6134 = vmatprep.mubr.f32.mxu0 0.0
    %6135 = vmatmul.mubr.f32.gmra.mrb[0].mxu0 %v6068
    %v6136 = vpop.f32.mrb[0].mxu0
    %v6137 = vadd.f32 %v6065, %v6136
    %v6138 = vpop.f32.mrb[0].mxu0
    %6139 = vdwg.mxu0
    %v6140 = vmul.f32 %v4802, 0.5
    %v6141 = vmax.f32 %v6137, 0.0
    %v6142 = vmul.f32 %v6141, 0.5
    %v6143 = vadd.f32 %v6140, %v6142
    %v6144 = vld [vmem:[#allocation16] sm:$0xff]
    %v6145 = vld [vmem:[#allocation16 + $0x8] sm:$0xff]
    %v6146 = vld [vmem:[#allocation16 + $0x10] sm:$0xff]
    %v6147 = vld [vmem:[#allocation16 + $0x18] sm:$0xff]
    %v6148 = vld [vmem:[#allocation16 + $0x20] sm:$0xff]
    %v6149 = vld [vmem:[#allocation17] sm:$0xff]
    %v6150 = vld [vmem:[#allocation17 + $0x8] sm:$0xff]
    %v6151 = vld [vmem:[#allocation17 + $0x10] sm:$0xff]
    %v6152 = vld [vmem:[#allocation17 + $0x18] sm:$0xff]
    %v6153 = vld [vmem:[#allocation17 + $0x20] sm:$0xff]
    %6155 = vset.pattern.permute.xlu0 0
    %6156 = vperm.xlu0 %6155, %v6149
    %v6157 = vpop.permute.xlu0 %6156
    %6160 = vset.pattern.permute.xlu0 0
    %6161 = vperm.xlu0 %6160, %v6150
    %v6162 = vpop.permute.xlu0 %6161
    %6165 = vset.pattern.permute.xlu0 0
    %6166 = vperm.xlu0 %6165, %v6151
    %v6167 = vpop.permute.xlu0 %6166
    %6170 = vset.pattern.permute.xlu0 0
    %6171 = vperm.xlu0 %6170, %v6152
    %v6172 = vpop.permute.xlu0 %6171
    %6175 = vset.pattern.permute.xlu0 0
    %6176 = vperm.xlu0 %6175, %v6153
    %v6177 = vpop.permute.xlu0 %6176
    %v6180 = vsel %vm2036, %v6144, 0
    %v6183 = vsel %vm2036, %v6145, 0
    %v6186 = vsel %vm2036, %v6146, 0
    %v6189 = vsel %vm2036, %v6147, 0
    %v6192 = vsel %vm2036, %v6148, 0
    %v6195 = vsel %vm2067, %v6143, 0
    %6197 = vmatprep.subr.mxu0 0.0
    %6198 = vmatpush1.msra.mxu0 %v6195
    %6199 = vmatprep.subr.mxu0 0.0
    %6200 = vmatpush1.msra.mxu0 0.0
    %6201 = vmatprep.subr.mxu0 0.0
    %6202 = vmatpush1.msra.mxu0 0.0
    %6203 = vmatprep.subr.mxu0 0.0
    %6204 = vmatpush1.msra.mxu0 0.0
    %6205 = vmatprep.subr.mxu0 0.0
    %6206 = vmatpush1.msra.mxu0 0.0
    %6207 = vmatprep.subr.mxu0 0.0
    %6208 = vmatpush1.msra.mxu0 0.0
    %6209 = vmatprep.subr.mxu0 0.0
    %6210 = vmatpush1.msra.mxu0 0.0
    %6211 = vmatprep.subr.mxu0 0.0
    %6212 = vmatpush1.msra.mxu0 0.0
    %6213 = vmatprep.subr.mxu0 0.0
    %6214 = vmatpush1.msra.mxu0 0.0
    %6215 = vmatprep.subr.mxu0 0.0
    %6216 = vmatpush1.msra.mxu0 0.0
    %6217 = vmatprep.subr.mxu0 0.0
    %6218 = vmatpush1.msra.mxu0 0.0
    %6219 = vmatprep.subr.mxu0 0.0
    %6220 = vmatpush1.msra.mxu0 0.0
    %6221 = vmatprep.subr.mxu0 0.0
    %6222 = vmatpush1.msra.mxu0 0.0
    %6223 = vmatprep.subr.mxu0 0.0
    %6224 = vmatpush1.msra.mxu0 0.0
    %6225 = vmatprep.subr.mxu0 0.0
    %6226 = vmatpush1.msra.mxu0 0.0
    %6227 = vmatprep.subr.mxu0 0.0
    %6228 = vmatpush1.msra.mxu0 0.0
    %6229 = vmatprep.subr.mxu0 0.0
    %6230 = vmatpush1.msra.mxu0 0.0
    %6231 = vmatprep.subr.mxu0 0.0
    %6232 = vmatpush1.msra.mxu0 0.0
    %6233 = vmatprep.subr.mxu0 0.0
    %6234 = vmatpush1.msra.mxu0 0.0
    %6235 = vmatprep.subr.mxu0 0.0
    %6236 = vmatpush1.msra.mxu0 0.0
    %6237 = vmatprep.subr.mxu0 0.0
    %6238 = vmatpush1.msra.mxu0 0.0
    %6239 = vmatprep.subr.mxu0 0.0
    %6240 = vmatpush1.msra.mxu0 0.0
    %6241 = vmatprep.subr.mxu0 0.0
    %6242 = vmatpush1.msra.mxu0 0.0
    %6243 = vmatprep.subr.mxu0 0.0
    %6244 = vmatpush1.msra.mxu0 0.0
    %6245 = vmatprep.subr.mxu0 0.0
    %6246 = vmatpush1.msra.mxu0 0.0
    %6247 = vmatprep.subr.mxu0 0.0
    %6248 = vmatpush1.msra.mxu0 0.0
    %6249 = vmatprep.subr.mxu0 0.0
    %6250 = vmatpush1.msra.mxu0 0.0
    %6251 = vmatprep.subr.mxu0 0.0
    %6252 = vmatpush1.msra.mxu0 0.0
    %6253 = vmatprep.subr.mxu0 0.0
    %6254 = vmatpush1.msra.mxu0 0.0
    %6255 = vmatprep.subr.mxu0 0.0
    %6256 = vmatpush1.msra.mxu0 0.0
    %6257 = vmatprep.subr.mxu0 0.0
    %6258 = vmatpush1.msra.mxu0 0.0
    %6259 = vmatprep.subr.mxu0 0.0
    %6260 = vmatpush1.msra.mxu0 0.0
    %6261 = vmatprep.mubr.f32.mxu0 0.0
    %6262 = vmatmul.mubr.f32.gmra.mrb[0].mxu0 %v6180
    %v6263 = vpop.f32.mrb[0].mxu0
    %v6264 = vadd.f32 %v6157, %v6263
    %v6265 = vpop.f32.mrb[0].mxu0
    %6266 = vmatprep.mubr.f32.mxu0 0.0
    %6267 = vmatmul.mubr.f32.gmra.mrb[0].mxu0 %v6183
    %v6268 = vpop.f32.mrb[0].mxu0
    %v6269 = vadd.f32 %v6162, %v6268
    %v6270 = vpop.f32.mrb[0].mxu0
    %6271 = vmatprep.mubr.f32.mxu0 0.0
    %6272 = vmatmul.mubr.f32.gmra.mrb[0].mxu0 %v6186
    %v6273 = vpop.f32.mrb[0].mxu0
    %v6274 = vadd.f32 %v6167, %v6273
    %v6275 = vpop.f32.mrb[0].mxu0
    %6276 = vmatprep.mubr.f32.mxu0 0.0
    %6277 = vmatmul.mubr.f32.gmra.mrb[0].mxu0 %v6189
    %v6278 = vpop.f32.mrb[0].mxu0
    %v6279 = vadd.f32 %v6172, %v6278
    %v6280 = vpop.f32.mrb[0].mxu0
    %6281 = vmatprep.mubr.f32.mxu0 0.0
    %6282 = vmatmul.mubr.f32.gmra.mrb[0].mxu0 %v6192
    %v6283 = vpop.f32.mrb[0].mxu0
    %v6284 = vadd.f32 %v6177, %v6283
    %v6285 = vpop.f32.mrb[0].mxu0
    %6286 = vdwg.mxu0
    %v6287 = vmax.f32 %v6264, 0.0
    %v6288 = vmax.f32 %v6269, 0.0
    %v6289 = vmax.f32 %v6274, 0.0
    %v6290 = vmax.f32 %v6279, 0.0
    %v6291 = vmax.f32 %v6284, 0.0
    %v6292 = vld [vmem:[#allocation19] sm:$0xff]
    %v6293 = vld [vmem:[#allocation19 + $0x8] sm:$0xff]
    %v6294 = vld [vmem:[#allocation19 + $0x10] sm:$0xff]
    %v6295 = vld [vmem:[#allocation19 + $0x18] sm:$0xff]
    %v6296 = vld [vmem:[#allocation19 + $0x20] sm:$0xff]
    %v6297 = vld [vmem:[#allocation20] sm:$0xff]
    %v6298 = vld [vmem:[#allocation20 + $0x8] sm:$0xff]
    %v6299 = vld [vmem:[#allocation20 + $0x10] sm:$0xff]
    %v6300 = vld [vmem:[#allocation20 + $0x18] sm:$0xff]
    %v6301 = vld [vmem:[#allocation20 + $0x20] sm:$0xff]
    %6303 = vset.pattern.permute.xlu0 0
    %6304 = vperm.xlu0 %6303, %v6297
    %v6305 = vpop.permute.xlu0 %6304
    %6308 = vset.pattern.permute.xlu0 0
    %6309 = vperm.xlu0 %6308, %v6298
    %v6310 = vpop.permute.xlu0 %6309
    %6313 = vset.pattern.permute.xlu0 0
    %6314 = vperm.xlu0 %6313, %v6299
    %v6315 = vpop.permute.xlu0 %6314
    %6318 = vset.pattern.permute.xlu0 0
    %6319 = vperm.xlu0 %6318, %v6300
    %v6320 = vpop.permute.xlu0 %6319
    %6323 = vset.pattern.permute.xlu0 0
    %6324 = vperm.xlu0 %6323, %v6301
    %v6325 = vpop.permute.xlu0 %6324
    %v6328 = vsel %vm1436, %v6292, 0
    %v6331 = vsel %vm1436, %v6293, 0
    %v6334 = vsel %vm1436, %v6294, 0
    %v6337 = vsel %vm1436, %v6295, 0
    %v6340 = vsel %vm1436, %v6296, 0
    %6342 = vmatprep.subr.mxu0 0.0
    %6343 = vmatpush1.msra.mxu0 %v6287
    %6344 = vmatprep.subr.mxu0 0.0
    %6345 = vmatpush1.msra.mxu0 %v6288
    %6346 = vmatprep.subr.mxu0 0.0
    %6347 = vmatpush1.msra.mxu0 %v6289
    %6348 = vmatprep.subr.mxu0 0.0
    %6349 = vmatpush1.msra.mxu0 %v6290
    %6350 = vmatprep.subr.mxu0 0.0
    %6351 = vmatpush1.msra.mxu0 %v6291
    %6352 = vmatprep.subr.mxu0 0.0
    %6353 = vmatpush1.msra.mxu0 0.0
    %6354 = vmatprep.subr.mxu0 0.0
    %6355 = vmatpush1.msra.mxu0 0.0
    %6356 = vmatprep.subr.mxu0 0.0
    %6357 = vmatpush1.msra.mxu0 0.0
    %6358 = vmatprep.subr.mxu0 0.0
    %6359 = vmatpush1.msra.mxu0 0.0
    %6360 = vmatprep.subr.mxu0 0.0
    %6361 = vmatpush1.msra.mxu0 0.0
    %6362 = vmatprep.subr.mxu0 0.0
    %6363 = vmatpush1.msra.mxu0 0.0
    %6364 = vmatprep.subr.mxu0 0.0
    %6365 = vmatpush1.msra.mxu0 0.0
    %6366 = vmatprep.subr.mxu0 0.0
    %6367 = vmatpush1.msra.mxu0 0.0
    %6368 = vmatprep.subr.mxu0 0.0
    %6369 = vmatpush1.msra.mxu0 0.0
    %6370 = vmatprep.subr.mxu0 0.0
    %6371 = vmatpush1.msra.mxu0 0.0
    %6372 = vmatprep.subr.mxu0 0.0
    %6373 = vmatpush1.msra.mxu0 0.0
    %6374 = vmatprep.subr.mxu0 0.0
    %6375 = vmatpush1.msra.mxu0 0.0
    %6376 = vmatprep.subr.mxu0 0.0
    %6377 = vmatpush1.msra.mxu0 0.0
    %6378 = vmatprep.subr.mxu0 0.0
    %6379 = vmatpush1.msra.mxu0 0.0
    %6380 = vmatprep.subr.mxu0 0.0
    %6381 = vmatpush1.msra.mxu0 0.0
    %6382 = vmatprep.subr.mxu0 0.0
    %6383 = vmatpush1.msra.mxu0 0.0
    %6384 = vmatprep.subr.mxu0 0.0
    %6385 = vmatpush1.msra.mxu0 0.0
    %6386 = vmatprep.subr.mxu0 0.0
    %6387 = vmatpush1.msra.mxu0 0.0
    %6388 = vmatprep.subr.mxu0 0.0
    %6389 = vmatpush1.msra.mxu0 0.0
    %6390 = vmatprep.subr.mxu0 0.0
    %6391 = vmatpush1.msra.mxu0 0.0
    %6392 = vmatprep.subr.mxu0 0.0
    %6393 = vmatpush1.msra.mxu0 0.0
    %6394 = vmatprep.subr.mxu0 0.0
    %6395 = vmatpush1.msra.mxu0 0.0
    %6396 = vmatprep.subr.mxu0 0.0
    %6397 = vmatpush1.msra.mxu0 0.0
    %6398 = vmatprep.subr.mxu0 0.0
    %6399 = vmatpush1.msra.mxu0 0.0
    %6400 = vmatprep.subr.mxu0 0.0
    %6401 = vmatpush1.msra.mxu0 0.0
    %6402 = vmatprep.subr.mxu0 0.0
    %6403 = vmatpush1.msra.mxu0 0.0
    %6404 = vmatprep.subr.mxu0 0.0
    %6405 = vmatpush1.msra.mxu0 0.0
    %6406 = vmatprep.mubr.f32.mxu0 0.0
    %6407 = vmatmul.mubr.f32.gmra.mrb[0].mxu0 %v6328
    %v6408 = vpop.f32.mrb[0].mxu0
    %v6409 = vadd.f32 %v6305, %v6408
    %v6410 = vpop.f32.mrb[0].mxu0
    %6411 = vmatprep.mubr.f32.mxu0 0.0
    %6412 = vmatmul.mubr.f32.gmra.mrb[0].mxu0 %v6331
    %v6413 = vpop.f32.mrb[0].mxu0
    %v6414 = vadd.f32 %v6310, %v6413
    %v6415 = vpop.f32.mrb[0].mxu0
    %6416 = vmatprep.mubr.f32.mxu0 0.0
    %6417 = vmatmul.mubr.f32.gmra.mrb[0].mxu0 %v6334
    %v6418 = vpop.f32.mrb[0].mxu0
    %v6419 = vadd.f32 %v6315, %v6418
    %v6420 = vpop.f32.mrb[0].mxu0
    %6421 = vmatprep.mubr.f32.mxu0 0.0
    %6422 = vmatmul.mubr.f32.gmra.mrb[0].mxu0 %v6337
    %v6423 = vpop.f32.mrb[0].mxu0
    %v6424 = vadd.f32 %v6320, %v6423
    %v6425 = vpop.f32.mrb[0].mxu0
    %6426 = vmatprep.mubr.f32.mxu0 0.0
    %6427 = vmatmul.mubr.f32.gmra.mrb[0].mxu0 %v6340
    %v6428 = vpop.f32.mrb[0].mxu0
    %v6429 = vadd.f32 %v6325, %v6428
    %v6430 = vpop.f32.mrb[0].mxu0
    %6431 = vdwg.mxu0
    %v6432 = vmax.f32 %v6409, 0.0
    %v6433 = vmax.f32 %v6414, 0.0
    %v6434 = vmax.f32 %v6419, 0.0
    %v6435 = vmax.f32 %v6424, 0.0
    %v6436 = vmax.f32 %v6429, 0.0
    %v6437 = vld [vmem:[#allocation22] sm:$0x1]
    %v6438 = vld [vmem:[#allocation3] sm:$0x1]
    %6440 = vset.pattern.permute.xlu0 0
    %6441 = vperm.xlu0 %6440, %v6438
    %v6442 = vpop.permute.xlu0 %6441
    %v6444 = vlaneseq
    %v6445 = vshrl.u32 %v6444, 7
    %v6446 = vsub.s32 0, %v6445
    %v6447 = vrot.slane %v6442, %v6446
    %v6449 = vsel %vm1436, %v6437, 0
    %6451 = vmatprep.subr.mxu0 0.0
    %6452 = vmatpush1.msra.mxu0 %v6432
    %6453 = vmatprep.subr.mxu0 0.0
    %6454 = vmatpush1.msra.mxu0 %v6433
    %6455 = vmatprep.subr.mxu0 0.0
    %6456 = vmatpush1.msra.mxu0 %v6434
    %6457 = vmatprep.subr.mxu0 0.0
    %6458 = vmatpush1.msra.mxu0 %v6435
    %6459 = vmatprep.subr.mxu0 0.0
    %6460 = vmatpush1.msra.mxu0 %v6436
    %6461 = vmatprep.subr.mxu0 0.0
    %6462 = vmatpush1.msra.mxu0 0.0
    %6463 = vmatprep.subr.mxu0 0.0
    %6464 = vmatpush1.msra.mxu0 0.0
    %6465 = vmatprep.subr.mxu0 0.0
    %6466 = vmatpush1.msra.mxu0 0.0
    %6467 = vmatprep.subr.mxu0 0.0
    %6468 = vmatpush1.msra.mxu0 0.0
    %6469 = vmatprep.subr.mxu0 0.0
    %6470 = vmatpush1.msra.mxu0 0.0
    %6471 = vmatprep.subr.mxu0 0.0
    %6472 = vmatpush1.msra.mxu0 0.0
    %6473 = vmatprep.subr.mxu0 0.0
    %6474 = vmatpush1.msra.mxu0 0.0
    %6475 = vmatprep.subr.mxu0 0.0
    %6476 = vmatpush1.msra.mxu0 0.0
    %6477 = vmatprep.subr.mxu0 0.0
    %6478 = vmatpush1.msra.mxu0 0.0
    %6479 = vmatprep.subr.mxu0 0.0
    %6480 = vmatpush1.msra.mxu0 0.0
    %6481 = vmatprep.subr.mxu0 0.0
    %6482 = vmatpush1.msra.mxu0 0.0
    %6483 = vmatprep.subr.mxu0 0.0
    %6484 = vmatpush1.msra.mxu0 0.0
    %6485 = vmatprep.subr.mxu0 0.0
    %6486 = vmatpush1.msra.mxu0 0.0
    %6487 = vmatprep.subr.mxu0 0.0
    %6488 = vmatpush1.msra.mxu0 0.0
    %6489 = vmatprep.subr.mxu0 0.0
    %6490 = vmatpush1.msra.mxu0 0.0
    %6491 = vmatprep.subr.mxu0 0.0
    %6492 = vmatpush1.msra.mxu0 0.0
    %6493 = vmatprep.subr.mxu0 0.0
    %6494 = vmatpush1.msra.mxu0 0.0
    %6495 = vmatprep.subr.mxu0 0.0
    %6496 = vmatpush1.msra.mxu0 0.0
    %6497 = vmatprep.subr.mxu0 0.0
    %6498 = vmatpush1.msra.mxu0 0.0
    %6499 = vmatprep.subr.mxu0 0.0
    %6500 = vmatpush1.msra.mxu0 0.0
    %6501 = vmatprep.subr.mxu0 0.0
    %6502 = vmatpush1.msra.mxu0 0.0
    %6503 = vmatprep.subr.mxu0 0.0
    %6504 = vmatpush1.msra.mxu0 0.0
    %6505 = vmatprep.subr.mxu0 0.0
    %6506 = vmatpush1.msra.mxu0 0.0
    %6507 = vmatprep.subr.mxu0 0.0
    %6508 = vmatpush1.msra.mxu0 0.0
    %6509 = vmatprep.subr.mxu0 0.0
    %6510 = vmatpush1.msra.mxu0 0.0
    %6511 = vmatprep.subr.mxu0 0.0
    %6512 = vmatpush1.msra.mxu0 0.0
    %6513 = vmatprep.subr.mxu0 0.0
    %6514 = vmatpush1.msra.mxu0 0.0
    %6515 = vmatprep.mubr.f32.mxu0 0.0
    %6516 = vmatmul.mubr.f32.gmra.mrb[0].mxu0 %v6449
    %v6517 = vpop.f32.mrb[0].mxu0
    %v6518 = vadd.f32 %v6447, %v6517
    %v6519 = vpop.f32.mrb[0].mxu0
    %6520 = vdwg.mxu0
    %v6521 = vxor.u32 %v6518, 2147483648
    %v6522 = vmul.f32 %v6521, 1.442695
    %v6523 = vpow.pop %v6522
    %v6524 = vadd.f32 %v6523, 1.0
    %v6525 = vrcp.pop %v6524
    %v6526 = vmul.f32 1.0, %v6525
    %v6527 = vadd.f32 %v6526, 1e-08
    %v6528 = vld [vmem:[#allocation23] sm:$0xff]
    %v6529 = vld [vmem:[#allocation23 + $0x8] sm:$0xff]
    %v6530 = vld [vmem:[#allocation23 + $0x10] sm:$0xff]
    %v6531 = vld [vmem:[#allocation23 + $0x18] sm:$0xff]
    %v6532 = vld [vmem:[#allocation23 + $0x20] sm:$0xff]
    %v6533 = vld [vmem:[#allocation25] sm:$0xff]
    %v6534 = vld [vmem:[#allocation25 + $0x8] sm:$0xff]
    %v6535 = vld [vmem:[#allocation25 + $0x10] sm:$0xff]
    %v6536 = vld [vmem:[#allocation25 + $0x18] sm:$0xff]
    %v6537 = vld [vmem:[#allocation25 + $0x20] sm:$0xff]
    %6539 = vset.pattern.permute.xlu0 0
    %6540 = vperm.xlu0 %6539, %v6533
    %v6541 = vpop.permute.xlu0 %6540
    %6544 = vset.pattern.permute.xlu0 0
    %6545 = vperm.xlu0 %6544, %v6534
    %v6546 = vpop.permute.xlu0 %6545
    %6549 = vset.pattern.permute.xlu0 0
    %6550 = vperm.xlu0 %6549, %v6535
    %v6551 = vpop.permute.xlu0 %6550
    %6554 = vset.pattern.permute.xlu0 0
    %6555 = vperm.xlu0 %6554, %v6536
    %v6556 = vpop.permute.xlu0 %6555
    %6559 = vset.pattern.permute.xlu0 0
    %6560 = vperm.xlu0 %6559, %v6537
    %v6561 = vpop.permute.xlu0 %6560
    %v6564 = vsel %vm2036, %v6528, 0
    %v6567 = vsel %vm2036, %v6529, 0
    %v6570 = vsel %vm2036, %v6530, 0
    %v6573 = vsel %vm2036, %v6531, 0
    %v6576 = vsel %vm2036, %v6532, 0
    %6578 = vmatprep.subr.mxu0 0.0
    %6579 = vmatpush1.msra.mxu0 %v6195
    %6580 = vmatprep.subr.mxu0 0.0
    %6581 = vmatpush1.msra.mxu0 0.0
    %6582 = vmatprep.subr.mxu0 0.0
    %6583 = vmatpush1.msra.mxu0 0.0
    %6584 = vmatprep.subr.mxu0 0.0
    %6585 = vmatpush1.msra.mxu0 0.0
    %6586 = vmatprep.subr.mxu0 0.0
    %6587 = vmatpush1.msra.mxu0 0.0
    %6588 = vmatprep.subr.mxu0 0.0
    %6589 = vmatpush1.msra.mxu0 0.0
    %6590 = vmatprep.subr.mxu0 0.0
    %6591 = vmatpush1.msra.mxu0 0.0
    %6592 = vmatprep.subr.mxu0 0.0
    %6593 = vmatpush1.msra.mxu0 0.0
    %6594 = vmatprep.subr.mxu0 0.0
    %6595 = vmatpush1.msra.mxu0 0.0
    %6596 = vmatprep.subr.mxu0 0.0
    %6597 = vmatpush1.msra.mxu0 0.0
    %6598 = vmatprep.subr.mxu0 0.0
    %6599 = vmatpush1.msra.mxu0 0.0
    %6600 = vmatprep.subr.mxu0 0.0
    %6601 = vmatpush1.msra.mxu0 0.0
    %6602 = vmatprep.subr.mxu0 0.0
    %6603 = vmatpush1.msra.mxu0 0.0
    %6604 = vmatprep.subr.mxu0 0.0
    %6605 = vmatpush1.msra.mxu0 0.0
    %6606 = vmatprep.subr.mxu0 0.0
    %6607 = vmatpush1.msra.mxu0 0.0
    %6608 = vmatprep.subr.mxu0 0.0
    %6609 = vmatpush1.msra.mxu0 0.0
    %6610 = vmatprep.subr.mxu0 0.0
    %6611 = vmatpush1.msra.mxu0 0.0
    %6612 = vmatprep.subr.mxu0 0.0
    %6613 = vmatpush1.msra.mxu0 0.0
    %6614 = vmatprep.subr.mxu0 0.0
    %6615 = vmatpush1.msra.mxu0 0.0
    %6616 = vmatprep.subr.mxu0 0.0
    %6617 = vmatpush1.msra.mxu0 0.0
    %6618 = vmatprep.subr.mxu0 0.0
    %6619 = vmatpush1.msra.mxu0 0.0
    %6620 = vmatprep.subr.mxu0 0.0
    %6621 = vmatpush1.msra.mxu0 0.0
    %6622 = vmatprep.subr.mxu0 0.0
    %6623 = vmatpush1.msra.mxu0 0.0
    %6624 = vmatprep.subr.mxu0 0.0
    %6625 = vmatpush1.msra.mxu0 0.0
    %6626 = vmatprep.subr.mxu0 0.0
    %6627 = vmatpush1.msra.mxu0 0.0
    %6628 = vmatprep.subr.mxu0 0.0
    %6629 = vmatpush1.msra.mxu0 0.0
    %6630 = vmatprep.subr.mxu0 0.0
    %6631 = vmatpush1.msra.mxu0 0.0
    %6632 = vmatprep.subr.mxu0 0.0
    %6633 = vmatpush1.msra.mxu0 0.0
    %6634 = vmatprep.subr.mxu0 0.0
    %6635 = vmatpush1.msra.mxu0 0.0
    %6636 = vmatprep.subr.mxu0 0.0
    %6637 = vmatpush1.msra.mxu0 0.0
    %6638 = vmatprep.subr.mxu0 0.0
    %6639 = vmatpush1.msra.mxu0 0.0
    %6640 = vmatprep.subr.mxu0 0.0
    %6641 = vmatpush1.msra.mxu0 0.0
    %6642 = vmatprep.mubr.f32.mxu0 0.0
    %6643 = vmatmul.mubr.f32.gmra.mrb[0].mxu0 %v6564
    %v6644 = vpop.f32.mrb[0].mxu0
    %v6645 = vadd.f32 %v6541, %v6644
    %v6646 = vpop.f32.mrb[0].mxu0
    %6647 = vmatprep.mubr.f32.mxu0 0.0
    %6648 = vmatmul.mubr.f32.gmra.mrb[0].mxu0 %v6567
    %v6649 = vpop.f32.mrb[0].mxu0
    %v6650 = vadd.f32 %v6546, %v6649
    %v6651 = vpop.f32.mrb[0].mxu0
    %6652 = vmatprep.mubr.f32.mxu0 0.0
    %6653 = vmatmul.mubr.f32.gmra.mrb[0].mxu0 %v6570
    %v6654 = vpop.f32.mrb[0].mxu0
    %v6655 = vadd.f32 %v6551, %v6654
    %v6656 = vpop.f32.mrb[0].mxu0
    %6657 = vmatprep.mubr.f32.mxu0 0.0
    %6658 = vmatmul.mubr.f32.gmra.mrb[0].mxu0 %v6573
    %v6659 = vpop.f32.mrb[0].mxu0
    %v6660 = vadd.f32 %v6556, %v6659
    %v6661 = vpop.f32.mrb[0].mxu0
    %6662 = vmatprep.mubr.f32.mxu0 0.0
    %6663 = vmatmul.mubr.f32.gmra.mrb[0].mxu0 %v6576
    %v6664 = vpop.f32.mrb[0].mxu0
    %v6665 = vadd.f32 %v6561, %v6664
    %v6666 = vpop.f32.mrb[0].mxu0
    %6667 = vdwg.mxu0
    %v6668 = vmax.f32 %v6645, 0.0
    %v6669 = vmax.f32 %v6650, 0.0
    %v6670 = vmax.f32 %v6655, 0.0
    %v6671 = vmax.f32 %v6660, 0.0
    %v6672 = vmax.f32 %v6665, 0.0
    %v6673 = vld [vmem:[#allocation26] sm:$0xff]
    %v6674 = vld [vmem:[#allocation26 + $0x8] sm:$0xff]
    %v6675 = vld [vmem:[#allocation26 + $0x10] sm:$0xff]
    %v6676 = vld [vmem:[#allocation26 + $0x18] sm:$0xff]
    %v6677 = vld [vmem:[#allocation26 + $0x20] sm:$0xff]
    %v6678 = vld [vmem:[#allocation28] sm:$0xff]
    %v6679 = vld [vmem:[#allocation28 + $0x8] sm:$0xff]
    %v6680 = vld [vmem:[#allocation28 + $0x10] sm:$0xff]
    %v6681 = vld [vmem:[#allocation28 + $0x18] sm:$0xff]
    %v6682 = vld [vmem:[#allocation28 + $0x20] sm:$0xff]
    %6684 = vset.pattern.permute.xlu0 0
    %6685 = vperm.xlu0 %6684, %v6678
    %v6686 = vpop.permute.xlu0 %6685
    %6689 = vset.pattern.permute.xlu0 0
    %6690 = vperm.xlu0 %6689, %v6679
    %v6691 = vpop.permute.xlu0 %6690
    %6694 = vset.pattern.permute.xlu0 0
    %6695 = vperm.xlu0 %6694, %v6680
    %v6696 = vpop.permute.xlu0 %6695
    %6699 = vset.pattern.permute.xlu0 0
    %6700 = vperm.xlu0 %6699, %v6681
    %v6701 = vpop.permute.xlu0 %6700
    %6704 = vset.pattern.permute.xlu0 0
    %6705 = vperm.xlu0 %6704, %v6682
    %v6706 = vpop.permute.xlu0 %6705
    %v6709 = vsel %vm1436, %v6673, 0
    %v6712 = vsel %vm1436, %v6674, 0
    %v6715 = vsel %vm1436, %v6675, 0
    %v6718 = vsel %vm1436, %v6676, 0
    %v6721 = vsel %vm1436, %v6677, 0
    %6723 = vmatprep.subr.mxu0 0.0
    %6724 = vmatpush1.msra.mxu0 %v6668
    %6725 = vmatprep.subr.mxu0 0.0
    %6726 = vmatpush1.msra.mxu0 %v6669
    %6727 = vmatprep.subr.mxu0 0.0
    %6728 = vmatpush1.msra.mxu0 %v6670
    %6729 = vmatprep.subr.mxu0 0.0
    %6730 = vmatpush1.msra.mxu0 %v6671
    %6731 = vmatprep.subr.mxu0 0.0
    %6732 = vmatpush1.msra.mxu0 %v6672
    %6733 = vmatprep.subr.mxu0 0.0
    %6734 = vmatpush1.msra.mxu0 0.0
    %6735 = vmatprep.subr.mxu0 0.0
    %6736 = vmatpush1.msra.mxu0 0.0
    %6737 = vmatprep.subr.mxu0 0.0
    %6738 = vmatpush1.msra.mxu0 0.0
    %6739 = vmatprep.subr.mxu0 0.0
    %6740 = vmatpush1.msra.mxu0 0.0
    %6741 = vmatprep.subr.mxu0 0.0
    %6742 = vmatpush1.msra.mxu0 0.0
    %6743 = vmatprep.subr.mxu0 0.0
    %6744 = vmatpush1.msra.mxu0 0.0
    %6745 = vmatprep.subr.mxu0 0.0
    %6746 = vmatpush1.msra.mxu0 0.0
    %6747 = vmatprep.subr.mxu0 0.0
    %6748 = vmatpush1.msra.mxu0 0.0
    %6749 = vmatprep.subr.mxu0 0.0
    %6750 = vmatpush1.msra.mxu0 0.0
    %6751 = vmatprep.subr.mxu0 0.0
    %6752 = vmatpush1.msra.mxu0 0.0
    %6753 = vmatprep.subr.mxu0 0.0
    %6754 = vmatpush1.msra.mxu0 0.0
    %6755 = vmatprep.subr.mxu0 0.0
    %6756 = vmatpush1.msra.mxu0 0.0
    %6757 = vmatprep.subr.mxu0 0.0
    %6758 = vmatpush1.msra.mxu0 0.0
    %6759 = vmatprep.subr.mxu0 0.0
    %6760 = vmatpush1.msra.mxu0 0.0
    %6761 = vmatprep.subr.mxu0 0.0
    %6762 = vmatpush1.msra.mxu0 0.0
    %6763 = vmatprep.subr.mxu0 0.0
    %6764 = vmatpush1.msra.mxu0 0.0
    %6765 = vmatprep.subr.mxu0 0.0
    %6766 = vmatpush1.msra.mxu0 0.0
    %6767 = vmatprep.subr.mxu0 0.0
    %6768 = vmatpush1.msra.mxu0 0.0
    %6769 = vmatprep.subr.mxu0 0.0
    %6770 = vmatpush1.msra.mxu0 0.0
    %6771 = vmatprep.subr.mxu0 0.0
    %6772 = vmatpush1.msra.mxu0 0.0
    %6773 = vmatprep.subr.mxu0 0.0
    %6774 = vmatpush1.msra.mxu0 0.0
    %6775 = vmatprep.subr.mxu0 0.0
    %6776 = vmatpush1.msra.mxu0 0.0
    %6777 = vmatprep.subr.mxu0 0.0
    %6778 = vmatpush1.msra.mxu0 0.0
    %6779 = vmatprep.subr.mxu0 0.0
    %6780 = vmatpush1.msra.mxu0 0.0
    %6781 = vmatprep.subr.mxu0 0.0
    %6782 = vmatpush1.msra.mxu0 0.0
    %6783 = vmatprep.subr.mxu0 0.0
    %6784 = vmatpush1.msra.mxu0 0.0
    %6785 = vmatprep.subr.mxu0 0.0
    %6786 = vmatpush1.msra.mxu0 0.0
    %6787 = vmatprep.mubr.f32.mxu0 0.0
    %6788 = vmatmul.mubr.f32.gmra.mrb[0].mxu0 %v6709
    %v6789 = vpop.f32.mrb[0].mxu0
    %v6790 = vadd.f32 %v6686, %v6789
    %v6791 = vpop.f32.mrb[0].mxu0
    %6792 = vmatprep.mubr.f32.mxu0 0.0
    %6793 = vmatmul.mubr.f32.gmra.mrb[0].mxu0 %v6712
    %v6794 = vpop.f32.mrb[0].mxu0
    %v6795 = vadd.f32 %v6691, %v6794
    %v6796 = vpop.f32.mrb[0].mxu0
    %6797 = vmatprep.mubr.f32.mxu0 0.0
    %6798 = vmatmul.mubr.f32.gmra.mrb[0].mxu0 %v6715
    %v6799 = vpop.f32.mrb[0].mxu0
    %v6800 = vadd.f32 %v6696, %v6799
    %v6801 = vpop.f32.mrb[0].mxu0
    %6802 = vmatprep.mubr.f32.mxu0 0.0
    %6803 = vmatmul.mubr.f32.gmra.mrb[0].mxu0 %v6718
    %v6804 = vpop.f32.mrb[0].mxu0
    %v6805 = vadd.f32 %v6701, %v6804
    %v6806 = vpop.f32.mrb[0].mxu0
    %6807 = vmatprep.mubr.f32.mxu0 0.0
    %6808 = vmatmul.mubr.f32.gmra.mrb[0].mxu0 %v6721
    %v6809 = vpop.f32.mrb[0].mxu0
    %v6810 = vadd.f32 %v6706, %v6809
    %v6811 = vpop.f32.mrb[0].mxu0
    %6812 = vdwg.mxu0
    %v6813 = vmax.f32 %v6790, 0.0
    %v6814 = vmax.f32 %v6795, 0.0
    %v6815 = vmax.f32 %v6800, 0.0
    %v6816 = vmax.f32 %v6805, 0.0
    %v6817 = vmax.f32 %v6810, 0.0
    %v6818 = vld [vmem:[%s51] sm:$0x3]
    %v6819 = vld [vmem:[#allocation29] sm:$0x3]
    %6821 = vset.pattern.permute.xlu0 0
    %6822 = vperm.xlu0 %6821, %v6819
    %v6823 = vpop.permute.xlu0 %6822
    %v6826 = vsel %vm1436, %v6818, 0
    %6828 = vmatprep.subr.mxu0 0.0
    %6829 = vmatpush1.msra.mxu0 %v6813
    %6830 = vmatprep.subr.mxu0 0.0
    %6831 = vmatpush1.msra.mxu0 %v6814
    %6832 = vmatprep.subr.mxu0 0.0
    %6833 = vmatpush1.msra.mxu0 %v6815
    %6834 = vmatprep.subr.mxu0 0.0
    %6835 = vmatpush1.msra.mxu0 %v6816
    %6836 = vmatprep.subr.mxu0 0.0
    %6837 = vmatpush1.msra.mxu0 %v6817
    %6838 = vmatprep.subr.mxu0 0.0
    %6839 = vmatpush1.msra.mxu0 0.0
    %6840 = vmatprep.subr.mxu0 0.0
    %6841 = vmatpush1.msra.mxu0 0.0
    %6842 = vmatprep.subr.mxu0 0.0
    %6843 = vmatpush1.msra.mxu0 0.0
    %6844 = vmatprep.subr.mxu0 0.0
    %6845 = vmatpush1.msra.mxu0 0.0
    %6846 = vmatprep.subr.mxu0 0.0
    %6847 = vmatpush1.msra.mxu0 0.0
    %6848 = vmatprep.subr.mxu0 0.0
    %6849 = vmatpush1.msra.mxu0 0.0
    %6850 = vmatprep.subr.mxu0 0.0
    %6851 = vmatpush1.msra.mxu0 0.0
    %6852 = vmatprep.subr.mxu0 0.0
    %6853 = vmatpush1.msra.mxu0 0.0
    %6854 = vmatprep.subr.mxu0 0.0
    %6855 = vmatpush1.msra.mxu0 0.0
    %6856 = vmatprep.subr.mxu0 0.0
    %6857 = vmatpush1.msra.mxu0 0.0
    %6858 = vmatprep.subr.mxu0 0.0
    %6859 = vmatpush1.msra.mxu0 0.0
    %6860 = vmatprep.subr.mxu0 0.0
    %6861 = vmatpush1.msra.mxu0 0.0
    %6862 = vmatprep.subr.mxu0 0.0
    %6863 = vmatpush1.msra.mxu0 0.0
    %6864 = vmatprep.subr.mxu0 0.0
    %6865 = vmatpush1.msra.mxu0 0.0
    %6866 = vmatprep.subr.mxu0 0.0
    %6867 = vmatpush1.msra.mxu0 0.0
    %6868 = vmatprep.subr.mxu0 0.0
    %6869 = vmatpush1.msra.mxu0 0.0
    %6870 = vmatprep.subr.mxu0 0.0
    %6871 = vmatpush1.msra.mxu0 0.0
    %6872 = vmatprep.subr.mxu0 0.0
    %6873 = vmatpush1.msra.mxu0 0.0
    %6874 = vmatprep.subr.mxu0 0.0
    %6875 = vmatpush1.msra.mxu0 0.0
    %6876 = vmatprep.subr.mxu0 0.0
    %6877 = vmatpush1.msra.mxu0 0.0
    %6878 = vmatprep.subr.mxu0 0.0
    %6879 = vmatpush1.msra.mxu0 0.0
    %6880 = vmatprep.subr.mxu0 0.0
    %6881 = vmatpush1.msra.mxu0 0.0
    %6882 = vmatprep.subr.mxu0 0.0
    %6883 = vmatpush1.msra.mxu0 0.0
    %6884 = vmatprep.subr.mxu0 0.0
    %6885 = vmatpush1.msra.mxu0 0.0
    %6886 = vmatprep.subr.mxu0 0.0
    %6887 = vmatpush1.msra.mxu0 0.0
    %6888 = vmatprep.subr.mxu0 0.0
    %6889 = vmatpush1.msra.mxu0 0.0
    %6890 = vmatprep.subr.mxu0 0.0
    %6891 = vmatpush1.msra.mxu0 0.0
    %6892 = vmatprep.mubr.f32.mxu0 0.0
    %6893 = vmatmul.mubr.f32.gmra.mrb[0].mxu0 %v6826
    %v6894 = vpop.f32.mrb[0].mxu0
    %v6895 = vadd.f32 %v6823, %v6894
    %v6896 = vpop.f32.mrb[0].mxu0
    %6897 = vdwg.mxu0
    %v6898 = vld [vmem:[#allocation50] sm:$0xff]
    %v6899 = vld [vmem:[#allocation50 + $0x8] sm:$0xff]
    %v6900 = vld [vmem:[#allocation50 + $0x10] sm:$0xff]
    %v6901 = vld [vmem:[#allocation50 + $0x18] sm:$0xff]
    %v6902 = vld [vmem:[#allocation50 + $0x20] sm:$0xff]
    %v6903 = vld [vmem:[#allocation50 + $0x28] sm:$0xff]
    %v6904 = vld [vmem:[#allocation50 + $0x30] sm:$0xff]
    %v6905 = vld [vmem:[#allocation50 + $0x38] sm:$0xff]
    %v6906 = vld [vmem:[#allocation50 + $0x40] sm:$0xff]
    %v6907 = vld [vmem:[#allocation50 + $0x48] sm:$0xff]
    %v6909 = vsel %vm2036, %v6898, 0
    %v6912 = vsel %vm2036, %v6899, 0
    %v6915 = vsel %vm2036, %v6900, 0
    %v6918 = vsel %vm2036, %v6901, 0
    %v6921 = vsel %vm2036, %v6902, 0
    %v6924 = vsel %vm2036, %v6903, 0
    %v6927 = vsel %vm2036, %v6904, 0
    %v6930 = vsel %vm2036, %v6905, 0
    %v6933 = vsel %vm2036, %v6906, 0
    %v6936 = vsel %vm2036, %v6907, 0
    %6938 = vmatprep.subr.mxu0 0.0
    %6939 = vmatpush1.msra.mxu0 %v6195
    %6940 = vmatprep.subr.mxu0 0.0
    %6941 = vmatpush1.msra.mxu0 0.0
    %6942 = vmatprep.subr.mxu0 0.0
    %6943 = vmatpush1.msra.mxu0 0.0
    %6944 = vmatprep.subr.mxu0 0.0
    %6945 = vmatpush1.msra.mxu0 0.0
    %6946 = vmatprep.subr.mxu0 0.0
    %6947 = vmatpush1.msra.mxu0 0.0
    %6948 = vmatprep.subr.mxu0 0.0
    %6949 = vmatpush1.msra.mxu0 0.0
    %6950 = vmatprep.subr.mxu0 0.0
    %6951 = vmatpush1.msra.mxu0 0.0
    %6952 = vmatprep.subr.mxu0 0.0
    %6953 = vmatpush1.msra.mxu0 0.0
    %6954 = vmatprep.subr.mxu0 0.0
    %6955 = vmatpush1.msra.mxu0 0.0
    %6956 = vmatprep.subr.mxu0 0.0
    %6957 = vmatpush1.msra.mxu0 0.0
    %6958 = vmatprep.subr.mxu0 0.0
    %6959 = vmatpush1.msra.mxu0 0.0
    %6960 = vmatprep.subr.mxu0 0.0
    %6961 = vmatpush1.msra.mxu0 0.0
    %6962 = vmatprep.subr.mxu0 0.0
    %6963 = vmatpush1.msra.mxu0 0.0
    %6964 = vmatprep.subr.mxu0 0.0
    %6965 = vmatpush1.msra.mxu0 0.0
    %6966 = vmatprep.subr.mxu0 0.0
    %6967 = vmatpush1.msra.mxu0 0.0
    %6968 = vmatprep.subr.mxu0 0.0
    %6969 = vmatpush1.msra.mxu0 0.0
    %6970 = vmatprep.subr.mxu0 0.0
    %6971 = vmatpush1.msra.mxu0 0.0
    %6972 = vmatprep.subr.mxu0 0.0
    %6973 = vmatpush1.msra.mxu0 0.0
    %6974 = vmatprep.subr.mxu0 0.0
    %6975 = vmatpush1.msra.mxu0 0.0
    %6976 = vmatprep.subr.mxu0 0.0
    %6977 = vmatpush1.msra.mxu0 0.0
    %6978 = vmatprep.subr.mxu0 0.0
    %6979 = vmatpush1.msra.mxu0 0.0
    %6980 = vmatprep.subr.mxu0 0.0
    %6981 = vmatpush1.msra.mxu0 0.0
    %6982 = vmatprep.subr.mxu0 0.0
    %6983 = vmatpush1.msra.mxu0 0.0
    %6984 = vmatprep.subr.mxu0 0.0
    %6985 = vmatpush1.msra.mxu0 0.0
    %6986 = vmatprep.subr.mxu0 0.0
    %6987 = vmatpush1.msra.mxu0 0.0
    %6988 = vmatprep.subr.mxu0 0.0
    %6989 = vmatpush1.msra.mxu0 0.0
    %6990 = vmatprep.subr.mxu0 0.0
    %6991 = vmatpush1.msra.mxu0 0.0
    %6992 = vmatprep.subr.mxu0 0.0
    %6993 = vmatpush1.msra.mxu0 0.0
    %6994 = vmatprep.subr.mxu0 0.0
    %6995 = vmatpush1.msra.mxu0 0.0
    %6996 = vmatprep.subr.mxu0 0.0
    %6997 = vmatpush1.msra.mxu0 0.0
    %6998 = vmatprep.subr.mxu0 0.0
    %6999 = vmatpush1.msra.mxu0 0.0
    %7000 = vmatprep.subr.mxu0 0.0
    %7001 = vmatpush1.msra.mxu0 0.0
    %7002 = vmatprep.mubr.f32.mxu0 0.0
    %7003 = vmatmul.mubr.f32.gmra.mrb[0].mxu0 %v6909
    %v7004 = vpop.f32.mrb[0].mxu0
    %v7005 = vadd.f32 0.0, %v7004
    %v7006 = vpop.f32.mrb[0].mxu0
    %7007 = vmatprep.mubr.f32.mxu0 0.0
    %7008 = vmatmul.mubr.f32.gmra.mrb[0].mxu0 %v6912
    %v7009 = vpop.f32.mrb[0].mxu0
    %v7010 = vadd.f32 0.0, %v7009
    %v7011 = vpop.f32.mrb[0].mxu0
    %7012 = vmatprep.mubr.f32.mxu0 0.0
    %7013 = vmatmul.mubr.f32.gmra.mrb[0].mxu0 %v6915
    %v7014 = vpop.f32.mrb[0].mxu0
    %v7015 = vadd.f32 0.0, %v7014
    %v7016 = vpop.f32.mrb[0].mxu0
    %7017 = vmatprep.mubr.f32.mxu0 0.0
    %7018 = vmatmul.mubr.f32.gmra.mrb[0].mxu0 %v6918
    %v7019 = vpop.f32.mrb[0].mxu0
    %v7020 = vadd.f32 0.0, %v7019
    %v7021 = vpop.f32.mrb[0].mxu0
    %7022 = vmatprep.mubr.f32.mxu0 0.0
    %7023 = vmatmul.mubr.f32.gmra.mrb[0].mxu0 %v6921
    %v7024 = vpop.f32.mrb[0].mxu0
    %v7025 = vadd.f32 0.0, %v7024
    %v7026 = vpop.f32.mrb[0].mxu0
    %7027 = vmatprep.mubr.f32.mxu0 0.0
    %7028 = vmatmul.mubr.f32.gmra.mrb[0].mxu0 %v6924
    %v7029 = vpop.f32.mrb[0].mxu0
    %v7030 = vadd.f32 0.0, %v7029
    %v7031 = vpop.f32.mrb[0].mxu0
    %7032 = vmatprep.mubr.f32.mxu0 0.0
    %7033 = vmatmul.mubr.f32.gmra.mrb[0].mxu0 %v6927
    %v7034 = vpop.f32.mrb[0].mxu0
    %v7035 = vadd.f32 0.0, %v7034
    %v7036 = vpop.f32.mrb[0].mxu0
    %7037 = vmatprep.mubr.f32.mxu0 0.0
    %7038 = vmatmul.mubr.f32.gmra.mrb[0].mxu0 %v6930
    %v7039 = vpop.f32.mrb[0].mxu0
    %v7040 = vadd.f32 0.0, %v7039
    %v7041 = vpop.f32.mrb[0].mxu0
    %7042 = vmatprep.mubr.f32.mxu0 0.0
    %7043 = vmatmul.mubr.f32.gmra.mrb[0].mxu0 %v6933
    %v7044 = vpop.f32.mrb[0].mxu0
    %v7045 = vadd.f32 0.0, %v7044
    %v7046 = vpop.f32.mrb[0].mxu0
    %7047 = vmatprep.mubr.f32.mxu0 0.0
    %7048 = vmatmul.mubr.f32.gmra.mrb[0].mxu0 %v6936
    %v7049 = vpop.f32.mrb[0].mxu0
    %v7050 = vadd.f32 0.0, %v7049
    %v7051 = vpop.f32.mrb[0].mxu0
    %7052 = vdwg.mxu0
    %v7053 = vpack.c.bf16 %v7010, %v7005
    %v7054 = vpack.c.bf16 %v7020, %v7015
    %v7055 = vpack.c.bf16 %v7025, %v7025
    %v7056 = vpack.c.bf16 %v7035, %v7030
    %v7057 = vpack.c.bf16 %v7045, %v7040
    %v7058 = vpack.c.bf16 %v7050, %v7050
    %7059 = vmatprep.subr.bf16.mxu0 0
    %7060 = vmatpush1.bf16.msra.mxu0 %v855
    %7061 = vmatprep.subr.bf16.mxu0 0
    %7062 = vmatpush1.bf16.msra.mxu0 %v856
    %7063 = vmatprep.subr.bf16.mxu0 0
    %7064 = vmatpush1.bf16.msra.mxu0 %v857
    %7065 = vmatprep.subr.bf16.mxu0 0
    %7066 = vmatpush1.bf16.msra.mxu0 %v858
    %7067 = vmatprep.subr.bf16.mxu0 0
    %7068 = vmatpush1.bf16.msra.mxu0 %v859
    %7069 = vmatprep.subr.bf16.mxu0 0
    %7070 = vmatpush1.bf16.msra.mxu0 %v860
    %7071 = vmatprep.subr.bf16.mxu0 0
    %7072 = vmatpush1.bf16.msra.mxu0 %v861
    %7073 = vmatprep.subr.bf16.mxu0 0
    %7074 = vmatpush1.bf16.msra.mxu0 %v862
    %7075 = vmatprep.subr.bf16.mxu0 0
    %7076 = vmatpush1.bf16.msra.mxu0 0
    %7077 = vmatprep.subr.bf16.mxu0 0
    %7078 = vmatpush1.bf16.msra.mxu0 0
    %7079 = vmatprep.subr.bf16.mxu0 0
    %7080 = vmatpush1.bf16.msra.mxu0 0
    %7081 = vmatprep.subr.bf16.mxu0 0
    %7082 = vmatpush1.bf16.msra.mxu0 0
    %7083 = vmatprep.subr.bf16.mxu0 0
    %7084 = vmatpush1.bf16.msra.mxu0 0
    %7085 = vmatprep.subr.bf16.mxu0 0
    %7086 = vmatpush1.bf16.msra.mxu0 0
    %7087 = vmatprep.subr.bf16.mxu0 0
    %7088 = vmatpush1.bf16.msra.mxu0 0
    %7089 = vmatprep.subr.bf16.mxu0 0
    %7090 = vmatpush1.bf16.msra.mxu0 0
    %7091 = vmatprep.mubr.bf16.mxu0 0
    %7092 = vmatmul.mubr.bf16.gmra.mrb[0].mxu0 %v7056
    %v7093 = vpop.f32.mrb[0].mxu0
    %v7094 = vadd.f32 0.0, %v7093
    %v7095 = vpop.f32.mrb[0].mxu0
    %v7096 = vpop.f32.mrb[0].mxu0
    %v7097 = vadd.f32 0.0, %v7096
    %v7098 = vpop.f32.mrb[0].mxu0
    %7099 = vmatprep.mubr.bf16.mxu0 0
    %7100 = vmatmul.mubr.bf16.gmra.mrb[0].mxu0 %v7057
    %v7101 = vpop.f32.mrb[0].mxu0
    %v7102 = vadd.f32 0.0, %v7101
    %v7103 = vpop.f32.mrb[0].mxu0
    %v7104 = vpop.f32.mrb[0].mxu0
    %v7105 = vadd.f32 0.0, %v7104
    %v7106 = vpop.f32.mrb[0].mxu0
    %7107 = vmatprep.mubr.bf16.mxu0 0
    %7108 = vmatmul.mubr.bf16.gmra.mrb[0].mxu0 %v7058
    %v7109 = vpop.f32.mrb[0].mxu0
    %v7110 = vadd.f32 0.0, %v7109
    %v7111 = vpop.f32.mrb[0].mxu0
    %v7112 = vpop.f32.mrb[0].mxu0
    %v7113 = vpop.f32.mrb[0].mxu0
    %7114 = vdwg.mxu0
    %7115 = vmatprep.subr.bf16.mxu0 0
    %7116 = vmatpush1.bf16.msra.mxu0 %v915
    %7117 = vmatprep.subr.bf16.mxu0 0
    %7118 = vmatpush1.bf16.msra.mxu0 %v916
    %7119 = vmatprep.subr.bf16.mxu0 0
    %7120 = vmatpush1.bf16.msra.mxu0 %v917
    %7121 = vmatprep.subr.bf16.mxu0 0
    %7122 = vmatpush1.bf16.msra.mxu0 %v918
    %7123 = vmatprep.subr.bf16.mxu0 0
    %7124 = vmatpush1.bf16.msra.mxu0 %v919
    %7125 = vmatprep.subr.bf16.mxu0 0
    %7126 = vmatpush1.bf16.msra.mxu0 %v920
    %7127 = vmatprep.subr.bf16.mxu0 0
    %7128 = vmatpush1.bf16.msra.mxu0 %v921
    %7129 = vmatprep.subr.bf16.mxu0 0
    %7130 = vmatpush1.bf16.msra.mxu0 %v922
    %7131 = vmatprep.subr.bf16.mxu0 0
    %7132 = vmatpush1.bf16.msra.mxu0 0
    %7133 = vmatprep.subr.bf16.mxu0 0
    %7134 = vmatpush1.bf16.msra.mxu0 0
    %7135 = vmatprep.subr.bf16.mxu0 0
    %7136 = vmatpush1.bf16.msra.mxu0 0
    %7137 = vmatprep.subr.bf16.mxu0 0
    %7138 = vmatpush1.bf16.msra.mxu0 0
    %7139 = vmatprep.subr.bf16.mxu0 0
    %7140 = vmatpush1.bf16.msra.mxu0 0
    %7141 = vmatprep.subr.bf16.mxu0 0
    %7142 = vmatpush1.bf16.msra.mxu0 0
    %7143 = vmatprep.subr.bf16.mxu0 0
    %7144 = vmatpush1.bf16.msra.mxu0 0
    %7145 = vmatprep.subr.bf16.mxu0 0
    %7146 = vmatpush1.bf16.msra.mxu0 0
    %7147 = vmatprep.mubr.bf16.mxu0 0
    %7148 = vmatmul.mubr.bf16.gmra.mrb[0].mxu0 %v7053
    %v7149 = vpop.f32.mrb[0].mxu0
    %v7150 = vadd.f32 %v7094, %v7149
    %v7151 = vpop.f32.mrb[0].mxu0
    %v7152 = vpop.f32.mrb[0].mxu0
    %v7153 = vadd.f32 %v7097, %v7152
    %v7154 = vpop.f32.mrb[0].mxu0
    %7155 = vmatprep.mubr.bf16.mxu0 0
    %7156 = vmatmul.mubr.bf16.gmra.mrb[0].mxu0 %v7054
    %v7157 = vpop.f32.mrb[0].mxu0
    %v7158 = vadd.f32 %v7102, %v7157
    %v7159 = vpop.f32.mrb[0].mxu0
    %v7160 = vpop.f32.mrb[0].mxu0
    %v7161 = vadd.f32 %v7105, %v7160
    %v7162 = vpop.f32.mrb[0].mxu0
    %7163 = vmatprep.mubr.bf16.mxu0 0
    %7164 = vmatmul.mubr.bf16.gmra.mrb[0].mxu0 %v7055
    %v7165 = vpop.f32.mrb[0].mxu0
    %v7166 = vadd.f32 %v7110, %v7165
    %v7167 = vpop.f32.mrb[0].mxu0
    %v7168 = vpop.f32.mrb[0].mxu0
    %v7169 = vpop.f32.mrb[0].mxu0
    %7170 = vdwg.mxu0
    %v7171 = vadd.f32 %v7150, %v5580
    %v7172 = vadd.f32 %v7153, %v5581
    %v7173 = vadd.f32 %v7158, %v5582
    %v7174 = vadd.f32 %v7161, %v5583
    %v7175 = vadd.f32 %v7166, %v5584
    %v7176 = vld [vmem:[#allocation53] sm:$0xff]
    %v7177 = vld [vmem:[#allocation53 + $0x8] sm:$0xff]
    %v7178 = vld [vmem:[#allocation53 + $0x10] sm:$0xff]
    %v7179 = vld [vmem:[#allocation53 + $0x18] sm:$0xff]
    %v7180 = vld [vmem:[#allocation53 + $0x20] sm:$0xff]
    %7182 = vset.pattern.permute.xlu0 0
    %7183 = vperm.xlu0 %7182, %v7176
    %v7184 = vpop.permute.xlu0 %7183
    %7187 = vset.pattern.permute.xlu0 0
    %7188 = vperm.xlu0 %7187, %v7177
    %v7189 = vpop.permute.xlu0 %7188
    %7192 = vset.pattern.permute.xlu0 0
    %7193 = vperm.xlu0 %7192, %v7178
    %v7194 = vpop.permute.xlu0 %7193
    %7197 = vset.pattern.permute.xlu0 0
    %7198 = vperm.xlu0 %7197, %v7179
    %v7199 = vpop.permute.xlu0 %7198
    %7202 = vset.pattern.permute.xlu0 0
    %7203 = vperm.xlu0 %7202, %v7180
    %v7204 = vpop.permute.xlu0 %7203
    %v7206 = vadd.f32 %v7171, %v7184
    %v7207 = vadd.f32 %v7172, %v7189
    %v7208 = vadd.f32 %v7173, %v7194
    %v7209 = vadd.f32 %v7174, %v7199
    %v7210 = vadd.f32 %v7175, %v7204
    %v7211 = vmax.f32 %v7206, 0.0
    %v7212 = vmax.f32 %v7207, 0.0
    %v7213 = vmax.f32 %v7208, 0.0
    %v7214 = vmax.f32 %v7209, 0.0
    %v7215 = vmax.f32 %v7210, 0.0
    %v7216 = vld [vmem:[#allocation55] sm:$0xff]
    %v7217 = vld [vmem:[#allocation55 + $0x8] sm:$0xff]
    %v7218 = vld [vmem:[#allocation55 + $0x10] sm:$0xff]
    %v7219 = vld [vmem:[#allocation55 + $0x18] sm:$0xff]
    %v7220 = vld [vmem:[#allocation55 + $0x20] sm:$0xff]
    %v7221 = vld [vmem:[#allocation56] sm:$0xff]
    %v7222 = vld [vmem:[#allocation56 + $0x8] sm:$0xff]
    %v7223 = vld [vmem:[#allocation56 + $0x10] sm:$0xff]
    %v7224 = vld [vmem:[#allocation56 + $0x18] sm:$0xff]
    %v7225 = vld [vmem:[#allocation56 + $0x20] sm:$0xff]
    %7227 = vset.pattern.permute.xlu0 0
    %7228 = vperm.xlu0 %7227, %v7221
    %v7229 = vpop.permute.xlu0 %7228
    %7232 = vset.pattern.permute.xlu0 0
    %7233 = vperm.xlu0 %7232, %v7222
    %v7234 = vpop.permute.xlu0 %7233
    %7237 = vset.pattern.permute.xlu0 0
    %7238 = vperm.xlu0 %7237, %v7223
    %v7239 = vpop.permute.xlu0 %7238
    %7242 = vset.pattern.permute.xlu0 0
    %7243 = vperm.xlu0 %7242, %v7224
    %v7244 = vpop.permute.xlu0 %7243
    %7247 = vset.pattern.permute.xlu0 0
    %7248 = vperm.xlu0 %7247, %v7225
    %v7249 = vpop.permute.xlu0 %7248
    %v7252 = vsel %vm1436, %v7216, 0
    %v7255 = vsel %vm1436, %v7217, 0
    %v7258 = vsel %vm1436, %v7218, 0
    %v7261 = vsel %vm1436, %v7219, 0
    %v7264 = vsel %vm1436, %v7220, 0
    %7266 = vmatprep.subr.mxu0 0.0
    %7267 = vmatpush1.msra.mxu0 %v7211
    %7268 = vmatprep.subr.mxu0 0.0
    %7269 = vmatpush1.msra.mxu0 %v7212
    %7270 = vmatprep.subr.mxu0 0.0
    %7271 = vmatpush1.msra.mxu0 %v7213
    %7272 = vmatprep.subr.mxu0 0.0
    %7273 = vmatpush1.msra.mxu0 %v7214
    %7274 = vmatprep.subr.mxu0 0.0
    %7275 = vmatpush1.msra.mxu0 %v7215
    %7276 = vmatprep.subr.mxu0 0.0
    %7277 = vmatpush1.msra.mxu0 0.0
    %7278 = vmatprep.subr.mxu0 0.0
    %7279 = vmatpush1.msra.mxu0 0.0
    %7280 = vmatprep.subr.mxu0 0.0
    %7281 = vmatpush1.msra.mxu0 0.0
    %7282 = vmatprep.subr.mxu0 0.0
    %7283 = vmatpush1.msra.mxu0 0.0
    %7284 = vmatprep.subr.mxu0 0.0
    %7285 = vmatpush1.msra.mxu0 0.0
    %7286 = vmatprep.subr.mxu0 0.0
    %7287 = vmatpush1.msra.mxu0 0.0
    %7288 = vmatprep.subr.mxu0 0.0
    %7289 = vmatpush1.msra.mxu0 0.0
    %7290 = vmatprep.subr.mxu0 0.0
    %7291 = vmatpush1.msra.mxu0 0.0
    %7292 = vmatprep.subr.mxu0 0.0
    %7293 = vmatpush1.msra.mxu0 0.0
    %7294 = vmatprep.subr.mxu0 0.0
    %7295 = vmatpush1.msra.mxu0 0.0
    %7296 = vmatprep.subr.mxu0 0.0
    %7297 = vmatpush1.msra.mxu0 0.0
    %7298 = vmatprep.subr.mxu0 0.0
    %7299 = vmatpush1.msra.mxu0 0.0
    %7300 = vmatprep.subr.mxu0 0.0
    %7301 = vmatpush1.msra.mxu0 0.0
    %7302 = vmatprep.subr.mxu0 0.0
    %7303 = vmatpush1.msra.mxu0 0.0
    %7304 = vmatprep.subr.mxu0 0.0
    %7305 = vmatpush1.msra.mxu0 0.0
    %7306 = vmatprep.subr.mxu0 0.0
    %7307 = vmatpush1.msra.mxu0 0.0
    %7308 = vmatprep.subr.mxu0 0.0
    %7309 = vmatpush1.msra.mxu0 0.0
    %7310 = vmatprep.subr.mxu0 0.0
    %7311 = vmatpush1.msra.mxu0 0.0
    %7312 = vmatprep.subr.mxu0 0.0
    %7313 = vmatpush1.msra.mxu0 0.0
    %7314 = vmatprep.subr.mxu0 0.0
    %7315 = vmatpush1.msra.mxu0 0.0
    %7316 = vmatprep.subr.mxu0 0.0
    %7317 = vmatpush1.msra.mxu0 0.0
    %7318 = vmatprep.subr.mxu0 0.0
    %7319 = vmatpush1.msra.mxu0 0.0
    %7320 = vmatprep.subr.mxu0 0.0
    %7321 = vmatpush1.msra.mxu0 0.0
    %7322 = vmatprep.subr.mxu0 0.0
    %7323 = vmatpush1.msra.mxu0 0.0
    %7324 = vmatprep.subr.mxu0 0.0
    %7325 = vmatpush1.msra.mxu0 0.0
    %7326 = vmatprep.subr.mxu0 0.0
    %7327 = vmatpush1.msra.mxu0 0.0
    %7328 = vmatprep.subr.mxu0 0.0
    %7329 = vmatpush1.msra.mxu0 0.0
    %7330 = vmatprep.mubr.f32.mxu0 0.0
    %7331 = vmatmul.mubr.f32.gmra.mrb[0].mxu0 %v7252
    %v7332 = vpop.f32.mrb[0].mxu0
    %v7333 = vadd.f32 %v7229, %v7332
    %v7334 = vpop.f32.mrb[0].mxu0
    %7335 = vmatprep.mubr.f32.mxu0 0.0
    %7336 = vmatmul.mubr.f32.gmra.mrb[0].mxu0 %v7255
    %v7337 = vpop.f32.mrb[0].mxu0
    %v7338 = vadd.f32 %v7234, %v7337
    %v7339 = vpop.f32.mrb[0].mxu0
    %7340 = vmatprep.mubr.f32.mxu0 0.0
    %7341 = vmatmul.mubr.f32.gmra.mrb[0].mxu0 %v7258
    %v7342 = vpop.f32.mrb[0].mxu0
    %v7343 = vadd.f32 %v7239, %v7342
    %v7344 = vpop.f32.mrb[0].mxu0
    %7345 = vmatprep.mubr.f32.mxu0 0.0
    %7346 = vmatmul.mubr.f32.gmra.mrb[0].mxu0 %v7261
    %v7347 = vpop.f32.mrb[0].mxu0
    %v7348 = vadd.f32 %v7244, %v7347
    %v7349 = vpop.f32.mrb[0].mxu0
    %7350 = vmatprep.mubr.f32.mxu0 0.0
    %7351 = vmatmul.mubr.f32.gmra.mrb[0].mxu0 %v7264
    %v7352 = vpop.f32.mrb[0].mxu0
    %v7353 = vadd.f32 %v7249, %v7352
    %v7354 = vpop.f32.mrb[0].mxu0
    %7355 = vdwg.mxu0
    %v7356 = vmax.f32 %v7333, 0.0
    %v7357 = vmax.f32 %v7338, 0.0
    %v7358 = vmax.f32 %v7343, 0.0
    %v7359 = vmax.f32 %v7348, 0.0
    %v7360 = vmax.f32 %v7353, 0.0
    %v7361 = vld [vmem:[#allocation58] sm:$0x1]
    %v7362 = vld [vmem:[#allocation4] sm:$0x1]
    %7364 = vset.pattern.permute.xlu0 0
    %7365 = vperm.xlu0 %7364, %v7362
    %v7366 = vpop.permute.xlu0 %7365
    %v7368 = vlaneseq
    %v7369 = vshrl.u32 %v7368, 7
    %v7370 = vsub.s32 0, %v7369
    %v7371 = vrot.slane %v7366, %v7370
    %v7373 = vsel %vm1436, %v7361, 0
    %7375 = vmatprep.subr.mxu0 0.0
    %7376 = vmatpush1.msra.mxu0 %v7356
    %7377 = vmatprep.subr.mxu0 0.0
    %7378 = vmatpush1.msra.mxu0 %v7357
    %7379 = vmatprep.subr.mxu0 0.0
    %7380 = vmatpush1.msra.mxu0 %v7358
    %7381 = vmatprep.subr.mxu0 0.0
    %7382 = vmatpush1.msra.mxu0 %v7359
    %7383 = vmatprep.subr.mxu0 0.0
    %7384 = vmatpush1.msra.mxu0 %v7360
    %7385 = vmatprep.subr.mxu0 0.0
    %7386 = vmatpush1.msra.mxu0 0.0
    %7387 = vmatprep.subr.mxu0 0.0
    %7388 = vmatpush1.msra.mxu0 0.0
    %7389 = vmatprep.subr.mxu0 0.0
    %7390 = vmatpush1.msra.mxu0 0.0
    %7391 = vmatprep.subr.mxu0 0.0
    %7392 = vmatpush1.msra.mxu0 0.0
    %7393 = vmatprep.subr.mxu0 0.0
    %7394 = vmatpush1.msra.mxu0 0.0
    %7395 = vmatprep.subr.mxu0 0.0
    %7396 = vmatpush1.msra.mxu0 0.0
    %7397 = vmatprep.subr.mxu0 0.0
    %7398 = vmatpush1.msra.mxu0 0.0
    %7399 = vmatprep.subr.mxu0 0.0
    %7400 = vmatpush1.msra.mxu0 0.0
    %7401 = vmatprep.subr.mxu0 0.0
    %7402 = vmatpush1.msra.mxu0 0.0
    %7403 = vmatprep.subr.mxu0 0.0
    %7404 = vmatpush1.msra.mxu0 0.0
    %7405 = vmatprep.subr.mxu0 0.0
    %7406 = vmatpush1.msra.mxu0 0.0
    %7407 = vmatprep.subr.mxu0 0.0
    %7408 = vmatpush1.msra.mxu0 0.0
    %7409 = vmatprep.subr.mxu0 0.0
    %7410 = vmatpush1.msra.mxu0 0.0
    %7411 = vmatprep.subr.mxu0 0.0
    %7412 = vmatpush1.msra.mxu0 0.0
    %7413 = vmatprep.subr.mxu0 0.0
    %7414 = vmatpush1.msra.mxu0 0.0
    %7415 = vmatprep.subr.mxu0 0.0
    %7416 = vmatpush1.msra.mxu0 0.0
    %7417 = vmatprep.subr.mxu0 0.0
    %7418 = vmatpush1.msra.mxu0 0.0
    %7419 = vmatprep.subr.mxu0 0.0
    %7420 = vmatpush1.msra.mxu0 0.0
    %7421 = vmatprep.subr.mxu0 0.0
    %7422 = vmatpush1.msra.mxu0 0.0
    %7423 = vmatprep.subr.mxu0 0.0
    %7424 = vmatpush1.msra.mxu0 0.0
    %7425 = vmatprep.subr.mxu0 0.0
    %7426 = vmatpush1.msra.mxu0 0.0
    %7427 = vmatprep.subr.mxu0 0.0
    %7428 = vmatpush1.msra.mxu0 0.0
    %7429 = vmatprep.subr.mxu0 0.0
    %7430 = vmatpush1.msra.mxu0 0.0
    %7431 = vmatprep.subr.mxu0 0.0
    %7432 = vmatpush1.msra.mxu0 0.0
    %7433 = vmatprep.subr.mxu0 0.0
    %7434 = vmatpush1.msra.mxu0 0.0
    %7435 = vmatprep.subr.mxu0 0.0
    %7436 = vmatpush1.msra.mxu0 0.0
    %7437 = vmatprep.subr.mxu0 0.0
    %7438 = vmatpush1.msra.mxu0 0.0
    %7439 = vmatprep.mubr.f32.mxu0 0.0
    %7440 = vmatmul.mubr.f32.gmra.mrb[0].mxu0 %v7373
    %v7441 = vpop.f32.mrb[0].mxu0
    %v7442 = vadd.f32 %v7371, %v7441
    %v7443 = vpop.f32.mrb[0].mxu0
    %7444 = vdwg.mxu0
    %v7445 = vld [vmem:[#allocation61] sm:$0xff]
    %v7446 = vld [vmem:[#allocation61 + $0x8] sm:$0xff]
    %v7447 = vld [vmem:[#allocation61 + $0x10] sm:$0xff]
    %v7448 = vld [vmem:[#allocation61 + $0x18] sm:$0xff]
    %v7449 = vld [vmem:[#allocation61 + $0x20] sm:$0xff]
    %v7450 = vmul.f32 %v7442, %v1640
    %vm7451 = vcmask 7168
    %v7453 = vsel %vm7451, %v7445, 0
    %v7456 = vsel %vm7451, %v7446, 0
    %v7459 = vsel %vm7451, %v7447, 0
    %v7462 = vsel %vm7451, %v7448, 0
    %v7465 = vsel %vm7451, %v7449, 0
    %vm7467 = vcmask 1040384
    %v7469 = vsel %vm7467, %v7450, 0
    %7471 = vmatprep.subr.mxu0 0.0
    %7472 = vmatpush1.msra.mxu0 %v7469
    %7473 = vmatprep.subr.mxu0 0.0
    %7474 = vmatpush1.msra.mxu0 0.0
    %7475 = vmatprep.subr.mxu0 0.0
    %7476 = vmatpush1.msra.mxu0 0.0
    %7477 = vmatprep.subr.mxu0 0.0
    %7478 = vmatpush1.msra.mxu0 0.0
    %7479 = vmatprep.subr.mxu0 0.0
    %7480 = vmatpush1.msra.mxu0 0.0
    %7481 = vmatprep.subr.mxu0 0.0
    %7482 = vmatpush1.msra.mxu0 0.0
    %7483 = vmatprep.subr.mxu0 0.0
    %7484 = vmatpush1.msra.mxu0 0.0
    %7485 = vmatprep.subr.mxu0 0.0
    %7486 = vmatpush1.msra.mxu0 0.0
    %7487 = vmatprep.subr.mxu0 0.0
    %7488 = vmatpush1.msra.mxu0 0.0
    %7489 = vmatprep.subr.mxu0 0.0
    %7490 = vmatpush1.msra.mxu0 0.0
    %7491 = vmatprep.subr.mxu0 0.0
    %7492 = vmatpush1.msra.mxu0 0.0
    %7493 = vmatprep.subr.mxu0 0.0
    %7494 = vmatpush1.msra.mxu0 0.0
    %7495 = vmatprep.subr.mxu0 0.0
    %7496 = vmatpush1.msra.mxu0 0.0
    %7497 = vmatprep.subr.mxu0 0.0
    %7498 = vmatpush1.msra.mxu0 0.0
    %7499 = vmatprep.subr.mxu0 0.0
    %7500 = vmatpush1.msra.mxu0 0.0
    %7501 = vmatprep.subr.mxu0 0.0
    %7502 = vmatpush1.msra.mxu0 0.0
    %7503 = vmatprep.subr.mxu0 0.0
    %7504 = vmatpush1.msra.mxu0 0.0
    %7505 = vmatprep.subr.mxu0 0.0
    %7506 = vmatpush1.msra.mxu0 0.0
    %7507 = vmatprep.subr.mxu0 0.0
    %7508 = vmatpush1.msra.mxu0 0.0
    %7509 = vmatprep.subr.mxu0 0.0
    %7510 = vmatpush1.msra.mxu0 0.0
    %7511 = vmatprep.subr.mxu0 0.0
    %7512 = vmatpush1.msra.mxu0 0.0
    %7513 = vmatprep.subr.mxu0 0.0
    %7514 = vmatpush1.msra.mxu0 0.0
    %7515 = vmatprep.subr.mxu0 0.0
    %7516 = vmatpush1.msra.mxu0 0.0
    %7517 = vmatprep.subr.mxu0 0.0
    %7518 = vmatpush1.msra.mxu0 0.0
    %7519 = vmatprep.subr.mxu0 0.0
    %7520 = vmatpush1.msra.mxu0 0.0
    %7521 = vmatprep.subr.mxu0 0.0
    %7522 = vmatpush1.msra.mxu0 0.0
    %7523 = vmatprep.subr.mxu0 0.0
    %7524 = vmatpush1.msra.mxu0 0.0
    %7525 = vmatprep.subr.mxu0 0.0
    %7526 = vmatpush1.msra.mxu0 0.0
    %7527 = vmatprep.subr.mxu0 0.0
    %7528 = vmatpush1.msra.mxu0 0.0
    %7529 = vmatprep.subr.mxu0 0.0
    %7530 = vmatpush1.msra.mxu0 0.0
    %7531 = vmatprep.subr.mxu0 0.0
    %7532 = vmatpush1.msra.mxu0 0.0
    %7533 = vmatprep.subr.mxu0 0.0
    %7534 = vmatpush1.msra.mxu0 0.0
    %7535 = vmatprep.mubr.f32.mxu0 0.0
    %7536 = vmatmul.mubr.f32.gmra.mrb[0].mxu0 %v7453
    %v7537 = vpop.f32.mrb[0].mxu0
    %v7538 = vadd.f32 0.0, %v7537
    %v7539 = vpop.f32.mrb[0].mxu0
    %7540 = vmatprep.mubr.f32.mxu0 0.0
    %7541 = vmatmul.mubr.f32.gmra.mrb[0].mxu0 %v7456
    %v7542 = vpop.f32.mrb[0].mxu0
    %v7543 = vadd.f32 0.0, %v7542
    %v7544 = vpop.f32.mrb[0].mxu0
    %7545 = vmatprep.mubr.f32.mxu0 0.0
    %7546 = vmatmul.mubr.f32.gmra.mrb[0].mxu0 %v7459
    %v7547 = vpop.f32.mrb[0].mxu0
    %v7548 = vadd.f32 0.0, %v7547
    %v7549 = vpop.f32.mrb[0].mxu0
    %7550 = vmatprep.mubr.f32.mxu0 0.0
    %7551 = vmatmul.mubr.f32.gmra.mrb[0].mxu0 %v7462
    %v7552 = vpop.f32.mrb[0].mxu0
    %v7553 = vadd.f32 0.0, %v7552
    %v7554 = vpop.f32.mrb[0].mxu0
    %7555 = vmatprep.mubr.f32.mxu0 0.0
    %7556 = vmatmul.mubr.f32.gmra.mrb[0].mxu0 %v7465
    %v7557 = vpop.f32.mrb[0].mxu0
    %v7558 = vadd.f32 0.0, %v7557
    %v7559 = vpop.f32.mrb[0].mxu0
    %7560 = vdwg.mxu0
    %v7561 = vpack.c.bf16 %v7543, %v7538
    %v7562 = vpack.c.bf16 %v7553, %v7548
    %v7563 = vpack.c.bf16 %v7558, %v7558
    %7564 = vmatprep.subr.bf16.mxu0 0
    %7565 = vmatpush1.bf16.msra.mxu0 %v955
    %7566 = vmatprep.subr.bf16.mxu0 0
    %7567 = vmatpush1.bf16.msra.mxu0 %v956
    %7568 = vmatprep.subr.bf16.mxu0 0
    %7569 = vmatpush1.bf16.msra.mxu0 %v957
    %7570 = vmatprep.subr.bf16.mxu0 0
    %7571 = vmatpush1.bf16.msra.mxu0 %v958
    %7572 = vmatprep.subr.bf16.mxu0 0
    %7573 = vmatpush1.bf16.msra.mxu0 %v959
    %7574 = vmatprep.subr.bf16.mxu0 0
    %7575 = vmatpush1.bf16.msra.mxu0 %v960
    %7576 = vmatprep.subr.bf16.mxu0 0
    %7577 = vmatpush1.bf16.msra.mxu0 %v961
    %7578 = vmatprep.subr.bf16.mxu0 0
    %7579 = vmatpush1.bf16.msra.mxu0 %v962
    %7580 = vmatprep.subr.bf16.mxu0 0
    %7581 = vmatpush1.bf16.msra.mxu0 0
    %7582 = vmatprep.subr.bf16.mxu0 0
    %7583 = vmatpush1.bf16.msra.mxu0 0
    %7584 = vmatprep.subr.bf16.mxu0 0
    %7585 = vmatpush1.bf16.msra.mxu0 0
    %7586 = vmatprep.subr.bf16.mxu0 0
    %7587 = vmatpush1.bf16.msra.mxu0 0
    %7588 = vmatprep.subr.bf16.mxu0 0
    %7589 = vmatpush1.bf16.msra.mxu0 0
    %7590 = vmatprep.subr.bf16.mxu0 0
    %7591 = vmatpush1.bf16.msra.mxu0 0
    %7592 = vmatprep.subr.bf16.mxu0 0
    %7593 = vmatpush1.bf16.msra.mxu0 0
    %7594 = vmatprep.subr.bf16.mxu0 0
    %7595 = vmatpush1.bf16.msra.mxu0 0
    %7596 = vmatprep.mubr.bf16.mxu0 0
    %7597 = vmatmul.mubr.bf16.gmra.mrb[0].mxu0 %v7561
    %v7598 = vpop.f32.mrb[0].mxu0
    %v7599 = vadd.f32 0.0, %v7598
    %v7600 = vpop.f32.mrb[0].mxu0
    %v7601 = vpop.f32.mrb[0].mxu0
    %v7602 = vadd.f32 0.0, %v7601
    %v7603 = vpop.f32.mrb[0].mxu0
    %7604 = vmatprep.mubr.bf16.mxu0 0
    %7605 = vmatmul.mubr.bf16.gmra.mrb[0].mxu0 %v7562
    %v7606 = vpop.f32.mrb[0].mxu0
    %v7607 = vadd.f32 0.0, %v7606
    %v7608 = vpop.f32.mrb[0].mxu0
    %v7609 = vpop.f32.mrb[0].mxu0
    %v7610 = vadd.f32 0.0, %v7609
    %v7611 = vpop.f32.mrb[0].mxu0
    %7612 = vmatprep.mubr.bf16.mxu0 0
    %7613 = vmatmul.mubr.bf16.gmra.mrb[0].mxu0 %v7563
    %v7614 = vpop.f32.mrb[0].mxu0
    %v7615 = vadd.f32 0.0, %v7614
    %v7616 = vpop.f32.mrb[0].mxu0
    %v7617 = vpop.f32.mrb[0].mxu0
    %v7618 = vpop.f32.mrb[0].mxu0
    %7619 = vdwg.mxu0
    %v7620 = vld [vmem:[#allocation59] sm:$0xff]
    %v7621 = vld [vmem:[#allocation59 + $0x8] sm:$0xff]
    %v7622 = vld [vmem:[#allocation59 + $0x10] sm:$0xff]
    %v7623 = vld [vmem:[#allocation59 + $0x18] sm:$0xff]
    %v7624 = vld [vmem:[#allocation59 + $0x20] sm:$0xff]
    %v7626 = vsel %vm2036, %v7620, 0
    %v7629 = vsel %vm2036, %v7621, 0
    %v7632 = vsel %vm2036, %v7622, 0
    %v7635 = vsel %vm2036, %v7623, 0
    %v7638 = vsel %vm2036, %v7624, 0
    %7640 = vmatprep.subr.mxu0 0.0
    %7641 = vmatpush1.msra.mxu0 %v6195
    %7642 = vmatprep.subr.mxu0 0.0
    %7643 = vmatpush1.msra.mxu0 0.0
    %7644 = vmatprep.subr.mxu0 0.0
    %7645 = vmatpush1.msra.mxu0 0.0
    %7646 = vmatprep.subr.mxu0 0.0
    %7647 = vmatpush1.msra.mxu0 0.0
    %7648 = vmatprep.subr.mxu0 0.0
    %7649 = vmatpush1.msra.mxu0 0.0
    %7650 = vmatprep.subr.mxu0 0.0
    %7651 = vmatpush1.msra.mxu0 0.0
    %7652 = vmatprep.subr.mxu0 0.0
    %7653 = vmatpush1.msra.mxu0 0.0
    %7654 = vmatprep.subr.mxu0 0.0
    %7655 = vmatpush1.msra.mxu0 0.0
    %7656 = vmatprep.subr.mxu0 0.0
    %7657 = vmatpush1.msra.mxu0 0.0
    %7658 = vmatprep.subr.mxu0 0.0
    %7659 = vmatpush1.msra.mxu0 0.0
    %7660 = vmatprep.subr.mxu0 0.0
    %7661 = vmatpush1.msra.mxu0 0.0
    %7662 = vmatprep.subr.mxu0 0.0
    %7663 = vmatpush1.msra.mxu0 0.0
    %7664 = vmatprep.subr.mxu0 0.0
    %7665 = vmatpush1.msra.mxu0 0.0
    %7666 = vmatprep.subr.mxu0 0.0
    %7667 = vmatpush1.msra.mxu0 0.0
    %7668 = vmatprep.subr.mxu0 0.0
    %7669 = vmatpush1.msra.mxu0 0.0
    %7670 = vmatprep.subr.mxu0 0.0
    %7671 = vmatpush1.msra.mxu0 0.0
    %7672 = vmatprep.subr.mxu0 0.0
    %7673 = vmatpush1.msra.mxu0 0.0
    %7674 = vmatprep.subr.mxu0 0.0
    %7675 = vmatpush1.msra.mxu0 0.0
    %7676 = vmatprep.subr.mxu0 0.0
    %7677 = vmatpush1.msra.mxu0 0.0
    %7678 = vmatprep.subr.mxu0 0.0
    %7679 = vmatpush1.msra.mxu0 0.0
    %7680 = vmatprep.subr.mxu0 0.0
    %7681 = vmatpush1.msra.mxu0 0.0
    %7682 = vmatprep.subr.mxu0 0.0
    %7683 = vmatpush1.msra.mxu0 0.0
    %7684 = vmatprep.subr.mxu0 0.0
    %7685 = vmatpush1.msra.mxu0 0.0
    %7686 = vmatprep.subr.mxu0 0.0
    %7687 = vmatpush1.msra.mxu0 0.0
    %7688 = vmatprep.subr.mxu0 0.0
    %7689 = vmatpush1.msra.mxu0 0.0
    %7690 = vmatprep.subr.mxu0 0.0
    %7691 = vmatpush1.msra.mxu0 0.0
    %7692 = vmatprep.subr.mxu0 0.0
    %7693 = vmatpush1.msra.mxu0 0.0
    %7694 = vmatprep.subr.mxu0 0.0
    %7695 = vmatpush1.msra.mxu0 0.0
    %7696 = vmatprep.subr.mxu0 0.0
    %7697 = vmatpush1.msra.mxu0 0.0
    %7698 = vmatprep.subr.mxu0 0.0
    %7699 = vmatpush1.msra.mxu0 0.0
    %7700 = vmatprep.subr.mxu0 0.0
    %7701 = vmatpush1.msra.mxu0 0.0
    %7702 = vmatprep.subr.mxu0 0.0
    %7703 = vmatpush1.msra.mxu0 0.0
    %7704 = vmatprep.mubr.f32.mxu0 0.0
    %7705 = vmatmul.mubr.f32.gmra.mrb[0].mxu0 %v7626
    %v7706 = vpop.f32.mrb[0].mxu0
    %v7707 = vadd.f32 %v7599, %v7706
    %v7708 = vpop.f32.mrb[0].mxu0
    %7709 = vmatprep.mubr.f32.mxu0 0.0
    %7710 = vmatmul.mubr.f32.gmra.mrb[0].mxu0 %v7629
    %v7711 = vpop.f32.mrb[0].mxu0
    %v7712 = vadd.f32 %v7602, %v7711
    %v7713 = vpop.f32.mrb[0].mxu0
    %7714 = vmatprep.mubr.f32.mxu0 0.0
    %7715 = vmatmul.mubr.f32.gmra.mrb[0].mxu0 %v7632
    %v7716 = vpop.f32.mrb[0].mxu0
    %v7717 = vadd.f32 %v7607, %v7716
    %v7718 = vpop.f32.mrb[0].mxu0
    %7719 = vmatprep.mubr.f32.mxu0 0.0
    %7720 = vmatmul.mubr.f32.gmra.mrb[0].mxu0 %v7635
    %v7721 = vpop.f32.mrb[0].mxu0
    %v7722 = vadd.f32 %v7610, %v7721
    %v7723 = vpop.f32.mrb[0].mxu0
    %7724 = vmatprep.mubr.f32.mxu0 0.0
    %7725 = vmatmul.mubr.f32.gmra.mrb[0].mxu0 %v7638
    %v7726 = vpop.f32.mrb[0].mxu0
    %v7727 = vadd.f32 %v7615, %v7726
    %v7728 = vpop.f32.mrb[0].mxu0
    %7729 = vdwg.mxu0
    %v7730 = vld [vmem:[#allocation62] sm:$0xff]
    %v7731 = vld [vmem:[#allocation62 + $0x8] sm:$0xff]
    %v7732 = vld [vmem:[#allocation62 + $0x10] sm:$0xff]
    %v7733 = vld [vmem:[#allocation62 + $0x18] sm:$0xff]
    %v7734 = vld [vmem:[#allocation62 + $0x20] sm:$0xff]
    %7736 = vset.pattern.permute.xlu0 0
    %7737 = vperm.xlu0 %7736, %v7730
    %v7738 = vpop.permute.xlu0 %7737
    %7741 = vset.pattern.permute.xlu0 0
    %7742 = vperm.xlu0 %7741, %v7731
    %v7743 = vpop.permute.xlu0 %7742
    %7746 = vset.pattern.permute.xlu0 0
    %7747 = vperm.xlu0 %7746, %v7732
    %v7748 = vpop.permute.xlu0 %7747
    %7751 = vset.pattern.permute.xlu0 0
    %7752 = vperm.xlu0 %7751, %v7733
    %v7753 = vpop.permute.xlu0 %7752
    %7756 = vset.pattern.permute.xlu0 0
    %7757 = vperm.xlu0 %7756, %v7734
    %v7758 = vpop.permute.xlu0 %7757
    %v7760 = vadd.f32 %v7707, %v7738
    %v7761 = vadd.f32 %v7712, %v7743
    %v7762 = vadd.f32 %v7717, %v7748
    %v7763 = vadd.f32 %v7722, %v7753
    %v7764 = vadd.f32 %v7727, %v7758
    %v7765 = vmax.f32 %v7760, 0.0
    %v7766 = vmax.f32 %v7761, 0.0
    %v7767 = vmax.f32 %v7762, 0.0
    %v7768 = vmax.f32 %v7763, 0.0
    %v7769 = vmax.f32 %v7764, 0.0
    %v7770 = vld [vmem:[#allocation64] sm:$0xff]
    %v7771 = vld [vmem:[#allocation64 + $0x8] sm:$0xff]
    %v7772 = vld [vmem:[#allocation64 + $0x10] sm:$0xff]
    %v7773 = vld [vmem:[#allocation64 + $0x18] sm:$0xff]
    %v7774 = vld [vmem:[#allocation64 + $0x20] sm:$0xff]
    %v7775 = vld [vmem:[#allocation65] sm:$0xff]
    %v7776 = vld [vmem:[#allocation65 + $0x8] sm:$0xff]
    %v7777 = vld [vmem:[#allocation65 + $0x10] sm:$0xff]
    %v7778 = vld [vmem:[#allocation65 + $0x18] sm:$0xff]
    %v7779 = vld [vmem:[#allocation65 + $0x20] sm:$0xff]
    %7781 = vset.pattern.permute.xlu0 0
    %7782 = vperm.xlu0 %7781, %v7775
    %v7783 = vpop.permute.xlu0 %7782
    %7786 = vset.pattern.permute.xlu0 0
    %7787 = vperm.xlu0 %7786, %v7776
    %v7788 = vpop.permute.xlu0 %7787
    %7791 = vset.pattern.permute.xlu0 0
    %7792 = vperm.xlu0 %7791, %v7777
    %v7793 = vpop.permute.xlu0 %7792
    %7796 = vset.pattern.permute.xlu0 0
    %7797 = vperm.xlu0 %7796, %v7778
    %v7798 = vpop.permute.xlu0 %7797
    %7801 = vset.pattern.permute.xlu0 0
    %7802 = vperm.xlu0 %7801, %v7779
    %v7803 = vpop.permute.xlu0 %7802
    %v7806 = vsel %vm1436, %v7770, 0
    %v7809 = vsel %vm1436, %v7771, 0
    %v7812 = vsel %vm1436, %v7772, 0
    %v7815 = vsel %vm1436, %v7773, 0
    %v7818 = vsel %vm1436, %v7774, 0
    %7820 = vmatprep.subr.mxu0 0.0
    %7821 = vmatpush1.msra.mxu0 %v7765
    %7822 = vmatprep.subr.mxu0 0.0
    %7823 = vmatpush1.msra.mxu0 %v7766
    %7824 = vmatprep.subr.mxu0 0.0
    %7825 = vmatpush1.msra.mxu0 %v7767
    %7826 = vmatprep.subr.mxu0 0.0
    %7827 = vmatpush1.msra.mxu0 %v7768
    %7828 = vmatprep.subr.mxu0 0.0
    %7829 = vmatpush1.msra.mxu0 %v7769
    %7830 = vmatprep.subr.mxu0 0.0
    %7831 = vmatpush1.msra.mxu0 0.0
    %7832 = vmatprep.subr.mxu0 0.0
    %7833 = vmatpush1.msra.mxu0 0.0
    %7834 = vmatprep.subr.mxu0 0.0
    %7835 = vmatpush1.msra.mxu0 0.0
    %7836 = vmatprep.subr.mxu0 0.0
    %7837 = vmatpush1.msra.mxu0 0.0
    %7838 = vmatprep.subr.mxu0 0.0
    %7839 = vmatpush1.msra.mxu0 0.0
    %7840 = vmatprep.subr.mxu0 0.0
    %7841 = vmatpush1.msra.mxu0 0.0
    %7842 = vmatprep.subr.mxu0 0.0
    %7843 = vmatpush1.msra.mxu0 0.0
    %7844 = vmatprep.subr.mxu0 0.0
    %7845 = vmatpush1.msra.mxu0 0.0
    %7846 = vmatprep.subr.mxu0 0.0
    %7847 = vmatpush1.msra.mxu0 0.0
    %7848 = vmatprep.subr.mxu0 0.0
    %7849 = vmatpush1.msra.mxu0 0.0
    %7850 = vmatprep.subr.mxu0 0.0
    %7851 = vmatpush1.msra.mxu0 0.0
    %7852 = vmatprep.subr.mxu0 0.0
    %7853 = vmatpush1.msra.mxu0 0.0
    %7854 = vmatprep.subr.mxu0 0.0
    %7855 = vmatpush1.msra.mxu0 0.0
    %7856 = vmatprep.subr.mxu0 0.0
    %7857 = vmatpush1.msra.mxu0 0.0
    %7858 = vmatprep.subr.mxu0 0.0
    %7859 = vmatpush1.msra.mxu0 0.0
    %7860 = vmatprep.subr.mxu0 0.0
    %7861 = vmatpush1.msra.mxu0 0.0
    %7862 = vmatprep.subr.mxu0 0.0
    %7863 = vmatpush1.msra.mxu0 0.0
    %7864 = vmatprep.subr.mxu0 0.0
    %7865 = vmatpush1.msra.mxu0 0.0
    %7866 = vmatprep.subr.mxu0 0.0
    %7867 = vmatpush1.msra.mxu0 0.0
    %7868 = vmatprep.subr.mxu0 0.0
    %7869 = vmatpush1.msra.mxu0 0.0
    %7870 = vmatprep.subr.mxu0 0.0
    %7871 = vmatpush1.msra.mxu0 0.0
    %7872 = vmatprep.subr.mxu0 0.0
    %7873 = vmatpush1.msra.mxu0 0.0
    %7874 = vmatprep.subr.mxu0 0.0
    %7875 = vmatpush1.msra.mxu0 0.0
    %7876 = vmatprep.subr.mxu0 0.0
    %7877 = vmatpush1.msra.mxu0 0.0
    %7878 = vmatprep.subr.mxu0 0.0
    %7879 = vmatpush1.msra.mxu0 0.0
    %7880 = vmatprep.subr.mxu0 0.0
    %7881 = vmatpush1.msra.mxu0 0.0
    %7882 = vmatprep.subr.mxu0 0.0
    %7883 = vmatpush1.msra.mxu0 0.0
    %7884 = vmatprep.mubr.f32.mxu0 0.0
    %7885 = vmatmul.mubr.f32.gmra.mrb[0].mxu0 %v7806
    %v7886 = vpop.f32.mrb[0].mxu0
    %v7887 = vadd.f32 %v7783, %v7886
    %v7888 = vpop.f32.mrb[0].mxu0
    %7889 = vmatprep.mubr.f32.mxu0 0.0
    %7890 = vmatmul.mubr.f32.gmra.mrb[0].mxu0 %v7809
    %v7891 = vpop.f32.mrb[0].mxu0
    %v7892 = vadd.f32 %v7788, %v7891
    %v7893 = vpop.f32.mrb[0].mxu0
    %7894 = vmatprep.mubr.f32.mxu0 0.0
    %7895 = vmatmul.mubr.f32.gmra.mrb[0].mxu0 %v7812
    %v7896 = vpop.f32.mrb[0].mxu0
    %v7897 = vadd.f32 %v7793, %v7896
    %v7898 = vpop.f32.mrb[0].mxu0
    %7899 = vmatprep.mubr.f32.mxu0 0.0
    %7900 = vmatmul.mubr.f32.gmra.mrb[0].mxu0 %v7815
    %v7901 = vpop.f32.mrb[0].mxu0
    %v7902 = vadd.f32 %v7798, %v7901
    %v7903 = vpop.f32.mrb[0].mxu0
    %7904 = vmatprep.mubr.f32.mxu0 0.0
    %7905 = vmatmul.mubr.f32.gmra.mrb[0].mxu0 %v7818
    %v7906 = vpop.f32.mrb[0].mxu0
    %v7907 = vadd.f32 %v7803, %v7906
    %v7908 = vpop.f32.mrb[0].mxu0
    %7909 = vdwg.mxu0
    %v7910 = vmax.f32 %v7887, 0.0
    %v7911 = vmax.f32 %v7892, 0.0
    %v7912 = vmax.f32 %v7897, 0.0
    %v7913 = vmax.f32 %v7902, 0.0
    %v7914 = vmax.f32 %v7907, 0.0
    %v7915 = vld [vmem:[#allocation67] sm:$0x1]
    %v7916 = vld [vmem:[#allocation5] sm:$0x1]
    %7918 = vset.pattern.permute.xlu0 0
    %7919 = vperm.xlu0 %7918, %v7916
    %v7920 = vpop.permute.xlu0 %7919
    %v7922 = vlaneseq
    %v7923 = vshrl.u32 %v7922, 7
    %v7924 = vsub.s32 0, %v7923
    %v7925 = vrot.slane %v7920, %v7924
    %v7927 = vsel %vm1436, %v7915, 0
    %7929 = vmatprep.subr.mxu0 0.0
    %7930 = vmatpush1.msra.mxu0 %v7910
    %7931 = vmatprep.subr.mxu0 0.0
    %7932 = vmatpush1.msra.mxu0 %v7911
    %7933 = vmatprep.subr.mxu0 0.0
    %7934 = vmatpush1.msra.mxu0 %v7912
    %7935 = vmatprep.subr.mxu0 0.0
    %7936 = vmatpush1.msra.mxu0 %v7913
    %7937 = vmatprep.subr.mxu0 0.0
    %7938 = vmatpush1.msra.mxu0 %v7914
    %7939 = vmatprep.subr.mxu0 0.0
    %7940 = vmatpush1.msra.mxu0 0.0
    %7941 = vmatprep.subr.mxu0 0.0
    %7942 = vmatpush1.msra.mxu0 0.0
    %7943 = vmatprep.subr.mxu0 0.0
    %7944 = vmatpush1.msra.mxu0 0.0
    %7945 = vmatprep.subr.mxu0 0.0
    %7946 = vmatpush1.msra.mxu0 0.0
    %7947 = vmatprep.subr.mxu0 0.0
    %7948 = vmatpush1.msra.mxu0 0.0
    %7949 = vmatprep.subr.mxu0 0.0
    %7950 = vmatpush1.msra.mxu0 0.0
    %7951 = vmatprep.subr.mxu0 0.0
    %7952 = vmatpush1.msra.mxu0 0.0
    %7953 = vmatprep.subr.mxu0 0.0
    %7954 = vmatpush1.msra.mxu0 0.0
    %7955 = vmatprep.subr.mxu0 0.0
    %7956 = vmatpush1.msra.mxu0 0.0
    %7957 = vmatprep.subr.mxu0 0.0
    %7958 = vmatpush1.msra.mxu0 0.0
    %7959 = vmatprep.subr.mxu0 0.0
    %7960 = vmatpush1.msra.mxu0 0.0
    %7961 = vmatprep.subr.mxu0 0.0
    %7962 = vmatpush1.msra.mxu0 0.0
    %7963 = vmatprep.subr.mxu0 0.0
    %7964 = vmatpush1.msra.mxu0 0.0
    %7965 = vmatprep.subr.mxu0 0.0
    %7966 = vmatpush1.msra.mxu0 0.0
    %7967 = vmatprep.subr.mxu0 0.0
    %7968 = vmatpush1.msra.mxu0 0.0
    %7969 = vmatprep.subr.mxu0 0.0
    %7970 = vmatpush1.msra.mxu0 0.0
    %7971 = vmatprep.subr.mxu0 0.0
    %7972 = vmatpush1.msra.mxu0 0.0
    %7973 = vmatprep.subr.mxu0 0.0
    %7974 = vmatpush1.msra.mxu0 0.0
    %7975 = vmatprep.subr.mxu0 0.0
    %7976 = vmatpush1.msra.mxu0 0.0
    %7977 = vmatprep.subr.mxu0 0.0
    %7978 = vmatpush1.msra.mxu0 0.0
    %7979 = vmatprep.subr.mxu0 0.0
    %7980 = vmatpush1.msra.mxu0 0.0
    %7981 = vmatprep.subr.mxu0 0.0
    %7982 = vmatpush1.msra.mxu0 0.0
    %7983 = vmatprep.subr.mxu0 0.0
    %7984 = vmatpush1.msra.mxu0 0.0
    %7985 = vmatprep.subr.mxu0 0.0
    %7986 = vmatpush1.msra.mxu0 0.0
    %7987 = vmatprep.subr.mxu0 0.0
    %7988 = vmatpush1.msra.mxu0 0.0
    %7989 = vmatprep.subr.mxu0 0.0
    %7990 = vmatpush1.msra.mxu0 0.0
    %7991 = vmatprep.subr.mxu0 0.0
    %7992 = vmatpush1.msra.mxu0 0.0
    %7993 = vmatprep.mubr.f32.mxu0 0.0
    %7994 = vmatmul.mubr.f32.gmra.mrb[0].mxu0 %v7927
    %v7995 = vpop.f32.mrb[0].mxu0
    %v7996 = vadd.f32 %v7925, %v7995
    %v7997 = vpop.f32.mrb[0].mxu0
    %7998 = vdwg.mxu0
    %v8000 = vrot.slane %v6527, 6
    %v8003 = vrot.slane %v7996, 5
    %vm8005 = vcmask 1041408
    %v8006 = vsel %vm8005, %v6895, %v8000
    %vm8007 = vcmask 1042432
    %v8008 = vsel %vm8007, %v8006, %v8003
    %8009 = vst [vmem:[%s113] sm:$0xf] %v8008
    // Predicated region
    $region386: #{a_call__.1} parent=1 // pred_check
      _
    $region387: #{a_call__.1} parent=1 // pred_check_branch
      %8011 = sbr.rel (0) target = $region389
    $region388: #{a_call__.1} parent=1 // pred_region
      _
    $region389: #{a_call__.1} parent=1 // pred_fallthru
      _
    // Predicated region
    $region390: #{a_call__.1} parent=1 // pred_check
      _
    $region391: #{a_call__.1} parent=1 // pred_check_branch
      %8013 = sbr.rel (0) target = $region393
    $region392: #{a_call__.1} parent=1 // pred_region
      _
    $region393: #{a_call__.1} parent=1 // pred_fallthru
      _
    // Predicated region
    $region394: #{a_call__.1} parent=1 // pred_check
      _
    $region395: #{a_call__.1} parent=1 // pred_check_branch
      %8015 = sbr.rel (0) target = $region397
    $region396: #{a_call__.1} parent=1 // pred_region
      _
    $region397: #{a_call__.1} parent=1 // pred_fallthru
      _
    // Predicated region
    $region398: #{a_call__.1} parent=1 // pred_check
      _
    $region399: #{a_call__.1} parent=1 // pred_check_branch
      %8017 = sbr.rel (0) target = $region401
    $region400: #{a_call__.1} parent=1 // pred_region
      _
    $region401: #{a_call__.1} parent=1 // pred_fallthru
      _
    %8018 = vsyncpa [#allocation7], 1
    %8019 = vsyncpa [#allocation9], 1
    %8020 = vsyncpa [#allocation12], 1
    %8021 = vsyncpa [#allocation15], 1
    %8022 = vsyncpa [#allocation18], 1
    %8023 = vsyncpa [#allocation21], 1
    %8024 = vsyncpa [#allocation24], 1
    %8025 = vsyncpa [#allocation27], 1
    %8026 = vsyncpa [#allocation30], 1
    %8027 = vsyncpa [#allocation33], 1
    %8028 = vsyncpa [#allocation36], 1
    %8029 = vsyncpa [#allocation39], 1
    %8030 = vsyncpa [#allocation42], 1
    %8031 = vsyncpa [#allocation45], 1
    %8032 = vsyncpa [#allocation48], 1
    %8033 = vsyncpa [#allocation51], 1
    %8034 = vsyncpa [#allocation54], 1
    %8035 = vsyncpa [#allocation57], 1
    %8036 = vsyncpa [#allocation60], 1
    %8037 = vsyncpa [#allocation63], 1
    %8038 = vsyncpa [#allocation66], 1

</llo_original>
